<compile_context>
chip_gen: v6e
topology: v6e:2x2x1
jax: 0.10.0
libtpu: 0.0.40
codegen_flags: <defaults>
</compile_context>

<pallas_src>
import functools

import jax
import jax.numpy as jnp
from jax import lax
from jax.experimental import pallas as pl
from jax.experimental.pallas import tpu as pltpu

EPS = 1e-5  # nn.InstanceNorm2d default eps


# ---------------------------------------------------------------------------
# Glue: spectral normalization of conv weights (deterministic power iteration)
# ---------------------------------------------------------------------------
def spectral_normalize(w, n_iter=50, eps=1e-12):
    """w: (O, I, kh, kw) torch layout. Returns w / sigma_max(w.reshape(O, -1)).

    TODO(synk): PyTorch's spectral_norm keeps a randomly-initialized persistent
    `u` buffer and does 1 power iteration per training forward; here we use a
    deterministic, converged power iteration (same fixed point, no RNG state).
    """
    o = w.shape[0]
    wm = w.reshape(o, -1).astype(jnp.float32)
    u0 = jnp.ones((o,), jnp.float32) / jnp.sqrt(jnp.float32(o))

    def body(_, u):
        v = wm.T @ u
        v = v / (jnp.linalg.norm(v) + eps)
        u = wm @ v
        u = u / (jnp.linalg.norm(u) + eps)
        return u

    u = lax.fori_loop(0, n_iter, body, u0)
    v = wm.T @ u
    v = v / (jnp.linalg.norm(v) + eps)
    sigma = u @ (wm @ v)
    return (w / sigma).astype(w.dtype)


# ---------------------------------------------------------------------------
# Pallas kernel: whole residual block for NB batch samples per grid step
# ---------------------------------------------------------------------------
def _resblock_kernel(xp_ref, w1_ref, w2_ref, o_ref, xpb, pad2, *, NB, H, W, C):
    """xp_ref : (NB, H+4, W+4, C) f32   input zero-padded by 2 (conv1 halo);
                                        interior doubles as the residual.
       w1_ref : (9, C, C) bf16          conv1 weights, (kh*3+kw, C_in, C_out)
       w2_ref : (9, C, C) bf16          conv2 weights, same layout
       o_ref  : (NB, H, W, C) f32
       xpb    : (NB, H+4, W+4, C) bf16  scratch: bf16 copy of xp (MXU operand)
       pad2   : (NB, H+2, W+2, C) bf16  scratch: conv2 halo staging
    """
    HW = H * W
    M = NB * HW
    inv_hw = 1.0 / HW

    # One bf16 cast pass over the padded input (instead of nine at-dot casts).
    xpb[...] = xp_ref[...].astype(jnp.bfloat16)

    # ---- conv1: 3x3, dilation=2 -> 9 accumulating dots with K = C ----
    # conv bias omitted: a per-channel constant is cancelled exactly by the
    # affine=False InstanceNorm mean subtraction that immediately follows.
    acc = None
    for kh in range(3):
        for kw in range(3):
            lhs = xpb[:, kh * 2:kh * 2 + H, kw * 2:kw * 2 + W, :].reshape(M, C)
            d = jnp.dot(lhs, w1_ref[kh * 3 + kw],
                        preferred_element_type=jnp.float32)
            acc = d if acc is None else acc + d

    # ---- InstanceNorm2d #1 (per sample, per channel over H*W) + ReLU ----
    # One-pass statistics: var = E[x^2] - mean^2 (f32, fine at these scales).
    acc = acc.reshape(NB, HW, C)
    mean1 = jnp.sum(acc, axis=1, keepdims=True) * inv_hw
    var1 = jnp.sum(acc * acc, axis=1, keepdims=True) * inv_hw - mean1 * mean1
    h1 = jnp.maximum((acc - mean1) * lax.rsqrt(var1 + EPS), 0.0)

    # ---- conv2 halo staging (bf16): interior fully overwritten each step,
    # only the 1-wide border needs zeroing.  Re-zeroed every step on purpose:
    # a program_id==0 guard is unsafe under megacore sharding (second core's
    # scratch border would stay uninitialized); cost is 4 thin stores.
    pad2[:, 1:1 + H, 1:1 + W, :] = h1.astype(jnp.bfloat16).reshape(NB, H, W, C)
    zrow = jnp.zeros((NB, 1, W + 2, C), jnp.bfloat16)
    pad2[:, 0:1, :, :] = zrow
    pad2[:, H + 1:H + 2, :, :] = zrow
    zcol = jnp.zeros((NB, H + 2, 1, C), jnp.bfloat16)
    pad2[:, :, 0:1, :] = zcol
    pad2[:, :, W + 1:W + 2, :] = zcol

    # ---- conv2: 3x3, padding=1 -> 9 accumulating dots with K = C ----
    acc2 = None
    for kh in range(3):
        for kw in range(3):
            lhs2 = pad2[:, kh:kh + H, kw:kw + W, :].reshape(M, C)
            d = jnp.dot(lhs2, w2_ref[kh * 3 + kw],
                        preferred_element_type=jnp.float32)
            acc2 = d if acc2 is None else acc2 + d

    # ---- InstanceNorm2d #2 + residual add (f32) ----
    acc2 = acc2.reshape(NB, HW, C)
    mean2 = jnp.sum(acc2, axis=1, keepdims=True) * inv_hw
    var2 = jnp.sum(acc2 * acc2, axis=1, keepdims=True) * inv_hw - mean2 * mean2
    h2 = (acc2 - mean2) * lax.rsqrt(var2 + EPS)
    ident = xp_ref[:, 2:2 + H, 2:2 + W, :].reshape(NB, HW, C)
    o_ref[...] = (h2 + ident).reshape(NB, H, W, C).astype(o_ref.dtype)


# ---------------------------------------------------------------------------
# Wrappers
# ---------------------------------------------------------------------------
def prepare_residual_block_params(w1_oihw, b1, w2_oihw, b2):
    """One-time (per weight update) preprocessing, hoisted out of the hot path.

    b1/b2 are accepted for API parity with nn.Conv2d but dropped: with
    InstanceNorm2d(affine=False) right after each conv, a per-channel bias is
    cancelled exactly by the mean subtraction.
    """
    del b1, b2
    C = w1_oihw.shape[0]
    w1n = spectral_normalize(w1_oihw)
    w2n = spectral_normalize(w2_oihw)
    # OIHW -> HWIO -> (9, C_in, C_out); bf16 MXU operands (f32 accumulation).
    w1r = jnp.transpose(w1n, (2, 3, 1, 0)).reshape(9, C, C).astype(jnp.bfloat16)
    w2r = jnp.transpose(w2n, (2, 3, 1, 0)).reshape(9, C, C).astype(jnp.bfloat16)
    return w1r, w2r


def _pick_nb(N, H, W):
    # Pack samples per grid step so the matmul M dim is reasonable and the
    # ~0.35us/step pipeline overhead amortizes, but keep the grid length >= 2
    # whenever N >= 2 (v7x megacore sharding + step-to-step DMA overlap).
    nb_cap = max(1, N // 2) if N >= 2 else 1
    nb = 1
    for cand in range(1, N + 1):
        if N % cand == 0 and cand <= nb_cap and cand * H * W <= 1024:
            nb = cand
    return nb


def _vmem_limit_bytes(nb, H, W, C):
    f32, bf16 = 4, 2
    xp = 2 * nb * (H + 4) * (W + 4) * C * f32      # input, double-buffered
    out = 2 * nb * H * W * C * f32                 # output, double-buffered
    wts = 2 * 2 * 9 * C * C * bf16                 # two weights, double-buffered
    xpb = nb * (H + 4) * (W + 4) * C * bf16        # bf16 input scratch
    pad2 = nb * (H + 2) * (W + 2) * C * bf16       # conv2 halo scratch
    tmps = 6 * nb * H * W * C * f32                # acc/h1/acc2/h2 live values
    est = xp + out + wts + xpb + pad2 + tmps
    return int(min(max(est * 5 // 4, 16 * 2**20), 60 * 2**20))


def residual_block_apply(x_nchw, w1r, w2r):
    """ResidualBlock forward with pre-normalized (9,C,C) bf16 weights. NCHW I/O."""
    x = jnp.transpose(x_nchw, (0, 2, 3, 1))  # NCHW -> NHWC
    N, H, W, C = x.shape

    # conv1 halo applied in the wrapper: a single f32 padded stream is the only
    # per-pixel input DMA; its interior also serves as the residual identity.
    xp = jnp.pad(x, ((0, 0), (2, 2), (2, 2), (0, 0)))

    nb = _pick_nb(N, H, W)

    # TODO(synk): for large H,W (>= ~32), add an 'arbitrary' spatial row-block
    # grid axis with halo rows and two-pass InstanceNorm statistics instead of
    # holding a full sample plus intermediates resident in VMEM.
    # TODO(synk): the weight blocks are grid-invariant; single-buffer them
    # (pipeline_mode=pl.Buffered(1)) to reclaim ~2.4 MiB once that path is
    # validated on all target generations.
    kernel = functools.partial(_resblock_kernel, NB=nb, H=H, W=W, C=C)

    out = pl.pallas_call(
        kernel,
        out_shape=jax.ShapeDtypeStruct((N, H, W, C), x.dtype),
        grid_spec=pltpu.PrefetchScalarGridSpec(
            num_scalar_prefetch=0,
            grid=(N // nb,),
            in_specs=[
                pl.BlockSpec((nb, H + 4, W + 4, C), lambda i: (i, 0, 0, 0)),
                pl.BlockSpec((9, C, C), lambda i: (0, 0, 0)),
                pl.BlockSpec((9, C, C), lambda i: (0, 0, 0)),
            ],
            out_specs=pl.BlockSpec((nb, H, W, C), lambda i: (i, 0, 0, 0)),
            scratch_shapes=[
                pltpu.VMEM((nb, H + 4, W + 4, C), jnp.bfloat16),  # bf16 input
                pltpu.VMEM((nb, H + 2, W + 2, C), jnp.bfloat16),  # conv2 halo
            ],
        ),
        compiler_params=pltpu.CompilerParams(
            # Batch steps are independent -> shardable across v7x's 2 TCs.
            dimension_semantics=("parallel",),
            vmem_limit_bytes=_vmem_limit_bytes(nb, H, W, C),
        ),
    )(xp, w1r, w2r)

    return jnp.transpose(out, (0, 3, 1, 2))  # back to NCHW


def residual_block_forward(x_nchw, w1_oihw, b1, w2_oihw, b2):
    """PyTorch-parity convenience wrapper. Re-runs the weight preprocessing on
    every call; in real use hoist prepare_residual_block_params out."""
    w1r, w2r = prepare_residual_block_params(w1_oihw, b1, w2_oihw, b2)
    return residual_block_apply(x_nchw, w1r, w2r)


# ---------------------------------------------------------------------------
# Pure-JAX reference (for correctness check)
# ---------------------------------------------------------------------------
def _instance_norm_nchw(x):
    mean = jnp.mean(x, axis=(2, 3), keepdims=True)
    var = jnp.mean(jnp.square(x - mean), axis=(2, 3), keepdims=True)
    return (x - mean) * lax.rsqrt(var + EPS)


def reference_forward(x_nchw, w1_oihw, b1, w2_oihw, b2,
                      conv_dtype=jnp.float32):
    """ResidualBlock reference. conv_dtype=bfloat16 mirrors the kernel's MXU
    operand precision (accumulation and everything else stays f32)."""
    w1n = spectral_normalize(w1_oihw)
    w2n = spectral_normalize(w2_oihw)
    dn = ("NCHW", "OIHW", "NCHW")

    def conv(x, w, pad, dil):
        return lax.conv_general_dilated(
            x.astype(conv_dtype), w.astype(conv_dtype),
            window_strides=(1, 1), padding=((pad, pad), (pad, pad)),
            rhs_dilation=(dil, dil), dimension_numbers=dn,
            preferred_element_type=jnp.float32)

    out = conv(x_nchw, w1n, 2, 2) + b1[None, :, None, None]
    out = jnp.maximum(_instance_norm_nchw(out), 0.0)
    out = conv(out, w2n, 1, 1) + b2[None, :, None, None]
    out = _instance_norm_nchw(out)
    return out + x_nchw


if __name__ == "__main__":
    # The module hardcodes 256 channels in ResidualBlock regardless of ctor
    # args; keep C=256 faithful, shrink batch/spatial to stay small.
    N, C, H, W = 2, 256, 8, 8
    key = jax.random.PRNGKey(0)
    k1, k2, k3, k4, k5 = jax.random.split(key, 5)

    x = jax.random.normal(k1, (N, C, H, W), jnp.float32)
    w1 = jax.random.normal(k2, (C, C, 3, 3), jnp.float32) * 0.05
    b1 = jax.random.normal(k3, (C,), jnp.float32) * 0.05
    w2 = jax.random.normal(k4, (C, C, 3, 3), jnp.float32) * 0.05
    b2 = jax.random.normal(k5, (C,), jnp.float32) * 0.05

    # Weight preprocessing (spectral norm + layout) hoisted out of the hot path.
    w1r, w2r = prepare_residual_block_params(w1, b1, w2, b2)
    out = jax.block_until_ready(residual_block_apply(x, w1r, w2r))
    assert out.shape == (N, C, H, W) and out.dtype == jnp.float32

    # Tight check against a reference using the same bf16 conv-operand
    # precision as the kernel (f32 accumulation / IN / residual in both).
    ref_bf16 = jax.block_until_ready(
        reference_forward(x, w1, b1, w2, b2, conv_dtype=jnp.bfloat16))
    assert jnp.allclose(out, ref_bf16, rtol=5e-3, atol=5e-3), (
        float(jnp.max(jnp.abs(out - ref_bf16))))

    # Coarse semantic check against the full-f32 reference (bf16 conv operands
    # introduce a small, expected numerical difference).
    ref_f32 = jax.block_until_ready(reference_forward(x, w1, b1, w2, b2))
    assert jnp.allclose(out, ref_f32, rtol=1e-1, atol=1e-1), (
        float(jnp.max(jnp.abs(out - ref_f32))))

    print("KERNEL_OK")
</pallas_src>

<mosaic_0001>
module attributes {stable_mosaic.version = 11 : i64} {
  func.func @_resblock_kernel(%arg0: i32, %arg1: memref<1x12x12x256xf32, #tpu.memory_space<vmem>>, %arg2: memref<9x256x256xbf16, #tpu.memory_space<vmem>>, %arg3: memref<9x256x256xbf16, #tpu.memory_space<vmem>>, %arg4: memref<1x8x8x256xf32, #tpu.memory_space<vmem>>, %arg5: memref<1x12x12x256xbf16, #tpu.memory_space<vmem>>, %arg6: memref<1x10x10x256xbf16, #tpu.memory_space<vmem>>) attributes {dimension_semantics = [#tpu.dimension_semantics<parallel>], iteration_bounds = array<i64: 2>, scalar_prefetch = 0 : i64, scratch_operands = 2 : i64, tpu.core_type = #tpu.core_type<tc>, window_params = [{transform_indices = @transform_0, window_bounds = array<i64: 1, 12, 12, 256>}, {pipeline_mode = #tpu.pipeline_mode<synchronous>, transform_indices = @transform_1, window_bounds = array<i64: 9, 256, 256>}, {pipeline_mode = #tpu.pipeline_mode<synchronous>, transform_indices = @transform_2, window_bounds = array<i64: 9, 256, 256>}, {transform_indices = @transform_3, window_bounds = array<i64: 1, 8, 8, 256>}]} {
    %c0 = arith.constant 0 : index
    %c0_0 = arith.constant 0 : index
    %c0_1 = arith.constant 0 : index
    %c0_2 = arith.constant 0 : index
    %0 = vector.load %arg1[%c0, %c0_0, %c0_1, %c0_2] : memref<1x12x12x256xf32, #tpu.memory_space<vmem>>, vector<1x12x12x256xf32>
    %1 = arith.truncf %0 : vector<1x12x12x256xf32> to vector<1x12x12x256xbf16>
    %c0_3 = arith.constant 0 : index
    %c0_4 = arith.constant 0 : index
    %c0_5 = arith.constant 0 : index
    %c0_6 = arith.constant 0 : index
    %2 = vector.load %arg5[%c0_3, %c0_4, %c0_5, %c0_6] : memref<1x12x12x256xbf16, #tpu.memory_space<vmem>>, vector<1x12x12x256xbf16>
    tpu.vector_store %arg5[%c0_3, %c0_4, %c0_5, %c0_6], %1 {strides = array<i32>} : memref<1x12x12x256xbf16, #tpu.memory_space<vmem>>, vector<1x12x12x256xbf16>,
    %c0_7 = arith.constant 0 : index
    %c0_8 = arith.constant 0 : index
    %c0_9 = arith.constant 0 : index
    %c0_10 = arith.constant 0 : index
    %3 = vector.load %arg5[%c0_7, %c0_8, %c0_9, %c0_10] : memref<1x12x12x256xbf16, #tpu.memory_space<vmem>>, vector<1x8x8x256xbf16>
    %4 = vector.shape_cast %3 : vector<1x8x8x256xbf16> to vector<64x256xbf16>
    %c0_11 = arith.constant 0 : index
    %c0_12 = arith.constant 0 : index
    %c0_13 = arith.constant 0 : index
    %5 = vector.load %arg2[%c0_11, %c0_12, %c0_13] : memref<9x256x256xbf16, #tpu.memory_space<vmem>>, vector<1x256x256xbf16>
    %6 = vector.shape_cast %5 : vector<1x256x256xbf16> to vector<256x256xbf16>
    %cst = arith.constant dense<0.000000e+00> : vector<64x256xf32>
    %7 = tpu.matmul %4, %6, %cst {dimension_numbers = #tpu.dot_dimension_numbers<[1], [0], [0], [1], [0, 0, 1, 1], [], []>} : vector<64x256xbf16>, vector<256x256xbf16>, vector<64x256xf32> -> vector<64x256xf32>
    %c0_14 = arith.constant 0 : index
    %c0_15 = arith.constant 0 : index
    %c2 = arith.constant 2 : index
    %c0_16 = arith.constant 0 : index
    %8 = vector.load %arg5[%c0_14, %c0_15, %c2, %c0_16] : memref<1x12x12x256xbf16, #tpu.memory_space<vmem>>, vector<1x8x8x256xbf16>
    %9 = vector.shape_cast %8 : vector<1x8x8x256xbf16> to vector<64x256xbf16>
    %c1 = arith.constant 1 : index
    %c0_17 = arith.constant 0 : index
    %c0_18 = arith.constant 0 : index
    %10 = vector.load %arg2[%c1, %c0_17, %c0_18] : memref<9x256x256xbf16, #tpu.memory_space<vmem>>, vector<1x256x256xbf16>
    %11 = vector.shape_cast %10 : vector<1x256x256xbf16> to vector<256x256xbf16>
    %cst_19 = arith.constant dense<0.000000e+00> : vector<64x256xf32>
    %12 = tpu.matmul %9, %11, %cst_19 {dimension_numbers = #tpu.dot_dimension_numbers<[1], [0], [0], [1], [0, 0, 1, 1], [], []>} : vector<64x256xbf16>, vector<256x256xbf16>, vector<64x256xf32> -> vector<64x256xf32>
    %13 = arith.addf %7, %12 : vector<64x256xf32>
    %c0_20 = arith.constant 0 : index
    %c0_21 = arith.constant 0 : index
    %c4 = arith.constant 4 : index
    %c0_22 = arith.constant 0 : index
    %14 = vector.load %arg5[%c0_20, %c0_21, %c4, %c0_22] : memref<1x12x12x256xbf16, #tpu.memory_space<vmem>>, vector<1x8x8x256xbf16>
    %15 = vector.shape_cast %14 : vector<1x8x8x256xbf16> to vector<64x256xbf16>
    %c2_23 = arith.constant 2 : index
    %c0_24 = arith.constant 0 : index
    %c0_25 = arith.constant 0 : index
    %16 = vector.load %arg2[%c2_23, %c0_24, %c0_25] : memref<9x256x256xbf16, #tpu.memory_space<vmem>>, vector<1x256x256xbf16>
    %17 = vector.shape_cast %16 : vector<1x256x256xbf16> to vector<256x256xbf16>
    %cst_26 = arith.constant dense<0.000000e+00> : vector<64x256xf32>
    %18 = tpu.matmul %15, %17, %cst_26 {dimension_numbers = #tpu.dot_dimension_numbers<[1], [0], [0], [1], [0, 0, 1, 1], [], []>} : vector<64x256xbf16>, vector<256x256xbf16>, vector<64x256xf32> -> vector<64x256xf32>
    %19 = arith.addf %13, %18 : vector<64x256xf32>
    %c0_27 = arith.constant 0 : index
    %c2_28 = arith.constant 2 : index
    %c0_29 = arith.constant 0 : index
    %c0_30 = arith.constant 0 : index
    %20 = vector.load %arg5[%c0_27, %c2_28, %c0_29, %c0_30] : memref<1x12x12x256xbf16, #tpu.memory_space<vmem>>, vector<1x8x8x256xbf16>
    %21 = vector.shape_cast %20 : vector<1x8x8x256xbf16> to vector<64x256xbf16>
    %c3 = arith.constant 3 : index
    %c0_31 = arith.constant 0 : index
    %c0_32 = arith.constant 0 : index
    %22 = vector.load %arg2[%c3, %c0_31, %c0_32] : memref<9x256x256xbf16, #tpu.memory_space<vmem>>, vector<1x256x256xbf16>
    %23 = vector.shape_cast %22 : vector<1x256x256xbf16> to vector<256x256xbf16>
    %cst_33 = arith.constant dense<0.000000e+00> : vector<64x256xf32>
    %24 = tpu.matmul %21, %23, %cst_33 {dimension_numbers = #tpu.dot_dimension_numbers<[1], [0], [0], [1], [0, 0, 1, 1], [], []>} : vector<64x256xbf16>, vector<256x256xbf16>, vector<64x256xf32> -> vector<64x256xf32>
    %25 = arith.addf %19, %24 : vector<64x256xf32>
    %c0_34 = arith.constant 0 : index
    %c2_35 = arith.constant 2 : index
    %c2_36 = arith.constant 2 : index
    %c0_37 = arith.constant 0 : index
    %26 = vector.load %arg5[%c0_34, %c2_35, %c2_36, %c0_37] : memref<1x12x12x256xbf16, #tpu.memory_space<vmem>>, vector<1x8x8x256xbf16>
    %27 = vector.shape_cast %26 : vector<1x8x8x256xbf16> to vector<64x256xbf16>
    %c4_38 = arith.constant 4 : index
    %c0_39 = arith.constant 0 : index
    %c0_40 = arith.constant 0 : index
    %28 = vector.load %arg2[%c4_38, %c0_39, %c0_40] : memref<9x256x256xbf16, #tpu.memory_space<vmem>>, vector<1x256x256xbf16>
    %29 = vector.shape_cast %28 : vector<1x256x256xbf16> to vector<256x256xbf16>
    %cst_41 = arith.constant dense<0.000000e+00> : vector<64x256xf32>
    %30 = tpu.matmul %27, %29, %cst_41 {dimension_numbers = #tpu.dot_dimension_numbers<[1], [0], [0], [1], [0, 0, 1, 1], [], []>} : vector<64x256xbf16>, vector<256x256xbf16>, vector<64x256xf32> -> vector<64x256xf32>
    %31 = arith.addf %25, %30 : vector<64x256xf32>
    %c0_42 = arith.constant 0 : index
    %c2_43 = arith.constant 2 : index
    %c4_44 = arith.constant 4 : index
    %c0_45 = arith.constant 0 : index
    %32 = vector.load %arg5[%c0_42, %c2_43, %c4_44, %c0_45] : memref<1x12x12x256xbf16, #tpu.memory_space<vmem>>, vector<1x8x8x256xbf16>
    %33 = vector.shape_cast %32 : vector<1x8x8x256xbf16> to vector<64x256xbf16>
    %c5 = arith.constant 5 : index
    %c0_46 = arith.constant 0 : index
    %c0_47 = arith.constant 0 : index
    %34 = vector.load %arg2[%c5, %c0_46, %c0_47] : memref<9x256x256xbf16, #tpu.memory_space<vmem>>, vector<1x256x256xbf16>
    %35 = vector.shape_cast %34 : vector<1x256x256xbf16> to vector<256x256xbf16>
    %cst_48 = arith.constant dense<0.000000e+00> : vector<64x256xf32>
    %36 = tpu.matmul %33, %35, %cst_48 {dimension_numbers = #tpu.dot_dimension_numbers<[1], [0], [0], [1], [0, 0, 1, 1], [], []>} : vector<64x256xbf16>, vector<256x256xbf16>, vector<64x256xf32> -> vector<64x256xf32>
    %37 = arith.addf %31, %36 : vector<64x256xf32>
    %c0_49 = arith.constant 0 : index
    %c4_50 = arith.constant 4 : index
    %c0_51 = arith.constant 0 : index
    %c0_52 = arith.constant 0 : index
    %38 = vector.load %arg5[%c0_49, %c4_50, %c0_51, %c0_52] : memref<1x12x12x256xbf16, #tpu.memory_space<vmem>>, vector<1x8x8x256xbf16>
    %39 = vector.shape_cast %38 : vector<1x8x8x256xbf16> to vector<64x256xbf16>
    %c6 = arith.constant 6 : index
    %c0_53 = arith.constant 0 : index
    %c0_54 = arith.constant 0 : index
    %40 = vector.load %arg2[%c6, %c0_53, %c0_54] : memref<9x256x256xbf16, #tpu.memory_space<vmem>>, vector<1x256x256xbf16>
    %41 = vector.shape_cast %40 : vector<1x256x256xbf16> to vector<256x256xbf16>
    %cst_55 = arith.constant dense<0.000000e+00> : vector<64x256xf32>
    %42 = tpu.matmul %39, %41, %cst_55 {dimension_numbers = #tpu.dot_dimension_numbers<[1], [0], [0], [1], [0, 0, 1, 1], [], []>} : vector<64x256xbf16>, vector<256x256xbf16>, vector<64x256xf32> -> vector<64x256xf32>
    %43 = arith.addf %37, %42 : vector<64x256xf32>
    %c0_56 = arith.constant 0 : index
    %c4_57 = arith.constant 4 : index
    %c2_58 = arith.constant 2 : index
    %c0_59 = arith.constant 0 : index
    %44 = vector.load %arg5[%c0_56, %c4_57, %c2_58, %c0_59] : memref<1x12x12x256xbf16, #tpu.memory_space<vmem>>, vector<1x8x8x256xbf16>
    %45 = vector.shape_cast %44 : vector<1x8x8x256xbf16> to vector<64x256xbf16>
    %c7 = arith.constant 7 : index
    %c0_60 = arith.constant 0 : index
    %c0_61 = arith.constant 0 : index
    %46 = vector.load %arg2[%c7, %c0_60, %c0_61] : memref<9x256x256xbf16, #tpu.memory_space<vmem>>, vector<1x256x256xbf16>
    %47 = vector.shape_cast %46 : vector<1x256x256xbf16> to vector<256x256xbf16>
    %cst_62 = arith.constant dense<0.000000e+00> : vector<64x256xf32>
    %48 = tpu.matmul %45, %47, %cst_62 {dimension_numbers = #tpu.dot_dimension_numbers<[1], [0], [0], [1], [0, 0, 1, 1], [], []>} : vector<64x256xbf16>, vector<256x256xbf16>, vector<64x256xf32> -> vector<64x256xf32>
    %49 = arith.addf %43, %48 : vector<64x256xf32>
    %c0_63 = arith.constant 0 : index
    %c4_64 = arith.constant 4 : index
    %c4_65 = arith.constant 4 : index
    %c0_66 = arith.constant 0 : index
    %50 = vector.load %arg5[%c0_63, %c4_64, %c4_65, %c0_66] : memref<1x12x12x256xbf16, #tpu.memory_space<vmem>>, vector<1x8x8x256xbf16>
    %51 = vector.shape_cast %50 : vector<1x8x8x256xbf16> to vector<64x256xbf16>
    %c8 = arith.constant 8 : index
    %c0_67 = arith.constant 0 : index
    %c0_68 = arith.constant 0 : index
    %52 = vector.load %arg2[%c8, %c0_67, %c0_68] : memref<9x256x256xbf16, #tpu.memory_space<vmem>>, vector<1x256x256xbf16>
    %53 = vector.shape_cast %52 : vector<1x256x256xbf16> to vector<256x256xbf16>
    %cst_69 = arith.constant dense<0.000000e+00> : vector<64x256xf32>
    %54 = tpu.matmul %51, %53, %cst_69 {dimension_numbers = #tpu.dot_dimension_numbers<[1], [0], [0], [1], [0, 0, 1, 1], [], []>} : vector<64x256xbf16>, vector<256x256xbf16>, vector<64x256xf32> -> vector<64x256xf32>
    %55 = arith.addf %49, %54 : vector<64x256xf32>
    %56 = vector.shape_cast %55 : vector<64x256xf32> to vector<1x64x256xf32>
    %cst_70 = arith.constant dense<0.000000e+00> : vector<1x256xf32>
    %57 = vector.multi_reduction <add>, %56, %cst_70 [1] : vector<1x64x256xf32> to vector<1x256xf32>
    %58 = vector.shape_cast %57 : vector<1x256xf32> to vector<1x1x256xf32>
    %cst_71 = arith.constant 1.562500e-02 : f32
    %59 = vector.broadcast %cst_71 : f32 to vector<1x1x256xf32>
    %60 = arith.mulf %58, %59 : vector<1x1x256xf32>
    %61 = arith.mulf %56, %56 : vector<1x64x256xf32>
    %cst_72 = arith.constant dense<0.000000e+00> : vector<1x256xf32>
    %62 = vector.multi_reduction <add>, %61, %cst_72 [1] : vector<1x64x256xf32> to vector<1x256xf32>
    %63 = vector.shape_cast %62 : vector<1x256xf32> to vector<1x1x256xf32>
    %cst_73 = arith.constant 1.562500e-02 : f32
    %64 = vector.broadcast %cst_73 : f32 to vector<1x1x256xf32>
    %65 = arith.mulf %63, %64 : vector<1x1x256xf32>
    %66 = arith.mulf %60, %60 : vector<1x1x256xf32>
    %67 = arith.subf %65, %66 : vector<1x1x256xf32>
    %68 = vector.broadcast %60 : vector<1x1x256xf32> to vector<1x64x256xf32>
    %69 = arith.subf %56, %68 : vector<1x64x256xf32>
    %cst_74 = arith.constant 9.99999974E-6 : f32
    %70 = vector.broadcast %cst_74 : f32 to vector<1x1x256xf32>
    %71 = arith.addf %67, %70 : vector<1x1x256xf32>
    %72 = math.rsqrt %71 : vector<1x1x256xf32>
    %73 = vector.broadcast %72 : vector<1x1x256xf32> to vector<1x64x256xf32>
    %74 = arith.mulf %69, %73 : vector<1x64x256xf32>
    %cst_75 = arith.constant 0.000000e+00 : f32
    %75 = vector.broadcast %cst_75 : f32 to vector<1x64x256xf32>
    %76 = arith.maximumf %74, %75 : vector<1x64x256xf32>
    %77 = arith.truncf %76 : vector<1x64x256xf32> to vector<1x64x256xbf16>
    %78 = vector.shape_cast %77 : vector<1x64x256xbf16> to vector<1x8x8x256xbf16>
    %c0_76 = arith.constant 0 : index
    %c1_77 = arith.constant 1 : index
    %c1_78 = arith.constant 1 : index
    %c0_79 = arith.constant 0 : index
    %79 = vector.load %arg6[%c0_76, %c1_77, %c1_78, %c0_79] : memref<1x10x10x256xbf16, #tpu.memory_space<vmem>>, vector<1x8x8x256xbf16>
    tpu.vector_store %arg6[%c0_76, %c1_77, %c1_78, %c0_79], %78 {strides = array<i32>} : memref<1x10x10x256xbf16, #tpu.memory_space<vmem>>, vector<1x8x8x256xbf16>,
    %cst_80 = arith.constant 0.000000e+00 : bf16
    %80 = vector.broadcast %cst_80 : bf16 to vector<1x1x10x256xbf16>
    %c0_81 = arith.constant 0 : index
    %c0_82 = arith.constant 0 : index
    %c0_83 = arith.constant 0 : index
    %c0_84 = arith.constant 0 : index
    %81 = vector.load %arg6[%c0_81, %c0_82, %c0_83, %c0_84] : memref<1x10x10x256xbf16, #tpu.memory_space<vmem>>, vector<1x1x10x256xbf16>
    tpu.vector_store %arg6[%c0_81, %c0_82, %c0_83, %c0_84], %80 {strides = array<i32>} : memref<1x10x10x256xbf16, #tpu.memory_space<vmem>>, vector<1x1x10x256xbf16>,
    %c0_85 = arith.constant 0 : index
    %c9 = arith.constant 9 : index
    %c0_86 = arith.constant 0 : index
    %c0_87 = arith.constant 0 : index
    %82 = vector.load %arg6[%c0_85, %c9, %c0_86, %c0_87] : memref<1x10x10x256xbf16, #tpu.memory_space<vmem>>, vector<1x1x10x256xbf16>
    tpu.vector_store %arg6[%c0_85, %c9, %c0_86, %c0_87], %80 {strides = array<i32>} : memref<1x10x10x256xbf16, #tpu.memory_space<vmem>>, vector<1x1x10x256xbf16>,
    %cst_88 = arith.constant 0.000000e+00 : bf16
    %83 = vector.broadcast %cst_88 : bf16 to vector<1x10x1x256xbf16>
    %c0_89 = arith.constant 0 : index
    %c0_90 = arith.constant 0 : index
    %c0_91 = arith.constant 0 : index
    %c0_92 = arith.constant 0 : index
    %84 = vector.load %arg6[%c0_89, %c0_90, %c0_91, %c0_92] : memref<1x10x10x256xbf16, #tpu.memory_space<vmem>>, vector<1x10x1x256xbf16>
    tpu.vector_store %arg6[%c0_89, %c0_90, %c0_91, %c0_92], %83 {strides = array<i32>} : memref<1x10x10x256xbf16, #tpu.memory_space<vmem>>, vector<1x10x1x256xbf16>,
    %c0_93 = arith.constant 0 : index
    %c0_94 = arith.constant 0 : index
    %c9_95 = arith.constant 9 : index
    %c0_96 = arith.constant 0 : index
    %85 = vector.load %arg6[%c0_93, %c0_94, %c9_95, %c0_96] : memref<1x10x10x256xbf16, #tpu.memory_space<vmem>>, vector<1x10x1x256xbf16>
    tpu.vector_store %arg6[%c0_93, %c0_94, %c9_95, %c0_96], %83 {strides = array<i32>} : memref<1x10x10x256xbf16, #tpu.memory_space<vmem>>, vector<1x10x1x256xbf16>,
    %c0_97 = arith.constant 0 : index
    %c0_98 = arith.constant 0 : index
    %c0_99 = arith.constant 0 : index
    %c0_100 = arith.constant 0 : index
    %86 = vector.load %arg6[%c0_97, %c0_98, %c0_99, %c0_100] : memref<1x10x10x256xbf16, #tpu.memory_space<vmem>>, vector<1x8x8x256xbf16>
    %87 = vector.shape_cast %86 : vector<1x8x8x256xbf16> to vector<64x256xbf16>
    %c0_101 = arith.constant 0 : index
    %c0_102 = arith.constant 0 : index
    %c0_103 = arith.constant 0 : index
    %88 = vector.load %arg3[%c0_101, %c0_102, %c0_103] : memref<9x256x256xbf16, #tpu.memory_space<vmem>>, vector<1x256x256xbf16>
    %89 = vector.shape_cast %88 : vector<1x256x256xbf16> to vector<256x256xbf16>
    %cst_104 = arith.constant dense<0.000000e+00> : vector<64x256xf32>
    %90 = tpu.matmul %87, %89, %cst_104 {dimension_numbers = #tpu.dot_dimension_numbers<[1], [0], [0], [1], [0, 0, 1, 1], [], []>} : vector<64x256xbf16>, vector<256x256xbf16>, vector<64x256xf32> -> vector<64x256xf32>
    %c0_105 = arith.constant 0 : index
    %c0_106 = arith.constant 0 : index
    %c1_107 = arith.constant 1 : index
    %c0_108 = arith.constant 0 : index
    %91 = vector.load %arg6[%c0_105, %c0_106, %c1_107, %c0_108] : memref<1x10x10x256xbf16, #tpu.memory_space<vmem>>, vector<1x8x8x256xbf16>
    %92 = vector.shape_cast %91 : vector<1x8x8x256xbf16> to vector<64x256xbf16>
    %c1_109 = arith.constant 1 : index
    %c0_110 = arith.constant 0 : index
    %c0_111 = arith.constant 0 : index
    %93 = vector.load %arg3[%c1_109, %c0_110, %c0_111] : memref<9x256x256xbf16, #tpu.memory_space<vmem>>, vector<1x256x256xbf16>
    %94 = vector.shape_cast %93 : vector<1x256x256xbf16> to vector<256x256xbf16>
    %cst_112 = arith.constant dense<0.000000e+00> : vector<64x256xf32>
    %95 = tpu.matmul %92, %94, %cst_112 {dimension_numbers = #tpu.dot_dimension_numbers<[1], [0], [0], [1], [0, 0, 1, 1], [], []>} : vector<64x256xbf16>, vector<256x256xbf16>, vector<64x256xf32> -> vector<64x256xf32>
    %96 = arith.addf %90, %95 : vector<64x256xf32>
    %c0_113 = arith.constant 0 : index
    %c0_114 = arith.constant 0 : index
    %c2_115 = arith.constant 2 : index
    %c0_116 = arith.constant 0 : index
    %97 = vector.load %arg6[%c0_113, %c0_114, %c2_115, %c0_116] : memref<1x10x10x256xbf16, #tpu.memory_space<vmem>>, vector<1x8x8x256xbf16>
    %98 = vector.shape_cast %97 : vector<1x8x8x256xbf16> to vector<64x256xbf16>
    %c2_117 = arith.constant 2 : index
    %c0_118 = arith.constant 0 : index
    %c0_119 = arith.constant 0 : index
    %99 = vector.load %arg3[%c2_117, %c0_118, %c0_119] : memref<9x256x256xbf16, #tpu.memory_space<vmem>>, vector<1x256x256xbf16>
    %100 = vector.shape_cast %99 : vector<1x256x256xbf16> to vector<256x256xbf16>
    %cst_120 = arith.constant dense<0.000000e+00> : vector<64x256xf32>
    %101 = tpu.matmul %98, %100, %cst_120 {dimension_numbers = #tpu.dot_dimension_numbers<[1], [0], [0], [1], [0, 0, 1, 1], [], []>} : vector<64x256xbf16>, vector<256x256xbf16>, vector<64x256xf32> -> vector<64x256xf32>
    %102 = arith.addf %96, %101 : vector<64x256xf32>
    %c0_121 = arith.constant 0 : index
    %c1_122 = arith.constant 1 : index
    %c0_123 = arith.constant 0 : index
    %c0_124 = arith.constant 0 : index
    %103 = vector.load %arg6[%c0_121, %c1_122, %c0_123, %c0_124] : memref<1x10x10x256xbf16, #tpu.memory_space<vmem>>, vector<1x8x8x256xbf16>
    %104 = vector.shape_cast %103 : vector<1x8x8x256xbf16> to vector<64x256xbf16>
    %c3_125 = arith.constant 3 : index
    %c0_126 = arith.constant 0 : index
    %c0_127 = arith.constant 0 : index
    %105 = vector.load %arg3[%c3_125, %c0_126, %c0_127] : memref<9x256x256xbf16, #tpu.memory_space<vmem>>, vector<1x256x256xbf16>
    %106 = vector.shape_cast %105 : vector<1x256x256xbf16> to vector<256x256xbf16>
    %cst_128 = arith.constant dense<0.000000e+00> : vector<64x256xf32>
    %107 = tpu.matmul %104, %106, %cst_128 {dimension_numbers = #tpu.dot_dimension_numbers<[1], [0], [0], [1], [0, 0, 1, 1], [], []>} : vector<64x256xbf16>, vector<256x256xbf16>, vector<64x256xf32> -> vector<64x256xf32>
    %108 = arith.addf %102, %107 : vector<64x256xf32>
    %c0_129 = arith.constant 0 : index
    %c1_130 = arith.constant 1 : index
    %c1_131 = arith.constant 1 : index
    %c0_132 = arith.constant 0 : index
    %109 = vector.load %arg6[%c0_129, %c1_130, %c1_131, %c0_132] : memref<1x10x10x256xbf16, #tpu.memory_space<vmem>>, vector<1x8x8x256xbf16>
    %110 = vector.shape_cast %109 : vector<1x8x8x256xbf16> to vector<64x256xbf16>
    %c4_133 = arith.constant 4 : index
    %c0_134 = arith.constant 0 : index
    %c0_135 = arith.constant 0 : index
    %111 = vector.load %arg3[%c4_133, %c0_134, %c0_135] : memref<9x256x256xbf16, #tpu.memory_space<vmem>>, vector<1x256x256xbf16>
    %112 = vector.shape_cast %111 : vector<1x256x256xbf16> to vector<256x256xbf16>
    %cst_136 = arith.constant dense<0.000000e+00> : vector<64x256xf32>
    %113 = tpu.matmul %110, %112, %cst_136 {dimension_numbers = #tpu.dot_dimension_numbers<[1], [0], [0], [1], [0, 0, 1, 1], [], []>} : vector<64x256xbf16>, vector<256x256xbf16>, vector<64x256xf32> -> vector<64x256xf32>
    %114 = arith.addf %108, %113 : vector<64x256xf32>
    %c0_137 = arith.constant 0 : index
    %c1_138 = arith.constant 1 : index
    %c2_139 = arith.constant 2 : index
    %c0_140 = arith.constant 0 : index
    %115 = vector.load %arg6[%c0_137, %c1_138, %c2_139, %c0_140] : memref<1x10x10x256xbf16, #tpu.memory_space<vmem>>, vector<1x8x8x256xbf16>
    %116 = vector.shape_cast %115 : vector<1x8x8x256xbf16> to vector<64x256xbf16>
    %c5_141 = arith.constant 5 : index
    %c0_142 = arith.constant 0 : index
    %c0_143 = arith.constant 0 : index
    %117 = vector.load %arg3[%c5_141, %c0_142, %c0_143] : memref<9x256x256xbf16, #tpu.memory_space<vmem>>, vector<1x256x256xbf16>
    %118 = vector.shape_cast %117 : vector<1x256x256xbf16> to vector<256x256xbf16>
    %cst_144 = arith.constant dense<0.000000e+00> : vector<64x256xf32>
    %119 = tpu.matmul %116, %118, %cst_144 {dimension_numbers = #tpu.dot_dimension_numbers<[1], [0], [0], [1], [0, 0, 1, 1], [], []>} : vector<64x256xbf16>, vector<256x256xbf16>, vector<64x256xf32> -> vector<64x256xf32>
    %120 = arith.addf %114, %119 : vector<64x256xf32>
    %c0_145 = arith.constant 0 : index
    %c2_146 = arith.constant 2 : index
    %c0_147 = arith.constant 0 : index
    %c0_148 = arith.constant 0 : index
    %121 = vector.load %arg6[%c0_145, %c2_146, %c0_147, %c0_148] : memref<1x10x10x256xbf16, #tpu.memory_space<vmem>>, vector<1x8x8x256xbf16>
    %122 = vector.shape_cast %121 : vector<1x8x8x256xbf16> to vector<64x256xbf16>
    %c6_149 = arith.constant 6 : index
    %c0_150 = arith.constant 0 : index
    %c0_151 = arith.constant 0 : index
    %123 = vector.load %arg3[%c6_149, %c0_150, %c0_151] : memref<9x256x256xbf16, #tpu.memory_space<vmem>>, vector<1x256x256xbf16>
    %124 = vector.shape_cast %123 : vector<1x256x256xbf16> to vector<256x256xbf16>
    %cst_152 = arith.constant dense<0.000000e+00> : vector<64x256xf32>
    %125 = tpu.matmul %122, %124, %cst_152 {dimension_numbers = #tpu.dot_dimension_numbers<[1], [0], [0], [1], [0, 0, 1, 1], [], []>} : vector<64x256xbf16>, vector<256x256xbf16>, vector<64x256xf32> -> vector<64x256xf32>
    %126 = arith.addf %120, %125 : vector<64x256xf32>
    %c0_153 = arith.constant 0 : index
    %c2_154 = arith.constant 2 : index
    %c1_155 = arith.constant 1 : index
    %c0_156 = arith.constant 0 : index
    %127 = vector.load %arg6[%c0_153, %c2_154, %c1_155, %c0_156] : memref<1x10x10x256xbf16, #tpu.memory_space<vmem>>, vector<1x8x8x256xbf16>
    %128 = vector.shape_cast %127 : vector<1x8x8x256xbf16> to vector<64x256xbf16>
    %c7_157 = arith.constant 7 : index
    %c0_158 = arith.constant 0 : index
    %c0_159 = arith.constant 0 : index
    %129 = vector.load %arg3[%c7_157, %c0_158, %c0_159] : memref<9x256x256xbf16, #tpu.memory_space<vmem>>, vector<1x256x256xbf16>
    %130 = vector.shape_cast %129 : vector<1x256x256xbf16> to vector<256x256xbf16>
    %cst_160 = arith.constant dense<0.000000e+00> : vector<64x256xf32>
    %131 = tpu.matmul %128, %130, %cst_160 {dimension_numbers = #tpu.dot_dimension_numbers<[1], [0], [0], [1], [0, 0, 1, 1], [], []>} : vector<64x256xbf16>, vector<256x256xbf16>, vector<64x256xf32> -> vector<64x256xf32>
    %132 = arith.addf %126, %131 : vector<64x256xf32>
    %c0_161 = arith.constant 0 : index
    %c2_162 = arith.constant 2 : index
    %c2_163 = arith.constant 2 : index
    %c0_164 = arith.constant 0 : index
    %133 = vector.load %arg6[%c0_161, %c2_162, %c2_163, %c0_164] : memref<1x10x10x256xbf16, #tpu.memory_space<vmem>>, vector<1x8x8x256xbf16>
    %134 = vector.shape_cast %133 : vector<1x8x8x256xbf16> to vector<64x256xbf16>
    %c8_165 = arith.constant 8 : index
    %c0_166 = arith.constant 0 : index
    %c0_167 = arith.constant 0 : index
    %135 = vector.load %arg3[%c8_165, %c0_166, %c0_167] : memref<9x256x256xbf16, #tpu.memory_space<vmem>>, vector<1x256x256xbf16>
    %136 = vector.shape_cast %135 : vector<1x256x256xbf16> to vector<256x256xbf16>
    %cst_168 = arith.constant dense<0.000000e+00> : vector<64x256xf32>
    %137 = tpu.matmul %134, %136, %cst_168 {dimension_numbers = #tpu.dot_dimension_numbers<[1], [0], [0], [1], [0, 0, 1, 1], [], []>} : vector<64x256xbf16>, vector<256x256xbf16>, vector<64x256xf32> -> vector<64x256xf32>
    %138 = arith.addf %132, %137 : vector<64x256xf32>
    %139 = vector.shape_cast %138 : vector<64x256xf32> to vector<1x64x256xf32>
    %cst_169 = arith.constant dense<0.000000e+00> : vector<1x256xf32>
    %140 = vector.multi_reduction <add>, %139, %cst_169 [1] : vector<1x64x256xf32> to vector<1x256xf32>
    %141 = vector.shape_cast %140 : vector<1x256xf32> to vector<1x1x256xf32>
    %cst_170 = arith.constant 1.562500e-02 : f32
    %142 = vector.broadcast %cst_170 : f32 to vector<1x1x256xf32>
    %143 = arith.mulf %141, %142 : vector<1x1x256xf32>
    %144 = arith.mulf %139, %139 : vector<1x64x256xf32>
    %cst_171 = arith.constant dense<0.000000e+00> : vector<1x256xf32>
    %145 = vector.multi_reduction <add>, %144, %cst_171 [1] : vector<1x64x256xf32> to vector<1x256xf32>
    %146 = vector.shape_cast %145 : vector<1x256xf32> to vector<1x1x256xf32>
    %cst_172 = arith.constant 1.562500e-02 : f32
    %147 = vector.broadcast %cst_172 : f32 to vector<1x1x256xf32>
    %148 = arith.mulf %146, %147 : vector<1x1x256xf32>
    %149 = arith.mulf %143, %143 : vector<1x1x256xf32>
    %150 = arith.subf %148, %149 : vector<1x1x256xf32>
    %151 = vector.broadcast %143 : vector<1x1x256xf32> to vector<1x64x256xf32>
    %152 = arith.subf %139, %151 : vector<1x64x256xf32>
    %cst_173 = arith.constant 9.99999974E-6 : f32
    %153 = vector.broadcast %cst_173 : f32 to vector<1x1x256xf32>
    %154 = arith.addf %150, %153 : vector<1x1x256xf32>
    %155 = math.rsqrt %154 : vector<1x1x256xf32>
    %156 = vector.broadcast %155 : vector<1x1x256xf32> to vector<1x64x256xf32>
    %157 = arith.mulf %152, %156 : vector<1x64x256xf32>
    %c0_174 = arith.constant 0 : index
    %c2_175 = arith.constant 2 : index
    %c2_176 = arith.constant 2 : index
    %c0_177 = arith.constant 0 : index
    %158 = vector.load %arg1[%c0_174, %c2_175, %c2_176, %c0_177] : memref<1x12x12x256xf32, #tpu.memory_space<vmem>>, vector<1x8x8x256xf32>
    %159 = vector.shape_cast %158 : vector<1x8x8x256xf32> to vector<1x64x256xf32>
    %160 = arith.addf %157, %159 : vector<1x64x256xf32>
    %161 = vector.shape_cast %160 : vector<1x64x256xf32> to vector<1x8x8x256xf32>
    %c0_178 = arith.constant 0 : index
    %c0_179 = arith.constant 0 : index
    %c0_180 = arith.constant 0 : index
    %c0_181 = arith.constant 0 : index
    %162 = vector.load %arg4[%c0_178, %c0_179, %c0_180, %c0_181] : memref<1x8x8x256xf32, #tpu.memory_space<vmem>>, vector<1x8x8x256xf32>
    tpu.vector_store %arg4[%c0_178, %c0_179, %c0_180, %c0_181], %161 {strides = array<i32>} : memref<1x8x8x256xf32, #tpu.memory_space<vmem>>, vector<1x8x8x256xf32>,
    return
  }
  func.func @transform_0(%arg0: i32) -> (i32, i32, i32, i32) {
    %c0_i32 = arith.constant 0 : i32
    %c0_i32_0 = arith.constant 0 : i32
    %c0_i32_1 = arith.constant 0 : i32
    %c0_i32_2 = arith.constant 0 : i32
    return %arg0, %c0_i32, %c0_i32_0, %c0_i32_1 : i32, i32, i32, i32
  }
  func.func @transform_1(%arg0: i32) -> (i32, i32, i32) {
    %c0_i32 = arith.constant 0 : i32
    %c0_i32_0 = arith.constant 0 : i32
    %c0_i32_1 = arith.constant 0 : i32
    %c0_i32_2 = arith.constant 0 : i32
    return %c0_i32, %c0_i32_0, %c0_i32_1 : i32, i32, i32
  }
  func.func @transform_2(%arg0: i32) -> (i32, i32, i32) {
    %c0_i32 = arith.constant 0 : i32
    %c0_i32_0 = arith.constant 0 : i32
    %c0_i32_1 = arith.constant 0 : i32
    %c0_i32_2 = arith.constant 0 : i32
    return %c0_i32, %c0_i32_0, %c0_i32_1 : i32, i32, i32
  }
  func.func @transform_3(%arg0: i32) -> (i32, i32, i32, i32) {
    %c0_i32 = arith.constant 0 : i32
    %c0_i32_0 = arith.constant 0 : i32
    %c0_i32_1 = arith.constant 0 : i32
    %c0_i32_2 = arith.constant 0 : i32
    return %arg0, %c0_i32, %c0_i32_0, %c0_i32_1 : i32, i32, i32, i32
  }
}

</mosaic_0001>

<llo_original>
// kernel: tpu_custom_call.1
$region0: #{tpu_custom_call.1}
  #allocation0 [shape = 'u32[]', space=smem, size = 0x4, offset = 0x4, fixed_abs, tag = 'smem constant byte address 0x4 - core index']
  #allocation1 [shape = 'u32[144,128]{1,0:T(1,128)}', space=vmem, size = 0x12000, scoped, tag = 'internal scratch']
  #allocation2 [shape = 'bf16[1,12,12,256]{3,2,1,0:T(8,128)(2,1)}', space=vmem, size = 0x18000, scoped, tag = 'scratch operand']
  #allocation3 [shape = 'bf16[1,10,10,256]{3,2,1,0:T(8,128)(2,1)}', space=vmem, size = 0x14000, scoped, tag = 'scratch operand']
  %s0 = inlined_call_operand.vmem [shape: f32[2,12,12,256], index: 0, kind: input, shape index: {}]
  %s1 = inlined_call_operand.hbm [shape: bf16[9,256,256], index: 1, kind: input, shape index: {}]
  %s2 = inlined_call_operand.hbm [shape: bf16[9,256,256], index: 2, kind: input, shape index: {}]
  %s3 = inlined_call_operand.hbm [shape: f32[2,8,8,256], index: 3, kind: output, shape index: {}]
  %s4 = sld [smem:[#allocation0]]
  $region53: #{tpu_custom_call.1} parent=0
    _
  %s6 = ssub.s32 1, %s4
  %s7 = scalar_select 0, %s6, %s4
  $region1: #{tpu_custom_call.1} parent=0
    #allocation4 [shape = 'u8[1179648]{0}', space=vmem, size = 0x120000, scoped, tag = 'input window, operand 1, single buffered']
    #allocation5 [shape = 's32[2]{0}', space=sflag, size = 0x8, scoped, tag = 'scoped memory for tpu_custom_call.1']
    #allocation6 [shape = 's32[2]{0}', space=sflag, size = 0x8, scoped, tag = 'scoped memory for tpu_custom_call.1']
    #allocation7 [shape = 'u8[1179648]{0}', space=vmem, size = 0x120000, scoped, tag = 'input window, operand 2, single buffered']
    #allocation8 [shape = 's32[1]{0}', space=sflag, size = 0x4, scoped, tag = 'scoped memory for tpu_custom_call.1']
    #allocation9 [shape = 'u8[131072]{0}', space=vmem, size = 0x20000, scoped, tag = 'output window, operand 0']
    %8 = vsyncpa [#allocation5], 0
    %9 = vsyncpa [#allocation8], 0
    %10 = vsyncpa [#allocation6], 0
    %s11 = scalar_lea.sflag [#allocation6], 1
    %12 = vsyncpa %s11, 0
    loop: start=0, step=1, limit=4
    $region2: #{tpu_custom_call.1} parent=1 // loop_pre_header
      _
    $region3: #{tpu_custom_call.1} parent=1 // loop_header
      %s14 = sphi 0, %s18
      %p15 = scmp.ge.s32.totalorder %s14, 4
      %s24 = sphi 0, %s26
      %s27 = sphi 0, %s24
      %s28 = sphi 0, %s27
      %s44 = sphi 0, %s28
      %s48 = sphi 0, %s48
      %s50 = sphi 0, %s48
      %s51 = sphi 0, %s50
      %s65 = sphi 0, %s51
      %s69 = sphi 0, %s69
      %s71 = sphi 0, %s69
      %s72 = sphi 0, %s71
      %s86 = sphi 0, %s72
      %s92 = sphi 0, %s94
      %s95 = sphi 0, %s92
      %s96 = sphi 0, %s95
      %s112 = sphi 0, %s96
    $region4: #{tpu_custom_call.1} parent=1 // loop_header_branch
      %17 = sbr.rel (%p15) target = $region8
    $region5: #{tpu_custom_call.1} parent=1 // loop_body
      %s19 = ssub.s32 %s14, 1
      %s20 = ssub.s32 %s14, 2
      %s21 = sadd.s32 %s14, 1
      %s22 = ssub.s32 %s14, %s21
      %p23 = scmp.eq.s32.totalorder %s22, 0
      %s25 = sadd.s32 %s24, 1
      %s26 = scalar_select %p23, %s24, %s25
      %p29 = pneg %p23
      %p30 = scmp.eq.s32.totalorder %s14, 1
      %p31 = por %p29, %p30
      %p32 = scmp.ne.s32.totalorder %s24, %s27
      %p33 = scmp.eq.s32.totalorder %s14, 0
      %p34 = por %p32, %p33
      %p35 = scmp.ne.s32.totalorder %s24, %s27
      %p36 = scmp.eq.s32.totalorder %s19, 1
      %p37 = por %p35, %p36
      %p38 = scmp.ne.s32.totalorder %s27, %s28
      %p39 = scmp.eq.s32.totalorder %s19, 0
      %p40 = por %p38, %p39
      %p41 = scmp.ne.s32.totalorder %s27, %s28
      %p42 = scmp.eq.s32.totalorder %s20, 1
      %p43 = por %p41, %p42
      %p45 = scmp.ne.s32.totalorder %s28, %s44
      %p46 = scmp.eq.s32.totalorder %s20, 0
      %p47 = por %p45, %p46
      %s49 = sadd.s32 %s48, 1
      %p52 = scmp.eq.s32.totalorder %s14, 1
      %p53 = scmp.ne.s32.totalorder %s48, %s50
      %p54 = scmp.eq.s32.totalorder %s14, 0
      %p55 = por %p53, %p54
      %p56 = scmp.ne.s32.totalorder %s48, %s50
      %p57 = scmp.eq.s32.totalorder %s19, 1
      %p58 = por %p56, %p57
      %p59 = scmp.ne.s32.totalorder %s50, %s51
      %p60 = scmp.eq.s32.totalorder %s19, 0
      %p61 = por %p59, %p60
      %p62 = scmp.ne.s32.totalorder %s50, %s51
      %p63 = scmp.eq.s32.totalorder %s20, 1
      %p64 = por %p62, %p63
      %p66 = scmp.ne.s32.totalorder %s51, %s65
      %p67 = scmp.eq.s32.totalorder %s20, 0
      %p68 = por %p66, %p67
      %s70 = sadd.s32 %s69, 1
      %p73 = scmp.eq.s32.totalorder %s14, 1
      %p74 = scmp.ne.s32.totalorder %s69, %s71
      %p75 = scmp.eq.s32.totalorder %s14, 0
      %p76 = por %p74, %p75
      %p77 = scmp.ne.s32.totalorder %s69, %s71
      %p78 = scmp.eq.s32.totalorder %s19, 1
      %p79 = por %p77, %p78
      %p80 = scmp.ne.s32.totalorder %s71, %s72
      %p81 = scmp.eq.s32.totalorder %s19, 0
      %p82 = por %p80, %p81
      %p83 = scmp.ne.s32.totalorder %s71, %s72
      %p84 = scmp.eq.s32.totalorder %s20, 1
      %p85 = por %p83, %p84
      %p87 = scmp.ne.s32.totalorder %s72, %s86
      %p88 = scmp.eq.s32.totalorder %s20, 0
      %p89 = por %p87, %p88
      %s90 = ssub.s32 %s14, %s21
      %p91 = scmp.eq.s32.totalorder %s90, 0
      %s93 = sadd.s32 %s92, 1
      %s94 = scalar_select %p91, %s92, %s93
      %p97 = pneg %p91
      %p98 = scmp.eq.s32.totalorder %s14, 1
      %p99 = por %p97, %p98
      %p100 = scmp.ne.s32.totalorder %s92, %s95
      %p101 = scmp.eq.s32.totalorder %s14, 0
      %p102 = por %p100, %p101
      %p103 = scmp.ne.s32.totalorder %s92, %s95
      %p104 = scmp.eq.s32.totalorder %s19, 1
      %p105 = por %p103, %p104
      %p106 = scmp.ne.s32.totalorder %s95, %s96
      %p107 = scmp.eq.s32.totalorder %s19, 0
      %p108 = por %p106, %p107
      %p109 = scmp.ne.s32.totalorder %s95, %s96
      %p110 = scmp.eq.s32.totalorder %s20, 1
      %p111 = por %p109, %p110
      %p113 = scmp.ne.s32.totalorder %s96, %s112
      %p114 = scmp.eq.s32.totalorder %s20, 0
      %p115 = por %p113, %p114
      %p116 = scmp.le.s32.totalorder 1, %s14
      %p117 = scmp.lt.s32.totalorder %s14, 3
      %p118 = pnand %p116, %p117
      %p119 = pneg %p118
      // Predicated region
      $region9: #{tpu_custom_call.1} parent=5 // pred_check
        _
      $region10: #{tpu_custom_call.1} parent=5 // pred_check_branch
        %121 = sbr.rel (%p118) target = $region12
      $region11: #{tpu_custom_call.1} parent=5 // pred_region
        %s122 = ssub.s32 %s14, 1
        // Predicated region
        $region13: #{tpu_custom_call.1} parent=11 // pred_check
          %p123 = pneg %p61
        $region14: #{tpu_custom_call.1} parent=11 // pred_check_branch
          %125 = sbr.rel (%p123) target = $region16
        $region15: #{tpu_custom_call.1} parent=11 // pred_region
          %s127 = ssub.s32 36864, 36864
          %128 = vsyncadd [#allocation5], %s127
          %s129 = sshll.u32 [#allocation4], 4
          %s130 = int_to_ptr.vmem [resolvable:$true] %s129
          %135 = dma.hbm_to_vmem [thread:$0]  %s1, 36864, %s130, [#allocation5], 128, 128, 8
        $region16: #{tpu_custom_call.1} parent=11 // pred_fallthru
          _
        // Predicated region
        $region17: #{tpu_custom_call.1} parent=11 // pred_check
          %p136 = pneg %p82
        $region18: #{tpu_custom_call.1} parent=11 // pred_check_branch
          %138 = sbr.rel (%p136) target = $region20
        $region19: #{tpu_custom_call.1} parent=11 // pred_region
          %s140 = ssub.s32 36864, 36864
          %141 = vsyncadd [#allocation8], %s140
          %s142 = sshll.u32 [#allocation7], 4
          %s143 = int_to_ptr.vmem [resolvable:$true] %s142
          %148 = dma.hbm_to_vmem [thread:$0]  %s2, 36864, %s143, [#allocation8], 128, 128, 8
        $region20: #{tpu_custom_call.1} parent=11 // pred_fallthru
          _
      $region12: #{tpu_custom_call.1} parent=5 // pred_fallthru
        _
      %p149 = scmp.lt.s32.totalorder %s14, 2
      // Predicated region
      $region21: #{tpu_custom_call.1} parent=5 // pred_check
        %p150 = pneg %p149
      $region22: #{tpu_custom_call.1} parent=5 // pred_check_branch
        %152 = sbr.rel (%p150) target = $region24
      $region23: #{tpu_custom_call.1} parent=5 // pred_region
        // Predicated region
        $region25: #{tpu_custom_call.1} parent=23 // pred_check
          %p153 = pneg %p34
        $region26: #{tpu_custom_call.1} parent=23 // pred_check_branch
          %155 = sbr.rel (%p153) target = $region28
        $region27: #{tpu_custom_call.1} parent=23 // pred_region
          %p156 = scmp.lt.s32.totalorder %s14, 1
          %s157 = scalar_select %p156, %s14, 1
          %s158 = smul.addr %s157, 48
          %s159 = smul.addr %s158, 8
          %s160 = scalar_lea.vmem %s0, %s159
        $region28: #{tpu_custom_call.1} parent=23 // pred_fallthru
          _
      $region24: #{tpu_custom_call.1} parent=5 // pred_fallthru
        _
      %p161 = scmp.le.s32.totalorder 1, %s14
      %p162 = scmp.lt.s32.totalorder %s14, 3
      %p163 = pnand %p161, %p162
      %p164 = pneg %p163
      // Predicated region
      $region29: #{tpu_custom_call.1} parent=5 // pred_check
        _
      $region30: #{tpu_custom_call.1} parent=5 // pred_check_branch
        %166 = sbr.rel (%p163) target = $region32
      $region31: #{tpu_custom_call.1} parent=5 // pred_region
        %s167 = ssub.s32 %s14, 1
        // Predicated region
        $region33: #{tpu_custom_call.1} parent=31 // pred_check
          %p168 = pneg %p61
        $region34: #{tpu_custom_call.1} parent=31 // pred_check_branch
          %170 = sbr.rel (%p168) target = $region36
        $region35: #{tpu_custom_call.1} parent=31 // pred_region
          %171 = dma.done [#allocation5], 36864
        $region36: #{tpu_custom_call.1} parent=31 // pred_fallthru
          _
        // Predicated region
        $region37: #{tpu_custom_call.1} parent=31 // pred_check
          %p172 = pneg %p82
        $region38: #{tpu_custom_call.1} parent=31 // pred_check_branch
          %174 = sbr.rel (%p172) target = $region40
        $region39: #{tpu_custom_call.1} parent=31 // pred_region
          %175 = dma.done [#allocation8], 36864
        $region40: #{tpu_custom_call.1} parent=31 // pred_fallthru
          _
        %p176 = scmp.lt.s32.totalorder %s19, 1
        %s177 = scalar_select %p176, %s19, 1
        %s178 = smul.addr %s177, 48
        %s179 = smul.addr %s178, 8
        %s180 = scalar_lea.vmem %s0, %s179
        %p181 = pneg %p40
        %p182 = pneg %p37
        %p183 = pneg %p61
        %p184 = pneg %p58
        %p185 = pneg %p82
        %p186 = pneg %p79
        %p187 = pneg %p108
        %p188 = pneg %p105
        %s189 = sand.u32 %s95, 1
        %s190 = scalar_lea.sflag [#allocation6], %s189
        %s191 = sand.u32 %s95, 1
        %s192 = smul.addr %s191, 128
        %s193 = scalar_lea.vmem [#allocation9], %s192
        %p194 = scmp.lt.s32.totalorder %s19, 1
        %s195 = scalar_select %p194, %s19, 1
        %s196 = smul.addr %s195, 48
        %s197 = smul.addr %s196, 8
        %s198 = scalar_lea.vmem %s0, %s197
        %v200 = vld [vmem:[%s198] sm:$0xff]
        %v201 = vld [vmem:[%s198 + $0x8] sm:$0xff]
        %v202 = vld [vmem:[%s198 + $0x10] sm:$0xf]
        %v203 = vld [vmem:[%s198 + $0x18] sm:$0xf]
        %v204 = vld [vmem:[%s198 + $0x20] sm:$0xff]
        %v205 = vld [vmem:[%s198 + $0x28] sm:$0xff]
        %v206 = vld [vmem:[%s198 + $0x30] sm:$0xf]
        %v207 = vld [vmem:[%s198 + $0x38] sm:$0xf]
        %v208 = vld [vmem:[%s198 + $0x40] sm:$0xff]
        %v209 = vld [vmem:[%s198 + $0x48] sm:$0xff]
        %v210 = vld [vmem:[%s198 + $0x50] sm:$0xf]
        %v211 = vld [vmem:[%s198 + $0x58] sm:$0xf]
        %v212 = vld [vmem:[%s198 + $0x60] sm:$0xff]
        %v213 = vld [vmem:[%s198 + $0x68] sm:$0xff]
        %v214 = vld [vmem:[%s198 + $0x70] sm:$0xf]
        %v215 = vld [vmem:[%s198 + $0x78] sm:$0xf]
        %v216 = vld [vmem:[%s198 + $0x80] sm:$0xff]
        %v217 = vld [vmem:[%s198 + $0x88] sm:$0xff]
        %v218 = vld [vmem:[%s198 + $0x90] sm:$0xf]
        %v219 = vld [vmem:[%s198 + $0x98] sm:$0xf]
        %v220 = vld [vmem:[%s198 + $0xa0] sm:$0xff]
        %v221 = vld [vmem:[%s198 + $0xa8] sm:$0xff]
        %v222 = vld [vmem:[%s198 + $0xb0] sm:$0xf]
        %v223 = vld [vmem:[%s198 + $0xb8] sm:$0xf]
        %v224 = vld [vmem:[%s198 + $0xc0] sm:$0xff]
        %v225 = vld [vmem:[%s198 + $0xc8] sm:$0xff]
        %v226 = vld [vmem:[%s198 + $0xd0] sm:$0xf]
        %v227 = vld [vmem:[%s198 + $0xd8] sm:$0xf]
        %v228 = vld [vmem:[%s198 + $0xe0] sm:$0xff]
        %v229 = vld [vmem:[%s198 + $0xe8] sm:$0xff]
        %v230 = vld [vmem:[%s198 + $0xf0] sm:$0xf]
        %v231 = vld [vmem:[%s198 + $0xf8] sm:$0xf]
        %v232 = vld [vmem:[%s198 + $0x100] sm:$0xff]
        %v233 = vld [vmem:[%s198 + $0x108] sm:$0xff]
        %v234 = vld [vmem:[%s198 + $0x110] sm:$0xf]
        %v235 = vld [vmem:[%s198 + $0x118] sm:$0xf]
        %v236 = vld [vmem:[%s198 + $0x120] sm:$0xff]
        %v237 = vld [vmem:[%s198 + $0x128] sm:$0xff]
        %v238 = vld [vmem:[%s198 + $0x130] sm:$0xf]
        %v239 = vld [vmem:[%s198 + $0x138] sm:$0xf]
        %v240 = vld [vmem:[%s198 + $0x140] sm:$0xff]
        %v241 = vld [vmem:[%s198 + $0x148] sm:$0xff]
        %v242 = vld [vmem:[%s198 + $0x150] sm:$0xf]
        %v243 = vld [vmem:[%s198 + $0x158] sm:$0xf]
        %v244 = vld [vmem:[%s198 + $0x160] sm:$0xff]
        %v245 = vld [vmem:[%s198 + $0x168] sm:$0xff]
        %v246 = vld [vmem:[%s198 + $0x170] sm:$0xf]
        %v247 = vld [vmem:[%s198 + $0x178] sm:$0xf]
        %v248 = vpack.c.bf16 %v202, %v200
        %v249 = vpack.c.bf16 %v203, %v201
        %v250 = vpack.c.bf16 %v206, %v204
        %v251 = vpack.c.bf16 %v207, %v205
        %v252 = vpack.c.bf16 %v210, %v208
        %v253 = vpack.c.bf16 %v211, %v209
        %v254 = vpack.c.bf16 %v214, %v212
        %v255 = vpack.c.bf16 %v215, %v213
        %v256 = vpack.c.bf16 %v218, %v216
        %v257 = vpack.c.bf16 %v219, %v217
        %v258 = vpack.c.bf16 %v222, %v220
        %v259 = vpack.c.bf16 %v223, %v221
        %v260 = vpack.c.bf16 %v226, %v224
        %v261 = vpack.c.bf16 %v227, %v225
        %v262 = vpack.c.bf16 %v230, %v228
        %v263 = vpack.c.bf16 %v231, %v229
        %v264 = vpack.c.bf16 %v234, %v232
        %v265 = vpack.c.bf16 %v235, %v233
        %v266 = vpack.c.bf16 %v238, %v236
        %v267 = vpack.c.bf16 %v239, %v237
        %v268 = vpack.c.bf16 %v242, %v240
        %v269 = vpack.c.bf16 %v243, %v241
        %v270 = vpack.c.bf16 %v246, %v244
        %v271 = vpack.c.bf16 %v247, %v245
        %v296 = vunpack.c.l.b16 %v248
        %v297 = vunpack.c.l.b16 %v249
        %v298 = vunpack.c.h.b16 %v248
        %v299 = vunpack.c.h.b16 %v249
        %v300 = vunpack.c.l.b16 %v250
        %v301 = vunpack.c.l.b16 %v251
        %v302 = vunpack.c.h.b16 %v250
        %v303 = vunpack.c.h.b16 %v251
        %v304 = vunpack.c.l.b16 %v252
        %v305 = vunpack.c.l.b16 %v253
        %v306 = vunpack.c.h.b16 %v252
        %v307 = vunpack.c.h.b16 %v253
        %v308 = vunpack.c.l.b16 %v254
        %v309 = vunpack.c.l.b16 %v255
        %v310 = vunpack.c.h.b16 %v254
        %v311 = vunpack.c.h.b16 %v255
        %v312 = vunpack.c.l.b16 %v256
        %v313 = vunpack.c.l.b16 %v257
        %v314 = vunpack.c.h.b16 %v256
        %v315 = vunpack.c.h.b16 %v257
        %v316 = vunpack.c.l.b16 %v258
        %v317 = vunpack.c.l.b16 %v259
        %v318 = vunpack.c.h.b16 %v258
        %v319 = vunpack.c.h.b16 %v259
        %v320 = vunpack.c.l.b16 %v260
        %v321 = vunpack.c.l.b16 %v261
        %v322 = vunpack.c.h.b16 %v260
        %v323 = vunpack.c.h.b16 %v261
        %v324 = vunpack.c.l.b16 %v262
        %v325 = vunpack.c.l.b16 %v263
        %v326 = vunpack.c.h.b16 %v262
        %v327 = vunpack.c.h.b16 %v263
        %v328 = vunpack.c.l.b16 %v264
        %v329 = vunpack.c.l.b16 %v265
        %v330 = vunpack.c.h.b16 %v264
        %v331 = vunpack.c.h.b16 %v265
        %v332 = vunpack.c.l.b16 %v266
        %v333 = vunpack.c.l.b16 %v267
        %v334 = vunpack.c.h.b16 %v266
        %v335 = vunpack.c.h.b16 %v267
        %v336 = vunpack.c.l.b16 %v268
        %v337 = vunpack.c.l.b16 %v269
        %v338 = vunpack.c.h.b16 %v268
        %v339 = vunpack.c.h.b16 %v269
        %v340 = vunpack.c.l.b16 %v270
        %v341 = vunpack.c.l.b16 %v271
        %v342 = vunpack.c.h.b16 %v270
        %v343 = vunpack.c.h.b16 %v271
        %v344 = vpack.c.b16 %v297, %v296
        %v345 = vpack.c.b16 %v299, %v298
        %v346 = vpack.c.b16 %v301, %v300
        %v347 = vpack.c.b16 %v303, %v302
        %v348 = vpack.c.b16 %v305, %v304
        %v349 = vpack.c.b16 %v307, %v306
        %v350 = vpack.c.b16 %v309, %v308
        %v351 = vpack.c.b16 %v311, %v310
        %v352 = vpack.c.b16 %v313, %v312
        %v353 = vpack.c.b16 %v315, %v314
        %v354 = vpack.c.b16 %v317, %v316
        %v355 = vpack.c.b16 %v319, %v318
        %v356 = vpack.c.b16 %v321, %v320
        %v357 = vpack.c.b16 %v323, %v322
        %v358 = vpack.c.b16 %v325, %v324
        %v359 = vpack.c.b16 %v327, %v326
        %v360 = vpack.c.b16 %v329, %v328
        %v361 = vpack.c.b16 %v331, %v330
        %v362 = vpack.c.b16 %v333, %v332
        %v363 = vpack.c.b16 %v335, %v334
        %v364 = vpack.c.b16 %v337, %v336
        %v365 = vpack.c.b16 %v339, %v338
        %v366 = vpack.c.b16 %v341, %v340
        %v367 = vpack.c.b16 %v343, %v342
        %392 = vst [vmem:[#allocation2] sm:$0xff] %v344
        %393 = vst [vmem:[#allocation2 + $0x8] sm:$0x33] %v345
        %394 = vst [vmem:[#allocation2 + $0x10] sm:$0xff] %v346
        %395 = vst [vmem:[#allocation2 + $0x18] sm:$0x33] %v347
        %396 = vst [vmem:[#allocation2 + $0x20] sm:$0xff] %v348
        %397 = vst [vmem:[#allocation2 + $0x28] sm:$0x33] %v349
        %398 = vst [vmem:[#allocation2 + $0x30] sm:$0xff] %v350
        %399 = vst [vmem:[#allocation2 + $0x38] sm:$0x33] %v351
        %400 = vst [vmem:[#allocation2 + $0x40] sm:$0xff] %v352
        %401 = vst [vmem:[#allocation2 + $0x48] sm:$0x33] %v353
        %402 = vst [vmem:[#allocation2 + $0x50] sm:$0xff] %v354
        %403 = vst [vmem:[#allocation2 + $0x58] sm:$0x33] %v355
        %404 = vst [vmem:[#allocation2 + $0x60] sm:$0xff] %v356
        %405 = vst [vmem:[#allocation2 + $0x68] sm:$0x33] %v357
        %406 = vst [vmem:[#allocation2 + $0x70] sm:$0xff] %v358
        %407 = vst [vmem:[#allocation2 + $0x78] sm:$0x33] %v359
        %408 = vst [vmem:[#allocation2 + $0x80] sm:$0xff] %v360
        %409 = vst [vmem:[#allocation2 + $0x88] sm:$0x33] %v361
        %410 = vst [vmem:[#allocation2 + $0x90] sm:$0xff] %v362
        %411 = vst [vmem:[#allocation2 + $0x98] sm:$0x33] %v363
        %412 = vst [vmem:[#allocation2 + $0xa0] sm:$0xff] %v364
        %413 = vst [vmem:[#allocation2 + $0xa8] sm:$0x33] %v365
        %414 = vst [vmem:[#allocation2 + $0xb0] sm:$0xff] %v366
        %415 = vst [vmem:[#allocation2 + $0xb8] sm:$0x33] %v367
        %v416 = vld [vmem:[#allocation2] sm:$0xff]
        %v417 = vld [vmem:[#allocation2 + $0x10] sm:$0xff]
        %v418 = vld [vmem:[#allocation2 + $0x20] sm:$0xff]
        %v419 = vld [vmem:[#allocation2 + $0x30] sm:$0xff]
        %v420 = vld [vmem:[#allocation2 + $0x40] sm:$0xff]
        %v421 = vld [vmem:[#allocation2 + $0x50] sm:$0xff]
        %v422 = vld [vmem:[#allocation2 + $0x60] sm:$0xff]
        %v423 = vld [vmem:[#allocation2 + $0x70] sm:$0xff]
        %v424 = vld [vmem:[#allocation4] sm:$0xff]
        %v425 = vld [vmem:[#allocation4 + $0x8] sm:$0xff]
        %v426 = vld [vmem:[#allocation4 + $0x10] sm:$0xff]
        %v427 = vld [vmem:[#allocation4 + $0x18] sm:$0xff]
        %v428 = vld [vmem:[#allocation4 + $0x20] sm:$0xff]
        %v429 = vld [vmem:[#allocation4 + $0x28] sm:$0xff]
        %v430 = vld [vmem:[#allocation4 + $0x30] sm:$0xff]
        %v431 = vld [vmem:[#allocation4 + $0x38] sm:$0xff]
        %v432 = vld [vmem:[#allocation4 + $0x40] sm:$0xff]
        %v433 = vld [vmem:[#allocation4 + $0x48] sm:$0xff]
        %v434 = vld [vmem:[#allocation4 + $0x50] sm:$0xff]
        %v435 = vld [vmem:[#allocation4 + $0x58] sm:$0xff]
        %v436 = vld [vmem:[#allocation4 + $0x60] sm:$0xff]
        %v437 = vld [vmem:[#allocation4 + $0x68] sm:$0xff]
        %v438 = vld [vmem:[#allocation4 + $0x70] sm:$0xff]
        %v439 = vld [vmem:[#allocation4 + $0x78] sm:$0xff]
        %v440 = vld [vmem:[#allocation4 + $0x80] sm:$0xff]
        %v441 = vld [vmem:[#allocation4 + $0x88] sm:$0xff]
        %v442 = vld [vmem:[#allocation4 + $0x90] sm:$0xff]
        %v443 = vld [vmem:[#allocation4 + $0x98] sm:$0xff]
        %v444 = vld [vmem:[#allocation4 + $0xa0] sm:$0xff]
        %v445 = vld [vmem:[#allocation4 + $0xa8] sm:$0xff]
        %v446 = vld [vmem:[#allocation4 + $0xb0] sm:$0xff]
        %v447 = vld [vmem:[#allocation4 + $0xb8] sm:$0xff]
        %v448 = vld [vmem:[#allocation4 + $0xc0] sm:$0xff]
        %v449 = vld [vmem:[#allocation4 + $0xc8] sm:$0xff]
        %v450 = vld [vmem:[#allocation4 + $0xd0] sm:$0xff]
        %v451 = vld [vmem:[#allocation4 + $0xd8] sm:$0xff]
        %v452 = vld [vmem:[#allocation4 + $0xe0] sm:$0xff]
        %v453 = vld [vmem:[#allocation4 + $0xe8] sm:$0xff]
        %v454 = vld [vmem:[#allocation4 + $0xf0] sm:$0xff]
        %v455 = vld [vmem:[#allocation4 + $0xf8] sm:$0xff]
        %v456 = vld [vmem:[#allocation2] sm:$0xee]
        %v457 = vld [vmem:[#allocation2 + $0x8] sm:$0x11]
        %v458 = vld [vmem:[#allocation2 + $0x10] sm:$0xee]
        %v459 = vld [vmem:[#allocation2 + $0x18] sm:$0x11]
        %v460 = vld [vmem:[#allocation2 + $0x20] sm:$0xee]
        %v461 = vld [vmem:[#allocation2 + $0x28] sm:$0x11]
        %v462 = vld [vmem:[#allocation2 + $0x30] sm:$0xee]
        %v463 = vld [vmem:[#allocation2 + $0x38] sm:$0x11]
        %v464 = vld [vmem:[#allocation2 + $0x40] sm:$0xee]
        %v465 = vld [vmem:[#allocation2 + $0x48] sm:$0x11]
        %v466 = vld [vmem:[#allocation2 + $0x50] sm:$0xee]
        %v467 = vld [vmem:[#allocation2 + $0x58] sm:$0x11]
        %v468 = vld [vmem:[#allocation2 + $0x60] sm:$0xee]
        %v469 = vld [vmem:[#allocation2 + $0x68] sm:$0x11]
        %v470 = vld [vmem:[#allocation2 + $0x70] sm:$0xee]
        %v471 = vld [vmem:[#allocation2 + $0x78] sm:$0x11]
        %vm488 = vcmask 1042432
        %vm489 = vcmask 1046532
        %vm490 = vmor %vm488, %vm489
        %v491 = vrot.slane %v456, 5
        %v492 = vrot.slane %v491, 4
        %v493 = vrot.slane %v457, 5
        %v494 = vsel %vm490, %v492, %v493
        %v495 = vrot.slane %v458, 5
        %v496 = vrot.slane %v495, 4
        %v497 = vrot.slane %v459, 5
        %v498 = vsel %vm490, %v496, %v497
        %v499 = vrot.slane %v460, 5
        %v500 = vrot.slane %v499, 4
        %v501 = vrot.slane %v461, 5
        %v502 = vsel %vm490, %v500, %v501
        %v503 = vrot.slane %v462, 5
        %v504 = vrot.slane %v503, 4
        %v505 = vrot.slane %v463, 5
        %v506 = vsel %vm490, %v504, %v505
        %v507 = vrot.slane %v464, 5
        %v508 = vrot.slane %v507, 4
        %v509 = vrot.slane %v465, 5
        %v510 = vsel %vm490, %v508, %v509
        %v511 = vrot.slane %v466, 5
        %v512 = vrot.slane %v511, 4
        %v513 = vrot.slane %v467, 5
        %v514 = vsel %vm490, %v512, %v513
        %v515 = vrot.slane %v468, 5
        %v516 = vrot.slane %v515, 4
        %v517 = vrot.slane %v469, 5
        %v518 = vsel %vm490, %v516, %v517
        %v519 = vrot.slane %v470, 5
        %v520 = vrot.slane %v519, 4
        %v521 = vrot.slane %v471, 5
        %v522 = vsel %vm490, %v520, %v521
        %s523 = scalar_lea.vmem [#allocation4], 256
        %v524 = vld [vmem:[%s523] sm:$0xff]
        %v525 = vld [vmem:[%s523 + $0x8] sm:$0xff]
        %v526 = vld [vmem:[%s523 + $0x10] sm:$0xff]
        %v527 = vld [vmem:[%s523 + $0x18] sm:$0xff]
        %v528 = vld [vmem:[%s523 + $0x20] sm:$0xff]
        %v529 = vld [vmem:[%s523 + $0x28] sm:$0xff]
        %v530 = vld [vmem:[%s523 + $0x30] sm:$0xff]
        %v531 = vld [vmem:[%s523 + $0x38] sm:$0xff]
        %v532 = vld [vmem:[%s523 + $0x40] sm:$0xff]
        %v533 = vld [vmem:[%s523 + $0x48] sm:$0xff]
        %v534 = vld [vmem:[%s523 + $0x50] sm:$0xff]
        %v535 = vld [vmem:[%s523 + $0x58] sm:$0xff]
        %v536 = vld [vmem:[%s523 + $0x60] sm:$0xff]
        %v537 = vld [vmem:[%s523 + $0x68] sm:$0xff]
        %v538 = vld [vmem:[%s523 + $0x70] sm:$0xff]
        %v539 = vld [vmem:[%s523 + $0x78] sm:$0xff]
        %v540 = vld [vmem:[%s523 + $0x80] sm:$0xff]
        %v541 = vld [vmem:[%s523 + $0x88] sm:$0xff]
        %v542 = vld [vmem:[%s523 + $0x90] sm:$0xff]
        %v543 = vld [vmem:[%s523 + $0x98] sm:$0xff]
        %v544 = vld [vmem:[%s523 + $0xa0] sm:$0xff]
        %v545 = vld [vmem:[%s523 + $0xa8] sm:$0xff]
        %v546 = vld [vmem:[%s523 + $0xb0] sm:$0xff]
        %v547 = vld [vmem:[%s523 + $0xb8] sm:$0xff]
        %v548 = vld [vmem:[%s523 + $0xc0] sm:$0xff]
        %v549 = vld [vmem:[%s523 + $0xc8] sm:$0xff]
        %v550 = vld [vmem:[%s523 + $0xd0] sm:$0xff]
        %v551 = vld [vmem:[%s523 + $0xd8] sm:$0xff]
        %v552 = vld [vmem:[%s523 + $0xe0] sm:$0xff]
        %v553 = vld [vmem:[%s523 + $0xe8] sm:$0xff]
        %v554 = vld [vmem:[%s523 + $0xf0] sm:$0xff]
        %v555 = vld [vmem:[%s523 + $0xf8] sm:$0xff]
        %v556 = vunpack.c.l.b16 %v494
        %v557 = vunpack.c.h.b16 %v494
        %v558 = vunpack.c.l.b16 %v498
        %v559 = vunpack.c.h.b16 %v498
        %v560 = vunpack.c.l.b16 %v502
        %v561 = vunpack.c.h.b16 %v502
        %v562 = vunpack.c.l.b16 %v506
        %v563 = vunpack.c.h.b16 %v506
        %v564 = vunpack.c.l.b16 %v510
        %v565 = vunpack.c.h.b16 %v510
        %v566 = vunpack.c.l.b16 %v514
        %v567 = vunpack.c.h.b16 %v514
        %v568 = vunpack.c.l.b16 %v518
        %v569 = vunpack.c.h.b16 %v518
        %v570 = vunpack.c.l.b16 %v522
        %v571 = vunpack.c.h.b16 %v522
        %v572 = vpack.c.b16 %v558, %v556
        %v573 = vpack.c.b16 %v559, %v557
        %v574 = vpack.c.b16 %v562, %v560
        %v575 = vpack.c.b16 %v563, %v561
        %v576 = vpack.c.b16 %v566, %v564
        %v577 = vpack.c.b16 %v567, %v565
        %v578 = vpack.c.b16 %v570, %v568
        %v579 = vpack.c.b16 %v571, %v569
        %v620 = vunpack.c.l.b16 %v524
        %v621 = vunpack.c.h.b16 %v524
        %v622 = vunpack.c.l.b16 %v525
        %v623 = vunpack.c.h.b16 %v525
        %v624 = vunpack.c.l.b16 %v526
        %v625 = vunpack.c.h.b16 %v526
        %v626 = vunpack.c.l.b16 %v527
        %v627 = vunpack.c.h.b16 %v527
        %v628 = vunpack.c.l.b16 %v528
        %v629 = vunpack.c.h.b16 %v528
        %v630 = vunpack.c.l.b16 %v529
        %v631 = vunpack.c.h.b16 %v529
        %v632 = vunpack.c.l.b16 %v530
        %v633 = vunpack.c.h.b16 %v530
        %v634 = vunpack.c.l.b16 %v531
        %v635 = vunpack.c.h.b16 %v531
        %v636 = vunpack.c.l.b16 %v532
        %v637 = vunpack.c.h.b16 %v532
        %v638 = vunpack.c.l.b16 %v533
        %v639 = vunpack.c.h.b16 %v533
        %v640 = vunpack.c.l.b16 %v534
        %v641 = vunpack.c.h.b16 %v534
        %v642 = vunpack.c.l.b16 %v535
        %v643 = vunpack.c.h.b16 %v535
        %v644 = vunpack.c.l.b16 %v536
        %v645 = vunpack.c.h.b16 %v536
        %v646 = vunpack.c.l.b16 %v537
        %v647 = vunpack.c.h.b16 %v537
        %v648 = vunpack.c.l.b16 %v538
        %v649 = vunpack.c.h.b16 %v538
        %v650 = vunpack.c.l.b16 %v539
        %v651 = vunpack.c.h.b16 %v539
        %v652 = vunpack.c.l.b16 %v540
        %v653 = vunpack.c.h.b16 %v540
        %v654 = vunpack.c.l.b16 %v541
        %v655 = vunpack.c.h.b16 %v541
        %v656 = vunpack.c.l.b16 %v542
        %v657 = vunpack.c.h.b16 %v542
        %v658 = vunpack.c.l.b16 %v543
        %v659 = vunpack.c.h.b16 %v543
        %v660 = vunpack.c.l.b16 %v544
        %v661 = vunpack.c.h.b16 %v544
        %v662 = vunpack.c.l.b16 %v545
        %v663 = vunpack.c.h.b16 %v545
        %v664 = vunpack.c.l.b16 %v546
        %v665 = vunpack.c.h.b16 %v546
        %v666 = vunpack.c.l.b16 %v547
        %v667 = vunpack.c.h.b16 %v547
        %v668 = vunpack.c.l.b16 %v548
        %v669 = vunpack.c.h.b16 %v548
        %v670 = vunpack.c.l.b16 %v549
        %v671 = vunpack.c.h.b16 %v549
        %v672 = vunpack.c.l.b16 %v550
        %v673 = vunpack.c.h.b16 %v550
        %v674 = vunpack.c.l.b16 %v551
        %v675 = vunpack.c.h.b16 %v551
        %v676 = vunpack.c.l.b16 %v552
        %v677 = vunpack.c.h.b16 %v552
        %v678 = vunpack.c.l.b16 %v553
        %v679 = vunpack.c.h.b16 %v553
        %v680 = vunpack.c.l.b16 %v554
        %v681 = vunpack.c.h.b16 %v554
        %v682 = vunpack.c.l.b16 %v555
        %v683 = vunpack.c.h.b16 %v555
        %v684 = vpack.c.b16 %v622, %v620
        %v685 = vpack.c.b16 %v623, %v621
        %v686 = vpack.c.b16 %v626, %v624
        %v687 = vpack.c.b16 %v627, %v625
        %v688 = vpack.c.b16 %v630, %v628
        %v689 = vpack.c.b16 %v631, %v629
        %v690 = vpack.c.b16 %v634, %v632
        %v691 = vpack.c.b16 %v635, %v633
        %v692 = vpack.c.b16 %v638, %v636
        %v693 = vpack.c.b16 %v639, %v637
        %v694 = vpack.c.b16 %v642, %v640
        %v695 = vpack.c.b16 %v643, %v641
        %v696 = vpack.c.b16 %v646, %v644
        %v697 = vpack.c.b16 %v647, %v645
        %v698 = vpack.c.b16 %v650, %v648
        %v699 = vpack.c.b16 %v651, %v649
        %v700 = vpack.c.b16 %v654, %v652
        %v701 = vpack.c.b16 %v655, %v653
        %v702 = vpack.c.b16 %v658, %v656
        %v703 = vpack.c.b16 %v659, %v657
        %v704 = vpack.c.b16 %v662, %v660
        %v705 = vpack.c.b16 %v663, %v661
        %v706 = vpack.c.b16 %v666, %v664
        %v707 = vpack.c.b16 %v667, %v665
        %v708 = vpack.c.b16 %v670, %v668
        %v709 = vpack.c.b16 %v671, %v669
        %v710 = vpack.c.b16 %v674, %v672
        %v711 = vpack.c.b16 %v675, %v673
        %v712 = vpack.c.b16 %v678, %v676
        %v713 = vpack.c.b16 %v679, %v677
        %v714 = vpack.c.b16 %v682, %v680
        %v715 = vpack.c.b16 %v683, %v681
        %748 = vmatprep.subr.bf16.mxu0 %v699
        %749 = vmatpush1.bf16.msra.mxu0 %v698
        %750 = vmatprep.subr.bf16.mxu0 %v697
        %751 = vmatpush1.bf16.msra.mxu0 %v696
        %752 = vmatprep.subr.bf16.mxu0 %v695
        %753 = vmatpush1.bf16.msra.mxu0 %v694
        %754 = vmatprep.subr.bf16.mxu0 %v693
        %755 = vmatpush1.bf16.msra.mxu0 %v692
        %756 = vmatprep.subr.bf16.mxu0 %v691
        %757 = vmatpush1.bf16.msra.mxu0 %v690
        %758 = vmatprep.subr.bf16.mxu0 %v689
        %759 = vmatpush1.bf16.msra.mxu0 %v688
        %760 = vmatprep.subr.bf16.mxu0 %v687
        %761 = vmatpush1.bf16.msra.mxu0 %v686
        %762 = vmatprep.subr.bf16.mxu0 %v685
        %763 = vmatpush1.bf16.msra.mxu0 %v684
        %764 = vmatprep.subr.bf16.mxu0 %v715
        %765 = vmatpush2.bf16.msra.mxu0 %v714
        %766 = vmatprep.subr.bf16.mxu0 %v713
        %767 = vmatpush2.bf16.msra.mxu0 %v712
        %768 = vmatprep.subr.bf16.mxu0 %v711
        %769 = vmatpush2.bf16.msra.mxu0 %v710
        %770 = vmatprep.subr.bf16.mxu0 %v709
        %771 = vmatpush2.bf16.msra.mxu0 %v708
        %772 = vmatprep.subr.bf16.mxu0 %v707
        %773 = vmatpush2.bf16.msra.mxu0 %v706
        %774 = vmatprep.subr.bf16.mxu0 %v705
        %775 = vmatpush2.bf16.msra.mxu0 %v704
        %776 = vmatprep.subr.bf16.mxu0 %v703
        %777 = vmatpush2.bf16.msra.mxu0 %v702
        %778 = vmatprep.subr.bf16.mxu0 %v701
        %779 = vmatpush2.bf16.msra.mxu0 %v700
        %780 = vmatprep.mubr.bf16.mxu0 %v573
        %781 = vmatmul.mubr.bf16.gmra.mxu0 %v572
        %v782 = vpop.f32.mrf.mxu0
        %v783 = vadd.f32 0.0, %v782
        %v784 = vpop.f32.mrf.mxu0
        %v785 = vadd.f32 0.0, %v784
        %v786 = vpop.f32.mrf.mxu0
        %v787 = vadd.f32 0.0, %v786
        %v788 = vpop.f32.mrf.mxu0
        %v789 = vadd.f32 0.0, %v788
        %790 = vmatprep.mubr.bf16.mxu0 %v575
        %791 = vmatmul.mubr.bf16.gmra.mxu0 %v574
        %v792 = vpop.f32.mrf.mxu0
        %v793 = vadd.f32 0.0, %v792
        %v794 = vpop.f32.mrf.mxu0
        %v795 = vadd.f32 0.0, %v794
        %v796 = vpop.f32.mrf.mxu0
        %v797 = vadd.f32 0.0, %v796
        %v798 = vpop.f32.mrf.mxu0
        %v799 = vadd.f32 0.0, %v798
        %800 = vmatprep.mubr.bf16.mxu0 %v577
        %801 = vmatmul.mubr.bf16.gmra.mxu0 %v576
        %v802 = vpop.f32.mrf.mxu0
        %v803 = vadd.f32 0.0, %v802
        %v804 = vpop.f32.mrf.mxu0
        %v805 = vadd.f32 0.0, %v804
        %v806 = vpop.f32.mrf.mxu0
        %v807 = vadd.f32 0.0, %v806
        %v808 = vpop.f32.mrf.mxu0
        %v809 = vadd.f32 0.0, %v808
        %810 = vmatprep.mubr.bf16.mxu0 %v579
        %811 = vmatmul.mubr.bf16.gmra.mxu0 %v578
        %v812 = vpop.f32.mrf.mxu0
        %v813 = vadd.f32 0.0, %v812
        %v814 = vpop.f32.mrf.mxu0
        %v815 = vadd.f32 0.0, %v814
        %v816 = vpop.f32.mrf.mxu0
        %v817 = vadd.f32 0.0, %v816
        %v818 = vpop.f32.mrf.mxu0
        %v819 = vadd.f32 0.0, %v818
        %820 = vdwg.mxu0
        %v829 = vunpack.c.l.b16 %v416
        %v830 = vunpack.c.h.b16 %v416
        %v831 = vunpack.c.l.b16 %v417
        %v832 = vunpack.c.h.b16 %v417
        %v833 = vunpack.c.l.b16 %v418
        %v834 = vunpack.c.h.b16 %v418
        %v835 = vunpack.c.l.b16 %v419
        %v836 = vunpack.c.h.b16 %v419
        %v837 = vunpack.c.l.b16 %v420
        %v838 = vunpack.c.h.b16 %v420
        %v839 = vunpack.c.l.b16 %v421
        %v840 = vunpack.c.h.b16 %v421
        %v841 = vunpack.c.l.b16 %v422
        %v842 = vunpack.c.h.b16 %v422
        %v843 = vunpack.c.l.b16 %v423
        %v844 = vunpack.c.h.b16 %v423
        %v845 = vpack.c.b16 %v831, %v829
        %v846 = vpack.c.b16 %v832, %v830
        %v847 = vpack.c.b16 %v835, %v833
        %v848 = vpack.c.b16 %v836, %v834
        %v849 = vpack.c.b16 %v839, %v837
        %v850 = vpack.c.b16 %v840, %v838
        %v851 = vpack.c.b16 %v843, %v841
        %v852 = vpack.c.b16 %v844, %v842
        %v893 = vunpack.c.l.b16 %v424
        %v894 = vunpack.c.h.b16 %v424
        %v895 = vunpack.c.l.b16 %v425
        %v896 = vunpack.c.h.b16 %v425
        %v897 = vunpack.c.l.b16 %v426
        %v898 = vunpack.c.h.b16 %v426
        %v899 = vunpack.c.l.b16 %v427
        %v900 = vunpack.c.h.b16 %v427
        %v901 = vunpack.c.l.b16 %v428
        %v902 = vunpack.c.h.b16 %v428
        %v903 = vunpack.c.l.b16 %v429
        %v904 = vunpack.c.h.b16 %v429
        %v905 = vunpack.c.l.b16 %v430
        %v906 = vunpack.c.h.b16 %v430
        %v907 = vunpack.c.l.b16 %v431
        %v908 = vunpack.c.h.b16 %v431
        %v909 = vunpack.c.l.b16 %v432
        %v910 = vunpack.c.h.b16 %v432
        %v911 = vunpack.c.l.b16 %v433
        %v912 = vunpack.c.h.b16 %v433
        %v913 = vunpack.c.l.b16 %v434
        %v914 = vunpack.c.h.b16 %v434
        %v915 = vunpack.c.l.b16 %v435
        %v916 = vunpack.c.h.b16 %v435
        %v917 = vunpack.c.l.b16 %v436
        %v918 = vunpack.c.h.b16 %v436
        %v919 = vunpack.c.l.b16 %v437
        %v920 = vunpack.c.h.b16 %v437
        %v921 = vunpack.c.l.b16 %v438
        %v922 = vunpack.c.h.b16 %v438
        %v923 = vunpack.c.l.b16 %v439
        %v924 = vunpack.c.h.b16 %v439
        %v925 = vunpack.c.l.b16 %v440
        %v926 = vunpack.c.h.b16 %v440
        %v927 = vunpack.c.l.b16 %v441
        %v928 = vunpack.c.h.b16 %v441
        %v929 = vunpack.c.l.b16 %v442
        %v930 = vunpack.c.h.b16 %v442
        %v931 = vunpack.c.l.b16 %v443
        %v932 = vunpack.c.h.b16 %v443
        %v933 = vunpack.c.l.b16 %v444
        %v934 = vunpack.c.h.b16 %v444
        %v935 = vunpack.c.l.b16 %v445
        %v936 = vunpack.c.h.b16 %v445
        %v937 = vunpack.c.l.b16 %v446
        %v938 = vunpack.c.h.b16 %v446
        %v939 = vunpack.c.l.b16 %v447
        %v940 = vunpack.c.h.b16 %v447
        %v941 = vunpack.c.l.b16 %v448
        %v942 = vunpack.c.h.b16 %v448
        %v943 = vunpack.c.l.b16 %v449
        %v944 = vunpack.c.h.b16 %v449
        %v945 = vunpack.c.l.b16 %v450
        %v946 = vunpack.c.h.b16 %v450
        %v947 = vunpack.c.l.b16 %v451
        %v948 = vunpack.c.h.b16 %v451
        %v949 = vunpack.c.l.b16 %v452
        %v950 = vunpack.c.h.b16 %v452
        %v951 = vunpack.c.l.b16 %v453
        %v952 = vunpack.c.h.b16 %v453
        %v953 = vunpack.c.l.b16 %v454
        %v954 = vunpack.c.h.b16 %v454
        %v955 = vunpack.c.l.b16 %v455
        %v956 = vunpack.c.h.b16 %v455
        %v957 = vpack.c.b16 %v895, %v893
        %v958 = vpack.c.b16 %v896, %v894
        %v959 = vpack.c.b16 %v899, %v897
        %v960 = vpack.c.b16 %v900, %v898
        %v961 = vpack.c.b16 %v903, %v901
        %v962 = vpack.c.b16 %v904, %v902
        %v963 = vpack.c.b16 %v907, %v905
        %v964 = vpack.c.b16 %v908, %v906
        %v965 = vpack.c.b16 %v911, %v909
        %v966 = vpack.c.b16 %v912, %v910
        %v967 = vpack.c.b16 %v915, %v913
        %v968 = vpack.c.b16 %v916, %v914
        %v969 = vpack.c.b16 %v919, %v917
        %v970 = vpack.c.b16 %v920, %v918
        %v971 = vpack.c.b16 %v923, %v921
        %v972 = vpack.c.b16 %v924, %v922
        %v973 = vpack.c.b16 %v927, %v925
        %v974 = vpack.c.b16 %v928, %v926
        %v975 = vpack.c.b16 %v931, %v929
        %v976 = vpack.c.b16 %v932, %v930
        %v977 = vpack.c.b16 %v935, %v933
        %v978 = vpack.c.b16 %v936, %v934
        %v979 = vpack.c.b16 %v939, %v937
        %v980 = vpack.c.b16 %v940, %v938
        %v981 = vpack.c.b16 %v943, %v941
        %v982 = vpack.c.b16 %v944, %v942
        %v983 = vpack.c.b16 %v947, %v945
        %v984 = vpack.c.b16 %v948, %v946
        %v985 = vpack.c.b16 %v951, %v949
        %v986 = vpack.c.b16 %v952, %v950
        %v987 = vpack.c.b16 %v955, %v953
        %v988 = vpack.c.b16 %v956, %v954
        %1021 = vmatprep.subr.bf16.mxu0 %v972
        %1022 = vmatpush1.bf16.msra.mxu0 %v971
        %1023 = vmatprep.subr.bf16.mxu0 %v970
        %1024 = vmatpush1.bf16.msra.mxu0 %v969
        %1025 = vmatprep.subr.bf16.mxu0 %v968
        %1026 = vmatpush1.bf16.msra.mxu0 %v967
        %1027 = vmatprep.subr.bf16.mxu0 %v966
        %1028 = vmatpush1.bf16.msra.mxu0 %v965
        %1029 = vmatprep.subr.bf16.mxu0 %v964
        %1030 = vmatpush1.bf16.msra.mxu0 %v963
        %1031 = vmatprep.subr.bf16.mxu0 %v962
        %1032 = vmatpush1.bf16.msra.mxu0 %v961
        %1033 = vmatprep.subr.bf16.mxu0 %v960
        %1034 = vmatpush1.bf16.msra.mxu0 %v959
        %1035 = vmatprep.subr.bf16.mxu0 %v958
        %1036 = vmatpush1.bf16.msra.mxu0 %v957
        %1037 = vmatprep.subr.bf16.mxu0 %v988
        %1038 = vmatpush2.bf16.msra.mxu0 %v987
        %1039 = vmatprep.subr.bf16.mxu0 %v986
        %1040 = vmatpush2.bf16.msra.mxu0 %v985
        %1041 = vmatprep.subr.bf16.mxu0 %v984
        %1042 = vmatpush2.bf16.msra.mxu0 %v983
        %1043 = vmatprep.subr.bf16.mxu0 %v982
        %1044 = vmatpush2.bf16.msra.mxu0 %v981
        %1045 = vmatprep.subr.bf16.mxu0 %v980
        %1046 = vmatpush2.bf16.msra.mxu0 %v979
        %1047 = vmatprep.subr.bf16.mxu0 %v978
        %1048 = vmatpush2.bf16.msra.mxu0 %v977
        %1049 = vmatprep.subr.bf16.mxu0 %v976
        %1050 = vmatpush2.bf16.msra.mxu0 %v975
        %1051 = vmatprep.subr.bf16.mxu0 %v974
        %1052 = vmatpush2.bf16.msra.mxu0 %v973
        %1053 = vmatprep.mubr.bf16.mxu0 %v846
        %1054 = vmatmul.mubr.bf16.gmra.mxu0 %v845
        %v1055 = vpop.f32.mrf.mxu0
        %v1056 = vadd.f32 %v783, %v1055
        %v1057 = vpop.f32.mrf.mxu0
        %v1058 = vadd.f32 %v785, %v1057
        %v1059 = vpop.f32.mrf.mxu0
        %v1060 = vadd.f32 %v787, %v1059
        %v1061 = vpop.f32.mrf.mxu0
        %v1062 = vadd.f32 %v789, %v1061
        %1063 = vmatprep.mubr.bf16.mxu0 %v848
        %1064 = vmatmul.mubr.bf16.gmra.mxu0 %v847
        %v1065 = vpop.f32.mrf.mxu0
        %v1066 = vadd.f32 %v793, %v1065
        %v1067 = vpop.f32.mrf.mxu0
        %v1068 = vadd.f32 %v795, %v1067
        %v1069 = vpop.f32.mrf.mxu0
        %v1070 = vadd.f32 %v797, %v1069
        %v1071 = vpop.f32.mrf.mxu0
        %v1072 = vadd.f32 %v799, %v1071
        %1073 = vmatprep.mubr.bf16.mxu0 %v850
        %1074 = vmatmul.mubr.bf16.gmra.mxu0 %v849
        %v1075 = vpop.f32.mrf.mxu0
        %v1076 = vadd.f32 %v803, %v1075
        %v1077 = vpop.f32.mrf.mxu0
        %v1078 = vadd.f32 %v805, %v1077
        %v1079 = vpop.f32.mrf.mxu0
        %v1080 = vadd.f32 %v807, %v1079
        %v1081 = vpop.f32.mrf.mxu0
        %v1082 = vadd.f32 %v809, %v1081
        %1083 = vmatprep.mubr.bf16.mxu0 %v852
        %1084 = vmatmul.mubr.bf16.gmra.mxu0 %v851
        %v1085 = vpop.f32.mrf.mxu0
        %v1086 = vadd.f32 %v813, %v1085
        %v1087 = vpop.f32.mrf.mxu0
        %v1088 = vadd.f32 %v815, %v1087
        %v1089 = vpop.f32.mrf.mxu0
        %v1090 = vadd.f32 %v817, %v1089
        %v1091 = vpop.f32.mrf.mxu0
        %v1092 = vadd.f32 %v819, %v1091
        %1093 = vdwg.mxu0
        %v1094 = vld [vmem:[#allocation2] sm:$0xcc]
        %v1095 = vld [vmem:[#allocation2 + $0x8] sm:$0x33]
        %v1096 = vld [vmem:[#allocation2 + $0x10] sm:$0xcc]
        %v1097 = vld [vmem:[#allocation2 + $0x18] sm:$0x33]
        %v1098 = vld [vmem:[#allocation2 + $0x20] sm:$0xcc]
        %v1099 = vld [vmem:[#allocation2 + $0x28] sm:$0x33]
        %v1100 = vld [vmem:[#allocation2 + $0x30] sm:$0xcc]
        %v1101 = vld [vmem:[#allocation2 + $0x38] sm:$0x33]
        %v1102 = vld [vmem:[#allocation2 + $0x40] sm:$0xcc]
        %v1103 = vld [vmem:[#allocation2 + $0x48] sm:$0x33]
        %v1104 = vld [vmem:[#allocation2 + $0x50] sm:$0xcc]
        %v1105 = vld [vmem:[#allocation2 + $0x58] sm:$0x33]
        %v1106 = vld [vmem:[#allocation2 + $0x60] sm:$0xcc]
        %v1107 = vld [vmem:[#allocation2 + $0x68] sm:$0x33]
        %v1108 = vld [vmem:[#allocation2 + $0x70] sm:$0xcc]
        %v1109 = vld [vmem:[#allocation2 + $0x78] sm:$0x33]
        %vm1126 = vcmask 1041408
        %vm1127 = vcmask 1045508
        %vm1128 = vmor %vm1126, %vm1127
        %v1129 = vrot.slane %v1094, 6
        %v1130 = vrot.slane %v1129, 4
        %v1131 = vrot.slane %v1095, 6
        %v1132 = vsel %vm1128, %v1130, %v1131
        %v1133 = vrot.slane %v1096, 6
        %v1134 = vrot.slane %v1133, 4
        %v1135 = vrot.slane %v1097, 6
        %v1136 = vsel %vm1128, %v1134, %v1135
        %v1137 = vrot.slane %v1098, 6
        %v1138 = vrot.slane %v1137, 4
        %v1139 = vrot.slane %v1099, 6
        %v1140 = vsel %vm1128, %v1138, %v1139
        %v1141 = vrot.slane %v1100, 6
        %v1142 = vrot.slane %v1141, 4
        %v1143 = vrot.slane %v1101, 6
        %v1144 = vsel %vm1128, %v1142, %v1143
        %v1145 = vrot.slane %v1102, 6
        %v1146 = vrot.slane %v1145, 4
        %v1147 = vrot.slane %v1103, 6
        %v1148 = vsel %vm1128, %v1146, %v1147
        %v1149 = vrot.slane %v1104, 6
        %v1150 = vrot.slane %v1149, 4
        %v1151 = vrot.slane %v1105, 6
        %v1152 = vsel %vm1128, %v1150, %v1151
        %v1153 = vrot.slane %v1106, 6
        %v1154 = vrot.slane %v1153, 4
        %v1155 = vrot.slane %v1107, 6
        %v1156 = vsel %vm1128, %v1154, %v1155
        %v1157 = vrot.slane %v1108, 6
        %v1158 = vrot.slane %v1157, 4
        %v1159 = vrot.slane %v1109, 6
        %v1160 = vsel %vm1128, %v1158, %v1159
        %s1161 = scalar_lea.vmem [#allocation4], 512
        %v1162 = vld [vmem:[%s1161] sm:$0xff]
        %v1163 = vld [vmem:[%s1161 + $0x8] sm:$0xff]
        %v1164 = vld [vmem:[%s1161 + $0x10] sm:$0xff]
        %v1165 = vld [vmem:[%s1161 + $0x18] sm:$0xff]
        %v1166 = vld [vmem:[%s1161 + $0x20] sm:$0xff]
        %v1167 = vld [vmem:[%s1161 + $0x28] sm:$0xff]
        %v1168 = vld [vmem:[%s1161 + $0x30] sm:$0xff]
        %v1169 = vld [vmem:[%s1161 + $0x38] sm:$0xff]
        %v1170 = vld [vmem:[%s1161 + $0x40] sm:$0xff]
        %v1171 = vld [vmem:[%s1161 + $0x48] sm:$0xff]
        %v1172 = vld [vmem:[%s1161 + $0x50] sm:$0xff]
        %v1173 = vld [vmem:[%s1161 + $0x58] sm:$0xff]
        %v1174 = vld [vmem:[%s1161 + $0x60] sm:$0xff]
        %v1175 = vld [vmem:[%s1161 + $0x68] sm:$0xff]
        %v1176 = vld [vmem:[%s1161 + $0x70] sm:$0xff]
        %v1177 = vld [vmem:[%s1161 + $0x78] sm:$0xff]
        %v1178 = vld [vmem:[%s1161 + $0x80] sm:$0xff]
        %v1179 = vld [vmem:[%s1161 + $0x88] sm:$0xff]
        %v1180 = vld [vmem:[%s1161 + $0x90] sm:$0xff]
        %v1181 = vld [vmem:[%s1161 + $0x98] sm:$0xff]
        %v1182 = vld [vmem:[%s1161 + $0xa0] sm:$0xff]
        %v1183 = vld [vmem:[%s1161 + $0xa8] sm:$0xff]
        %v1184 = vld [vmem:[%s1161 + $0xb0] sm:$0xff]
        %v1185 = vld [vmem:[%s1161 + $0xb8] sm:$0xff]
        %v1186 = vld [vmem:[%s1161 + $0xc0] sm:$0xff]
        %v1187 = vld [vmem:[%s1161 + $0xc8] sm:$0xff]
        %v1188 = vld [vmem:[%s1161 + $0xd0] sm:$0xff]
        %v1189 = vld [vmem:[%s1161 + $0xd8] sm:$0xff]
        %v1190 = vld [vmem:[%s1161 + $0xe0] sm:$0xff]
        %v1191 = vld [vmem:[%s1161 + $0xe8] sm:$0xff]
        %v1192 = vld [vmem:[%s1161 + $0xf0] sm:$0xff]
        %v1193 = vld [vmem:[%s1161 + $0xf8] sm:$0xff]
        %v1194 = vunpack.c.l.b16 %v1132
        %v1195 = vunpack.c.h.b16 %v1132
        %v1196 = vunpack.c.l.b16 %v1136
        %v1197 = vunpack.c.h.b16 %v1136
        %v1198 = vunpack.c.l.b16 %v1140
        %v1199 = vunpack.c.h.b16 %v1140
        %v1200 = vunpack.c.l.b16 %v1144
        %v1201 = vunpack.c.h.b16 %v1144
        %v1202 = vunpack.c.l.b16 %v1148
        %v1203 = vunpack.c.h.b16 %v1148
        %v1204 = vunpack.c.l.b16 %v1152
        %v1205 = vunpack.c.h.b16 %v1152
        %v1206 = vunpack.c.l.b16 %v1156
        %v1207 = vunpack.c.h.b16 %v1156
        %v1208 = vunpack.c.l.b16 %v1160
        %v1209 = vunpack.c.h.b16 %v1160
        %v1210 = vpack.c.b16 %v1196, %v1194
        %v1211 = vpack.c.b16 %v1197, %v1195
        %v1212 = vpack.c.b16 %v1200, %v1198
        %v1213 = vpack.c.b16 %v1201, %v1199
        %v1214 = vpack.c.b16 %v1204, %v1202
        %v1215 = vpack.c.b16 %v1205, %v1203
        %v1216 = vpack.c.b16 %v1208, %v1206
        %v1217 = vpack.c.b16 %v1209, %v1207
        %v1258 = vunpack.c.l.b16 %v1162
        %v1259 = vunpack.c.h.b16 %v1162
        %v1260 = vunpack.c.l.b16 %v1163
        %v1261 = vunpack.c.h.b16 %v1163
        %v1262 = vunpack.c.l.b16 %v1164
        %v1263 = vunpack.c.h.b16 %v1164
        %v1264 = vunpack.c.l.b16 %v1165
        %v1265 = vunpack.c.h.b16 %v1165
        %v1266 = vunpack.c.l.b16 %v1166
        %v1267 = vunpack.c.h.b16 %v1166
        %v1268 = vunpack.c.l.b16 %v1167
        %v1269 = vunpack.c.h.b16 %v1167
        %v1270 = vunpack.c.l.b16 %v1168
        %v1271 = vunpack.c.h.b16 %v1168
        %v1272 = vunpack.c.l.b16 %v1169
        %v1273 = vunpack.c.h.b16 %v1169
        %v1274 = vunpack.c.l.b16 %v1170
        %v1275 = vunpack.c.h.b16 %v1170
        %v1276 = vunpack.c.l.b16 %v1171
        %v1277 = vunpack.c.h.b16 %v1171
        %v1278 = vunpack.c.l.b16 %v1172
        %v1279 = vunpack.c.h.b16 %v1172
        %v1280 = vunpack.c.l.b16 %v1173
        %v1281 = vunpack.c.h.b16 %v1173
        %v1282 = vunpack.c.l.b16 %v1174
        %v1283 = vunpack.c.h.b16 %v1174
        %v1284 = vunpack.c.l.b16 %v1175
        %v1285 = vunpack.c.h.b16 %v1175
        %v1286 = vunpack.c.l.b16 %v1176
        %v1287 = vunpack.c.h.b16 %v1176
        %v1288 = vunpack.c.l.b16 %v1177
        %v1289 = vunpack.c.h.b16 %v1177
        %v1290 = vunpack.c.l.b16 %v1178
        %v1291 = vunpack.c.h.b16 %v1178
        %v1292 = vunpack.c.l.b16 %v1179
        %v1293 = vunpack.c.h.b16 %v1179
        %v1294 = vunpack.c.l.b16 %v1180
        %v1295 = vunpack.c.h.b16 %v1180
        %v1296 = vunpack.c.l.b16 %v1181
        %v1297 = vunpack.c.h.b16 %v1181
        %v1298 = vunpack.c.l.b16 %v1182
        %v1299 = vunpack.c.h.b16 %v1182
        %v1300 = vunpack.c.l.b16 %v1183
        %v1301 = vunpack.c.h.b16 %v1183
        %v1302 = vunpack.c.l.b16 %v1184
        %v1303 = vunpack.c.h.b16 %v1184
        %v1304 = vunpack.c.l.b16 %v1185
        %v1305 = vunpack.c.h.b16 %v1185
        %v1306 = vunpack.c.l.b16 %v1186
        %v1307 = vunpack.c.h.b16 %v1186
        %v1308 = vunpack.c.l.b16 %v1187
        %v1309 = vunpack.c.h.b16 %v1187
        %v1310 = vunpack.c.l.b16 %v1188
        %v1311 = vunpack.c.h.b16 %v1188
        %v1312 = vunpack.c.l.b16 %v1189
        %v1313 = vunpack.c.h.b16 %v1189
        %v1314 = vunpack.c.l.b16 %v1190
        %v1315 = vunpack.c.h.b16 %v1190
        %v1316 = vunpack.c.l.b16 %v1191
        %v1317 = vunpack.c.h.b16 %v1191
        %v1318 = vunpack.c.l.b16 %v1192
        %v1319 = vunpack.c.h.b16 %v1192
        %v1320 = vunpack.c.l.b16 %v1193
        %v1321 = vunpack.c.h.b16 %v1193
        %v1322 = vpack.c.b16 %v1260, %v1258
        %v1323 = vpack.c.b16 %v1261, %v1259
        %v1324 = vpack.c.b16 %v1264, %v1262
        %v1325 = vpack.c.b16 %v1265, %v1263
        %v1326 = vpack.c.b16 %v1268, %v1266
        %v1327 = vpack.c.b16 %v1269, %v1267
        %v1328 = vpack.c.b16 %v1272, %v1270
        %v1329 = vpack.c.b16 %v1273, %v1271
        %v1330 = vpack.c.b16 %v1276, %v1274
        %v1331 = vpack.c.b16 %v1277, %v1275
        %v1332 = vpack.c.b16 %v1280, %v1278
        %v1333 = vpack.c.b16 %v1281, %v1279
        %v1334 = vpack.c.b16 %v1284, %v1282
        %v1335 = vpack.c.b16 %v1285, %v1283
        %v1336 = vpack.c.b16 %v1288, %v1286
        %v1337 = vpack.c.b16 %v1289, %v1287
        %v1338 = vpack.c.b16 %v1292, %v1290
        %v1339 = vpack.c.b16 %v1293, %v1291
        %v1340 = vpack.c.b16 %v1296, %v1294
        %v1341 = vpack.c.b16 %v1297, %v1295
        %v1342 = vpack.c.b16 %v1300, %v1298
        %v1343 = vpack.c.b16 %v1301, %v1299
        %v1344 = vpack.c.b16 %v1304, %v1302
        %v1345 = vpack.c.b16 %v1305, %v1303
        %v1346 = vpack.c.b16 %v1308, %v1306
        %v1347 = vpack.c.b16 %v1309, %v1307
        %v1348 = vpack.c.b16 %v1312, %v1310
        %v1349 = vpack.c.b16 %v1313, %v1311
        %v1350 = vpack.c.b16 %v1316, %v1314
        %v1351 = vpack.c.b16 %v1317, %v1315
        %v1352 = vpack.c.b16 %v1320, %v1318
        %v1353 = vpack.c.b16 %v1321, %v1319
        %1386 = vmatprep.subr.bf16.mxu0 %v1337
        %1387 = vmatpush1.bf16.msra.mxu0 %v1336
        %1388 = vmatprep.subr.bf16.mxu0 %v1335
        %1389 = vmatpush1.bf16.msra.mxu0 %v1334
        %1390 = vmatprep.subr.bf16.mxu0 %v1333
        %1391 = vmatpush1.bf16.msra.mxu0 %v1332
        %1392 = vmatprep.subr.bf16.mxu0 %v1331
        %1393 = vmatpush1.bf16.msra.mxu0 %v1330
        %1394 = vmatprep.subr.bf16.mxu0 %v1329
        %1395 = vmatpush1.bf16.msra.mxu0 %v1328
        %1396 = vmatprep.subr.bf16.mxu0 %v1327
        %1397 = vmatpush1.bf16.msra.mxu0 %v1326
        %1398 = vmatprep.subr.bf16.mxu0 %v1325
        %1399 = vmatpush1.bf16.msra.mxu0 %v1324
        %1400 = vmatprep.subr.bf16.mxu0 %v1323
        %1401 = vmatpush1.bf16.msra.mxu0 %v1322
        %1402 = vmatprep.subr.bf16.mxu0 %v1353
        %1403 = vmatpush2.bf16.msra.mxu0 %v1352
        %1404 = vmatprep.subr.bf16.mxu0 %v1351
        %1405 = vmatpush2.bf16.msra.mxu0 %v1350
        %1406 = vmatprep.subr.bf16.mxu0 %v1349
        %1407 = vmatpush2.bf16.msra.mxu0 %v1348
        %1408 = vmatprep.subr.bf16.mxu0 %v1347
        %1409 = vmatpush2.bf16.msra.mxu0 %v1346
        %1410 = vmatprep.subr.bf16.mxu0 %v1345
        %1411 = vmatpush2.bf16.msra.mxu0 %v1344
        %1412 = vmatprep.subr.bf16.mxu0 %v1343
        %1413 = vmatpush2.bf16.msra.mxu0 %v1342
        %1414 = vmatprep.subr.bf16.mxu0 %v1341
        %1415 = vmatpush2.bf16.msra.mxu0 %v1340
        %1416 = vmatprep.subr.bf16.mxu0 %v1339
        %1417 = vmatpush2.bf16.msra.mxu0 %v1338
        %1418 = vmatprep.mubr.bf16.mxu0 %v1211
        %1419 = vmatmul.mubr.bf16.gmra.mxu0 %v1210
        %v1420 = vpop.f32.mrf.mxu0
        %v1421 = vadd.f32 0.0, %v1420
        %v1422 = vpop.f32.mrf.mxu0
        %v1423 = vadd.f32 0.0, %v1422
        %v1424 = vpop.f32.mrf.mxu0
        %v1425 = vadd.f32 0.0, %v1424
        %v1426 = vpop.f32.mrf.mxu0
        %v1427 = vadd.f32 0.0, %v1426
        %1428 = vmatprep.mubr.bf16.mxu0 %v1213
        %1429 = vmatmul.mubr.bf16.gmra.mxu0 %v1212
        %v1430 = vpop.f32.mrf.mxu0
        %v1431 = vadd.f32 0.0, %v1430
        %v1432 = vpop.f32.mrf.mxu0
        %v1433 = vadd.f32 0.0, %v1432
        %v1434 = vpop.f32.mrf.mxu0
        %v1435 = vadd.f32 0.0, %v1434
        %v1436 = vpop.f32.mrf.mxu0
        %v1437 = vadd.f32 0.0, %v1436
        %1438 = vmatprep.mubr.bf16.mxu0 %v1215
        %1439 = vmatmul.mubr.bf16.gmra.mxu0 %v1214
        %v1440 = vpop.f32.mrf.mxu0
        %v1441 = vadd.f32 0.0, %v1440
        %v1442 = vpop.f32.mrf.mxu0
        %v1443 = vadd.f32 0.0, %v1442
        %v1444 = vpop.f32.mrf.mxu0
        %v1445 = vadd.f32 0.0, %v1444
        %v1446 = vpop.f32.mrf.mxu0
        %v1447 = vadd.f32 0.0, %v1446
        %1448 = vmatprep.mubr.bf16.mxu0 %v1217
        %1449 = vmatmul.mubr.bf16.gmra.mxu0 %v1216
        %v1450 = vpop.f32.mrf.mxu0
        %v1451 = vadd.f32 0.0, %v1450
        %v1452 = vpop.f32.mrf.mxu0
        %v1453 = vadd.f32 0.0, %v1452
        %v1454 = vpop.f32.mrf.mxu0
        %v1455 = vadd.f32 0.0, %v1454
        %v1456 = vpop.f32.mrf.mxu0
        %v1457 = vadd.f32 0.0, %v1456
        %1458 = vdwg.mxu0
        %v1459 = vadd.f32 %v1056, %v1421
        %v1460 = vadd.f32 %v1058, %v1423
        %v1461 = vadd.f32 %v1060, %v1425
        %v1462 = vadd.f32 %v1062, %v1427
        %v1463 = vadd.f32 %v1066, %v1431
        %v1464 = vadd.f32 %v1068, %v1433
        %v1465 = vadd.f32 %v1070, %v1435
        %v1466 = vadd.f32 %v1072, %v1437
        %v1467 = vadd.f32 %v1076, %v1441
        %v1468 = vadd.f32 %v1078, %v1443
        %v1469 = vadd.f32 %v1080, %v1445
        %v1470 = vadd.f32 %v1082, %v1447
        %v1471 = vadd.f32 %v1086, %v1451
        %v1472 = vadd.f32 %v1088, %v1453
        %v1473 = vadd.f32 %v1090, %v1455
        %v1474 = vadd.f32 %v1092, %v1457
        %s1475 = scalar_lea.vmem [#allocation2], 32
        %v1476 = vld [vmem:[%s1475] sm:$0xff]
        %v1477 = vld [vmem:[%s1475 + $0x10] sm:$0xff]
        %v1478 = vld [vmem:[%s1475 + $0x20] sm:$0xff]
        %v1479 = vld [vmem:[%s1475 + $0x30] sm:$0xff]
        %v1480 = vld [vmem:[%s1475 + $0x40] sm:$0xff]
        %v1481 = vld [vmem:[%s1475 + $0x50] sm:$0xff]
        %v1482 = vld [vmem:[%s1475 + $0x60] sm:$0xff]
        %v1483 = vld [vmem:[%s1475 + $0x70] sm:$0xff]
        %s1484 = scalar_lea.vmem [#allocation4], 768
        %v1485 = vld [vmem:[%s1484] sm:$0xff]
        %v1486 = vld [vmem:[%s1484 + $0x8] sm:$0xff]
        %v1487 = vld [vmem:[%s1484 + $0x10] sm:$0xff]
        %v1488 = vld [vmem:[%s1484 + $0x18] sm:$0xff]
        %v1489 = vld [vmem:[%s1484 + $0x20] sm:$0xff]
        %v1490 = vld [vmem:[%s1484 + $0x28] sm:$0xff]
        %v1491 = vld [vmem:[%s1484 + $0x30] sm:$0xff]
        %v1492 = vld [vmem:[%s1484 + $0x38] sm:$0xff]
        %v1493 = vld [vmem:[%s1484 + $0x40] sm:$0xff]
        %v1494 = vld [vmem:[%s1484 + $0x48] sm:$0xff]
        %v1495 = vld [vmem:[%s1484 + $0x50] sm:$0xff]
        %v1496 = vld [vmem:[%s1484 + $0x58] sm:$0xff]
        %v1497 = vld [vmem:[%s1484 + $0x60] sm:$0xff]
        %v1498 = vld [vmem:[%s1484 + $0x68] sm:$0xff]
        %v1499 = vld [vmem:[%s1484 + $0x70] sm:$0xff]
        %v1500 = vld [vmem:[%s1484 + $0x78] sm:$0xff]
        %v1501 = vld [vmem:[%s1484 + $0x80] sm:$0xff]
        %v1502 = vld [vmem:[%s1484 + $0x88] sm:$0xff]
        %v1503 = vld [vmem:[%s1484 + $0x90] sm:$0xff]
        %v1504 = vld [vmem:[%s1484 + $0x98] sm:$0xff]
        %v1505 = vld [vmem:[%s1484 + $0xa0] sm:$0xff]
        %v1506 = vld [vmem:[%s1484 + $0xa8] sm:$0xff]
        %v1507 = vld [vmem:[%s1484 + $0xb0] sm:$0xff]
        %v1508 = vld [vmem:[%s1484 + $0xb8] sm:$0xff]
        %v1509 = vld [vmem:[%s1484 + $0xc0] sm:$0xff]
        %v1510 = vld [vmem:[%s1484 + $0xc8] sm:$0xff]
        %v1511 = vld [vmem:[%s1484 + $0xd0] sm:$0xff]
        %v1512 = vld [vmem:[%s1484 + $0xd8] sm:$0xff]
        %v1513 = vld [vmem:[%s1484 + $0xe0] sm:$0xff]
        %v1514 = vld [vmem:[%s1484 + $0xe8] sm:$0xff]
        %v1515 = vld [vmem:[%s1484 + $0xf0] sm:$0xff]
        %v1516 = vld [vmem:[%s1484 + $0xf8] sm:$0xff]
        %v1525 = vunpack.c.l.b16 %v1476
        %v1526 = vunpack.c.h.b16 %v1476
        %v1527 = vunpack.c.l.b16 %v1477
        %v1528 = vunpack.c.h.b16 %v1477
        %v1529 = vunpack.c.l.b16 %v1478
        %v1530 = vunpack.c.h.b16 %v1478
        %v1531 = vunpack.c.l.b16 %v1479
        %v1532 = vunpack.c.h.b16 %v1479
        %v1533 = vunpack.c.l.b16 %v1480
        %v1534 = vunpack.c.h.b16 %v1480
        %v1535 = vunpack.c.l.b16 %v1481
        %v1536 = vunpack.c.h.b16 %v1481
        %v1537 = vunpack.c.l.b16 %v1482
        %v1538 = vunpack.c.h.b16 %v1482
        %v1539 = vunpack.c.l.b16 %v1483
        %v1540 = vunpack.c.h.b16 %v1483
        %v1541 = vpack.c.b16 %v1527, %v1525
        %v1542 = vpack.c.b16 %v1528, %v1526
        %v1543 = vpack.c.b16 %v1531, %v1529
        %v1544 = vpack.c.b16 %v1532, %v1530
        %v1545 = vpack.c.b16 %v1535, %v1533
        %v1546 = vpack.c.b16 %v1536, %v1534
        %v1547 = vpack.c.b16 %v1539, %v1537
        %v1548 = vpack.c.b16 %v1540, %v1538
        %v1589 = vunpack.c.l.b16 %v1485
        %v1590 = vunpack.c.h.b16 %v1485
        %v1591 = vunpack.c.l.b16 %v1486
        %v1592 = vunpack.c.h.b16 %v1486
        %v1593 = vunpack.c.l.b16 %v1487
        %v1594 = vunpack.c.h.b16 %v1487
        %v1595 = vunpack.c.l.b16 %v1488
        %v1596 = vunpack.c.h.b16 %v1488
        %v1597 = vunpack.c.l.b16 %v1489
        %v1598 = vunpack.c.h.b16 %v1489
        %v1599 = vunpack.c.l.b16 %v1490
        %v1600 = vunpack.c.h.b16 %v1490
        %v1601 = vunpack.c.l.b16 %v1491
        %v1602 = vunpack.c.h.b16 %v1491
        %v1603 = vunpack.c.l.b16 %v1492
        %v1604 = vunpack.c.h.b16 %v1492
        %v1605 = vunpack.c.l.b16 %v1493
        %v1606 = vunpack.c.h.b16 %v1493
        %v1607 = vunpack.c.l.b16 %v1494
        %v1608 = vunpack.c.h.b16 %v1494
        %v1609 = vunpack.c.l.b16 %v1495
        %v1610 = vunpack.c.h.b16 %v1495
        %v1611 = vunpack.c.l.b16 %v1496
        %v1612 = vunpack.c.h.b16 %v1496
        %v1613 = vunpack.c.l.b16 %v1497
        %v1614 = vunpack.c.h.b16 %v1497
        %v1615 = vunpack.c.l.b16 %v1498
        %v1616 = vunpack.c.h.b16 %v1498
        %v1617 = vunpack.c.l.b16 %v1499
        %v1618 = vunpack.c.h.b16 %v1499
        %v1619 = vunpack.c.l.b16 %v1500
        %v1620 = vunpack.c.h.b16 %v1500
        %v1621 = vunpack.c.l.b16 %v1501
        %v1622 = vunpack.c.h.b16 %v1501
        %v1623 = vunpack.c.l.b16 %v1502
        %v1624 = vunpack.c.h.b16 %v1502
        %v1625 = vunpack.c.l.b16 %v1503
        %v1626 = vunpack.c.h.b16 %v1503
        %v1627 = vunpack.c.l.b16 %v1504
        %v1628 = vunpack.c.h.b16 %v1504
        %v1629 = vunpack.c.l.b16 %v1505
        %v1630 = vunpack.c.h.b16 %v1505
        %v1631 = vunpack.c.l.b16 %v1506
        %v1632 = vunpack.c.h.b16 %v1506
        %v1633 = vunpack.c.l.b16 %v1507
        %v1634 = vunpack.c.h.b16 %v1507
        %v1635 = vunpack.c.l.b16 %v1508
        %v1636 = vunpack.c.h.b16 %v1508
        %v1637 = vunpack.c.l.b16 %v1509
        %v1638 = vunpack.c.h.b16 %v1509
        %v1639 = vunpack.c.l.b16 %v1510
        %v1640 = vunpack.c.h.b16 %v1510
        %v1641 = vunpack.c.l.b16 %v1511
        %v1642 = vunpack.c.h.b16 %v1511
        %v1643 = vunpack.c.l.b16 %v1512
        %v1644 = vunpack.c.h.b16 %v1512
        %v1645 = vunpack.c.l.b16 %v1513
        %v1646 = vunpack.c.h.b16 %v1513
        %v1647 = vunpack.c.l.b16 %v1514
        %v1648 = vunpack.c.h.b16 %v1514
        %v1649 = vunpack.c.l.b16 %v1515
        %v1650 = vunpack.c.h.b16 %v1515
        %v1651 = vunpack.c.l.b16 %v1516
        %v1652 = vunpack.c.h.b16 %v1516
        %v1653 = vpack.c.b16 %v1591, %v1589
        %v1654 = vpack.c.b16 %v1592, %v1590
        %v1655 = vpack.c.b16 %v1595, %v1593
        %v1656 = vpack.c.b16 %v1596, %v1594
        %v1657 = vpack.c.b16 %v1599, %v1597
        %v1658 = vpack.c.b16 %v1600, %v1598
        %v1659 = vpack.c.b16 %v1603, %v1601
        %v1660 = vpack.c.b16 %v1604, %v1602
        %v1661 = vpack.c.b16 %v1607, %v1605
        %v1662 = vpack.c.b16 %v1608, %v1606
        %v1663 = vpack.c.b16 %v1611, %v1609
        %v1664 = vpack.c.b16 %v1612, %v1610
        %v1665 = vpack.c.b16 %v1615, %v1613
        %v1666 = vpack.c.b16 %v1616, %v1614
        %v1667 = vpack.c.b16 %v1619, %v1617
        %v1668 = vpack.c.b16 %v1620, %v1618
        %v1669 = vpack.c.b16 %v1623, %v1621
        %v1670 = vpack.c.b16 %v1624, %v1622
        %v1671 = vpack.c.b16 %v1627, %v1625
        %v1672 = vpack.c.b16 %v1628, %v1626
        %v1673 = vpack.c.b16 %v1631, %v1629
        %v1674 = vpack.c.b16 %v1632, %v1630
        %v1675 = vpack.c.b16 %v1635, %v1633
        %v1676 = vpack.c.b16 %v1636, %v1634
        %v1677 = vpack.c.b16 %v1639, %v1637
        %v1678 = vpack.c.b16 %v1640, %v1638
        %v1679 = vpack.c.b16 %v1643, %v1641
        %v1680 = vpack.c.b16 %v1644, %v1642
        %v1681 = vpack.c.b16 %v1647, %v1645
        %v1682 = vpack.c.b16 %v1648, %v1646
        %v1683 = vpack.c.b16 %v1651, %v1649
        %v1684 = vpack.c.b16 %v1652, %v1650
        %1717 = vmatprep.subr.bf16.mxu0 %v1668
        %1718 = vmatpush1.bf16.msra.mxu0 %v1667
        %1719 = vmatprep.subr.bf16.mxu0 %v1666
        %1720 = vmatpush1.bf16.msra.mxu0 %v1665
        %1721 = vmatprep.subr.bf16.mxu0 %v1664
        %1722 = vmatpush1.bf16.msra.mxu0 %v1663
        %1723 = vmatprep.subr.bf16.mxu0 %v1662
        %1724 = vmatpush1.bf16.msra.mxu0 %v1661
        %1725 = vmatprep.subr.bf16.mxu0 %v1660
        %1726 = vmatpush1.bf16.msra.mxu0 %v1659
        %1727 = vmatprep.subr.bf16.mxu0 %v1658
        %1728 = vmatpush1.bf16.msra.mxu0 %v1657
        %1729 = vmatprep.subr.bf16.mxu0 %v1656
        %1730 = vmatpush1.bf16.msra.mxu0 %v1655
        %1731 = vmatprep.subr.bf16.mxu0 %v1654
        %1732 = vmatpush1.bf16.msra.mxu0 %v1653
        %1733 = vmatprep.subr.bf16.mxu0 %v1684
        %1734 = vmatpush2.bf16.msra.mxu0 %v1683
        %1735 = vmatprep.subr.bf16.mxu0 %v1682
        %1736 = vmatpush2.bf16.msra.mxu0 %v1681
        %1737 = vmatprep.subr.bf16.mxu0 %v1680
        %1738 = vmatpush2.bf16.msra.mxu0 %v1679
        %1739 = vmatprep.subr.bf16.mxu0 %v1678
        %1740 = vmatpush2.bf16.msra.mxu0 %v1677
        %1741 = vmatprep.subr.bf16.mxu0 %v1676
        %1742 = vmatpush2.bf16.msra.mxu0 %v1675
        %1743 = vmatprep.subr.bf16.mxu0 %v1674
        %1744 = vmatpush2.bf16.msra.mxu0 %v1673
        %1745 = vmatprep.subr.bf16.mxu0 %v1672
        %1746 = vmatpush2.bf16.msra.mxu0 %v1671
        %1747 = vmatprep.subr.bf16.mxu0 %v1670
        %1748 = vmatpush2.bf16.msra.mxu0 %v1669
        %1749 = vmatprep.mubr.bf16.mxu0 %v1542
        %1750 = vmatmul.mubr.bf16.gmra.mxu0 %v1541
        %v1751 = vpop.f32.mrf.mxu0
        %v1752 = vadd.f32 0.0, %v1751
        %v1753 = vpop.f32.mrf.mxu0
        %v1754 = vadd.f32 0.0, %v1753
        %v1755 = vpop.f32.mrf.mxu0
        %v1756 = vadd.f32 0.0, %v1755
        %v1757 = vpop.f32.mrf.mxu0
        %v1758 = vadd.f32 0.0, %v1757
        %1759 = vmatprep.mubr.bf16.mxu0 %v1544
        %1760 = vmatmul.mubr.bf16.gmra.mxu0 %v1543
        %v1761 = vpop.f32.mrf.mxu0
        %v1762 = vadd.f32 0.0, %v1761
        %v1763 = vpop.f32.mrf.mxu0
        %v1764 = vadd.f32 0.0, %v1763
        %v1765 = vpop.f32.mrf.mxu0
        %v1766 = vadd.f32 0.0, %v1765
        %v1767 = vpop.f32.mrf.mxu0
        %v1768 = vadd.f32 0.0, %v1767
        %1769 = vmatprep.mubr.bf16.mxu0 %v1546
        %1770 = vmatmul.mubr.bf16.gmra.mxu0 %v1545
        %v1771 = vpop.f32.mrf.mxu0
        %v1772 = vadd.f32 0.0, %v1771
        %v1773 = vpop.f32.mrf.mxu0
        %v1774 = vadd.f32 0.0, %v1773
        %v1775 = vpop.f32.mrf.mxu0
        %v1776 = vadd.f32 0.0, %v1775
        %v1777 = vpop.f32.mrf.mxu0
        %v1778 = vadd.f32 0.0, %v1777
        %1779 = vmatprep.mubr.bf16.mxu0 %v1548
        %1780 = vmatmul.mubr.bf16.gmra.mxu0 %v1547
        %v1781 = vpop.f32.mrf.mxu0
        %v1782 = vadd.f32 0.0, %v1781
        %v1783 = vpop.f32.mrf.mxu0
        %v1784 = vadd.f32 0.0, %v1783
        %v1785 = vpop.f32.mrf.mxu0
        %v1786 = vadd.f32 0.0, %v1785
        %v1787 = vpop.f32.mrf.mxu0
        %v1788 = vadd.f32 0.0, %v1787
        %1789 = vdwg.mxu0
        %v1790 = vadd.f32 %v1459, %v1752
        %v1791 = vadd.f32 %v1460, %v1754
        %v1792 = vadd.f32 %v1461, %v1756
        %v1793 = vadd.f32 %v1462, %v1758
        %v1794 = vadd.f32 %v1463, %v1762
        %v1795 = vadd.f32 %v1464, %v1764
        %v1796 = vadd.f32 %v1465, %v1766
        %v1797 = vadd.f32 %v1466, %v1768
        %v1798 = vadd.f32 %v1467, %v1772
        %v1799 = vadd.f32 %v1468, %v1774
        %v1800 = vadd.f32 %v1469, %v1776
        %v1801 = vadd.f32 %v1470, %v1778
        %v1802 = vadd.f32 %v1471, %v1782
        %v1803 = vadd.f32 %v1472, %v1784
        %v1804 = vadd.f32 %v1473, %v1786
        %v1805 = vadd.f32 %v1474, %v1788
        %v1806 = vld [vmem:[%s1475] sm:$0xee]
        %v1807 = vld [vmem:[%s1475 + $0x8] sm:$0x11]
        %v1808 = vld [vmem:[%s1475 + $0x10] sm:$0xee]
        %v1809 = vld [vmem:[%s1475 + $0x18] sm:$0x11]
        %v1810 = vld [vmem:[%s1475 + $0x20] sm:$0xee]
        %v1811 = vld [vmem:[%s1475 + $0x28] sm:$0x11]
        %v1812 = vld [vmem:[%s1475 + $0x30] sm:$0xee]
        %v1813 = vld [vmem:[%s1475 + $0x38] sm:$0x11]
        %v1814 = vld [vmem:[%s1475 + $0x40] sm:$0xee]
        %v1815 = vld [vmem:[%s1475 + $0x48] sm:$0x11]
        %v1816 = vld [vmem:[%s1475 + $0x50] sm:$0xee]
        %v1817 = vld [vmem:[%s1475 + $0x58] sm:$0x11]
        %v1818 = vld [vmem:[%s1475 + $0x60] sm:$0xee]
        %v1819 = vld [vmem:[%s1475 + $0x68] sm:$0x11]
        %v1820 = vld [vmem:[%s1475 + $0x70] sm:$0xee]
        %v1821 = vld [vmem:[%s1475 + $0x78] sm:$0x11]
        %v1838 = vrot.slane %v1806, 5
        %v1839 = vrot.slane %v1838, 4
        %v1840 = vrot.slane %v1807, 5
        %v1841 = vsel %vm490, %v1839, %v1840
        %v1842 = vrot.slane %v1808, 5
        %v1843 = vrot.slane %v1842, 4
        %v1844 = vrot.slane %v1809, 5
        %v1845 = vsel %vm490, %v1843, %v1844
        %v1846 = vrot.slane %v1810, 5
        %v1847 = vrot.slane %v1846, 4
        %v1848 = vrot.slane %v1811, 5
        %v1849 = vsel %vm490, %v1847, %v1848
        %v1850 = vrot.slane %v1812, 5
        %v1851 = vrot.slane %v1850, 4
        %v1852 = vrot.slane %v1813, 5
        %v1853 = vsel %vm490, %v1851, %v1852
        %v1854 = vrot.slane %v1814, 5
        %v1855 = vrot.slane %v1854, 4
        %v1856 = vrot.slane %v1815, 5
        %v1857 = vsel %vm490, %v1855, %v1856
        %v1858 = vrot.slane %v1816, 5
        %v1859 = vrot.slane %v1858, 4
        %v1860 = vrot.slane %v1817, 5
        %v1861 = vsel %vm490, %v1859, %v1860
        %v1862 = vrot.slane %v1818, 5
        %v1863 = vrot.slane %v1862, 4
        %v1864 = vrot.slane %v1819, 5
        %v1865 = vsel %vm490, %v1863, %v1864
        %v1866 = vrot.slane %v1820, 5
        %v1867 = vrot.slane %v1866, 4
        %v1868 = vrot.slane %v1821, 5
        %v1869 = vsel %vm490, %v1867, %v1868
        %s1870 = scalar_lea.vmem [#allocation4], 1024
        %v1871 = vld [vmem:[%s1870] sm:$0xff]
        %v1872 = vld [vmem:[%s1870 + $0x8] sm:$0xff]
        %v1873 = vld [vmem:[%s1870 + $0x10] sm:$0xff]
        %v1874 = vld [vmem:[%s1870 + $0x18] sm:$0xff]
        %v1875 = vld [vmem:[%s1870 + $0x20] sm:$0xff]
        %v1876 = vld [vmem:[%s1870 + $0x28] sm:$0xff]
        %v1877 = vld [vmem:[%s1870 + $0x30] sm:$0xff]
        %v1878 = vld [vmem:[%s1870 + $0x38] sm:$0xff]
        %v1879 = vld [vmem:[%s1870 + $0x40] sm:$0xff]
        %v1880 = vld [vmem:[%s1870 + $0x48] sm:$0xff]
        %v1881 = vld [vmem:[%s1870 + $0x50] sm:$0xff]
        %v1882 = vld [vmem:[%s1870 + $0x58] sm:$0xff]
        %v1883 = vld [vmem:[%s1870 + $0x60] sm:$0xff]
        %v1884 = vld [vmem:[%s1870 + $0x68] sm:$0xff]
        %v1885 = vld [vmem:[%s1870 + $0x70] sm:$0xff]
        %v1886 = vld [vmem:[%s1870 + $0x78] sm:$0xff]
        %v1887 = vld [vmem:[%s1870 + $0x80] sm:$0xff]
        %v1888 = vld [vmem:[%s1870 + $0x88] sm:$0xff]
        %v1889 = vld [vmem:[%s1870 + $0x90] sm:$0xff]
        %v1890 = vld [vmem:[%s1870 + $0x98] sm:$0xff]
        %v1891 = vld [vmem:[%s1870 + $0xa0] sm:$0xff]
        %v1892 = vld [vmem:[%s1870 + $0xa8] sm:$0xff]
        %v1893 = vld [vmem:[%s1870 + $0xb0] sm:$0xff]
        %v1894 = vld [vmem:[%s1870 + $0xb8] sm:$0xff]
        %v1895 = vld [vmem:[%s1870 + $0xc0] sm:$0xff]
        %v1896 = vld [vmem:[%s1870 + $0xc8] sm:$0xff]
        %v1897 = vld [vmem:[%s1870 + $0xd0] sm:$0xff]
        %v1898 = vld [vmem:[%s1870 + $0xd8] sm:$0xff]
        %v1899 = vld [vmem:[%s1870 + $0xe0] sm:$0xff]
        %v1900 = vld [vmem:[%s1870 + $0xe8] sm:$0xff]
        %v1901 = vld [vmem:[%s1870 + $0xf0] sm:$0xff]
        %v1902 = vld [vmem:[%s1870 + $0xf8] sm:$0xff]
        %v1903 = vunpack.c.l.b16 %v1841
        %v1904 = vunpack.c.h.b16 %v1841
        %v1905 = vunpack.c.l.b16 %v1845
        %v1906 = vunpack.c.h.b16 %v1845
        %v1907 = vunpack.c.l.b16 %v1849
        %v1908 = vunpack.c.h.b16 %v1849
        %v1909 = vunpack.c.l.b16 %v1853
        %v1910 = vunpack.c.h.b16 %v1853
        %v1911 = vunpack.c.l.b16 %v1857
        %v1912 = vunpack.c.h.b16 %v1857
        %v1913 = vunpack.c.l.b16 %v1861
        %v1914 = vunpack.c.h.b16 %v1861
        %v1915 = vunpack.c.l.b16 %v1865
        %v1916 = vunpack.c.h.b16 %v1865
        %v1917 = vunpack.c.l.b16 %v1869
        %v1918 = vunpack.c.h.b16 %v1869
        %v1919 = vpack.c.b16 %v1905, %v1903
        %v1920 = vpack.c.b16 %v1906, %v1904
        %v1921 = vpack.c.b16 %v1909, %v1907
        %v1922 = vpack.c.b16 %v1910, %v1908
        %v1923 = vpack.c.b16 %v1913, %v1911
        %v1924 = vpack.c.b16 %v1914, %v1912
        %v1925 = vpack.c.b16 %v1917, %v1915
        %v1926 = vpack.c.b16 %v1918, %v1916
        %v1967 = vunpack.c.l.b16 %v1871
        %v1968 = vunpack.c.h.b16 %v1871
        %v1969 = vunpack.c.l.b16 %v1872
        %v1970 = vunpack.c.h.b16 %v1872
        %v1971 = vunpack.c.l.b16 %v1873
        %v1972 = vunpack.c.h.b16 %v1873
        %v1973 = vunpack.c.l.b16 %v1874
        %v1974 = vunpack.c.h.b16 %v1874
        %v1975 = vunpack.c.l.b16 %v1875
        %v1976 = vunpack.c.h.b16 %v1875
        %v1977 = vunpack.c.l.b16 %v1876
        %v1978 = vunpack.c.h.b16 %v1876
        %v1979 = vunpack.c.l.b16 %v1877
        %v1980 = vunpack.c.h.b16 %v1877
        %v1981 = vunpack.c.l.b16 %v1878
        %v1982 = vunpack.c.h.b16 %v1878
        %v1983 = vunpack.c.l.b16 %v1879
        %v1984 = vunpack.c.h.b16 %v1879
        %v1985 = vunpack.c.l.b16 %v1880
        %v1986 = vunpack.c.h.b16 %v1880
        %v1987 = vunpack.c.l.b16 %v1881
        %v1988 = vunpack.c.h.b16 %v1881
        %v1989 = vunpack.c.l.b16 %v1882
        %v1990 = vunpack.c.h.b16 %v1882
        %v1991 = vunpack.c.l.b16 %v1883
        %v1992 = vunpack.c.h.b16 %v1883
        %v1993 = vunpack.c.l.b16 %v1884
        %v1994 = vunpack.c.h.b16 %v1884
        %v1995 = vunpack.c.l.b16 %v1885
        %v1996 = vunpack.c.h.b16 %v1885
        %v1997 = vunpack.c.l.b16 %v1886
        %v1998 = vunpack.c.h.b16 %v1886
        %v1999 = vunpack.c.l.b16 %v1887
        %v2000 = vunpack.c.h.b16 %v1887
        %v2001 = vunpack.c.l.b16 %v1888
        %v2002 = vunpack.c.h.b16 %v1888
        %v2003 = vunpack.c.l.b16 %v1889
        %v2004 = vunpack.c.h.b16 %v1889
        %v2005 = vunpack.c.l.b16 %v1890
        %v2006 = vunpack.c.h.b16 %v1890
        %v2007 = vunpack.c.l.b16 %v1891
        %v2008 = vunpack.c.h.b16 %v1891
        %v2009 = vunpack.c.l.b16 %v1892
        %v2010 = vunpack.c.h.b16 %v1892
        %v2011 = vunpack.c.l.b16 %v1893
        %v2012 = vunpack.c.h.b16 %v1893
        %v2013 = vunpack.c.l.b16 %v1894
        %v2014 = vunpack.c.h.b16 %v1894
        %v2015 = vunpack.c.l.b16 %v1895
        %v2016 = vunpack.c.h.b16 %v1895
        %v2017 = vunpack.c.l.b16 %v1896
        %v2018 = vunpack.c.h.b16 %v1896
        %v2019 = vunpack.c.l.b16 %v1897
        %v2020 = vunpack.c.h.b16 %v1897
        %v2021 = vunpack.c.l.b16 %v1898
        %v2022 = vunpack.c.h.b16 %v1898
        %v2023 = vunpack.c.l.b16 %v1899
        %v2024 = vunpack.c.h.b16 %v1899
        %v2025 = vunpack.c.l.b16 %v1900
        %v2026 = vunpack.c.h.b16 %v1900
        %v2027 = vunpack.c.l.b16 %v1901
        %v2028 = vunpack.c.h.b16 %v1901
        %v2029 = vunpack.c.l.b16 %v1902
        %v2030 = vunpack.c.h.b16 %v1902
        %v2031 = vpack.c.b16 %v1969, %v1967
        %v2032 = vpack.c.b16 %v1970, %v1968
        %v2033 = vpack.c.b16 %v1973, %v1971
        %v2034 = vpack.c.b16 %v1974, %v1972
        %v2035 = vpack.c.b16 %v1977, %v1975
        %v2036 = vpack.c.b16 %v1978, %v1976
        %v2037 = vpack.c.b16 %v1981, %v1979
        %v2038 = vpack.c.b16 %v1982, %v1980
        %v2039 = vpack.c.b16 %v1985, %v1983
        %v2040 = vpack.c.b16 %v1986, %v1984
        %v2041 = vpack.c.b16 %v1989, %v1987
        %v2042 = vpack.c.b16 %v1990, %v1988
        %v2043 = vpack.c.b16 %v1993, %v1991
        %v2044 = vpack.c.b16 %v1994, %v1992
        %v2045 = vpack.c.b16 %v1997, %v1995
        %v2046 = vpack.c.b16 %v1998, %v1996
        %v2047 = vpack.c.b16 %v2001, %v1999
        %v2048 = vpack.c.b16 %v2002, %v2000
        %v2049 = vpack.c.b16 %v2005, %v2003
        %v2050 = vpack.c.b16 %v2006, %v2004
        %v2051 = vpack.c.b16 %v2009, %v2007
        %v2052 = vpack.c.b16 %v2010, %v2008
        %v2053 = vpack.c.b16 %v2013, %v2011
        %v2054 = vpack.c.b16 %v2014, %v2012
        %v2055 = vpack.c.b16 %v2017, %v2015
        %v2056 = vpack.c.b16 %v2018, %v2016
        %v2057 = vpack.c.b16 %v2021, %v2019
        %v2058 = vpack.c.b16 %v2022, %v2020
        %v2059 = vpack.c.b16 %v2025, %v2023
        %v2060 = vpack.c.b16 %v2026, %v2024
        %v2061 = vpack.c.b16 %v2029, %v2027
        %v2062 = vpack.c.b16 %v2030, %v2028
        %2095 = vmatprep.subr.bf16.mxu0 %v2046
        %2096 = vmatpush1.bf16.msra.mxu0 %v2045
        %2097 = vmatprep.subr.bf16.mxu0 %v2044
        %2098 = vmatpush1.bf16.msra.mxu0 %v2043
        %2099 = vmatprep.subr.bf16.mxu0 %v2042
        %2100 = vmatpush1.bf16.msra.mxu0 %v2041
        %2101 = vmatprep.subr.bf16.mxu0 %v2040
        %2102 = vmatpush1.bf16.msra.mxu0 %v2039
        %2103 = vmatprep.subr.bf16.mxu0 %v2038
        %2104 = vmatpush1.bf16.msra.mxu0 %v2037
        %2105 = vmatprep.subr.bf16.mxu0 %v2036
        %2106 = vmatpush1.bf16.msra.mxu0 %v2035
        %2107 = vmatprep.subr.bf16.mxu0 %v2034
        %2108 = vmatpush1.bf16.msra.mxu0 %v2033
        %2109 = vmatprep.subr.bf16.mxu0 %v2032
        %2110 = vmatpush1.bf16.msra.mxu0 %v2031
        %2111 = vmatprep.subr.bf16.mxu0 %v2062
        %2112 = vmatpush2.bf16.msra.mxu0 %v2061
        %2113 = vmatprep.subr.bf16.mxu0 %v2060
        %2114 = vmatpush2.bf16.msra.mxu0 %v2059
        %2115 = vmatprep.subr.bf16.mxu0 %v2058
        %2116 = vmatpush2.bf16.msra.mxu0 %v2057
        %2117 = vmatprep.subr.bf16.mxu0 %v2056
        %2118 = vmatpush2.bf16.msra.mxu0 %v2055
        %2119 = vmatprep.subr.bf16.mxu0 %v2054
        %2120 = vmatpush2.bf16.msra.mxu0 %v2053
        %2121 = vmatprep.subr.bf16.mxu0 %v2052
        %2122 = vmatpush2.bf16.msra.mxu0 %v2051
        %2123 = vmatprep.subr.bf16.mxu0 %v2050
        %2124 = vmatpush2.bf16.msra.mxu0 %v2049
        %2125 = vmatprep.subr.bf16.mxu0 %v2048
        %2126 = vmatpush2.bf16.msra.mxu0 %v2047
        %2127 = vmatprep.mubr.bf16.mxu0 %v1920
        %2128 = vmatmul.mubr.bf16.gmra.mxu0 %v1919
        %v2129 = vpop.f32.mrf.mxu0
        %v2130 = vadd.f32 0.0, %v2129
        %v2131 = vpop.f32.mrf.mxu0
        %v2132 = vadd.f32 0.0, %v2131
        %v2133 = vpop.f32.mrf.mxu0
        %v2134 = vadd.f32 0.0, %v2133
        %v2135 = vpop.f32.mrf.mxu0
        %v2136 = vadd.f32 0.0, %v2135
        %2137 = vmatprep.mubr.bf16.mxu0 %v1922
        %2138 = vmatmul.mubr.bf16.gmra.mxu0 %v1921
        %v2139 = vpop.f32.mrf.mxu0
        %v2140 = vadd.f32 0.0, %v2139
        %v2141 = vpop.f32.mrf.mxu0
        %v2142 = vadd.f32 0.0, %v2141
        %v2143 = vpop.f32.mrf.mxu0
        %v2144 = vadd.f32 0.0, %v2143
        %v2145 = vpop.f32.mrf.mxu0
        %v2146 = vadd.f32 0.0, %v2145
        %2147 = vmatprep.mubr.bf16.mxu0 %v1924
        %2148 = vmatmul.mubr.bf16.gmra.mxu0 %v1923
        %v2149 = vpop.f32.mrf.mxu0
        %v2150 = vadd.f32 0.0, %v2149
        %v2151 = vpop.f32.mrf.mxu0
        %v2152 = vadd.f32 0.0, %v2151
        %v2153 = vpop.f32.mrf.mxu0
        %v2154 = vadd.f32 0.0, %v2153
        %v2155 = vpop.f32.mrf.mxu0
        %v2156 = vadd.f32 0.0, %v2155
        %2157 = vmatprep.mubr.bf16.mxu0 %v1926
        %2158 = vmatmul.mubr.bf16.gmra.mxu0 %v1925
        %v2159 = vpop.f32.mrf.mxu0
        %v2160 = vadd.f32 0.0, %v2159
        %v2161 = vpop.f32.mrf.mxu0
        %v2162 = vadd.f32 0.0, %v2161
        %v2163 = vpop.f32.mrf.mxu0
        %v2164 = vadd.f32 0.0, %v2163
        %v2165 = vpop.f32.mrf.mxu0
        %v2166 = vadd.f32 0.0, %v2165
        %2167 = vdwg.mxu0
        %v2168 = vadd.f32 %v1790, %v2130
        %v2169 = vadd.f32 %v1791, %v2132
        %v2170 = vadd.f32 %v1792, %v2134
        %v2171 = vadd.f32 %v1793, %v2136
        %v2172 = vadd.f32 %v1794, %v2140
        %v2173 = vadd.f32 %v1795, %v2142
        %v2174 = vadd.f32 %v1796, %v2144
        %v2175 = vadd.f32 %v1797, %v2146
        %v2176 = vadd.f32 %v1798, %v2150
        %v2177 = vadd.f32 %v1799, %v2152
        %v2178 = vadd.f32 %v1800, %v2154
        %v2179 = vadd.f32 %v1801, %v2156
        %v2180 = vadd.f32 %v1802, %v2160
        %v2181 = vadd.f32 %v1803, %v2162
        %v2182 = vadd.f32 %v1804, %v2164
        %v2183 = vadd.f32 %v1805, %v2166
        %v2184 = vld [vmem:[%s1475] sm:$0xcc]
        %v2185 = vld [vmem:[%s1475 + $0x8] sm:$0x33]
        %v2186 = vld [vmem:[%s1475 + $0x10] sm:$0xcc]
        %v2187 = vld [vmem:[%s1475 + $0x18] sm:$0x33]
        %v2188 = vld [vmem:[%s1475 + $0x20] sm:$0xcc]
        %v2189 = vld [vmem:[%s1475 + $0x28] sm:$0x33]
        %v2190 = vld [vmem:[%s1475 + $0x30] sm:$0xcc]
        %v2191 = vld [vmem:[%s1475 + $0x38] sm:$0x33]
        %v2192 = vld [vmem:[%s1475 + $0x40] sm:$0xcc]
        %v2193 = vld [vmem:[%s1475 + $0x48] sm:$0x33]
        %v2194 = vld [vmem:[%s1475 + $0x50] sm:$0xcc]
        %v2195 = vld [vmem:[%s1475 + $0x58] sm:$0x33]
        %v2196 = vld [vmem:[%s1475 + $0x60] sm:$0xcc]
        %v2197 = vld [vmem:[%s1475 + $0x68] sm:$0x33]
        %v2198 = vld [vmem:[%s1475 + $0x70] sm:$0xcc]
        %v2199 = vld [vmem:[%s1475 + $0x78] sm:$0x33]
        %v2216 = vrot.slane %v2184, 6
        %v2217 = vrot.slane %v2216, 4
        %v2218 = vrot.slane %v2185, 6
        %v2219 = vsel %vm1128, %v2217, %v2218
        %v2220 = vrot.slane %v2186, 6
        %v2221 = vrot.slane %v2220, 4
        %v2222 = vrot.slane %v2187, 6
        %v2223 = vsel %vm1128, %v2221, %v2222
        %v2224 = vrot.slane %v2188, 6
        %v2225 = vrot.slane %v2224, 4
        %v2226 = vrot.slane %v2189, 6
        %v2227 = vsel %vm1128, %v2225, %v2226
        %v2228 = vrot.slane %v2190, 6
        %v2229 = vrot.slane %v2228, 4
        %v2230 = vrot.slane %v2191, 6
        %v2231 = vsel %vm1128, %v2229, %v2230
        %v2232 = vrot.slane %v2192, 6
        %v2233 = vrot.slane %v2232, 4
        %v2234 = vrot.slane %v2193, 6
        %v2235 = vsel %vm1128, %v2233, %v2234
        %v2236 = vrot.slane %v2194, 6
        %v2237 = vrot.slane %v2236, 4
        %v2238 = vrot.slane %v2195, 6
        %v2239 = vsel %vm1128, %v2237, %v2238
        %v2240 = vrot.slane %v2196, 6
        %v2241 = vrot.slane %v2240, 4
        %v2242 = vrot.slane %v2197, 6
        %v2243 = vsel %vm1128, %v2241, %v2242
        %v2244 = vrot.slane %v2198, 6
        %v2245 = vrot.slane %v2244, 4
        %v2246 = vrot.slane %v2199, 6
        %v2247 = vsel %vm1128, %v2245, %v2246
        %s2248 = scalar_lea.vmem [#allocation4], 1280
        %v2249 = vld [vmem:[%s2248] sm:$0xff]
        %v2250 = vld [vmem:[%s2248 + $0x8] sm:$0xff]
        %v2251 = vld [vmem:[%s2248 + $0x10] sm:$0xff]
        %v2252 = vld [vmem:[%s2248 + $0x18] sm:$0xff]
        %v2253 = vld [vmem:[%s2248 + $0x20] sm:$0xff]
        %v2254 = vld [vmem:[%s2248 + $0x28] sm:$0xff]
        %v2255 = vld [vmem:[%s2248 + $0x30] sm:$0xff]
        %v2256 = vld [vmem:[%s2248 + $0x38] sm:$0xff]
        %v2257 = vld [vmem:[%s2248 + $0x40] sm:$0xff]
        %v2258 = vld [vmem:[%s2248 + $0x48] sm:$0xff]
        %v2259 = vld [vmem:[%s2248 + $0x50] sm:$0xff]
        %v2260 = vld [vmem:[%s2248 + $0x58] sm:$0xff]
        %v2261 = vld [vmem:[%s2248 + $0x60] sm:$0xff]
        %v2262 = vld [vmem:[%s2248 + $0x68] sm:$0xff]
        %v2263 = vld [vmem:[%s2248 + $0x70] sm:$0xff]
        %v2264 = vld [vmem:[%s2248 + $0x78] sm:$0xff]
        %v2265 = vld [vmem:[%s2248 + $0x80] sm:$0xff]
        %v2266 = vld [vmem:[%s2248 + $0x88] sm:$0xff]
        %v2267 = vld [vmem:[%s2248 + $0x90] sm:$0xff]
        %v2268 = vld [vmem:[%s2248 + $0x98] sm:$0xff]
        %v2269 = vld [vmem:[%s2248 + $0xa0] sm:$0xff]
        %v2270 = vld [vmem:[%s2248 + $0xa8] sm:$0xff]
        %v2271 = vld [vmem:[%s2248 + $0xb0] sm:$0xff]
        %v2272 = vld [vmem:[%s2248 + $0xb8] sm:$0xff]
        %v2273 = vld [vmem:[%s2248 + $0xc0] sm:$0xff]
        %v2274 = vld [vmem:[%s2248 + $0xc8] sm:$0xff]
        %v2275 = vld [vmem:[%s2248 + $0xd0] sm:$0xff]
        %v2276 = vld [vmem:[%s2248 + $0xd8] sm:$0xff]
        %v2277 = vld [vmem:[%s2248 + $0xe0] sm:$0xff]
        %v2278 = vld [vmem:[%s2248 + $0xe8] sm:$0xff]
        %v2279 = vld [vmem:[%s2248 + $0xf0] sm:$0xff]
        %v2280 = vld [vmem:[%s2248 + $0xf8] sm:$0xff]
        %v2281 = vunpack.c.l.b16 %v2219
        %v2282 = vunpack.c.h.b16 %v2219
        %v2283 = vunpack.c.l.b16 %v2223
        %v2284 = vunpack.c.h.b16 %v2223
        %v2285 = vunpack.c.l.b16 %v2227
        %v2286 = vunpack.c.h.b16 %v2227
        %v2287 = vunpack.c.l.b16 %v2231
        %v2288 = vunpack.c.h.b16 %v2231
        %v2289 = vunpack.c.l.b16 %v2235
        %v2290 = vunpack.c.h.b16 %v2235
        %v2291 = vunpack.c.l.b16 %v2239
        %v2292 = vunpack.c.h.b16 %v2239
        %v2293 = vunpack.c.l.b16 %v2243
        %v2294 = vunpack.c.h.b16 %v2243
        %v2295 = vunpack.c.l.b16 %v2247
        %v2296 = vunpack.c.h.b16 %v2247
        %v2297 = vpack.c.b16 %v2283, %v2281
        %v2298 = vpack.c.b16 %v2284, %v2282
        %v2299 = vpack.c.b16 %v2287, %v2285
        %v2300 = vpack.c.b16 %v2288, %v2286
        %v2301 = vpack.c.b16 %v2291, %v2289
        %v2302 = vpack.c.b16 %v2292, %v2290
        %v2303 = vpack.c.b16 %v2295, %v2293
        %v2304 = vpack.c.b16 %v2296, %v2294
        %v2345 = vunpack.c.l.b16 %v2249
        %v2346 = vunpack.c.h.b16 %v2249
        %v2347 = vunpack.c.l.b16 %v2250
        %v2348 = vunpack.c.h.b16 %v2250
        %v2349 = vunpack.c.l.b16 %v2251
        %v2350 = vunpack.c.h.b16 %v2251
        %v2351 = vunpack.c.l.b16 %v2252
        %v2352 = vunpack.c.h.b16 %v2252
        %v2353 = vunpack.c.l.b16 %v2253
        %v2354 = vunpack.c.h.b16 %v2253
        %v2355 = vunpack.c.l.b16 %v2254
        %v2356 = vunpack.c.h.b16 %v2254
        %v2357 = vunpack.c.l.b16 %v2255
        %v2358 = vunpack.c.h.b16 %v2255
        %v2359 = vunpack.c.l.b16 %v2256
        %v2360 = vunpack.c.h.b16 %v2256
        %v2361 = vunpack.c.l.b16 %v2257
        %v2362 = vunpack.c.h.b16 %v2257
        %v2363 = vunpack.c.l.b16 %v2258
        %v2364 = vunpack.c.h.b16 %v2258
        %v2365 = vunpack.c.l.b16 %v2259
        %v2366 = vunpack.c.h.b16 %v2259
        %v2367 = vunpack.c.l.b16 %v2260
        %v2368 = vunpack.c.h.b16 %v2260
        %v2369 = vunpack.c.l.b16 %v2261
        %v2370 = vunpack.c.h.b16 %v2261
        %v2371 = vunpack.c.l.b16 %v2262
        %v2372 = vunpack.c.h.b16 %v2262
        %v2373 = vunpack.c.l.b16 %v2263
        %v2374 = vunpack.c.h.b16 %v2263
        %v2375 = vunpack.c.l.b16 %v2264
        %v2376 = vunpack.c.h.b16 %v2264
        %v2377 = vunpack.c.l.b16 %v2265
        %v2378 = vunpack.c.h.b16 %v2265
        %v2379 = vunpack.c.l.b16 %v2266
        %v2380 = vunpack.c.h.b16 %v2266
        %v2381 = vunpack.c.l.b16 %v2267
        %v2382 = vunpack.c.h.b16 %v2267
        %v2383 = vunpack.c.l.b16 %v2268
        %v2384 = vunpack.c.h.b16 %v2268
        %v2385 = vunpack.c.l.b16 %v2269
        %v2386 = vunpack.c.h.b16 %v2269
        %v2387 = vunpack.c.l.b16 %v2270
        %v2388 = vunpack.c.h.b16 %v2270
        %v2389 = vunpack.c.l.b16 %v2271
        %v2390 = vunpack.c.h.b16 %v2271
        %v2391 = vunpack.c.l.b16 %v2272
        %v2392 = vunpack.c.h.b16 %v2272
        %v2393 = vunpack.c.l.b16 %v2273
        %v2394 = vunpack.c.h.b16 %v2273
        %v2395 = vunpack.c.l.b16 %v2274
        %v2396 = vunpack.c.h.b16 %v2274
        %v2397 = vunpack.c.l.b16 %v2275
        %v2398 = vunpack.c.h.b16 %v2275
        %v2399 = vunpack.c.l.b16 %v2276
        %v2400 = vunpack.c.h.b16 %v2276
        %v2401 = vunpack.c.l.b16 %v2277
        %v2402 = vunpack.c.h.b16 %v2277
        %v2403 = vunpack.c.l.b16 %v2278
        %v2404 = vunpack.c.h.b16 %v2278
        %v2405 = vunpack.c.l.b16 %v2279
        %v2406 = vunpack.c.h.b16 %v2279
        %v2407 = vunpack.c.l.b16 %v2280
        %v2408 = vunpack.c.h.b16 %v2280
        %v2409 = vpack.c.b16 %v2347, %v2345
        %v2410 = vpack.c.b16 %v2348, %v2346
        %v2411 = vpack.c.b16 %v2351, %v2349
        %v2412 = vpack.c.b16 %v2352, %v2350
        %v2413 = vpack.c.b16 %v2355, %v2353
        %v2414 = vpack.c.b16 %v2356, %v2354
        %v2415 = vpack.c.b16 %v2359, %v2357
        %v2416 = vpack.c.b16 %v2360, %v2358
        %v2417 = vpack.c.b16 %v2363, %v2361
        %v2418 = vpack.c.b16 %v2364, %v2362
        %v2419 = vpack.c.b16 %v2367, %v2365
        %v2420 = vpack.c.b16 %v2368, %v2366
        %v2421 = vpack.c.b16 %v2371, %v2369
        %v2422 = vpack.c.b16 %v2372, %v2370
        %v2423 = vpack.c.b16 %v2375, %v2373
        %v2424 = vpack.c.b16 %v2376, %v2374
        %v2425 = vpack.c.b16 %v2379, %v2377
        %v2426 = vpack.c.b16 %v2380, %v2378
        %v2427 = vpack.c.b16 %v2383, %v2381
        %v2428 = vpack.c.b16 %v2384, %v2382
        %v2429 = vpack.c.b16 %v2387, %v2385
        %v2430 = vpack.c.b16 %v2388, %v2386
        %v2431 = vpack.c.b16 %v2391, %v2389
        %v2432 = vpack.c.b16 %v2392, %v2390
        %v2433 = vpack.c.b16 %v2395, %v2393
        %v2434 = vpack.c.b16 %v2396, %v2394
        %v2435 = vpack.c.b16 %v2399, %v2397
        %v2436 = vpack.c.b16 %v2400, %v2398
        %v2437 = vpack.c.b16 %v2403, %v2401
        %v2438 = vpack.c.b16 %v2404, %v2402
        %v2439 = vpack.c.b16 %v2407, %v2405
        %v2440 = vpack.c.b16 %v2408, %v2406
        %2473 = vmatprep.subr.bf16.mxu0 %v2424
        %2474 = vmatpush1.bf16.msra.mxu0 %v2423
        %2475 = vmatprep.subr.bf16.mxu0 %v2422
        %2476 = vmatpush1.bf16.msra.mxu0 %v2421
        %2477 = vmatprep.subr.bf16.mxu0 %v2420
        %2478 = vmatpush1.bf16.msra.mxu0 %v2419
        %2479 = vmatprep.subr.bf16.mxu0 %v2418
        %2480 = vmatpush1.bf16.msra.mxu0 %v2417
        %2481 = vmatprep.subr.bf16.mxu0 %v2416
        %2482 = vmatpush1.bf16.msra.mxu0 %v2415
        %2483 = vmatprep.subr.bf16.mxu0 %v2414
        %2484 = vmatpush1.bf16.msra.mxu0 %v2413
        %2485 = vmatprep.subr.bf16.mxu0 %v2412
        %2486 = vmatpush1.bf16.msra.mxu0 %v2411
        %2487 = vmatprep.subr.bf16.mxu0 %v2410
        %2488 = vmatpush1.bf16.msra.mxu0 %v2409
        %2489 = vmatprep.subr.bf16.mxu0 %v2440
        %2490 = vmatpush2.bf16.msra.mxu0 %v2439
        %2491 = vmatprep.subr.bf16.mxu0 %v2438
        %2492 = vmatpush2.bf16.msra.mxu0 %v2437
        %2493 = vmatprep.subr.bf16.mxu0 %v2436
        %2494 = vmatpush2.bf16.msra.mxu0 %v2435
        %2495 = vmatprep.subr.bf16.mxu0 %v2434
        %2496 = vmatpush2.bf16.msra.mxu0 %v2433
        %2497 = vmatprep.subr.bf16.mxu0 %v2432
        %2498 = vmatpush2.bf16.msra.mxu0 %v2431
        %2499 = vmatprep.subr.bf16.mxu0 %v2430
        %2500 = vmatpush2.bf16.msra.mxu0 %v2429
        %2501 = vmatprep.subr.bf16.mxu0 %v2428
        %2502 = vmatpush2.bf16.msra.mxu0 %v2427
        %2503 = vmatprep.subr.bf16.mxu0 %v2426
        %2504 = vmatpush2.bf16.msra.mxu0 %v2425
        %2505 = vmatprep.mubr.bf16.mxu0 %v2298
        %2506 = vmatmul.mubr.bf16.gmra.mxu0 %v2297
        %v2507 = vpop.f32.mrf.mxu0
        %v2508 = vadd.f32 0.0, %v2507
        %v2509 = vpop.f32.mrf.mxu0
        %v2510 = vadd.f32 0.0, %v2509
        %v2511 = vpop.f32.mrf.mxu0
        %v2512 = vadd.f32 0.0, %v2511
        %v2513 = vpop.f32.mrf.mxu0
        %v2514 = vadd.f32 0.0, %v2513
        %2515 = vmatprep.mubr.bf16.mxu0 %v2300
        %2516 = vmatmul.mubr.bf16.gmra.mxu0 %v2299
        %v2517 = vpop.f32.mrf.mxu0
        %v2518 = vadd.f32 0.0, %v2517
        %v2519 = vpop.f32.mrf.mxu0
        %v2520 = vadd.f32 0.0, %v2519
        %v2521 = vpop.f32.mrf.mxu0
        %v2522 = vadd.f32 0.0, %v2521
        %v2523 = vpop.f32.mrf.mxu0
        %v2524 = vadd.f32 0.0, %v2523
        %2525 = vmatprep.mubr.bf16.mxu0 %v2302
        %2526 = vmatmul.mubr.bf16.gmra.mxu0 %v2301
        %v2527 = vpop.f32.mrf.mxu0
        %v2528 = vadd.f32 0.0, %v2527
        %v2529 = vpop.f32.mrf.mxu0
        %v2530 = vadd.f32 0.0, %v2529
        %v2531 = vpop.f32.mrf.mxu0
        %v2532 = vadd.f32 0.0, %v2531
        %v2533 = vpop.f32.mrf.mxu0
        %v2534 = vadd.f32 0.0, %v2533
        %2535 = vmatprep.mubr.bf16.mxu0 %v2304
        %2536 = vmatmul.mubr.bf16.gmra.mxu0 %v2303
        %v2537 = vpop.f32.mrf.mxu0
        %v2538 = vadd.f32 0.0, %v2537
        %v2539 = vpop.f32.mrf.mxu0
        %v2540 = vadd.f32 0.0, %v2539
        %v2541 = vpop.f32.mrf.mxu0
        %v2542 = vadd.f32 0.0, %v2541
        %v2543 = vpop.f32.mrf.mxu0
        %v2544 = vadd.f32 0.0, %v2543
        %2545 = vdwg.mxu0
        %v2546 = vadd.f32 %v2168, %v2508
        %v2547 = vadd.f32 %v2169, %v2510
        %v2548 = vadd.f32 %v2170, %v2512
        %v2549 = vadd.f32 %v2171, %v2514
        %v2550 = vadd.f32 %v2172, %v2518
        %v2551 = vadd.f32 %v2173, %v2520
        %v2552 = vadd.f32 %v2174, %v2522
        %v2553 = vadd.f32 %v2175, %v2524
        %v2554 = vadd.f32 %v2176, %v2528
        %v2555 = vadd.f32 %v2177, %v2530
        %v2556 = vadd.f32 %v2178, %v2532
        %v2557 = vadd.f32 %v2179, %v2534
        %v2558 = vadd.f32 %v2180, %v2538
        %v2559 = vadd.f32 %v2181, %v2540
        %v2560 = vadd.f32 %v2182, %v2542
        %v2561 = vadd.f32 %v2183, %v2544
        %s2562 = scalar_lea.vmem [#allocation2], 64
        %v2563 = vld [vmem:[%s2562] sm:$0xff]
        %v2564 = vld [vmem:[%s2562 + $0x10] sm:$0xff]
        %v2565 = vld [vmem:[%s2562 + $0x20] sm:$0xff]
        %v2566 = vld [vmem:[%s2562 + $0x30] sm:$0xff]
        %v2567 = vld [vmem:[%s2562 + $0x40] sm:$0xff]
        %v2568 = vld [vmem:[%s2562 + $0x50] sm:$0xff]
        %v2569 = vld [vmem:[%s2562 + $0x60] sm:$0xff]
        %v2570 = vld [vmem:[%s2562 + $0x70] sm:$0xff]
        %s2571 = scalar_lea.vmem [#allocation4], 1536
        %v2572 = vld [vmem:[%s2571] sm:$0xff]
        %v2573 = vld [vmem:[%s2571 + $0x8] sm:$0xff]
        %v2574 = vld [vmem:[%s2571 + $0x10] sm:$0xff]
        %v2575 = vld [vmem:[%s2571 + $0x18] sm:$0xff]
        %v2576 = vld [vmem:[%s2571 + $0x20] sm:$0xff]
        %v2577 = vld [vmem:[%s2571 + $0x28] sm:$0xff]
        %v2578 = vld [vmem:[%s2571 + $0x30] sm:$0xff]
        %v2579 = vld [vmem:[%s2571 + $0x38] sm:$0xff]
        %v2580 = vld [vmem:[%s2571 + $0x40] sm:$0xff]
        %v2581 = vld [vmem:[%s2571 + $0x48] sm:$0xff]
        %v2582 = vld [vmem:[%s2571 + $0x50] sm:$0xff]
        %v2583 = vld [vmem:[%s2571 + $0x58] sm:$0xff]
        %v2584 = vld [vmem:[%s2571 + $0x60] sm:$0xff]
        %v2585 = vld [vmem:[%s2571 + $0x68] sm:$0xff]
        %v2586 = vld [vmem:[%s2571 + $0x70] sm:$0xff]
        %v2587 = vld [vmem:[%s2571 + $0x78] sm:$0xff]
        %v2588 = vld [vmem:[%s2571 + $0x80] sm:$0xff]
        %v2589 = vld [vmem:[%s2571 + $0x88] sm:$0xff]
        %v2590 = vld [vmem:[%s2571 + $0x90] sm:$0xff]
        %v2591 = vld [vmem:[%s2571 + $0x98] sm:$0xff]
        %v2592 = vld [vmem:[%s2571 + $0xa0] sm:$0xff]
        %v2593 = vld [vmem:[%s2571 + $0xa8] sm:$0xff]
        %v2594 = vld [vmem:[%s2571 + $0xb0] sm:$0xff]
        %v2595 = vld [vmem:[%s2571 + $0xb8] sm:$0xff]
        %v2596 = vld [vmem:[%s2571 + $0xc0] sm:$0xff]
        %v2597 = vld [vmem:[%s2571 + $0xc8] sm:$0xff]
        %v2598 = vld [vmem:[%s2571 + $0xd0] sm:$0xff]
        %v2599 = vld [vmem:[%s2571 + $0xd8] sm:$0xff]
        %v2600 = vld [vmem:[%s2571 + $0xe0] sm:$0xff]
        %v2601 = vld [vmem:[%s2571 + $0xe8] sm:$0xff]
        %v2602 = vld [vmem:[%s2571 + $0xf0] sm:$0xff]
        %v2603 = vld [vmem:[%s2571 + $0xf8] sm:$0xff]
        %v2612 = vunpack.c.l.b16 %v2563
        %v2613 = vunpack.c.h.b16 %v2563
        %v2614 = vunpack.c.l.b16 %v2564
        %v2615 = vunpack.c.h.b16 %v2564
        %v2616 = vunpack.c.l.b16 %v2565
        %v2617 = vunpack.c.h.b16 %v2565
        %v2618 = vunpack.c.l.b16 %v2566
        %v2619 = vunpack.c.h.b16 %v2566
        %v2620 = vunpack.c.l.b16 %v2567
        %v2621 = vunpack.c.h.b16 %v2567
        %v2622 = vunpack.c.l.b16 %v2568
        %v2623 = vunpack.c.h.b16 %v2568
        %v2624 = vunpack.c.l.b16 %v2569
        %v2625 = vunpack.c.h.b16 %v2569
        %v2626 = vunpack.c.l.b16 %v2570
        %v2627 = vunpack.c.h.b16 %v2570
        %v2628 = vpack.c.b16 %v2614, %v2612
        %v2629 = vpack.c.b16 %v2615, %v2613
        %v2630 = vpack.c.b16 %v2618, %v2616
        %v2631 = vpack.c.b16 %v2619, %v2617
        %v2632 = vpack.c.b16 %v2622, %v2620
        %v2633 = vpack.c.b16 %v2623, %v2621
        %v2634 = vpack.c.b16 %v2626, %v2624
        %v2635 = vpack.c.b16 %v2627, %v2625
        %v2676 = vunpack.c.l.b16 %v2572
        %v2677 = vunpack.c.h.b16 %v2572
        %v2678 = vunpack.c.l.b16 %v2573
        %v2679 = vunpack.c.h.b16 %v2573
        %v2680 = vunpack.c.l.b16 %v2574
        %v2681 = vunpack.c.h.b16 %v2574
        %v2682 = vunpack.c.l.b16 %v2575
        %v2683 = vunpack.c.h.b16 %v2575
        %v2684 = vunpack.c.l.b16 %v2576
        %v2685 = vunpack.c.h.b16 %v2576
        %v2686 = vunpack.c.l.b16 %v2577
        %v2687 = vunpack.c.h.b16 %v2577
        %v2688 = vunpack.c.l.b16 %v2578
        %v2689 = vunpack.c.h.b16 %v2578
        %v2690 = vunpack.c.l.b16 %v2579
        %v2691 = vunpack.c.h.b16 %v2579
        %v2692 = vunpack.c.l.b16 %v2580
        %v2693 = vunpack.c.h.b16 %v2580
        %v2694 = vunpack.c.l.b16 %v2581
        %v2695 = vunpack.c.h.b16 %v2581
        %v2696 = vunpack.c.l.b16 %v2582
        %v2697 = vunpack.c.h.b16 %v2582
        %v2698 = vunpack.c.l.b16 %v2583
        %v2699 = vunpack.c.h.b16 %v2583
        %v2700 = vunpack.c.l.b16 %v2584
        %v2701 = vunpack.c.h.b16 %v2584
        %v2702 = vunpack.c.l.b16 %v2585
        %v2703 = vunpack.c.h.b16 %v2585
        %v2704 = vunpack.c.l.b16 %v2586
        %v2705 = vunpack.c.h.b16 %v2586
        %v2706 = vunpack.c.l.b16 %v2587
        %v2707 = vunpack.c.h.b16 %v2587
        %v2708 = vunpack.c.l.b16 %v2588
        %v2709 = vunpack.c.h.b16 %v2588
        %v2710 = vunpack.c.l.b16 %v2589
        %v2711 = vunpack.c.h.b16 %v2589
        %v2712 = vunpack.c.l.b16 %v2590
        %v2713 = vunpack.c.h.b16 %v2590
        %v2714 = vunpack.c.l.b16 %v2591
        %v2715 = vunpack.c.h.b16 %v2591
        %v2716 = vunpack.c.l.b16 %v2592
        %v2717 = vunpack.c.h.b16 %v2592
        %v2718 = vunpack.c.l.b16 %v2593
        %v2719 = vunpack.c.h.b16 %v2593
        %v2720 = vunpack.c.l.b16 %v2594
        %v2721 = vunpack.c.h.b16 %v2594
        %v2722 = vunpack.c.l.b16 %v2595
        %v2723 = vunpack.c.h.b16 %v2595
        %v2724 = vunpack.c.l.b16 %v2596
        %v2725 = vunpack.c.h.b16 %v2596
        %v2726 = vunpack.c.l.b16 %v2597
        %v2727 = vunpack.c.h.b16 %v2597
        %v2728 = vunpack.c.l.b16 %v2598
        %v2729 = vunpack.c.h.b16 %v2598
        %v2730 = vunpack.c.l.b16 %v2599
        %v2731 = vunpack.c.h.b16 %v2599
        %v2732 = vunpack.c.l.b16 %v2600
        %v2733 = vunpack.c.h.b16 %v2600
        %v2734 = vunpack.c.l.b16 %v2601
        %v2735 = vunpack.c.h.b16 %v2601
        %v2736 = vunpack.c.l.b16 %v2602
        %v2737 = vunpack.c.h.b16 %v2602
        %v2738 = vunpack.c.l.b16 %v2603
        %v2739 = vunpack.c.h.b16 %v2603
        %v2740 = vpack.c.b16 %v2678, %v2676
        %v2741 = vpack.c.b16 %v2679, %v2677
        %v2742 = vpack.c.b16 %v2682, %v2680
        %v2743 = vpack.c.b16 %v2683, %v2681
        %v2744 = vpack.c.b16 %v2686, %v2684
        %v2745 = vpack.c.b16 %v2687, %v2685
        %v2746 = vpack.c.b16 %v2690, %v2688
        %v2747 = vpack.c.b16 %v2691, %v2689
        %v2748 = vpack.c.b16 %v2694, %v2692
        %v2749 = vpack.c.b16 %v2695, %v2693
        %v2750 = vpack.c.b16 %v2698, %v2696
        %v2751 = vpack.c.b16 %v2699, %v2697
        %v2752 = vpack.c.b16 %v2702, %v2700
        %v2753 = vpack.c.b16 %v2703, %v2701
        %v2754 = vpack.c.b16 %v2706, %v2704
        %v2755 = vpack.c.b16 %v2707, %v2705
        %v2756 = vpack.c.b16 %v2710, %v2708
        %v2757 = vpack.c.b16 %v2711, %v2709
        %v2758 = vpack.c.b16 %v2714, %v2712
        %v2759 = vpack.c.b16 %v2715, %v2713
        %v2760 = vpack.c.b16 %v2718, %v2716
        %v2761 = vpack.c.b16 %v2719, %v2717
        %v2762 = vpack.c.b16 %v2722, %v2720
        %v2763 = vpack.c.b16 %v2723, %v2721
        %v2764 = vpack.c.b16 %v2726, %v2724
        %v2765 = vpack.c.b16 %v2727, %v2725
        %v2766 = vpack.c.b16 %v2730, %v2728
        %v2767 = vpack.c.b16 %v2731, %v2729
        %v2768 = vpack.c.b16 %v2734, %v2732
        %v2769 = vpack.c.b16 %v2735, %v2733
        %v2770 = vpack.c.b16 %v2738, %v2736
        %v2771 = vpack.c.b16 %v2739, %v2737
        %2804 = vmatprep.subr.bf16.mxu0 %v2755
        %2805 = vmatpush1.bf16.msra.mxu0 %v2754
        %2806 = vmatprep.subr.bf16.mxu0 %v2753
        %2807 = vmatpush1.bf16.msra.mxu0 %v2752
        %2808 = vmatprep.subr.bf16.mxu0 %v2751
        %2809 = vmatpush1.bf16.msra.mxu0 %v2750
        %2810 = vmatprep.subr.bf16.mxu0 %v2749
        %2811 = vmatpush1.bf16.msra.mxu0 %v2748
        %2812 = vmatprep.subr.bf16.mxu0 %v2747
        %2813 = vmatpush1.bf16.msra.mxu0 %v2746
        %2814 = vmatprep.subr.bf16.mxu0 %v2745
        %2815 = vmatpush1.bf16.msra.mxu0 %v2744
        %2816 = vmatprep.subr.bf16.mxu0 %v2743
        %2817 = vmatpush1.bf16.msra.mxu0 %v2742
        %2818 = vmatprep.subr.bf16.mxu0 %v2741
        %2819 = vmatpush1.bf16.msra.mxu0 %v2740
        %2820 = vmatprep.subr.bf16.mxu0 %v2771
        %2821 = vmatpush2.bf16.msra.mxu0 %v2770
        %2822 = vmatprep.subr.bf16.mxu0 %v2769
        %2823 = vmatpush2.bf16.msra.mxu0 %v2768
        %2824 = vmatprep.subr.bf16.mxu0 %v2767
        %2825 = vmatpush2.bf16.msra.mxu0 %v2766
        %2826 = vmatprep.subr.bf16.mxu0 %v2765
        %2827 = vmatpush2.bf16.msra.mxu0 %v2764
        %2828 = vmatprep.subr.bf16.mxu0 %v2763
        %2829 = vmatpush2.bf16.msra.mxu0 %v2762
        %2830 = vmatprep.subr.bf16.mxu0 %v2761
        %2831 = vmatpush2.bf16.msra.mxu0 %v2760
        %2832 = vmatprep.subr.bf16.mxu0 %v2759
        %2833 = vmatpush2.bf16.msra.mxu0 %v2758
        %2834 = vmatprep.subr.bf16.mxu0 %v2757
        %2835 = vmatpush2.bf16.msra.mxu0 %v2756
        %2836 = vmatprep.mubr.bf16.mxu0 %v2629
        %2837 = vmatmul.mubr.bf16.gmra.mxu0 %v2628
        %v2838 = vpop.f32.mrf.mxu0
        %v2839 = vadd.f32 0.0, %v2838
        %v2840 = vpop.f32.mrf.mxu0
        %v2841 = vadd.f32 0.0, %v2840
        %v2842 = vpop.f32.mrf.mxu0
        %v2843 = vadd.f32 0.0, %v2842
        %v2844 = vpop.f32.mrf.mxu0
        %v2845 = vadd.f32 0.0, %v2844
        %2846 = vmatprep.mubr.bf16.mxu0 %v2631
        %2847 = vmatmul.mubr.bf16.gmra.mxu0 %v2630
        %v2848 = vpop.f32.mrf.mxu0
        %v2849 = vadd.f32 0.0, %v2848
        %v2850 = vpop.f32.mrf.mxu0
        %v2851 = vadd.f32 0.0, %v2850
        %v2852 = vpop.f32.mrf.mxu0
        %v2853 = vadd.f32 0.0, %v2852
        %v2854 = vpop.f32.mrf.mxu0
        %v2855 = vadd.f32 0.0, %v2854
        %2856 = vmatprep.mubr.bf16.mxu0 %v2633
        %2857 = vmatmul.mubr.bf16.gmra.mxu0 %v2632
        %v2858 = vpop.f32.mrf.mxu0
        %v2859 = vadd.f32 0.0, %v2858
        %v2860 = vpop.f32.mrf.mxu0
        %v2861 = vadd.f32 0.0, %v2860
        %v2862 = vpop.f32.mrf.mxu0
        %v2863 = vadd.f32 0.0, %v2862
        %v2864 = vpop.f32.mrf.mxu0
        %v2865 = vadd.f32 0.0, %v2864
        %2866 = vmatprep.mubr.bf16.mxu0 %v2635
        %2867 = vmatmul.mubr.bf16.gmra.mxu0 %v2634
        %v2868 = vpop.f32.mrf.mxu0
        %v2869 = vadd.f32 0.0, %v2868
        %v2870 = vpop.f32.mrf.mxu0
        %v2871 = vadd.f32 0.0, %v2870
        %v2872 = vpop.f32.mrf.mxu0
        %v2873 = vadd.f32 0.0, %v2872
        %v2874 = vpop.f32.mrf.mxu0
        %v2875 = vadd.f32 0.0, %v2874
        %2876 = vdwg.mxu0
        %v2877 = vadd.f32 %v2546, %v2839
        %v2878 = vadd.f32 %v2547, %v2841
        %v2879 = vadd.f32 %v2548, %v2843
        %v2880 = vadd.f32 %v2549, %v2845
        %v2881 = vadd.f32 %v2550, %v2849
        %v2882 = vadd.f32 %v2551, %v2851
        %v2883 = vadd.f32 %v2552, %v2853
        %v2884 = vadd.f32 %v2553, %v2855
        %v2885 = vadd.f32 %v2554, %v2859
        %v2886 = vadd.f32 %v2555, %v2861
        %v2887 = vadd.f32 %v2556, %v2863
        %v2888 = vadd.f32 %v2557, %v2865
        %v2889 = vadd.f32 %v2558, %v2869
        %v2890 = vadd.f32 %v2559, %v2871
        %v2891 = vadd.f32 %v2560, %v2873
        %v2892 = vadd.f32 %v2561, %v2875
        %v2893 = vld [vmem:[%s2562] sm:$0xee]
        %v2894 = vld [vmem:[%s2562 + $0x8] sm:$0x11]
        %v2895 = vld [vmem:[%s2562 + $0x10] sm:$0xee]
        %v2896 = vld [vmem:[%s2562 + $0x18] sm:$0x11]
        %v2897 = vld [vmem:[%s2562 + $0x20] sm:$0xee]
        %v2898 = vld [vmem:[%s2562 + $0x28] sm:$0x11]
        %v2899 = vld [vmem:[%s2562 + $0x30] sm:$0xee]
        %v2900 = vld [vmem:[%s2562 + $0x38] sm:$0x11]
        %v2901 = vld [vmem:[%s2562 + $0x40] sm:$0xee]
        %v2902 = vld [vmem:[%s2562 + $0x48] sm:$0x11]
        %v2903 = vld [vmem:[%s2562 + $0x50] sm:$0xee]
        %v2904 = vld [vmem:[%s2562 + $0x58] sm:$0x11]
        %v2905 = vld [vmem:[%s2562 + $0x60] sm:$0xee]
        %v2906 = vld [vmem:[%s2562 + $0x68] sm:$0x11]
        %v2907 = vld [vmem:[%s2562 + $0x70] sm:$0xee]
        %v2908 = vld [vmem:[%s2562 + $0x78] sm:$0x11]
        %v2925 = vrot.slane %v2893, 5
        %v2926 = vrot.slane %v2925, 4
        %v2927 = vrot.slane %v2894, 5
        %v2928 = vsel %vm490, %v2926, %v2927
        %v2929 = vrot.slane %v2895, 5
        %v2930 = vrot.slane %v2929, 4
        %v2931 = vrot.slane %v2896, 5
        %v2932 = vsel %vm490, %v2930, %v2931
        %v2933 = vrot.slane %v2897, 5
        %v2934 = vrot.slane %v2933, 4
        %v2935 = vrot.slane %v2898, 5
        %v2936 = vsel %vm490, %v2934, %v2935
        %v2937 = vrot.slane %v2899, 5
        %v2938 = vrot.slane %v2937, 4
        %v2939 = vrot.slane %v2900, 5
        %v2940 = vsel %vm490, %v2938, %v2939
        %v2941 = vrot.slane %v2901, 5
        %v2942 = vrot.slane %v2941, 4
        %v2943 = vrot.slane %v2902, 5
        %v2944 = vsel %vm490, %v2942, %v2943
        %v2945 = vrot.slane %v2903, 5
        %v2946 = vrot.slane %v2945, 4
        %v2947 = vrot.slane %v2904, 5
        %v2948 = vsel %vm490, %v2946, %v2947
        %v2949 = vrot.slane %v2905, 5
        %v2950 = vrot.slane %v2949, 4
        %v2951 = vrot.slane %v2906, 5
        %v2952 = vsel %vm490, %v2950, %v2951
        %v2953 = vrot.slane %v2907, 5
        %v2954 = vrot.slane %v2953, 4
        %v2955 = vrot.slane %v2908, 5
        %v2956 = vsel %vm490, %v2954, %v2955
        %s2957 = scalar_lea.vmem [#allocation4], 1792
        %v2958 = vld [vmem:[%s2957] sm:$0xff]
        %v2959 = vld [vmem:[%s2957 + $0x8] sm:$0xff]
        %v2960 = vld [vmem:[%s2957 + $0x10] sm:$0xff]
        %v2961 = vld [vmem:[%s2957 + $0x18] sm:$0xff]
        %v2962 = vld [vmem:[%s2957 + $0x20] sm:$0xff]
        %v2963 = vld [vmem:[%s2957 + $0x28] sm:$0xff]
        %v2964 = vld [vmem:[%s2957 + $0x30] sm:$0xff]
        %v2965 = vld [vmem:[%s2957 + $0x38] sm:$0xff]
        %v2966 = vld [vmem:[%s2957 + $0x40] sm:$0xff]
        %v2967 = vld [vmem:[%s2957 + $0x48] sm:$0xff]
        %v2968 = vld [vmem:[%s2957 + $0x50] sm:$0xff]
        %v2969 = vld [vmem:[%s2957 + $0x58] sm:$0xff]
        %v2970 = vld [vmem:[%s2957 + $0x60] sm:$0xff]
        %v2971 = vld [vmem:[%s2957 + $0x68] sm:$0xff]
        %v2972 = vld [vmem:[%s2957 + $0x70] sm:$0xff]
        %v2973 = vld [vmem:[%s2957 + $0x78] sm:$0xff]
        %v2974 = vld [vmem:[%s2957 + $0x80] sm:$0xff]
        %v2975 = vld [vmem:[%s2957 + $0x88] sm:$0xff]
        %v2976 = vld [vmem:[%s2957 + $0x90] sm:$0xff]
        %v2977 = vld [vmem:[%s2957 + $0x98] sm:$0xff]
        %v2978 = vld [vmem:[%s2957 + $0xa0] sm:$0xff]
        %v2979 = vld [vmem:[%s2957 + $0xa8] sm:$0xff]
        %v2980 = vld [vmem:[%s2957 + $0xb0] sm:$0xff]
        %v2981 = vld [vmem:[%s2957 + $0xb8] sm:$0xff]
        %v2982 = vld [vmem:[%s2957 + $0xc0] sm:$0xff]
        %v2983 = vld [vmem:[%s2957 + $0xc8] sm:$0xff]
        %v2984 = vld [vmem:[%s2957 + $0xd0] sm:$0xff]
        %v2985 = vld [vmem:[%s2957 + $0xd8] sm:$0xff]
        %v2986 = vld [vmem:[%s2957 + $0xe0] sm:$0xff]
        %v2987 = vld [vmem:[%s2957 + $0xe8] sm:$0xff]
        %v2988 = vld [vmem:[%s2957 + $0xf0] sm:$0xff]
        %v2989 = vld [vmem:[%s2957 + $0xf8] sm:$0xff]
        %v2990 = vunpack.c.l.b16 %v2928
        %v2991 = vunpack.c.h.b16 %v2928
        %v2992 = vunpack.c.l.b16 %v2932
        %v2993 = vunpack.c.h.b16 %v2932
        %v2994 = vunpack.c.l.b16 %v2936
        %v2995 = vunpack.c.h.b16 %v2936
        %v2996 = vunpack.c.l.b16 %v2940
        %v2997 = vunpack.c.h.b16 %v2940
        %v2998 = vunpack.c.l.b16 %v2944
        %v2999 = vunpack.c.h.b16 %v2944
        %v3000 = vunpack.c.l.b16 %v2948
        %v3001 = vunpack.c.h.b16 %v2948
        %v3002 = vunpack.c.l.b16 %v2952
        %v3003 = vunpack.c.h.b16 %v2952
        %v3004 = vunpack.c.l.b16 %v2956
        %v3005 = vunpack.c.h.b16 %v2956
        %v3006 = vpack.c.b16 %v2992, %v2990
        %v3007 = vpack.c.b16 %v2993, %v2991
        %v3008 = vpack.c.b16 %v2996, %v2994
        %v3009 = vpack.c.b16 %v2997, %v2995
        %v3010 = vpack.c.b16 %v3000, %v2998
        %v3011 = vpack.c.b16 %v3001, %v2999
        %v3012 = vpack.c.b16 %v3004, %v3002
        %v3013 = vpack.c.b16 %v3005, %v3003
        %v3054 = vunpack.c.l.b16 %v2958
        %v3055 = vunpack.c.h.b16 %v2958
        %v3056 = vunpack.c.l.b16 %v2959
        %v3057 = vunpack.c.h.b16 %v2959
        %v3058 = vunpack.c.l.b16 %v2960
        %v3059 = vunpack.c.h.b16 %v2960
        %v3060 = vunpack.c.l.b16 %v2961
        %v3061 = vunpack.c.h.b16 %v2961
        %v3062 = vunpack.c.l.b16 %v2962
        %v3063 = vunpack.c.h.b16 %v2962
        %v3064 = vunpack.c.l.b16 %v2963
        %v3065 = vunpack.c.h.b16 %v2963
        %v3066 = vunpack.c.l.b16 %v2964
        %v3067 = vunpack.c.h.b16 %v2964
        %v3068 = vunpack.c.l.b16 %v2965
        %v3069 = vunpack.c.h.b16 %v2965
        %v3070 = vunpack.c.l.b16 %v2966
        %v3071 = vunpack.c.h.b16 %v2966
        %v3072 = vunpack.c.l.b16 %v2967
        %v3073 = vunpack.c.h.b16 %v2967
        %v3074 = vunpack.c.l.b16 %v2968
        %v3075 = vunpack.c.h.b16 %v2968
        %v3076 = vunpack.c.l.b16 %v2969
        %v3077 = vunpack.c.h.b16 %v2969
        %v3078 = vunpack.c.l.b16 %v2970
        %v3079 = vunpack.c.h.b16 %v2970
        %v3080 = vunpack.c.l.b16 %v2971
        %v3081 = vunpack.c.h.b16 %v2971
        %v3082 = vunpack.c.l.b16 %v2972
        %v3083 = vunpack.c.h.b16 %v2972
        %v3084 = vunpack.c.l.b16 %v2973
        %v3085 = vunpack.c.h.b16 %v2973
        %v3086 = vunpack.c.l.b16 %v2974
        %v3087 = vunpack.c.h.b16 %v2974
        %v3088 = vunpack.c.l.b16 %v2975
        %v3089 = vunpack.c.h.b16 %v2975
        %v3090 = vunpack.c.l.b16 %v2976
        %v3091 = vunpack.c.h.b16 %v2976
        %v3092 = vunpack.c.l.b16 %v2977
        %v3093 = vunpack.c.h.b16 %v2977
        %v3094 = vunpack.c.l.b16 %v2978
        %v3095 = vunpack.c.h.b16 %v2978
        %v3096 = vunpack.c.l.b16 %v2979
        %v3097 = vunpack.c.h.b16 %v2979
        %v3098 = vunpack.c.l.b16 %v2980
        %v3099 = vunpack.c.h.b16 %v2980
        %v3100 = vunpack.c.l.b16 %v2981
        %v3101 = vunpack.c.h.b16 %v2981
        %v3102 = vunpack.c.l.b16 %v2982
        %v3103 = vunpack.c.h.b16 %v2982
        %v3104 = vunpack.c.l.b16 %v2983
        %v3105 = vunpack.c.h.b16 %v2983
        %v3106 = vunpack.c.l.b16 %v2984
        %v3107 = vunpack.c.h.b16 %v2984
        %v3108 = vunpack.c.l.b16 %v2985
        %v3109 = vunpack.c.h.b16 %v2985
        %v3110 = vunpack.c.l.b16 %v2986
        %v3111 = vunpack.c.h.b16 %v2986
        %v3112 = vunpack.c.l.b16 %v2987
        %v3113 = vunpack.c.h.b16 %v2987
        %v3114 = vunpack.c.l.b16 %v2988
        %v3115 = vunpack.c.h.b16 %v2988
        %v3116 = vunpack.c.l.b16 %v2989
        %v3117 = vunpack.c.h.b16 %v2989
        %v3118 = vpack.c.b16 %v3056, %v3054
        %v3119 = vpack.c.b16 %v3057, %v3055
        %v3120 = vpack.c.b16 %v3060, %v3058
        %v3121 = vpack.c.b16 %v3061, %v3059
        %v3122 = vpack.c.b16 %v3064, %v3062
        %v3123 = vpack.c.b16 %v3065, %v3063
        %v3124 = vpack.c.b16 %v3068, %v3066
        %v3125 = vpack.c.b16 %v3069, %v3067
        %v3126 = vpack.c.b16 %v3072, %v3070
        %v3127 = vpack.c.b16 %v3073, %v3071
        %v3128 = vpack.c.b16 %v3076, %v3074
        %v3129 = vpack.c.b16 %v3077, %v3075
        %v3130 = vpack.c.b16 %v3080, %v3078
        %v3131 = vpack.c.b16 %v3081, %v3079
        %v3132 = vpack.c.b16 %v3084, %v3082
        %v3133 = vpack.c.b16 %v3085, %v3083
        %v3134 = vpack.c.b16 %v3088, %v3086
        %v3135 = vpack.c.b16 %v3089, %v3087
        %v3136 = vpack.c.b16 %v3092, %v3090
        %v3137 = vpack.c.b16 %v3093, %v3091
        %v3138 = vpack.c.b16 %v3096, %v3094
        %v3139 = vpack.c.b16 %v3097, %v3095
        %v3140 = vpack.c.b16 %v3100, %v3098
        %v3141 = vpack.c.b16 %v3101, %v3099
        %v3142 = vpack.c.b16 %v3104, %v3102
        %v3143 = vpack.c.b16 %v3105, %v3103
        %v3144 = vpack.c.b16 %v3108, %v3106
        %v3145 = vpack.c.b16 %v3109, %v3107
        %v3146 = vpack.c.b16 %v3112, %v3110
        %v3147 = vpack.c.b16 %v3113, %v3111
        %v3148 = vpack.c.b16 %v3116, %v3114
        %v3149 = vpack.c.b16 %v3117, %v3115
        %3182 = vmatprep.subr.bf16.mxu0 %v3133
        %3183 = vmatpush1.bf16.msra.mxu0 %v3132
        %3184 = vmatprep.subr.bf16.mxu0 %v3131
        %3185 = vmatpush1.bf16.msra.mxu0 %v3130
        %3186 = vmatprep.subr.bf16.mxu0 %v3129
        %3187 = vmatpush1.bf16.msra.mxu0 %v3128
        %3188 = vmatprep.subr.bf16.mxu0 %v3127
        %3189 = vmatpush1.bf16.msra.mxu0 %v3126
        %3190 = vmatprep.subr.bf16.mxu0 %v3125
        %3191 = vmatpush1.bf16.msra.mxu0 %v3124
        %3192 = vmatprep.subr.bf16.mxu0 %v3123
        %3193 = vmatpush1.bf16.msra.mxu0 %v3122
        %3194 = vmatprep.subr.bf16.mxu0 %v3121
        %3195 = vmatpush1.bf16.msra.mxu0 %v3120
        %3196 = vmatprep.subr.bf16.mxu0 %v3119
        %3197 = vmatpush1.bf16.msra.mxu0 %v3118
        %3198 = vmatprep.subr.bf16.mxu0 %v3149
        %3199 = vmatpush2.bf16.msra.mxu0 %v3148
        %3200 = vmatprep.subr.bf16.mxu0 %v3147
        %3201 = vmatpush2.bf16.msra.mxu0 %v3146
        %3202 = vmatprep.subr.bf16.mxu0 %v3145
        %3203 = vmatpush2.bf16.msra.mxu0 %v3144
        %3204 = vmatprep.subr.bf16.mxu0 %v3143
        %3205 = vmatpush2.bf16.msra.mxu0 %v3142
        %3206 = vmatprep.subr.bf16.mxu0 %v3141
        %3207 = vmatpush2.bf16.msra.mxu0 %v3140
        %3208 = vmatprep.subr.bf16.mxu0 %v3139
        %3209 = vmatpush2.bf16.msra.mxu0 %v3138
        %3210 = vmatprep.subr.bf16.mxu0 %v3137
        %3211 = vmatpush2.bf16.msra.mxu0 %v3136
        %3212 = vmatprep.subr.bf16.mxu0 %v3135
        %3213 = vmatpush2.bf16.msra.mxu0 %v3134
        %3214 = vmatprep.mubr.bf16.mxu0 %v3007
        %3215 = vmatmul.mubr.bf16.gmra.mxu0 %v3006
        %v3216 = vpop.f32.mrf.mxu0
        %v3217 = vadd.f32 0.0, %v3216
        %v3218 = vpop.f32.mrf.mxu0
        %v3219 = vadd.f32 0.0, %v3218
        %v3220 = vpop.f32.mrf.mxu0
        %v3221 = vadd.f32 0.0, %v3220
        %v3222 = vpop.f32.mrf.mxu0
        %v3223 = vadd.f32 0.0, %v3222
        %3224 = vmatprep.mubr.bf16.mxu0 %v3009
        %3225 = vmatmul.mubr.bf16.gmra.mxu0 %v3008
        %v3226 = vpop.f32.mrf.mxu0
        %v3227 = vadd.f32 0.0, %v3226
        %v3228 = vpop.f32.mrf.mxu0
        %v3229 = vadd.f32 0.0, %v3228
        %v3230 = vpop.f32.mrf.mxu0
        %v3231 = vadd.f32 0.0, %v3230
        %v3232 = vpop.f32.mrf.mxu0
        %v3233 = vadd.f32 0.0, %v3232
        %3234 = vmatprep.mubr.bf16.mxu0 %v3011
        %3235 = vmatmul.mubr.bf16.gmra.mxu0 %v3010
        %v3236 = vpop.f32.mrf.mxu0
        %v3237 = vadd.f32 0.0, %v3236
        %v3238 = vpop.f32.mrf.mxu0
        %v3239 = vadd.f32 0.0, %v3238
        %v3240 = vpop.f32.mrf.mxu0
        %v3241 = vadd.f32 0.0, %v3240
        %v3242 = vpop.f32.mrf.mxu0
        %v3243 = vadd.f32 0.0, %v3242
        %3244 = vmatprep.mubr.bf16.mxu0 %v3013
        %3245 = vmatmul.mubr.bf16.gmra.mxu0 %v3012
        %v3246 = vpop.f32.mrf.mxu0
        %v3247 = vadd.f32 0.0, %v3246
        %v3248 = vpop.f32.mrf.mxu0
        %v3249 = vadd.f32 0.0, %v3248
        %v3250 = vpop.f32.mrf.mxu0
        %v3251 = vadd.f32 0.0, %v3250
        %v3252 = vpop.f32.mrf.mxu0
        %v3253 = vadd.f32 0.0, %v3252
        %3254 = vdwg.mxu0
        %v3255 = vadd.f32 %v2877, %v3217
        %v3256 = vadd.f32 %v2878, %v3219
        %v3257 = vadd.f32 %v2879, %v3221
        %v3258 = vadd.f32 %v2880, %v3223
        %v3259 = vadd.f32 %v2881, %v3227
        %v3260 = vadd.f32 %v2882, %v3229
        %v3261 = vadd.f32 %v2883, %v3231
        %v3262 = vadd.f32 %v2884, %v3233
        %v3263 = vadd.f32 %v2885, %v3237
        %v3264 = vadd.f32 %v2886, %v3239
        %v3265 = vadd.f32 %v2887, %v3241
        %v3266 = vadd.f32 %v2888, %v3243
        %v3267 = vadd.f32 %v2889, %v3247
        %v3268 = vadd.f32 %v2890, %v3249
        %v3269 = vadd.f32 %v2891, %v3251
        %v3270 = vadd.f32 %v2892, %v3253
        %v3271 = vld [vmem:[%s2562] sm:$0xcc]
        %v3272 = vld [vmem:[%s2562 + $0x8] sm:$0x33]
        %v3273 = vld [vmem:[%s2562 + $0x10] sm:$0xcc]
        %v3274 = vld [vmem:[%s2562 + $0x18] sm:$0x33]
        %v3275 = vld [vmem:[%s2562 + $0x20] sm:$0xcc]
        %v3276 = vld [vmem:[%s2562 + $0x28] sm:$0x33]
        %v3277 = vld [vmem:[%s2562 + $0x30] sm:$0xcc]
        %v3278 = vld [vmem:[%s2562 + $0x38] sm:$0x33]
        %v3279 = vld [vmem:[%s2562 + $0x40] sm:$0xcc]
        %v3280 = vld [vmem:[%s2562 + $0x48] sm:$0x33]
        %v3281 = vld [vmem:[%s2562 + $0x50] sm:$0xcc]
        %v3282 = vld [vmem:[%s2562 + $0x58] sm:$0x33]
        %v3283 = vld [vmem:[%s2562 + $0x60] sm:$0xcc]
        %v3284 = vld [vmem:[%s2562 + $0x68] sm:$0x33]
        %v3285 = vld [vmem:[%s2562 + $0x70] sm:$0xcc]
        %v3286 = vld [vmem:[%s2562 + $0x78] sm:$0x33]
        %v3303 = vrot.slane %v3271, 6
        %v3304 = vrot.slane %v3303, 4
        %v3305 = vrot.slane %v3272, 6
        %v3306 = vsel %vm1128, %v3304, %v3305
        %v3307 = vrot.slane %v3273, 6
        %v3308 = vrot.slane %v3307, 4
        %v3309 = vrot.slane %v3274, 6
        %v3310 = vsel %vm1128, %v3308, %v3309
        %v3311 = vrot.slane %v3275, 6
        %v3312 = vrot.slane %v3311, 4
        %v3313 = vrot.slane %v3276, 6
        %v3314 = vsel %vm1128, %v3312, %v3313
        %v3315 = vrot.slane %v3277, 6
        %v3316 = vrot.slane %v3315, 4
        %v3317 = vrot.slane %v3278, 6
        %v3318 = vsel %vm1128, %v3316, %v3317
        %v3319 = vrot.slane %v3279, 6
        %v3320 = vrot.slane %v3319, 4
        %v3321 = vrot.slane %v3280, 6
        %v3322 = vsel %vm1128, %v3320, %v3321
        %v3323 = vrot.slane %v3281, 6
        %v3324 = vrot.slane %v3323, 4
        %v3325 = vrot.slane %v3282, 6
        %v3326 = vsel %vm1128, %v3324, %v3325
        %v3327 = vrot.slane %v3283, 6
        %v3328 = vrot.slane %v3327, 4
        %v3329 = vrot.slane %v3284, 6
        %v3330 = vsel %vm1128, %v3328, %v3329
        %v3331 = vrot.slane %v3285, 6
        %v3332 = vrot.slane %v3331, 4
        %v3333 = vrot.slane %v3286, 6
        %v3334 = vsel %vm1128, %v3332, %v3333
        %s3335 = scalar_lea.vmem [#allocation4], 2048
        %v3336 = vld [vmem:[%s3335] sm:$0xff]
        %v3337 = vld [vmem:[%s3335 + $0x8] sm:$0xff]
        %v3338 = vld [vmem:[%s3335 + $0x10] sm:$0xff]
        %v3339 = vld [vmem:[%s3335 + $0x18] sm:$0xff]
        %v3340 = vld [vmem:[%s3335 + $0x20] sm:$0xff]
        %v3341 = vld [vmem:[%s3335 + $0x28] sm:$0xff]
        %v3342 = vld [vmem:[%s3335 + $0x30] sm:$0xff]
        %v3343 = vld [vmem:[%s3335 + $0x38] sm:$0xff]
        %v3344 = vld [vmem:[%s3335 + $0x40] sm:$0xff]
        %v3345 = vld [vmem:[%s3335 + $0x48] sm:$0xff]
        %v3346 = vld [vmem:[%s3335 + $0x50] sm:$0xff]
        %v3347 = vld [vmem:[%s3335 + $0x58] sm:$0xff]
        %v3348 = vld [vmem:[%s3335 + $0x60] sm:$0xff]
        %v3349 = vld [vmem:[%s3335 + $0x68] sm:$0xff]
        %v3350 = vld [vmem:[%s3335 + $0x70] sm:$0xff]
        %v3351 = vld [vmem:[%s3335 + $0x78] sm:$0xff]
        %v3352 = vld [vmem:[%s3335 + $0x80] sm:$0xff]
        %v3353 = vld [vmem:[%s3335 + $0x88] sm:$0xff]
        %v3354 = vld [vmem:[%s3335 + $0x90] sm:$0xff]
        %v3355 = vld [vmem:[%s3335 + $0x98] sm:$0xff]
        %v3356 = vld [vmem:[%s3335 + $0xa0] sm:$0xff]
        %v3357 = vld [vmem:[%s3335 + $0xa8] sm:$0xff]
        %v3358 = vld [vmem:[%s3335 + $0xb0] sm:$0xff]
        %v3359 = vld [vmem:[%s3335 + $0xb8] sm:$0xff]
        %v3360 = vld [vmem:[%s3335 + $0xc0] sm:$0xff]
        %v3361 = vld [vmem:[%s3335 + $0xc8] sm:$0xff]
        %v3362 = vld [vmem:[%s3335 + $0xd0] sm:$0xff]
        %v3363 = vld [vmem:[%s3335 + $0xd8] sm:$0xff]
        %v3364 = vld [vmem:[%s3335 + $0xe0] sm:$0xff]
        %v3365 = vld [vmem:[%s3335 + $0xe8] sm:$0xff]
        %v3366 = vld [vmem:[%s3335 + $0xf0] sm:$0xff]
        %v3367 = vld [vmem:[%s3335 + $0xf8] sm:$0xff]
        %v3368 = vunpack.c.l.b16 %v3306
        %v3369 = vunpack.c.h.b16 %v3306
        %v3370 = vunpack.c.l.b16 %v3310
        %v3371 = vunpack.c.h.b16 %v3310
        %v3372 = vunpack.c.l.b16 %v3314
        %v3373 = vunpack.c.h.b16 %v3314
        %v3374 = vunpack.c.l.b16 %v3318
        %v3375 = vunpack.c.h.b16 %v3318
        %v3376 = vunpack.c.l.b16 %v3322
        %v3377 = vunpack.c.h.b16 %v3322
        %v3378 = vunpack.c.l.b16 %v3326
        %v3379 = vunpack.c.h.b16 %v3326
        %v3380 = vunpack.c.l.b16 %v3330
        %v3381 = vunpack.c.h.b16 %v3330
        %v3382 = vunpack.c.l.b16 %v3334
        %v3383 = vunpack.c.h.b16 %v3334
        %v3384 = vpack.c.b16 %v3370, %v3368
        %v3385 = vpack.c.b16 %v3371, %v3369
        %v3386 = vpack.c.b16 %v3374, %v3372
        %v3387 = vpack.c.b16 %v3375, %v3373
        %v3388 = vpack.c.b16 %v3378, %v3376
        %v3389 = vpack.c.b16 %v3379, %v3377
        %v3390 = vpack.c.b16 %v3382, %v3380
        %v3391 = vpack.c.b16 %v3383, %v3381
        %v3432 = vunpack.c.l.b16 %v3336
        %v3433 = vunpack.c.h.b16 %v3336
        %v3434 = vunpack.c.l.b16 %v3337
        %v3435 = vunpack.c.h.b16 %v3337
        %v3436 = vunpack.c.l.b16 %v3338
        %v3437 = vunpack.c.h.b16 %v3338
        %v3438 = vunpack.c.l.b16 %v3339
        %v3439 = vunpack.c.h.b16 %v3339
        %v3440 = vunpack.c.l.b16 %v3340
        %v3441 = vunpack.c.h.b16 %v3340
        %v3442 = vunpack.c.l.b16 %v3341
        %v3443 = vunpack.c.h.b16 %v3341
        %v3444 = vunpack.c.l.b16 %v3342
        %v3445 = vunpack.c.h.b16 %v3342
        %v3446 = vunpack.c.l.b16 %v3343
        %v3447 = vunpack.c.h.b16 %v3343
        %v3448 = vunpack.c.l.b16 %v3344
        %v3449 = vunpack.c.h.b16 %v3344
        %v3450 = vunpack.c.l.b16 %v3345
        %v3451 = vunpack.c.h.b16 %v3345
        %v3452 = vunpack.c.l.b16 %v3346
        %v3453 = vunpack.c.h.b16 %v3346
        %v3454 = vunpack.c.l.b16 %v3347
        %v3455 = vunpack.c.h.b16 %v3347
        %v3456 = vunpack.c.l.b16 %v3348
        %v3457 = vunpack.c.h.b16 %v3348
        %v3458 = vunpack.c.l.b16 %v3349
        %v3459 = vunpack.c.h.b16 %v3349
        %v3460 = vunpack.c.l.b16 %v3350
        %v3461 = vunpack.c.h.b16 %v3350
        %v3462 = vunpack.c.l.b16 %v3351
        %v3463 = vunpack.c.h.b16 %v3351
        %v3464 = vunpack.c.l.b16 %v3352
        %v3465 = vunpack.c.h.b16 %v3352
        %v3466 = vunpack.c.l.b16 %v3353
        %v3467 = vunpack.c.h.b16 %v3353
        %v3468 = vunpack.c.l.b16 %v3354
        %v3469 = vunpack.c.h.b16 %v3354
        %v3470 = vunpack.c.l.b16 %v3355
        %v3471 = vunpack.c.h.b16 %v3355
        %v3472 = vunpack.c.l.b16 %v3356
        %v3473 = vunpack.c.h.b16 %v3356
        %v3474 = vunpack.c.l.b16 %v3357
        %v3475 = vunpack.c.h.b16 %v3357
        %v3476 = vunpack.c.l.b16 %v3358
        %v3477 = vunpack.c.h.b16 %v3358
        %v3478 = vunpack.c.l.b16 %v3359
        %v3479 = vunpack.c.h.b16 %v3359
        %v3480 = vunpack.c.l.b16 %v3360
        %v3481 = vunpack.c.h.b16 %v3360
        %v3482 = vunpack.c.l.b16 %v3361
        %v3483 = vunpack.c.h.b16 %v3361
        %v3484 = vunpack.c.l.b16 %v3362
        %v3485 = vunpack.c.h.b16 %v3362
        %v3486 = vunpack.c.l.b16 %v3363
        %v3487 = vunpack.c.h.b16 %v3363
        %v3488 = vunpack.c.l.b16 %v3364
        %v3489 = vunpack.c.h.b16 %v3364
        %v3490 = vunpack.c.l.b16 %v3365
        %v3491 = vunpack.c.h.b16 %v3365
        %v3492 = vunpack.c.l.b16 %v3366
        %v3493 = vunpack.c.h.b16 %v3366
        %v3494 = vunpack.c.l.b16 %v3367
        %v3495 = vunpack.c.h.b16 %v3367
        %v3496 = vpack.c.b16 %v3434, %v3432
        %v3497 = vpack.c.b16 %v3435, %v3433
        %v3498 = vpack.c.b16 %v3438, %v3436
        %v3499 = vpack.c.b16 %v3439, %v3437
        %v3500 = vpack.c.b16 %v3442, %v3440
        %v3501 = vpack.c.b16 %v3443, %v3441
        %v3502 = vpack.c.b16 %v3446, %v3444
        %v3503 = vpack.c.b16 %v3447, %v3445
        %v3504 = vpack.c.b16 %v3450, %v3448
        %v3505 = vpack.c.b16 %v3451, %v3449
        %v3506 = vpack.c.b16 %v3454, %v3452
        %v3507 = vpack.c.b16 %v3455, %v3453
        %v3508 = vpack.c.b16 %v3458, %v3456
        %v3509 = vpack.c.b16 %v3459, %v3457
        %v3510 = vpack.c.b16 %v3462, %v3460
        %v3511 = vpack.c.b16 %v3463, %v3461
        %v3512 = vpack.c.b16 %v3466, %v3464
        %v3513 = vpack.c.b16 %v3467, %v3465
        %v3514 = vpack.c.b16 %v3470, %v3468
        %v3515 = vpack.c.b16 %v3471, %v3469
        %v3516 = vpack.c.b16 %v3474, %v3472
        %v3517 = vpack.c.b16 %v3475, %v3473
        %v3518 = vpack.c.b16 %v3478, %v3476
        %v3519 = vpack.c.b16 %v3479, %v3477
        %v3520 = vpack.c.b16 %v3482, %v3480
        %v3521 = vpack.c.b16 %v3483, %v3481
        %v3522 = vpack.c.b16 %v3486, %v3484
        %v3523 = vpack.c.b16 %v3487, %v3485
        %v3524 = vpack.c.b16 %v3490, %v3488
        %v3525 = vpack.c.b16 %v3491, %v3489
        %v3526 = vpack.c.b16 %v3494, %v3492
        %v3527 = vpack.c.b16 %v3495, %v3493
        %3560 = vmatprep.subr.bf16.mxu0 %v3511
        %3561 = vmatpush1.bf16.msra.mxu0 %v3510
        %3562 = vmatprep.subr.bf16.mxu0 %v3509
        %3563 = vmatpush1.bf16.msra.mxu0 %v3508
        %3564 = vmatprep.subr.bf16.mxu0 %v3507
        %3565 = vmatpush1.bf16.msra.mxu0 %v3506
        %3566 = vmatprep.subr.bf16.mxu0 %v3505
        %3567 = vmatpush1.bf16.msra.mxu0 %v3504
        %3568 = vmatprep.subr.bf16.mxu0 %v3503
        %3569 = vmatpush1.bf16.msra.mxu0 %v3502
        %3570 = vmatprep.subr.bf16.mxu0 %v3501
        %3571 = vmatpush1.bf16.msra.mxu0 %v3500
        %3572 = vmatprep.subr.bf16.mxu0 %v3499
        %3573 = vmatpush1.bf16.msra.mxu0 %v3498
        %3574 = vmatprep.subr.bf16.mxu0 %v3497
        %3575 = vmatpush1.bf16.msra.mxu0 %v3496
        %3576 = vmatprep.subr.bf16.mxu0 %v3527
        %3577 = vmatpush2.bf16.msra.mxu0 %v3526
        %3578 = vmatprep.subr.bf16.mxu0 %v3525
        %3579 = vmatpush2.bf16.msra.mxu0 %v3524
        %3580 = vmatprep.subr.bf16.mxu0 %v3523
        %3581 = vmatpush2.bf16.msra.mxu0 %v3522
        %3582 = vmatprep.subr.bf16.mxu0 %v3521
        %3583 = vmatpush2.bf16.msra.mxu0 %v3520
        %3584 = vmatprep.subr.bf16.mxu0 %v3519
        %3585 = vmatpush2.bf16.msra.mxu0 %v3518
        %3586 = vmatprep.subr.bf16.mxu0 %v3517
        %3587 = vmatpush2.bf16.msra.mxu0 %v3516
        %3588 = vmatprep.subr.bf16.mxu0 %v3515
        %3589 = vmatpush2.bf16.msra.mxu0 %v3514
        %3590 = vmatprep.subr.bf16.mxu0 %v3513
        %3591 = vmatpush2.bf16.msra.mxu0 %v3512
        %3592 = vmatprep.mubr.bf16.mxu0 %v3385
        %3593 = vmatmul.mubr.bf16.gmra.mxu0 %v3384
        %v3594 = vpop.f32.mrf.mxu0
        %v3595 = vadd.f32 0.0, %v3594
        %v3596 = vpop.f32.mrf.mxu0
        %v3597 = vadd.f32 0.0, %v3596
        %v3598 = vpop.f32.mrf.mxu0
        %v3599 = vadd.f32 0.0, %v3598
        %v3600 = vpop.f32.mrf.mxu0
        %v3601 = vadd.f32 0.0, %v3600
        %3602 = vmatprep.mubr.bf16.mxu0 %v3387
        %3603 = vmatmul.mubr.bf16.gmra.mxu0 %v3386
        %v3604 = vpop.f32.mrf.mxu0
        %v3605 = vadd.f32 0.0, %v3604
        %v3606 = vpop.f32.mrf.mxu0
        %v3607 = vadd.f32 0.0, %v3606
        %v3608 = vpop.f32.mrf.mxu0
        %v3609 = vadd.f32 0.0, %v3608
        %v3610 = vpop.f32.mrf.mxu0
        %v3611 = vadd.f32 0.0, %v3610
        %3612 = vmatprep.mubr.bf16.mxu0 %v3389
        %3613 = vmatmul.mubr.bf16.gmra.mxu0 %v3388
        %v3614 = vpop.f32.mrf.mxu0
        %v3615 = vadd.f32 0.0, %v3614
        %v3616 = vpop.f32.mrf.mxu0
        %v3617 = vadd.f32 0.0, %v3616
        %v3618 = vpop.f32.mrf.mxu0
        %v3619 = vadd.f32 0.0, %v3618
        %v3620 = vpop.f32.mrf.mxu0
        %v3621 = vadd.f32 0.0, %v3620
        %3622 = vmatprep.mubr.bf16.mxu0 %v3391
        %3623 = vmatmul.mubr.bf16.gmra.mxu0 %v3390
        %v3624 = vpop.f32.mrf.mxu0
        %v3625 = vadd.f32 0.0, %v3624
        %v3626 = vpop.f32.mrf.mxu0
        %v3627 = vadd.f32 0.0, %v3626
        %v3628 = vpop.f32.mrf.mxu0
        %v3629 = vadd.f32 0.0, %v3628
        %v3630 = vpop.f32.mrf.mxu0
        %v3631 = vadd.f32 0.0, %v3630
        %3632 = vdwg.mxu0
        %v3633 = vadd.f32 %v3255, %v3595
        %v3634 = vadd.f32 %v3256, %v3597
        %v3635 = vadd.f32 %v3257, %v3599
        %v3636 = vadd.f32 %v3258, %v3601
        %v3637 = vadd.f32 %v3259, %v3605
        %v3638 = vadd.f32 %v3260, %v3607
        %v3639 = vadd.f32 %v3261, %v3609
        %v3640 = vadd.f32 %v3262, %v3611
        %v3641 = vadd.f32 %v3263, %v3615
        %v3642 = vadd.f32 %v3264, %v3617
        %v3643 = vadd.f32 %v3265, %v3619
        %v3644 = vadd.f32 %v3266, %v3621
        %v3645 = vadd.f32 %v3267, %v3625
        %v3646 = vadd.f32 %v3268, %v3627
        %v3647 = vadd.f32 %v3269, %v3629
        %v3648 = vadd.f32 %v3270, %v3631
        %v3649 = vadd.f32 %v3633, %v3635
        %v3650 = vadd.f32 %v3649, %v3637
        %v3651 = vadd.f32 %v3650, %v3639
        %v3652 = vadd.f32 %v3651, %v3641
        %v3653 = vadd.f32 %v3652, %v3643
        %v3654 = vadd.f32 %v3653, %v3645
        %v3655 = vadd.f32 %v3654, %v3647
        %v3656 = vrot.slane %v3655, 4
        %v3657 = vadd.f32 %v3655, %v3656
        %v3658 = vrot.slane %v3657, 2
        %v3659 = vadd.f32 %v3657, %v3658
        %v3660 = vrot.slane %v3659, 1
        %v3661 = vadd.f32 %v3659, %v3660
        %v3662 = vadd.f32 %v3634, %v3636
        %v3663 = vadd.f32 %v3662, %v3638
        %v3664 = vadd.f32 %v3663, %v3640
        %v3665 = vadd.f32 %v3664, %v3642
        %v3666 = vadd.f32 %v3665, %v3644
        %v3667 = vadd.f32 %v3666, %v3646
        %v3668 = vadd.f32 %v3667, %v3648
        %v3669 = vrot.slane %v3668, 4
        %v3670 = vadd.f32 %v3668, %v3669
        %v3671 = vrot.slane %v3670, 2
        %v3672 = vadd.f32 %v3670, %v3671
        %v3673 = vrot.slane %v3672, 1
        %v3674 = vadd.f32 %v3672, %v3673
        %v3675 = vmul.f32 %v3661, 0.015625
        %v3676 = vmul.f32 %v3674, 0.015625
        %v3677 = vmul.f32 %v3633, %v3633
        %v3678 = vmul.f32 %v3634, %v3634
        %v3679 = vmul.f32 %v3635, %v3635
        %v3680 = vmul.f32 %v3636, %v3636
        %v3681 = vmul.f32 %v3637, %v3637
        %v3682 = vmul.f32 %v3638, %v3638
        %v3683 = vmul.f32 %v3639, %v3639
        %v3684 = vmul.f32 %v3640, %v3640
        %v3685 = vmul.f32 %v3641, %v3641
        %v3686 = vmul.f32 %v3642, %v3642
        %v3687 = vmul.f32 %v3643, %v3643
        %v3688 = vmul.f32 %v3644, %v3644
        %v3689 = vmul.f32 %v3645, %v3645
        %v3690 = vmul.f32 %v3646, %v3646
        %v3691 = vmul.f32 %v3647, %v3647
        %v3692 = vmul.f32 %v3648, %v3648
        %v3693 = vadd.f32 %v3677, %v3679
        %v3694 = vadd.f32 %v3693, %v3681
        %v3695 = vadd.f32 %v3694, %v3683
        %v3696 = vadd.f32 %v3695, %v3685
        %v3697 = vadd.f32 %v3696, %v3687
        %v3698 = vadd.f32 %v3697, %v3689
        %v3699 = vadd.f32 %v3698, %v3691
        %v3700 = vrot.slane %v3699, 4
        %v3701 = vadd.f32 %v3699, %v3700
        %v3702 = vrot.slane %v3701, 2
        %v3703 = vadd.f32 %v3701, %v3702
        %v3704 = vrot.slane %v3703, 1
        %v3705 = vadd.f32 %v3703, %v3704
        %v3706 = vadd.f32 %v3678, %v3680
        %v3707 = vadd.f32 %v3706, %v3682
        %v3708 = vadd.f32 %v3707, %v3684
        %v3709 = vadd.f32 %v3708, %v3686
        %v3710 = vadd.f32 %v3709, %v3688
        %v3711 = vadd.f32 %v3710, %v3690
        %v3712 = vadd.f32 %v3711, %v3692
        %v3713 = vrot.slane %v3712, 4
        %v3714 = vadd.f32 %v3712, %v3713
        %v3715 = vrot.slane %v3714, 2
        %v3716 = vadd.f32 %v3714, %v3715
        %v3717 = vrot.slane %v3716, 1
        %v3718 = vadd.f32 %v3716, %v3717
        %v3719 = vmul.f32 %v3705, 0.015625
        %v3720 = vmul.f32 %v3718, 0.015625
        %v3721 = vmul.f32 %v3675, %v3675
        %v3722 = vmul.f32 %v3676, %v3676
        %v3723 = vsub.f32 %v3719, %v3721
        %v3724 = vsub.f32 %v3720, %v3722
        %v3725 = vsub.f32 %v3633, %v3675
        %v3726 = vsub.f32 %v3634, %v3676
        %v3727 = vsub.f32 %v3635, %v3675
        %v3728 = vsub.f32 %v3636, %v3676
        %v3729 = vsub.f32 %v3637, %v3675
        %v3730 = vsub.f32 %v3638, %v3676
        %v3731 = vsub.f32 %v3639, %v3675
        %v3732 = vsub.f32 %v3640, %v3676
        %v3733 = vsub.f32 %v3641, %v3675
        %v3734 = vsub.f32 %v3642, %v3676
        %v3735 = vsub.f32 %v3643, %v3675
        %v3736 = vsub.f32 %v3644, %v3676
        %v3737 = vsub.f32 %v3645, %v3675
        %v3738 = vsub.f32 %v3646, %v3676
        %v3739 = vsub.f32 %v3647, %v3675
        %v3740 = vsub.f32 %v3648, %v3676
        %v3741 = vadd.f32 %v3723, 1e-05
        %v3742 = vadd.f32 %v3724, 1e-05
        %v3743 = vrsqrt.pop %v3741
        %v3744 = vrsqrt.pop %v3742
        %v3745 = vmul.f32 %v3725, %v3743
        %v3746 = vmul.f32 %v3726, %v3744
        %v3747 = vmul.f32 %v3727, %v3743
        %v3748 = vmul.f32 %v3728, %v3744
        %v3749 = vmul.f32 %v3729, %v3743
        %v3750 = vmul.f32 %v3730, %v3744
        %v3751 = vmul.f32 %v3731, %v3743
        %v3752 = vmul.f32 %v3732, %v3744
        %v3753 = vmul.f32 %v3733, %v3743
        %v3754 = vmul.f32 %v3734, %v3744
        %v3755 = vmul.f32 %v3735, %v3743
        %v3756 = vmul.f32 %v3736, %v3744
        %v3757 = vmul.f32 %v3737, %v3743
        %v3758 = vmul.f32 %v3738, %v3744
        %v3759 = vmul.f32 %v3739, %v3743
        %v3760 = vmul.f32 %v3740, %v3744
        %v3761 = vmax.f32 %v3745, 0.0
        %v3762 = vmax.f32 %v3746, 0.0
        %v3763 = vmax.f32 %v3747, 0.0
        %v3764 = vmax.f32 %v3748, 0.0
        %v3765 = vmax.f32 %v3749, 0.0
        %v3766 = vmax.f32 %v3750, 0.0
        %v3767 = vmax.f32 %v3751, 0.0
        %v3768 = vmax.f32 %v3752, 0.0
        %v3769 = vmax.f32 %v3753, 0.0
        %v3770 = vmax.f32 %v3754, 0.0
        %v3771 = vmax.f32 %v3755, 0.0
        %v3772 = vmax.f32 %v3756, 0.0
        %v3773 = vmax.f32 %v3757, 0.0
        %v3774 = vmax.f32 %v3758, 0.0
        %v3775 = vmax.f32 %v3759, 0.0
        %v3776 = vmax.f32 %v3760, 0.0
        %v3777 = vpack.c.bf16 %v3763, %v3761
        %v3778 = vpack.c.bf16 %v3764, %v3762
        %v3779 = vpack.c.bf16 %v3767, %v3765
        %v3780 = vpack.c.bf16 %v3768, %v3766
        %v3781 = vpack.c.bf16 %v3771, %v3769
        %v3782 = vpack.c.bf16 %v3772, %v3770
        %v3783 = vpack.c.bf16 %v3775, %v3773
        %v3784 = vpack.c.bf16 %v3776, %v3774
        %v3793 = vunpack.c.l.b16 %v3777
        %v3794 = vunpack.c.l.b16 %v3778
        %v3795 = vunpack.c.h.b16 %v3777
        %v3796 = vunpack.c.h.b16 %v3778
        %v3797 = vunpack.c.l.b16 %v3779
        %v3798 = vunpack.c.l.b16 %v3780
        %v3799 = vunpack.c.h.b16 %v3779
        %v3800 = vunpack.c.h.b16 %v3780
        %v3801 = vunpack.c.l.b16 %v3781
        %v3802 = vunpack.c.l.b16 %v3782
        %v3803 = vunpack.c.h.b16 %v3781
        %v3804 = vunpack.c.h.b16 %v3782
        %v3805 = vunpack.c.l.b16 %v3783
        %v3806 = vunpack.c.l.b16 %v3784
        %v3807 = vunpack.c.h.b16 %v3783
        %v3808 = vunpack.c.h.b16 %v3784
        %v3809 = vpack.c.b16 %v3794, %v3793
        %v3810 = vpack.c.b16 %v3796, %v3795
        %v3811 = vpack.c.b16 %v3798, %v3797
        %v3812 = vpack.c.b16 %v3800, %v3799
        %v3813 = vpack.c.b16 %v3802, %v3801
        %v3814 = vpack.c.b16 %v3804, %v3803
        %v3815 = vpack.c.b16 %v3806, %v3805
        %v3816 = vpack.c.b16 %v3808, %v3807
        %v3818 = vshrl.u32 %v3809, 16
        %v3820 = vrot.slane %v3818, 7
        %v3821 = vshll.u32 %v3809, 16
        %v3823 = vor.u32 %v3820, %v3821
        %v3824 = vrot.slane %v3820, 4
        %v3826 = vshrl.u32 %v3810, 16
        %v3828 = vrot.slane %v3826, 7
        %v3829 = vshll.u32 %v3810, 16
        %v3831 = vor.u32 %v3828, %v3829
        %v3832 = vrot.slane %v3828, 4
        %v3834 = vshrl.u32 %v3811, 16
        %v3836 = vrot.slane %v3834, 7
        %v3837 = vshll.u32 %v3811, 16
        %v3839 = vor.u32 %v3836, %v3837
        %v3840 = vrot.slane %v3836, 4
        %v3842 = vshrl.u32 %v3812, 16
        %v3844 = vrot.slane %v3842, 7
        %v3845 = vshll.u32 %v3812, 16
        %v3847 = vor.u32 %v3844, %v3845
        %v3848 = vrot.slane %v3844, 4
        %v3850 = vshrl.u32 %v3813, 16
        %v3852 = vrot.slane %v3850, 7
        %v3853 = vshll.u32 %v3813, 16
        %v3855 = vor.u32 %v3852, %v3853
        %v3856 = vrot.slane %v3852, 4
        %v3858 = vshrl.u32 %v3814, 16
        %v3860 = vrot.slane %v3858, 7
        %v3861 = vshll.u32 %v3814, 16
        %v3863 = vor.u32 %v3860, %v3861
        %v3864 = vrot.slane %v3860, 4
        %v3866 = vshrl.u32 %v3815, 16
        %v3868 = vrot.slane %v3866, 7
        %v3869 = vshll.u32 %v3815, 16
        %v3871 = vor.u32 %v3868, %v3869
        %v3872 = vrot.slane %v3868, 4
        %v3874 = vshrl.u32 %v3816, 16
        %v3876 = vrot.slane %v3874, 7
        %v3877 = vshll.u32 %v3816, 16
        %v3879 = vor.u32 %v3876, %v3877
        %v3880 = vrot.slane %v3876, 4
        %s3897 = scalar_lea.vmem [#allocation3], 16
        %vm3898 = vcmask 1043456
        %vm3899 = vsmask.f32 7938
        %vm3900 = vmand %vm3898, %vm3899
        %vm3901 = vcmask 1047556
        %vm3902 = vsmask.f32 7954
        %vm3903 = vmand %vm3901, %vm3902
        %vm3904 = vmor %vm3903, %vm3900
        %v3905 = vld [vmem:[%s3897] sm:$0xff]
        %v3906 = vsel %vm3904, %v3823, %v3905
        %3907 = vst [vmem:[%s3897] sm:$0xff] %v3906
        %vm3908 = vcmask 1040384
        %vm3909 = vsmask.f32 256
        %vm3910 = vmand %vm3908, %vm3909
        %vm3911 = vcmask 1044484
        %vm3912 = vsmask.f32 4352
        %vm3913 = vmand %vm3911, %vm3912
        %vm3914 = vmor %vm3913, %vm3910
        %v3915 = vld [vmem:[%s3897 + $0x8] sm:$0x11]
        %v3916 = vsel %vm3914, %v3824, %v3915
        %3917 = vst [vmem:[%s3897 + $0x8] sm:$0x11] %v3916
        %v3918 = vld [vmem:[%s3897 + $0x10] sm:$0xff]
        %v3919 = vsel %vm3904, %v3831, %v3918
        %3920 = vst [vmem:[%s3897 + $0x10] sm:$0xff] %v3919
        %v3921 = vld [vmem:[%s3897 + $0x18] sm:$0x11]
        %v3922 = vsel %vm3914, %v3832, %v3921
        %3923 = vst [vmem:[%s3897 + $0x18] sm:$0x11] %v3922
        %v3924 = vld [vmem:[%s3897 + $0x20] sm:$0xff]
        %v3925 = vsel %vm3904, %v3839, %v3924
        %3926 = vst [vmem:[%s3897 + $0x20] sm:$0xff] %v3925
        %v3927 = vld [vmem:[%s3897 + $0x28] sm:$0x11]
        %v3928 = vsel %vm3914, %v3840, %v3927
        %3929 = vst [vmem:[%s3897 + $0x28] sm:$0x11] %v3928
        %v3930 = vld [vmem:[%s3897 + $0x30] sm:$0xff]
        %v3931 = vsel %vm3904, %v3847, %v3930
        %3932 = vst [vmem:[%s3897 + $0x30] sm:$0xff] %v3931
        %v3933 = vld [vmem:[%s3897 + $0x38] sm:$0x11]
        %v3934 = vsel %vm3914, %v3848, %v3933
        %3935 = vst [vmem:[%s3897 + $0x38] sm:$0x11] %v3934
        %v3936 = vld [vmem:[%s3897 + $0x40] sm:$0xff]
        %v3937 = vsel %vm3904, %v3855, %v3936
        %3938 = vst [vmem:[%s3897 + $0x40] sm:$0xff] %v3937
        %v3939 = vld [vmem:[%s3897 + $0x48] sm:$0x11]
        %v3940 = vsel %vm3914, %v3856, %v3939
        %3941 = vst [vmem:[%s3897 + $0x48] sm:$0x11] %v3940
        %v3942 = vld [vmem:[%s3897 + $0x50] sm:$0xff]
        %v3943 = vsel %vm3904, %v3863, %v3942
        %3944 = vst [vmem:[%s3897 + $0x50] sm:$0xff] %v3943
        %v3945 = vld [vmem:[%s3897 + $0x58] sm:$0x11]
        %v3946 = vsel %vm3914, %v3864, %v3945
        %3947 = vst [vmem:[%s3897 + $0x58] sm:$0x11] %v3946
        %v3948 = vld [vmem:[%s3897 + $0x60] sm:$0xff]
        %v3949 = vsel %vm3904, %v3871, %v3948
        %3950 = vst [vmem:[%s3897 + $0x60] sm:$0xff] %v3949
        %v3951 = vld [vmem:[%s3897 + $0x68] sm:$0x11]
        %v3952 = vsel %vm3914, %v3872, %v3951
        %3953 = vst [vmem:[%s3897 + $0x68] sm:$0x11] %v3952
        %v3954 = vld [vmem:[%s3897 + $0x70] sm:$0xff]
        %v3955 = vsel %vm3904, %v3879, %v3954
        %3956 = vst [vmem:[%s3897 + $0x70] sm:$0xff] %v3955
        %v3957 = vld [vmem:[%s3897 + $0x78] sm:$0x11]
        %v3958 = vsel %vm3914, %v3880, %v3957
        %3959 = vst [vmem:[%s3897 + $0x78] sm:$0x11] %v3958
        %3960 = vst [vmem:[#allocation3] sm:$0xff] 0
        %3961 = vst [vmem:[#allocation3 + $0x8] sm:$0x11] 0
        %s3962 = scalar_lea.vmem [#allocation3], 144
        %3963 = vst [vmem:[%s3962] sm:$0xff] 0
        %3964 = vst [vmem:[%s3962 + $0x8] sm:$0x11] 0
        %v3965 = vld [vmem:[#allocation3] sm:$0x11]
        %v3966 = vsel %vm3914, 0, %v3965
        %3967 = vst [vmem:[#allocation3] sm:$0x11] %v3966
        %v3968 = vld [vmem:[#allocation3 + $0x10] sm:$0x11]
        %v3969 = vsel %vm3914, 0, %v3968
        %3970 = vst [vmem:[#allocation3 + $0x10] sm:$0x11] %v3969
        %v3971 = vld [vmem:[#allocation3 + $0x20] sm:$0x11]
        %v3972 = vsel %vm3914, 0, %v3971
        %3973 = vst [vmem:[#allocation3 + $0x20] sm:$0x11] %v3972
        %v3974 = vld [vmem:[#allocation3 + $0x30] sm:$0x11]
        %v3975 = vsel %vm3914, 0, %v3974
        %3976 = vst [vmem:[#allocation3 + $0x30] sm:$0x11] %v3975
        %v3977 = vld [vmem:[#allocation3 + $0x40] sm:$0x11]
        %v3978 = vsel %vm3914, 0, %v3977
        %3979 = vst [vmem:[#allocation3 + $0x40] sm:$0x11] %v3978
        %v3980 = vld [vmem:[#allocation3 + $0x50] sm:$0x11]
        %v3981 = vsel %vm3914, 0, %v3980
        %3982 = vst [vmem:[#allocation3 + $0x50] sm:$0x11] %v3981
        %v3983 = vld [vmem:[#allocation3 + $0x60] sm:$0x11]
        %v3984 = vsel %vm3914, 0, %v3983
        %3985 = vst [vmem:[#allocation3 + $0x60] sm:$0x11] %v3984
        %v3986 = vld [vmem:[#allocation3 + $0x70] sm:$0x11]
        %v3987 = vsel %vm3914, 0, %v3986
        %3988 = vst [vmem:[#allocation3 + $0x70] sm:$0x11] %v3987
        %v3989 = vld [vmem:[#allocation3 + $0x80] sm:$0x11]
        %v3990 = vsel %vm3914, 0, %v3989
        %3991 = vst [vmem:[#allocation3 + $0x80] sm:$0x11] %v3990
        %v3992 = vld [vmem:[#allocation3 + $0x90] sm:$0x11]
        %v3993 = vsel %vm3914, 0, %v3992
        %3994 = vst [vmem:[#allocation3 + $0x90] sm:$0x11] %v3993
        %vm3995 = vmand %vm3908, %vm3899
        %vm3996 = vmand %vm3911, %vm3902
        %vm3997 = vmor %vm3996, %vm3995
        %v3998 = vld [vmem:[#allocation3 + $0x8] sm:$0x11]
        %v3999 = vsel %vm3997, 0, %v3998
        %4000 = vst [vmem:[#allocation3 + $0x8] sm:$0x11] %v3999
        %v4001 = vld [vmem:[#allocation3 + $0x18] sm:$0x11]
        %v4002 = vsel %vm3997, 0, %v4001
        %4003 = vst [vmem:[#allocation3 + $0x18] sm:$0x11] %v4002
        %v4004 = vld [vmem:[#allocation3 + $0x28] sm:$0x11]
        %v4005 = vsel %vm3997, 0, %v4004
        %4006 = vst [vmem:[#allocation3 + $0x28] sm:$0x11] %v4005
        %v4007 = vld [vmem:[#allocation3 + $0x38] sm:$0x11]
        %v4008 = vsel %vm3997, 0, %v4007
        %4009 = vst [vmem:[#allocation3 + $0x38] sm:$0x11] %v4008
        %v4010 = vld [vmem:[#allocation3 + $0x48] sm:$0x11]
        %v4011 = vsel %vm3997, 0, %v4010
        %4012 = vst [vmem:[#allocation3 + $0x48] sm:$0x11] %v4011
        %v4013 = vld [vmem:[#allocation3 + $0x58] sm:$0x11]
        %v4014 = vsel %vm3997, 0, %v4013
        %4015 = vst [vmem:[#allocation3 + $0x58] sm:$0x11] %v4014
        %v4016 = vld [vmem:[#allocation3 + $0x68] sm:$0x11]
        %v4017 = vsel %vm3997, 0, %v4016
        %4018 = vst [vmem:[#allocation3 + $0x68] sm:$0x11] %v4017
        %v4019 = vld [vmem:[#allocation3 + $0x78] sm:$0x11]
        %v4020 = vsel %vm3997, 0, %v4019
        %4021 = vst [vmem:[#allocation3 + $0x78] sm:$0x11] %v4020
        %v4022 = vld [vmem:[#allocation3 + $0x88] sm:$0x11]
        %v4023 = vsel %vm3997, 0, %v4022
        %4024 = vst [vmem:[#allocation3 + $0x88] sm:$0x11] %v4023
        %v4025 = vld [vmem:[#allocation3 + $0x98] sm:$0x11]
        %v4026 = vsel %vm3997, 0, %v4025
        %4027 = vst [vmem:[#allocation3 + $0x98] sm:$0x11] %v4026
        %v4028 = vld [vmem:[#allocation3] sm:$0xff]
        %v4029 = vld [vmem:[#allocation3 + $0x10] sm:$0xff]
        %v4030 = vld [vmem:[#allocation3 + $0x20] sm:$0xff]
        %v4031 = vld [vmem:[#allocation3 + $0x30] sm:$0xff]
        %v4032 = vld [vmem:[#allocation3 + $0x40] sm:$0xff]
        %v4033 = vld [vmem:[#allocation3 + $0x50] sm:$0xff]
        %v4034 = vld [vmem:[#allocation3 + $0x60] sm:$0xff]
        %v4035 = vld [vmem:[#allocation3 + $0x70] sm:$0xff]
        %v4036 = vld [vmem:[#allocation7] sm:$0xff]
        %v4037 = vld [vmem:[#allocation7 + $0x8] sm:$0xff]
        %v4038 = vld [vmem:[#allocation7 + $0x10] sm:$0xff]
        %v4039 = vld [vmem:[#allocation7 + $0x18] sm:$0xff]
        %v4040 = vld [vmem:[#allocation7 + $0x20] sm:$0xff]
        %v4041 = vld [vmem:[#allocation7 + $0x28] sm:$0xff]
        %v4042 = vld [vmem:[#allocation7 + $0x30] sm:$0xff]
        %v4043 = vld [vmem:[#allocation7 + $0x38] sm:$0xff]
        %v4044 = vld [vmem:[#allocation7 + $0x40] sm:$0xff]
        %v4045 = vld [vmem:[#allocation7 + $0x48] sm:$0xff]
        %v4046 = vld [vmem:[#allocation7 + $0x50] sm:$0xff]
        %v4047 = vld [vmem:[#allocation7 + $0x58] sm:$0xff]
        %v4048 = vld [vmem:[#allocation7 + $0x60] sm:$0xff]
        %v4049 = vld [vmem:[#allocation7 + $0x68] sm:$0xff]
        %v4050 = vld [vmem:[#allocation7 + $0x70] sm:$0xff]
        %v4051 = vld [vmem:[#allocation7 + $0x78] sm:$0xff]
        %v4052 = vld [vmem:[#allocation7 + $0x80] sm:$0xff]
        %v4053 = vld [vmem:[#allocation7 + $0x88] sm:$0xff]
        %v4054 = vld [vmem:[#allocation7 + $0x90] sm:$0xff]
        %v4055 = vld [vmem:[#allocation7 + $0x98] sm:$0xff]
        %v4056 = vld [vmem:[#allocation7 + $0xa0] sm:$0xff]
        %v4057 = vld [vmem:[#allocation7 + $0xa8] sm:$0xff]
        %v4058 = vld [vmem:[#allocation7 + $0xb0] sm:$0xff]
        %v4059 = vld [vmem:[#allocation7 + $0xb8] sm:$0xff]
        %v4060 = vld [vmem:[#allocation7 + $0xc0] sm:$0xff]
        %v4061 = vld [vmem:[#allocation7 + $0xc8] sm:$0xff]
        %v4062 = vld [vmem:[#allocation7 + $0xd0] sm:$0xff]
        %v4063 = vld [vmem:[#allocation7 + $0xd8] sm:$0xff]
        %v4064 = vld [vmem:[#allocation7 + $0xe0] sm:$0xff]
        %v4065 = vld [vmem:[#allocation7 + $0xe8] sm:$0xff]
        %v4066 = vld [vmem:[#allocation7 + $0xf0] sm:$0xff]
        %v4067 = vld [vmem:[#allocation7 + $0xf8] sm:$0xff]
        %v4068 = vld [vmem:[#allocation3 + $0x8] sm:$0x11]
        %v4069 = vld [vmem:[#allocation3 + $0x18] sm:$0x11]
        %v4070 = vld [vmem:[#allocation3 + $0x28] sm:$0x11]
        %v4071 = vld [vmem:[#allocation3 + $0x38] sm:$0x11]
        %v4072 = vld [vmem:[#allocation3 + $0x48] sm:$0x11]
        %v4073 = vld [vmem:[#allocation3 + $0x58] sm:$0x11]
        %v4074 = vld [vmem:[#allocation3 + $0x68] sm:$0x11]
        %v4075 = vld [vmem:[#allocation3 + $0x78] sm:$0x11]
        %vm4076 = vsmask.f32 3328
        %vm4077 = vsmask.f32 7440
        %vm4078 = vmor %vm4076, %vm4077
        %v4080 = vshrl.u32 %v4028, 16
        %v4082 = vrot.slane %v4080, 4
        %v4083 = vshll.u32 %v4028, 16
        %v4085 = vrot.slane %v4083, 5
        %v4086 = vor.u32 %v4082, %v4085
        %v4087 = vrot.slane %v4086, 4
        %v4089 = vshll.u32 %v4068, 16
        %v4091 = vrot.slane %v4089, 5
        %v4092 = vsel %vm4078, %v4087, %v4091
        %v4094 = vshrl.u32 %v4029, 16
        %v4096 = vrot.slane %v4094, 4
        %v4097 = vshll.u32 %v4029, 16
        %v4099 = vrot.slane %v4097, 5
        %v4100 = vor.u32 %v4096, %v4099
        %v4101 = vrot.slane %v4100, 4
        %v4103 = vshll.u32 %v4069, 16
        %v4105 = vrot.slane %v4103, 5
        %v4106 = vsel %vm4078, %v4101, %v4105
        %v4108 = vshrl.u32 %v4030, 16
        %v4110 = vrot.slane %v4108, 4
        %v4111 = vshll.u32 %v4030, 16
        %v4113 = vrot.slane %v4111, 5
        %v4114 = vor.u32 %v4110, %v4113
        %v4115 = vrot.slane %v4114, 4
        %v4117 = vshll.u32 %v4070, 16
        %v4119 = vrot.slane %v4117, 5
        %v4120 = vsel %vm4078, %v4115, %v4119
        %v4122 = vshrl.u32 %v4031, 16
        %v4124 = vrot.slane %v4122, 4
        %v4125 = vshll.u32 %v4031, 16
        %v4127 = vrot.slane %v4125, 5
        %v4128 = vor.u32 %v4124, %v4127
        %v4129 = vrot.slane %v4128, 4
        %v4131 = vshll.u32 %v4071, 16
        %v4133 = vrot.slane %v4131, 5
        %v4134 = vsel %vm4078, %v4129, %v4133
        %v4136 = vshrl.u32 %v4032, 16
        %v4138 = vrot.slane %v4136, 4
        %v4139 = vshll.u32 %v4032, 16
        %v4141 = vrot.slane %v4139, 5
        %v4142 = vor.u32 %v4138, %v4141
        %v4143 = vrot.slane %v4142, 4
        %v4145 = vshll.u32 %v4072, 16
        %v4147 = vrot.slane %v4145, 5
        %v4148 = vsel %vm4078, %v4143, %v4147
        %v4150 = vshrl.u32 %v4033, 16
        %v4152 = vrot.slane %v4150, 4
        %v4153 = vshll.u32 %v4033, 16
        %v4155 = vrot.slane %v4153, 5
        %v4156 = vor.u32 %v4152, %v4155
        %v4157 = vrot.slane %v4156, 4
        %v4159 = vshll.u32 %v4073, 16
        %v4161 = vrot.slane %v4159, 5
        %v4162 = vsel %vm4078, %v4157, %v4161
        %v4164 = vshrl.u32 %v4034, 16
        %v4166 = vrot.slane %v4164, 4
        %v4167 = vshll.u32 %v4034, 16
        %v4169 = vrot.slane %v4167, 5
        %v4170 = vor.u32 %v4166, %v4169
        %v4171 = vrot.slane %v4170, 4
        %v4173 = vshll.u32 %v4074, 16
        %v4175 = vrot.slane %v4173, 5
        %v4176 = vsel %vm4078, %v4171, %v4175
        %v4178 = vshrl.u32 %v4035, 16
        %v4180 = vrot.slane %v4178, 4
        %v4181 = vshll.u32 %v4035, 16
        %v4183 = vrot.slane %v4181, 5
        %v4184 = vor.u32 %v4180, %v4183
        %v4185 = vrot.slane %v4184, 4
        %v4187 = vshll.u32 %v4075, 16
        %v4189 = vrot.slane %v4187, 5
        %v4190 = vsel %vm4078, %v4185, %v4189
        %s4191 = scalar_lea.vmem [#allocation7], 256
        %v4192 = vld [vmem:[%s4191] sm:$0xff]
        %v4193 = vld [vmem:[%s4191 + $0x8] sm:$0xff]
        %v4194 = vld [vmem:[%s4191 + $0x10] sm:$0xff]
        %v4195 = vld [vmem:[%s4191 + $0x18] sm:$0xff]
        %v4196 = vld [vmem:[%s4191 + $0x20] sm:$0xff]
        %v4197 = vld [vmem:[%s4191 + $0x28] sm:$0xff]
        %v4198 = vld [vmem:[%s4191 + $0x30] sm:$0xff]
        %v4199 = vld [vmem:[%s4191 + $0x38] sm:$0xff]
        %v4200 = vld [vmem:[%s4191 + $0x40] sm:$0xff]
        %v4201 = vld [vmem:[%s4191 + $0x48] sm:$0xff]
        %v4202 = vld [vmem:[%s4191 + $0x50] sm:$0xff]
        %v4203 = vld [vmem:[%s4191 + $0x58] sm:$0xff]
        %v4204 = vld [vmem:[%s4191 + $0x60] sm:$0xff]
        %v4205 = vld [vmem:[%s4191 + $0x68] sm:$0xff]
        %v4206 = vld [vmem:[%s4191 + $0x70] sm:$0xff]
        %v4207 = vld [vmem:[%s4191 + $0x78] sm:$0xff]
        %v4208 = vld [vmem:[%s4191 + $0x80] sm:$0xff]
        %v4209 = vld [vmem:[%s4191 + $0x88] sm:$0xff]
        %v4210 = vld [vmem:[%s4191 + $0x90] sm:$0xff]
        %v4211 = vld [vmem:[%s4191 + $0x98] sm:$0xff]
        %v4212 = vld [vmem:[%s4191 + $0xa0] sm:$0xff]
        %v4213 = vld [vmem:[%s4191 + $0xa8] sm:$0xff]
        %v4214 = vld [vmem:[%s4191 + $0xb0] sm:$0xff]
        %v4215 = vld [vmem:[%s4191 + $0xb8] sm:$0xff]
        %v4216 = vld [vmem:[%s4191 + $0xc0] sm:$0xff]
        %v4217 = vld [vmem:[%s4191 + $0xc8] sm:$0xff]
        %v4218 = vld [vmem:[%s4191 + $0xd0] sm:$0xff]
        %v4219 = vld [vmem:[%s4191 + $0xd8] sm:$0xff]
        %v4220 = vld [vmem:[%s4191 + $0xe0] sm:$0xff]
        %v4221 = vld [vmem:[%s4191 + $0xe8] sm:$0xff]
        %v4222 = vld [vmem:[%s4191 + $0xf0] sm:$0xff]
        %v4223 = vld [vmem:[%s4191 + $0xf8] sm:$0xff]
        %v4224 = vunpack.c.l.b16 %v4092
        %v4225 = vunpack.c.h.b16 %v4092
        %v4226 = vunpack.c.l.b16 %v4106
        %v4227 = vunpack.c.h.b16 %v4106
        %v4228 = vunpack.c.l.b16 %v4120
        %v4229 = vunpack.c.h.b16 %v4120
        %v4230 = vunpack.c.l.b16 %v4134
        %v4231 = vunpack.c.h.b16 %v4134
        %v4232 = vunpack.c.l.b16 %v4148
        %v4233 = vunpack.c.h.b16 %v4148
        %v4234 = vunpack.c.l.b16 %v4162
        %v4235 = vunpack.c.h.b16 %v4162
        %v4236 = vunpack.c.l.b16 %v4176
        %v4237 = vunpack.c.h.b16 %v4176
        %v4238 = vunpack.c.l.b16 %v4190
        %v4239 = vunpack.c.h.b16 %v4190
        %v4240 = vpack.c.b16 %v4226, %v4224
        %v4241 = vpack.c.b16 %v4227, %v4225
        %v4242 = vpack.c.b16 %v4230, %v4228
        %v4243 = vpack.c.b16 %v4231, %v4229
        %v4244 = vpack.c.b16 %v4234, %v4232
        %v4245 = vpack.c.b16 %v4235, %v4233
        %v4246 = vpack.c.b16 %v4238, %v4236
        %v4247 = vpack.c.b16 %v4239, %v4237
        %v4288 = vunpack.c.l.b16 %v4192
        %v4289 = vunpack.c.h.b16 %v4192
        %v4290 = vunpack.c.l.b16 %v4193
        %v4291 = vunpack.c.h.b16 %v4193
        %v4292 = vunpack.c.l.b16 %v4194
        %v4293 = vunpack.c.h.b16 %v4194
        %v4294 = vunpack.c.l.b16 %v4195
        %v4295 = vunpack.c.h.b16 %v4195
        %v4296 = vunpack.c.l.b16 %v4196
        %v4297 = vunpack.c.h.b16 %v4196
        %v4298 = vunpack.c.l.b16 %v4197
        %v4299 = vunpack.c.h.b16 %v4197
        %v4300 = vunpack.c.l.b16 %v4198
        %v4301 = vunpack.c.h.b16 %v4198
        %v4302 = vunpack.c.l.b16 %v4199
        %v4303 = vunpack.c.h.b16 %v4199
        %v4304 = vunpack.c.l.b16 %v4200
        %v4305 = vunpack.c.h.b16 %v4200
        %v4306 = vunpack.c.l.b16 %v4201
        %v4307 = vunpack.c.h.b16 %v4201
        %v4308 = vunpack.c.l.b16 %v4202
        %v4309 = vunpack.c.h.b16 %v4202
        %v4310 = vunpack.c.l.b16 %v4203
        %v4311 = vunpack.c.h.b16 %v4203
        %v4312 = vunpack.c.l.b16 %v4204
        %v4313 = vunpack.c.h.b16 %v4204
        %v4314 = vunpack.c.l.b16 %v4205
        %v4315 = vunpack.c.h.b16 %v4205
        %v4316 = vunpack.c.l.b16 %v4206
        %v4317 = vunpack.c.h.b16 %v4206
        %v4318 = vunpack.c.l.b16 %v4207
        %v4319 = vunpack.c.h.b16 %v4207
        %v4320 = vunpack.c.l.b16 %v4208
        %v4321 = vunpack.c.h.b16 %v4208
        %v4322 = vunpack.c.l.b16 %v4209
        %v4323 = vunpack.c.h.b16 %v4209
        %v4324 = vunpack.c.l.b16 %v4210
        %v4325 = vunpack.c.h.b16 %v4210
        %v4326 = vunpack.c.l.b16 %v4211
        %v4327 = vunpack.c.h.b16 %v4211
        %v4328 = vunpack.c.l.b16 %v4212
        %v4329 = vunpack.c.h.b16 %v4212
        %v4330 = vunpack.c.l.b16 %v4213
        %v4331 = vunpack.c.h.b16 %v4213
        %v4332 = vunpack.c.l.b16 %v4214
        %v4333 = vunpack.c.h.b16 %v4214
        %v4334 = vunpack.c.l.b16 %v4215
        %v4335 = vunpack.c.h.b16 %v4215
        %v4336 = vunpack.c.l.b16 %v4216
        %v4337 = vunpack.c.h.b16 %v4216
        %v4338 = vunpack.c.l.b16 %v4217
        %v4339 = vunpack.c.h.b16 %v4217
        %v4340 = vunpack.c.l.b16 %v4218
        %v4341 = vunpack.c.h.b16 %v4218
        %v4342 = vunpack.c.l.b16 %v4219
        %v4343 = vunpack.c.h.b16 %v4219
        %v4344 = vunpack.c.l.b16 %v4220
        %v4345 = vunpack.c.h.b16 %v4220
        %v4346 = vunpack.c.l.b16 %v4221
        %v4347 = vunpack.c.h.b16 %v4221
        %v4348 = vunpack.c.l.b16 %v4222
        %v4349 = vunpack.c.h.b16 %v4222
        %v4350 = vunpack.c.l.b16 %v4223
        %v4351 = vunpack.c.h.b16 %v4223
        %v4352 = vpack.c.b16 %v4290, %v4288
        %v4353 = vpack.c.b16 %v4291, %v4289
        %v4354 = vpack.c.b16 %v4294, %v4292
        %v4355 = vpack.c.b16 %v4295, %v4293
        %v4356 = vpack.c.b16 %v4298, %v4296
        %v4357 = vpack.c.b16 %v4299, %v4297
        %v4358 = vpack.c.b16 %v4302, %v4300
        %v4359 = vpack.c.b16 %v4303, %v4301
        %v4360 = vpack.c.b16 %v4306, %v4304
        %v4361 = vpack.c.b16 %v4307, %v4305
        %v4362 = vpack.c.b16 %v4310, %v4308
        %v4363 = vpack.c.b16 %v4311, %v4309
        %v4364 = vpack.c.b16 %v4314, %v4312
        %v4365 = vpack.c.b16 %v4315, %v4313
        %v4366 = vpack.c.b16 %v4318, %v4316
        %v4367 = vpack.c.b16 %v4319, %v4317
        %v4368 = vpack.c.b16 %v4322, %v4320
        %v4369 = vpack.c.b16 %v4323, %v4321
        %v4370 = vpack.c.b16 %v4326, %v4324
        %v4371 = vpack.c.b16 %v4327, %v4325
        %v4372 = vpack.c.b16 %v4330, %v4328
        %v4373 = vpack.c.b16 %v4331, %v4329
        %v4374 = vpack.c.b16 %v4334, %v4332
        %v4375 = vpack.c.b16 %v4335, %v4333
        %v4376 = vpack.c.b16 %v4338, %v4336
        %v4377 = vpack.c.b16 %v4339, %v4337
        %v4378 = vpack.c.b16 %v4342, %v4340
        %v4379 = vpack.c.b16 %v4343, %v4341
        %v4380 = vpack.c.b16 %v4346, %v4344
        %v4381 = vpack.c.b16 %v4347, %v4345
        %v4382 = vpack.c.b16 %v4350, %v4348
        %v4383 = vpack.c.b16 %v4351, %v4349
        %4416 = vmatprep.subr.bf16.mxu0 %v4367
        %4417 = vmatpush1.bf16.msra.mxu0 %v4366
        %4418 = vmatprep.subr.bf16.mxu0 %v4365
        %4419 = vmatpush1.bf16.msra.mxu0 %v4364
        %4420 = vmatprep.subr.bf16.mxu0 %v4363
        %4421 = vmatpush1.bf16.msra.mxu0 %v4362
        %4422 = vmatprep.subr.bf16.mxu0 %v4361
        %4423 = vmatpush1.bf16.msra.mxu0 %v4360
        %4424 = vmatprep.subr.bf16.mxu0 %v4359
        %4425 = vmatpush1.bf16.msra.mxu0 %v4358
        %4426 = vmatprep.subr.bf16.mxu0 %v4357
        %4427 = vmatpush1.bf16.msra.mxu0 %v4356
        %4428 = vmatprep.subr.bf16.mxu0 %v4355
        %4429 = vmatpush1.bf16.msra.mxu0 %v4354
        %4430 = vmatprep.subr.bf16.mxu0 %v4353
        %4431 = vmatpush1.bf16.msra.mxu0 %v4352
        %4432 = vmatprep.subr.bf16.mxu0 %v4383
        %4433 = vmatpush2.bf16.msra.mxu0 %v4382
        %4434 = vmatprep.subr.bf16.mxu0 %v4381
        %4435 = vmatpush2.bf16.msra.mxu0 %v4380
        %4436 = vmatprep.subr.bf16.mxu0 %v4379
        %4437 = vmatpush2.bf16.msra.mxu0 %v4378
        %4438 = vmatprep.subr.bf16.mxu0 %v4377
        %4439 = vmatpush2.bf16.msra.mxu0 %v4376
        %4440 = vmatprep.subr.bf16.mxu0 %v4375
        %4441 = vmatpush2.bf16.msra.mxu0 %v4374
        %4442 = vmatprep.subr.bf16.mxu0 %v4373
        %4443 = vmatpush2.bf16.msra.mxu0 %v4372
        %4444 = vmatprep.subr.bf16.mxu0 %v4371
        %4445 = vmatpush2.bf16.msra.mxu0 %v4370
        %4446 = vmatprep.subr.bf16.mxu0 %v4369
        %4447 = vmatpush2.bf16.msra.mxu0 %v4368
        %4448 = vmatprep.mubr.bf16.mxu0 %v4241
        %4449 = vmatmul.mubr.bf16.gmra.mxu0 %v4240
        %v4450 = vpop.f32.mrf.mxu0
        %v4451 = vadd.f32 0.0, %v4450
        %v4452 = vpop.f32.mrf.mxu0
        %v4453 = vadd.f32 0.0, %v4452
        %v4454 = vpop.f32.mrf.mxu0
        %v4455 = vadd.f32 0.0, %v4454
        %v4456 = vpop.f32.mrf.mxu0
        %v4457 = vadd.f32 0.0, %v4456
        %4458 = vmatprep.mubr.bf16.mxu0 %v4243
        %4459 = vmatmul.mubr.bf16.gmra.mxu0 %v4242
        %v4460 = vpop.f32.mrf.mxu0
        %v4461 = vadd.f32 0.0, %v4460
        %v4462 = vpop.f32.mrf.mxu0
        %v4463 = vadd.f32 0.0, %v4462
        %v4464 = vpop.f32.mrf.mxu0
        %v4465 = vadd.f32 0.0, %v4464
        %v4466 = vpop.f32.mrf.mxu0
        %v4467 = vadd.f32 0.0, %v4466
        %4468 = vmatprep.mubr.bf16.mxu0 %v4245
        %4469 = vmatmul.mubr.bf16.gmra.mxu0 %v4244
        %v4470 = vpop.f32.mrf.mxu0
        %v4471 = vadd.f32 0.0, %v4470
        %v4472 = vpop.f32.mrf.mxu0
        %v4473 = vadd.f32 0.0, %v4472
        %v4474 = vpop.f32.mrf.mxu0
        %v4475 = vadd.f32 0.0, %v4474
        %v4476 = vpop.f32.mrf.mxu0
        %v4477 = vadd.f32 0.0, %v4476
        %4478 = vmatprep.mubr.bf16.mxu0 %v4247
        %4479 = vmatmul.mubr.bf16.gmra.mxu0 %v4246
        %v4480 = vpop.f32.mrf.mxu0
        %v4481 = vadd.f32 0.0, %v4480
        %v4482 = vpop.f32.mrf.mxu0
        %v4483 = vadd.f32 0.0, %v4482
        %v4484 = vpop.f32.mrf.mxu0
        %v4485 = vadd.f32 0.0, %v4484
        %v4486 = vpop.f32.mrf.mxu0
        %v4487 = vadd.f32 0.0, %v4486
        %4488 = vdwg.mxu0
        %v4497 = vunpack.c.l.b16 %v4028
        %v4498 = vunpack.c.h.b16 %v4028
        %v4499 = vunpack.c.l.b16 %v4029
        %v4500 = vunpack.c.h.b16 %v4029
        %v4501 = vunpack.c.l.b16 %v4030
        %v4502 = vunpack.c.h.b16 %v4030
        %v4503 = vunpack.c.l.b16 %v4031
        %v4504 = vunpack.c.h.b16 %v4031
        %v4505 = vunpack.c.l.b16 %v4032
        %v4506 = vunpack.c.h.b16 %v4032
        %v4507 = vunpack.c.l.b16 %v4033
        %v4508 = vunpack.c.h.b16 %v4033
        %v4509 = vunpack.c.l.b16 %v4034
        %v4510 = vunpack.c.h.b16 %v4034
        %v4511 = vunpack.c.l.b16 %v4035
        %v4512 = vunpack.c.h.b16 %v4035
        %v4513 = vpack.c.b16 %v4499, %v4497
        %v4514 = vpack.c.b16 %v4500, %v4498
        %v4515 = vpack.c.b16 %v4503, %v4501
        %v4516 = vpack.c.b16 %v4504, %v4502
        %v4517 = vpack.c.b16 %v4507, %v4505
        %v4518 = vpack.c.b16 %v4508, %v4506
        %v4519 = vpack.c.b16 %v4511, %v4509
        %v4520 = vpack.c.b16 %v4512, %v4510
        %v4561 = vunpack.c.l.b16 %v4036
        %v4562 = vunpack.c.h.b16 %v4036
        %v4563 = vunpack.c.l.b16 %v4037
        %v4564 = vunpack.c.h.b16 %v4037
        %v4565 = vunpack.c.l.b16 %v4038
        %v4566 = vunpack.c.h.b16 %v4038
        %v4567 = vunpack.c.l.b16 %v4039
        %v4568 = vunpack.c.h.b16 %v4039
        %v4569 = vunpack.c.l.b16 %v4040
        %v4570 = vunpack.c.h.b16 %v4040
        %v4571 = vunpack.c.l.b16 %v4041
        %v4572 = vunpack.c.h.b16 %v4041
        %v4573 = vunpack.c.l.b16 %v4042
        %v4574 = vunpack.c.h.b16 %v4042
        %v4575 = vunpack.c.l.b16 %v4043
        %v4576 = vunpack.c.h.b16 %v4043
        %v4577 = vunpack.c.l.b16 %v4044
        %v4578 = vunpack.c.h.b16 %v4044
        %v4579 = vunpack.c.l.b16 %v4045
        %v4580 = vunpack.c.h.b16 %v4045
        %v4581 = vunpack.c.l.b16 %v4046
        %v4582 = vunpack.c.h.b16 %v4046
        %v4583 = vunpack.c.l.b16 %v4047
        %v4584 = vunpack.c.h.b16 %v4047
        %v4585 = vunpack.c.l.b16 %v4048
        %v4586 = vunpack.c.h.b16 %v4048
        %v4587 = vunpack.c.l.b16 %v4049
        %v4588 = vunpack.c.h.b16 %v4049
        %v4589 = vunpack.c.l.b16 %v4050
        %v4590 = vunpack.c.h.b16 %v4050
        %v4591 = vunpack.c.l.b16 %v4051
        %v4592 = vunpack.c.h.b16 %v4051
        %v4593 = vunpack.c.l.b16 %v4052
        %v4594 = vunpack.c.h.b16 %v4052
        %v4595 = vunpack.c.l.b16 %v4053
        %v4596 = vunpack.c.h.b16 %v4053
        %v4597 = vunpack.c.l.b16 %v4054
        %v4598 = vunpack.c.h.b16 %v4054
        %v4599 = vunpack.c.l.b16 %v4055
        %v4600 = vunpack.c.h.b16 %v4055
        %v4601 = vunpack.c.l.b16 %v4056
        %v4602 = vunpack.c.h.b16 %v4056
        %v4603 = vunpack.c.l.b16 %v4057
        %v4604 = vunpack.c.h.b16 %v4057
        %v4605 = vunpack.c.l.b16 %v4058
        %v4606 = vunpack.c.h.b16 %v4058
        %v4607 = vunpack.c.l.b16 %v4059
        %v4608 = vunpack.c.h.b16 %v4059
        %v4609 = vunpack.c.l.b16 %v4060
        %v4610 = vunpack.c.h.b16 %v4060
        %v4611 = vunpack.c.l.b16 %v4061
        %v4612 = vunpack.c.h.b16 %v4061
        %v4613 = vunpack.c.l.b16 %v4062
        %v4614 = vunpack.c.h.b16 %v4062
        %v4615 = vunpack.c.l.b16 %v4063
        %v4616 = vunpack.c.h.b16 %v4063
        %v4617 = vunpack.c.l.b16 %v4064
        %v4618 = vunpack.c.h.b16 %v4064
        %v4619 = vunpack.c.l.b16 %v4065
        %v4620 = vunpack.c.h.b16 %v4065
        %v4621 = vunpack.c.l.b16 %v4066
        %v4622 = vunpack.c.h.b16 %v4066
        %v4623 = vunpack.c.l.b16 %v4067
        %v4624 = vunpack.c.h.b16 %v4067
        %v4625 = vpack.c.b16 %v4563, %v4561
        %v4626 = vpack.c.b16 %v4564, %v4562
        %v4627 = vpack.c.b16 %v4567, %v4565
        %v4628 = vpack.c.b16 %v4568, %v4566
        %v4629 = vpack.c.b16 %v4571, %v4569
        %v4630 = vpack.c.b16 %v4572, %v4570
        %v4631 = vpack.c.b16 %v4575, %v4573
        %v4632 = vpack.c.b16 %v4576, %v4574
        %v4633 = vpack.c.b16 %v4579, %v4577
        %v4634 = vpack.c.b16 %v4580, %v4578
        %v4635 = vpack.c.b16 %v4583, %v4581
        %v4636 = vpack.c.b16 %v4584, %v4582
        %v4637 = vpack.c.b16 %v4587, %v4585
        %v4638 = vpack.c.b16 %v4588, %v4586
        %v4639 = vpack.c.b16 %v4591, %v4589
        %v4640 = vpack.c.b16 %v4592, %v4590
        %v4641 = vpack.c.b16 %v4595, %v4593
        %v4642 = vpack.c.b16 %v4596, %v4594
        %v4643 = vpack.c.b16 %v4599, %v4597
        %v4644 = vpack.c.b16 %v4600, %v4598
        %v4645 = vpack.c.b16 %v4603, %v4601
        %v4646 = vpack.c.b16 %v4604, %v4602
        %v4647 = vpack.c.b16 %v4607, %v4605
        %v4648 = vpack.c.b16 %v4608, %v4606
        %v4649 = vpack.c.b16 %v4611, %v4609
        %v4650 = vpack.c.b16 %v4612, %v4610
        %v4651 = vpack.c.b16 %v4615, %v4613
        %v4652 = vpack.c.b16 %v4616, %v4614
        %v4653 = vpack.c.b16 %v4619, %v4617
        %v4654 = vpack.c.b16 %v4620, %v4618
        %v4655 = vpack.c.b16 %v4623, %v4621
        %v4656 = vpack.c.b16 %v4624, %v4622
        %4689 = vmatprep.subr.bf16.mxu0 %v4640
        %4690 = vmatpush1.bf16.msra.mxu0 %v4639
        %4691 = vmatprep.subr.bf16.mxu0 %v4638
        %4692 = vmatpush1.bf16.msra.mxu0 %v4637
        %4693 = vmatprep.subr.bf16.mxu0 %v4636
        %4694 = vmatpush1.bf16.msra.mxu0 %v4635
        %4695 = vmatprep.subr.bf16.mxu0 %v4634
        %4696 = vmatpush1.bf16.msra.mxu0 %v4633
        %4697 = vmatprep.subr.bf16.mxu0 %v4632
        %4698 = vmatpush1.bf16.msra.mxu0 %v4631
        %4699 = vmatprep.subr.bf16.mxu0 %v4630
        %4700 = vmatpush1.bf16.msra.mxu0 %v4629
        %4701 = vmatprep.subr.bf16.mxu0 %v4628
        %4702 = vmatpush1.bf16.msra.mxu0 %v4627
        %4703 = vmatprep.subr.bf16.mxu0 %v4626
        %4704 = vmatpush1.bf16.msra.mxu0 %v4625
        %4705 = vmatprep.subr.bf16.mxu0 %v4656
        %4706 = vmatpush2.bf16.msra.mxu0 %v4655
        %4707 = vmatprep.subr.bf16.mxu0 %v4654
        %4708 = vmatpush2.bf16.msra.mxu0 %v4653
        %4709 = vmatprep.subr.bf16.mxu0 %v4652
        %4710 = vmatpush2.bf16.msra.mxu0 %v4651
        %4711 = vmatprep.subr.bf16.mxu0 %v4650
        %4712 = vmatpush2.bf16.msra.mxu0 %v4649
        %4713 = vmatprep.subr.bf16.mxu0 %v4648
        %4714 = vmatpush2.bf16.msra.mxu0 %v4647
        %4715 = vmatprep.subr.bf16.mxu0 %v4646
        %4716 = vmatpush2.bf16.msra.mxu0 %v4645
        %4717 = vmatprep.subr.bf16.mxu0 %v4644
        %4718 = vmatpush2.bf16.msra.mxu0 %v4643
        %4719 = vmatprep.subr.bf16.mxu0 %v4642
        %4720 = vmatpush2.bf16.msra.mxu0 %v4641
        %4721 = vmatprep.mubr.bf16.mxu0 %v4514
        %4722 = vmatmul.mubr.bf16.gmra.mxu0 %v4513
        %v4723 = vpop.f32.mrf.mxu0
        %v4724 = vadd.f32 %v4451, %v4723
        %v4725 = vpop.f32.mrf.mxu0
        %v4726 = vadd.f32 %v4453, %v4725
        %v4727 = vpop.f32.mrf.mxu0
        %v4728 = vadd.f32 %v4455, %v4727
        %v4729 = vpop.f32.mrf.mxu0
        %v4730 = vadd.f32 %v4457, %v4729
        %4731 = vmatprep.mubr.bf16.mxu0 %v4516
        %4732 = vmatmul.mubr.bf16.gmra.mxu0 %v4515
        %v4733 = vpop.f32.mrf.mxu0
        %v4734 = vadd.f32 %v4461, %v4733
        %v4735 = vpop.f32.mrf.mxu0
        %v4736 = vadd.f32 %v4463, %v4735
        %v4737 = vpop.f32.mrf.mxu0
        %v4738 = vadd.f32 %v4465, %v4737
        %v4739 = vpop.f32.mrf.mxu0
        %v4740 = vadd.f32 %v4467, %v4739
        %4741 = vmatprep.mubr.bf16.mxu0 %v4518
        %4742 = vmatmul.mubr.bf16.gmra.mxu0 %v4517
        %v4743 = vpop.f32.mrf.mxu0
        %v4744 = vadd.f32 %v4471, %v4743
        %v4745 = vpop.f32.mrf.mxu0
        %v4746 = vadd.f32 %v4473, %v4745
        %v4747 = vpop.f32.mrf.mxu0
        %v4748 = vadd.f32 %v4475, %v4747
        %v4749 = vpop.f32.mrf.mxu0
        %v4750 = vadd.f32 %v4477, %v4749
        %4751 = vmatprep.mubr.bf16.mxu0 %v4520
        %4752 = vmatmul.mubr.bf16.gmra.mxu0 %v4519
        %v4753 = vpop.f32.mrf.mxu0
        %v4754 = vadd.f32 %v4481, %v4753
        %v4755 = vpop.f32.mrf.mxu0
        %v4756 = vadd.f32 %v4483, %v4755
        %v4757 = vpop.f32.mrf.mxu0
        %v4758 = vadd.f32 %v4485, %v4757
        %v4759 = vpop.f32.mrf.mxu0
        %v4760 = vadd.f32 %v4487, %v4759
        %4761 = vdwg.mxu0
        %v4762 = vld [vmem:[#allocation3] sm:$0xee]
        %v4763 = vld [vmem:[#allocation3 + $0x10] sm:$0xee]
        %v4764 = vld [vmem:[#allocation3 + $0x20] sm:$0xee]
        %v4765 = vld [vmem:[#allocation3 + $0x30] sm:$0xee]
        %v4766 = vld [vmem:[#allocation3 + $0x40] sm:$0xee]
        %v4767 = vld [vmem:[#allocation3 + $0x50] sm:$0xee]
        %v4768 = vld [vmem:[#allocation3 + $0x60] sm:$0xee]
        %v4769 = vld [vmem:[#allocation3 + $0x70] sm:$0xee]
        %v4786 = vrot.slane %v4762, 5
        %v4787 = vrot.slane %v4786, 4
        %v4788 = vrot.slane %v4068, 5
        %v4789 = vsel %vm490, %v4787, %v4788
        %v4790 = vrot.slane %v4763, 5
        %v4791 = vrot.slane %v4790, 4
        %v4792 = vrot.slane %v4069, 5
        %v4793 = vsel %vm490, %v4791, %v4792
        %v4794 = vrot.slane %v4764, 5
        %v4795 = vrot.slane %v4794, 4
        %v4796 = vrot.slane %v4070, 5
        %v4797 = vsel %vm490, %v4795, %v4796
        %v4798 = vrot.slane %v4765, 5
        %v4799 = vrot.slane %v4798, 4
        %v4800 = vrot.slane %v4071, 5
        %v4801 = vsel %vm490, %v4799, %v4800
        %v4802 = vrot.slane %v4766, 5
        %v4803 = vrot.slane %v4802, 4
        %v4804 = vrot.slane %v4072, 5
        %v4805 = vsel %vm490, %v4803, %v4804
        %v4806 = vrot.slane %v4767, 5
        %v4807 = vrot.slane %v4806, 4
        %v4808 = vrot.slane %v4073, 5
        %v4809 = vsel %vm490, %v4807, %v4808
        %v4810 = vrot.slane %v4768, 5
        %v4811 = vrot.slane %v4810, 4
        %v4812 = vrot.slane %v4074, 5
        %v4813 = vsel %vm490, %v4811, %v4812
        %v4814 = vrot.slane %v4769, 5
        %v4815 = vrot.slane %v4814, 4
        %v4816 = vrot.slane %v4075, 5
        %v4817 = vsel %vm490, %v4815, %v4816
        %s4818 = scalar_lea.vmem [#allocation7], 512
        %v4819 = vld [vmem:[%s4818] sm:$0xff]
        %v4820 = vld [vmem:[%s4818 + $0x8] sm:$0xff]
        %v4821 = vld [vmem:[%s4818 + $0x10] sm:$0xff]
        %v4822 = vld [vmem:[%s4818 + $0x18] sm:$0xff]
        %v4823 = vld [vmem:[%s4818 + $0x20] sm:$0xff]
        %v4824 = vld [vmem:[%s4818 + $0x28] sm:$0xff]
        %v4825 = vld [vmem:[%s4818 + $0x30] sm:$0xff]
        %v4826 = vld [vmem:[%s4818 + $0x38] sm:$0xff]
        %v4827 = vld [vmem:[%s4818 + $0x40] sm:$0xff]
        %v4828 = vld [vmem:[%s4818 + $0x48] sm:$0xff]
        %v4829 = vld [vmem:[%s4818 + $0x50] sm:$0xff]
        %v4830 = vld [vmem:[%s4818 + $0x58] sm:$0xff]
        %v4831 = vld [vmem:[%s4818 + $0x60] sm:$0xff]
        %v4832 = vld [vmem:[%s4818 + $0x68] sm:$0xff]
        %v4833 = vld [vmem:[%s4818 + $0x70] sm:$0xff]
        %v4834 = vld [vmem:[%s4818 + $0x78] sm:$0xff]
        %v4835 = vld [vmem:[%s4818 + $0x80] sm:$0xff]
        %v4836 = vld [vmem:[%s4818 + $0x88] sm:$0xff]
        %v4837 = vld [vmem:[%s4818 + $0x90] sm:$0xff]
        %v4838 = vld [vmem:[%s4818 + $0x98] sm:$0xff]
        %v4839 = vld [vmem:[%s4818 + $0xa0] sm:$0xff]
        %v4840 = vld [vmem:[%s4818 + $0xa8] sm:$0xff]
        %v4841 = vld [vmem:[%s4818 + $0xb0] sm:$0xff]
        %v4842 = vld [vmem:[%s4818 + $0xb8] sm:$0xff]
        %v4843 = vld [vmem:[%s4818 + $0xc0] sm:$0xff]
        %v4844 = vld [vmem:[%s4818 + $0xc8] sm:$0xff]
        %v4845 = vld [vmem:[%s4818 + $0xd0] sm:$0xff]
        %v4846 = vld [vmem:[%s4818 + $0xd8] sm:$0xff]
        %v4847 = vld [vmem:[%s4818 + $0xe0] sm:$0xff]
        %v4848 = vld [vmem:[%s4818 + $0xe8] sm:$0xff]
        %v4849 = vld [vmem:[%s4818 + $0xf0] sm:$0xff]
        %v4850 = vld [vmem:[%s4818 + $0xf8] sm:$0xff]
        %v4851 = vunpack.c.l.b16 %v4789
        %v4852 = vunpack.c.h.b16 %v4789
        %v4853 = vunpack.c.l.b16 %v4793
        %v4854 = vunpack.c.h.b16 %v4793
        %v4855 = vunpack.c.l.b16 %v4797
        %v4856 = vunpack.c.h.b16 %v4797
        %v4857 = vunpack.c.l.b16 %v4801
        %v4858 = vunpack.c.h.b16 %v4801
        %v4859 = vunpack.c.l.b16 %v4805
        %v4860 = vunpack.c.h.b16 %v4805
        %v4861 = vunpack.c.l.b16 %v4809
        %v4862 = vunpack.c.h.b16 %v4809
        %v4863 = vunpack.c.l.b16 %v4813
        %v4864 = vunpack.c.h.b16 %v4813
        %v4865 = vunpack.c.l.b16 %v4817
        %v4866 = vunpack.c.h.b16 %v4817
        %v4867 = vpack.c.b16 %v4853, %v4851
        %v4868 = vpack.c.b16 %v4854, %v4852
        %v4869 = vpack.c.b16 %v4857, %v4855
        %v4870 = vpack.c.b16 %v4858, %v4856
        %v4871 = vpack.c.b16 %v4861, %v4859
        %v4872 = vpack.c.b16 %v4862, %v4860
        %v4873 = vpack.c.b16 %v4865, %v4863
        %v4874 = vpack.c.b16 %v4866, %v4864
        %v4915 = vunpack.c.l.b16 %v4819
        %v4916 = vunpack.c.h.b16 %v4819
        %v4917 = vunpack.c.l.b16 %v4820
        %v4918 = vunpack.c.h.b16 %v4820
        %v4919 = vunpack.c.l.b16 %v4821
        %v4920 = vunpack.c.h.b16 %v4821
        %v4921 = vunpack.c.l.b16 %v4822
        %v4922 = vunpack.c.h.b16 %v4822
        %v4923 = vunpack.c.l.b16 %v4823
        %v4924 = vunpack.c.h.b16 %v4823
        %v4925 = vunpack.c.l.b16 %v4824
        %v4926 = vunpack.c.h.b16 %v4824
        %v4927 = vunpack.c.l.b16 %v4825
        %v4928 = vunpack.c.h.b16 %v4825
        %v4929 = vunpack.c.l.b16 %v4826
        %v4930 = vunpack.c.h.b16 %v4826
        %v4931 = vunpack.c.l.b16 %v4827
        %v4932 = vunpack.c.h.b16 %v4827
        %v4933 = vunpack.c.l.b16 %v4828
        %v4934 = vunpack.c.h.b16 %v4828
        %v4935 = vunpack.c.l.b16 %v4829
        %v4936 = vunpack.c.h.b16 %v4829
        %v4937 = vunpack.c.l.b16 %v4830
        %v4938 = vunpack.c.h.b16 %v4830
        %v4939 = vunpack.c.l.b16 %v4831
        %v4940 = vunpack.c.h.b16 %v4831
        %v4941 = vunpack.c.l.b16 %v4832
        %v4942 = vunpack.c.h.b16 %v4832
        %v4943 = vunpack.c.l.b16 %v4833
        %v4944 = vunpack.c.h.b16 %v4833
        %v4945 = vunpack.c.l.b16 %v4834
        %v4946 = vunpack.c.h.b16 %v4834
        %v4947 = vunpack.c.l.b16 %v4835
        %v4948 = vunpack.c.h.b16 %v4835
        %v4949 = vunpack.c.l.b16 %v4836
        %v4950 = vunpack.c.h.b16 %v4836
        %v4951 = vunpack.c.l.b16 %v4837
        %v4952 = vunpack.c.h.b16 %v4837
        %v4953 = vunpack.c.l.b16 %v4838
        %v4954 = vunpack.c.h.b16 %v4838
        %v4955 = vunpack.c.l.b16 %v4839
        %v4956 = vunpack.c.h.b16 %v4839
        %v4957 = vunpack.c.l.b16 %v4840
        %v4958 = vunpack.c.h.b16 %v4840
        %v4959 = vunpack.c.l.b16 %v4841
        %v4960 = vunpack.c.h.b16 %v4841
        %v4961 = vunpack.c.l.b16 %v4842
        %v4962 = vunpack.c.h.b16 %v4842
        %v4963 = vunpack.c.l.b16 %v4843
        %v4964 = vunpack.c.h.b16 %v4843
        %v4965 = vunpack.c.l.b16 %v4844
        %v4966 = vunpack.c.h.b16 %v4844
        %v4967 = vunpack.c.l.b16 %v4845
        %v4968 = vunpack.c.h.b16 %v4845
        %v4969 = vunpack.c.l.b16 %v4846
        %v4970 = vunpack.c.h.b16 %v4846
        %v4971 = vunpack.c.l.b16 %v4847
        %v4972 = vunpack.c.h.b16 %v4847
        %v4973 = vunpack.c.l.b16 %v4848
        %v4974 = vunpack.c.h.b16 %v4848
        %v4975 = vunpack.c.l.b16 %v4849
        %v4976 = vunpack.c.h.b16 %v4849
        %v4977 = vunpack.c.l.b16 %v4850
        %v4978 = vunpack.c.h.b16 %v4850
        %v4979 = vpack.c.b16 %v4917, %v4915
        %v4980 = vpack.c.b16 %v4918, %v4916
        %v4981 = vpack.c.b16 %v4921, %v4919
        %v4982 = vpack.c.b16 %v4922, %v4920
        %v4983 = vpack.c.b16 %v4925, %v4923
        %v4984 = vpack.c.b16 %v4926, %v4924
        %v4985 = vpack.c.b16 %v4929, %v4927
        %v4986 = vpack.c.b16 %v4930, %v4928
        %v4987 = vpack.c.b16 %v4933, %v4931
        %v4988 = vpack.c.b16 %v4934, %v4932
        %v4989 = vpack.c.b16 %v4937, %v4935
        %v4990 = vpack.c.b16 %v4938, %v4936
        %v4991 = vpack.c.b16 %v4941, %v4939
        %v4992 = vpack.c.b16 %v4942, %v4940
        %v4993 = vpack.c.b16 %v4945, %v4943
        %v4994 = vpack.c.b16 %v4946, %v4944
        %v4995 = vpack.c.b16 %v4949, %v4947
        %v4996 = vpack.c.b16 %v4950, %v4948
        %v4997 = vpack.c.b16 %v4953, %v4951
        %v4998 = vpack.c.b16 %v4954, %v4952
        %v4999 = vpack.c.b16 %v4957, %v4955
        %v5000 = vpack.c.b16 %v4958, %v4956
        %v5001 = vpack.c.b16 %v4961, %v4959
        %v5002 = vpack.c.b16 %v4962, %v4960
        %v5003 = vpack.c.b16 %v4965, %v4963
        %v5004 = vpack.c.b16 %v4966, %v4964
        %v5005 = vpack.c.b16 %v4969, %v4967
        %v5006 = vpack.c.b16 %v4970, %v4968
        %v5007 = vpack.c.b16 %v4973, %v4971
        %v5008 = vpack.c.b16 %v4974, %v4972
        %v5009 = vpack.c.b16 %v4977, %v4975
        %v5010 = vpack.c.b16 %v4978, %v4976
        %5043 = vmatprep.subr.bf16.mxu0 %v4994
        %5044 = vmatpush1.bf16.msra.mxu0 %v4993
        %5045 = vmatprep.subr.bf16.mxu0 %v4992
        %5046 = vmatpush1.bf16.msra.mxu0 %v4991
        %5047 = vmatprep.subr.bf16.mxu0 %v4990
        %5048 = vmatpush1.bf16.msra.mxu0 %v4989
        %5049 = vmatprep.subr.bf16.mxu0 %v4988
        %5050 = vmatpush1.bf16.msra.mxu0 %v4987
        %5051 = vmatprep.subr.bf16.mxu0 %v4986
        %5052 = vmatpush1.bf16.msra.mxu0 %v4985
        %5053 = vmatprep.subr.bf16.mxu0 %v4984
        %5054 = vmatpush1.bf16.msra.mxu0 %v4983
        %5055 = vmatprep.subr.bf16.mxu0 %v4982
        %5056 = vmatpush1.bf16.msra.mxu0 %v4981
        %5057 = vmatprep.subr.bf16.mxu0 %v4980
        %5058 = vmatpush1.bf16.msra.mxu0 %v4979
        %5059 = vmatprep.subr.bf16.mxu0 %v5010
        %5060 = vmatpush2.bf16.msra.mxu0 %v5009
        %5061 = vmatprep.subr.bf16.mxu0 %v5008
        %5062 = vmatpush2.bf16.msra.mxu0 %v5007
        %5063 = vmatprep.subr.bf16.mxu0 %v5006
        %5064 = vmatpush2.bf16.msra.mxu0 %v5005
        %5065 = vmatprep.subr.bf16.mxu0 %v5004
        %5066 = vmatpush2.bf16.msra.mxu0 %v5003
        %5067 = vmatprep.subr.bf16.mxu0 %v5002
        %5068 = vmatpush2.bf16.msra.mxu0 %v5001
        %5069 = vmatprep.subr.bf16.mxu0 %v5000
        %5070 = vmatpush2.bf16.msra.mxu0 %v4999
        %5071 = vmatprep.subr.bf16.mxu0 %v4998
        %5072 = vmatpush2.bf16.msra.mxu0 %v4997
        %5073 = vmatprep.subr.bf16.mxu0 %v4996
        %5074 = vmatpush2.bf16.msra.mxu0 %v4995
        %5075 = vmatprep.mubr.bf16.mxu0 %v4868
        %5076 = vmatmul.mubr.bf16.gmra.mxu0 %v4867
        %v5077 = vpop.f32.mrf.mxu0
        %v5078 = vadd.f32 0.0, %v5077
        %v5079 = vpop.f32.mrf.mxu0
        %v5080 = vadd.f32 0.0, %v5079
        %v5081 = vpop.f32.mrf.mxu0
        %v5082 = vadd.f32 0.0, %v5081
        %v5083 = vpop.f32.mrf.mxu0
        %v5084 = vadd.f32 0.0, %v5083
        %5085 = vmatprep.mubr.bf16.mxu0 %v4870
        %5086 = vmatmul.mubr.bf16.gmra.mxu0 %v4869
        %v5087 = vpop.f32.mrf.mxu0
        %v5088 = vadd.f32 0.0, %v5087
        %v5089 = vpop.f32.mrf.mxu0
        %v5090 = vadd.f32 0.0, %v5089
        %v5091 = vpop.f32.mrf.mxu0
        %v5092 = vadd.f32 0.0, %v5091
        %v5093 = vpop.f32.mrf.mxu0
        %v5094 = vadd.f32 0.0, %v5093
        %5095 = vmatprep.mubr.bf16.mxu0 %v4872
        %5096 = vmatmul.mubr.bf16.gmra.mxu0 %v4871
        %v5097 = vpop.f32.mrf.mxu0
        %v5098 = vadd.f32 0.0, %v5097
        %v5099 = vpop.f32.mrf.mxu0
        %v5100 = vadd.f32 0.0, %v5099
        %v5101 = vpop.f32.mrf.mxu0
        %v5102 = vadd.f32 0.0, %v5101
        %v5103 = vpop.f32.mrf.mxu0
        %v5104 = vadd.f32 0.0, %v5103
        %5105 = vmatprep.mubr.bf16.mxu0 %v4874
        %5106 = vmatmul.mubr.bf16.gmra.mxu0 %v4873
        %v5107 = vpop.f32.mrf.mxu0
        %v5108 = vadd.f32 0.0, %v5107
        %v5109 = vpop.f32.mrf.mxu0
        %v5110 = vadd.f32 0.0, %v5109
        %v5111 = vpop.f32.mrf.mxu0
        %v5112 = vadd.f32 0.0, %v5111
        %v5113 = vpop.f32.mrf.mxu0
        %v5114 = vadd.f32 0.0, %v5113
        %5115 = vdwg.mxu0
        %v5116 = vadd.f32 %v4724, %v5078
        %v5117 = vadd.f32 %v4726, %v5080
        %v5118 = vadd.f32 %v4728, %v5082
        %v5119 = vadd.f32 %v4730, %v5084
        %v5120 = vadd.f32 %v4734, %v5088
        %v5121 = vadd.f32 %v4736, %v5090
        %v5122 = vadd.f32 %v4738, %v5092
        %v5123 = vadd.f32 %v4740, %v5094
        %v5124 = vadd.f32 %v4744, %v5098
        %v5125 = vadd.f32 %v4746, %v5100
        %v5126 = vadd.f32 %v4748, %v5102
        %v5127 = vadd.f32 %v4750, %v5104
        %v5128 = vadd.f32 %v4754, %v5108
        %v5129 = vadd.f32 %v4756, %v5110
        %v5130 = vadd.f32 %v4758, %v5112
        %v5131 = vadd.f32 %v4760, %v5114
        %v5132 = vld [vmem:[%s3897] sm:$0xff]
        %v5133 = vld [vmem:[%s3897 + $0x10] sm:$0xff]
        %v5134 = vld [vmem:[%s3897 + $0x20] sm:$0xff]
        %v5135 = vld [vmem:[%s3897 + $0x30] sm:$0xff]
        %v5136 = vld [vmem:[%s3897 + $0x40] sm:$0xff]
        %v5137 = vld [vmem:[%s3897 + $0x50] sm:$0xff]
        %v5138 = vld [vmem:[%s3897 + $0x60] sm:$0xff]
        %v5139 = vld [vmem:[%s3897 + $0x70] sm:$0xff]
        %s5140 = scalar_lea.vmem [#allocation7], 768
        %v5141 = vld [vmem:[%s5140] sm:$0xff]
        %v5142 = vld [vmem:[%s5140 + $0x8] sm:$0xff]
        %v5143 = vld [vmem:[%s5140 + $0x10] sm:$0xff]
        %v5144 = vld [vmem:[%s5140 + $0x18] sm:$0xff]
        %v5145 = vld [vmem:[%s5140 + $0x20] sm:$0xff]
        %v5146 = vld [vmem:[%s5140 + $0x28] sm:$0xff]
        %v5147 = vld [vmem:[%s5140 + $0x30] sm:$0xff]
        %v5148 = vld [vmem:[%s5140 + $0x38] sm:$0xff]
        %v5149 = vld [vmem:[%s5140 + $0x40] sm:$0xff]
        %v5150 = vld [vmem:[%s5140 + $0x48] sm:$0xff]
        %v5151 = vld [vmem:[%s5140 + $0x50] sm:$0xff]
        %v5152 = vld [vmem:[%s5140 + $0x58] sm:$0xff]
        %v5153 = vld [vmem:[%s5140 + $0x60] sm:$0xff]
        %v5154 = vld [vmem:[%s5140 + $0x68] sm:$0xff]
        %v5155 = vld [vmem:[%s5140 + $0x70] sm:$0xff]
        %v5156 = vld [vmem:[%s5140 + $0x78] sm:$0xff]
        %v5157 = vld [vmem:[%s5140 + $0x80] sm:$0xff]
        %v5158 = vld [vmem:[%s5140 + $0x88] sm:$0xff]
        %v5159 = vld [vmem:[%s5140 + $0x90] sm:$0xff]
        %v5160 = vld [vmem:[%s5140 + $0x98] sm:$0xff]
        %v5161 = vld [vmem:[%s5140 + $0xa0] sm:$0xff]
        %v5162 = vld [vmem:[%s5140 + $0xa8] sm:$0xff]
        %v5163 = vld [vmem:[%s5140 + $0xb0] sm:$0xff]
        %v5164 = vld [vmem:[%s5140 + $0xb8] sm:$0xff]
        %v5165 = vld [vmem:[%s5140 + $0xc0] sm:$0xff]
        %v5166 = vld [vmem:[%s5140 + $0xc8] sm:$0xff]
        %v5167 = vld [vmem:[%s5140 + $0xd0] sm:$0xff]
        %v5168 = vld [vmem:[%s5140 + $0xd8] sm:$0xff]
        %v5169 = vld [vmem:[%s5140 + $0xe0] sm:$0xff]
        %v5170 = vld [vmem:[%s5140 + $0xe8] sm:$0xff]
        %v5171 = vld [vmem:[%s5140 + $0xf0] sm:$0xff]
        %v5172 = vld [vmem:[%s5140 + $0xf8] sm:$0xff]
        %v5181 = vunpack.c.l.b16 %v5132
        %v5182 = vunpack.c.h.b16 %v5132
        %v5183 = vunpack.c.l.b16 %v5133
        %v5184 = vunpack.c.h.b16 %v5133
        %v5185 = vunpack.c.l.b16 %v5134
        %v5186 = vunpack.c.h.b16 %v5134
        %v5187 = vunpack.c.l.b16 %v5135
        %v5188 = vunpack.c.h.b16 %v5135
        %v5189 = vunpack.c.l.b16 %v5136
        %v5190 = vunpack.c.h.b16 %v5136
        %v5191 = vunpack.c.l.b16 %v5137
        %v5192 = vunpack.c.h.b16 %v5137
        %v5193 = vunpack.c.l.b16 %v5138
        %v5194 = vunpack.c.h.b16 %v5138
        %v5195 = vunpack.c.l.b16 %v5139
        %v5196 = vunpack.c.h.b16 %v5139
        %v5197 = vpack.c.b16 %v5183, %v5181
        %v5198 = vpack.c.b16 %v5184, %v5182
        %v5199 = vpack.c.b16 %v5187, %v5185
        %v5200 = vpack.c.b16 %v5188, %v5186
        %v5201 = vpack.c.b16 %v5191, %v5189
        %v5202 = vpack.c.b16 %v5192, %v5190
        %v5203 = vpack.c.b16 %v5195, %v5193
        %v5204 = vpack.c.b16 %v5196, %v5194
        %v5245 = vunpack.c.l.b16 %v5141
        %v5246 = vunpack.c.h.b16 %v5141
        %v5247 = vunpack.c.l.b16 %v5142
        %v5248 = vunpack.c.h.b16 %v5142
        %v5249 = vunpack.c.l.b16 %v5143
        %v5250 = vunpack.c.h.b16 %v5143
        %v5251 = vunpack.c.l.b16 %v5144
        %v5252 = vunpack.c.h.b16 %v5144
        %v5253 = vunpack.c.l.b16 %v5145
        %v5254 = vunpack.c.h.b16 %v5145
        %v5255 = vunpack.c.l.b16 %v5146
        %v5256 = vunpack.c.h.b16 %v5146
        %v5257 = vunpack.c.l.b16 %v5147
        %v5258 = vunpack.c.h.b16 %v5147
        %v5259 = vunpack.c.l.b16 %v5148
        %v5260 = vunpack.c.h.b16 %v5148
        %v5261 = vunpack.c.l.b16 %v5149
        %v5262 = vunpack.c.h.b16 %v5149
        %v5263 = vunpack.c.l.b16 %v5150
        %v5264 = vunpack.c.h.b16 %v5150
        %v5265 = vunpack.c.l.b16 %v5151
        %v5266 = vunpack.c.h.b16 %v5151
        %v5267 = vunpack.c.l.b16 %v5152
        %v5268 = vunpack.c.h.b16 %v5152
        %v5269 = vunpack.c.l.b16 %v5153
        %v5270 = vunpack.c.h.b16 %v5153
        %v5271 = vunpack.c.l.b16 %v5154
        %v5272 = vunpack.c.h.b16 %v5154
        %v5273 = vunpack.c.l.b16 %v5155
        %v5274 = vunpack.c.h.b16 %v5155
        %v5275 = vunpack.c.l.b16 %v5156
        %v5276 = vunpack.c.h.b16 %v5156
        %v5277 = vunpack.c.l.b16 %v5157
        %v5278 = vunpack.c.h.b16 %v5157
        %v5279 = vunpack.c.l.b16 %v5158
        %v5280 = vunpack.c.h.b16 %v5158
        %v5281 = vunpack.c.l.b16 %v5159
        %v5282 = vunpack.c.h.b16 %v5159
        %v5283 = vunpack.c.l.b16 %v5160
        %v5284 = vunpack.c.h.b16 %v5160
        %v5285 = vunpack.c.l.b16 %v5161
        %v5286 = vunpack.c.h.b16 %v5161
        %v5287 = vunpack.c.l.b16 %v5162
        %v5288 = vunpack.c.h.b16 %v5162
        %v5289 = vunpack.c.l.b16 %v5163
        %v5290 = vunpack.c.h.b16 %v5163
        %v5291 = vunpack.c.l.b16 %v5164
        %v5292 = vunpack.c.h.b16 %v5164
        %v5293 = vunpack.c.l.b16 %v5165
        %v5294 = vunpack.c.h.b16 %v5165
        %v5295 = vunpack.c.l.b16 %v5166
        %v5296 = vunpack.c.h.b16 %v5166
        %v5297 = vunpack.c.l.b16 %v5167
        %v5298 = vunpack.c.h.b16 %v5167
        %v5299 = vunpack.c.l.b16 %v5168
        %v5300 = vunpack.c.h.b16 %v5168
        %v5301 = vunpack.c.l.b16 %v5169
        %v5302 = vunpack.c.h.b16 %v5169
        %v5303 = vunpack.c.l.b16 %v5170
        %v5304 = vunpack.c.h.b16 %v5170
        %v5305 = vunpack.c.l.b16 %v5171
        %v5306 = vunpack.c.h.b16 %v5171
        %v5307 = vunpack.c.l.b16 %v5172
        %v5308 = vunpack.c.h.b16 %v5172
        %v5309 = vpack.c.b16 %v5247, %v5245
        %v5310 = vpack.c.b16 %v5248, %v5246
        %v5311 = vpack.c.b16 %v5251, %v5249
        %v5312 = vpack.c.b16 %v5252, %v5250
        %v5313 = vpack.c.b16 %v5255, %v5253
        %v5314 = vpack.c.b16 %v5256, %v5254
        %v5315 = vpack.c.b16 %v5259, %v5257
        %v5316 = vpack.c.b16 %v5260, %v5258
        %v5317 = vpack.c.b16 %v5263, %v5261
        %v5318 = vpack.c.b16 %v5264, %v5262
        %v5319 = vpack.c.b16 %v5267, %v5265
        %v5320 = vpack.c.b16 %v5268, %v5266
        %v5321 = vpack.c.b16 %v5271, %v5269
        %v5322 = vpack.c.b16 %v5272, %v5270
        %v5323 = vpack.c.b16 %v5275, %v5273
        %v5324 = vpack.c.b16 %v5276, %v5274
        %v5325 = vpack.c.b16 %v5279, %v5277
        %v5326 = vpack.c.b16 %v5280, %v5278
        %v5327 = vpack.c.b16 %v5283, %v5281
        %v5328 = vpack.c.b16 %v5284, %v5282
        %v5329 = vpack.c.b16 %v5287, %v5285
        %v5330 = vpack.c.b16 %v5288, %v5286
        %v5331 = vpack.c.b16 %v5291, %v5289
        %v5332 = vpack.c.b16 %v5292, %v5290
        %v5333 = vpack.c.b16 %v5295, %v5293
        %v5334 = vpack.c.b16 %v5296, %v5294
        %v5335 = vpack.c.b16 %v5299, %v5297
        %v5336 = vpack.c.b16 %v5300, %v5298
        %v5337 = vpack.c.b16 %v5303, %v5301
        %v5338 = vpack.c.b16 %v5304, %v5302
        %v5339 = vpack.c.b16 %v5307, %v5305
        %v5340 = vpack.c.b16 %v5308, %v5306
        %5373 = vmatprep.subr.bf16.mxu0 %v5324
        %5374 = vmatpush1.bf16.msra.mxu0 %v5323
        %5375 = vmatprep.subr.bf16.mxu0 %v5322
        %5376 = vmatpush1.bf16.msra.mxu0 %v5321
        %5377 = vmatprep.subr.bf16.mxu0 %v5320
        %5378 = vmatpush1.bf16.msra.mxu0 %v5319
        %5379 = vmatprep.subr.bf16.mxu0 %v5318
        %5380 = vmatpush1.bf16.msra.mxu0 %v5317
        %5381 = vmatprep.subr.bf16.mxu0 %v5316
        %5382 = vmatpush1.bf16.msra.mxu0 %v5315
        %5383 = vmatprep.subr.bf16.mxu0 %v5314
        %5384 = vmatpush1.bf16.msra.mxu0 %v5313
        %5385 = vmatprep.subr.bf16.mxu0 %v5312
        %5386 = vmatpush1.bf16.msra.mxu0 %v5311
        %5387 = vmatprep.subr.bf16.mxu0 %v5310
        %5388 = vmatpush1.bf16.msra.mxu0 %v5309
        %5389 = vmatprep.subr.bf16.mxu0 %v5340
        %5390 = vmatpush2.bf16.msra.mxu0 %v5339
        %5391 = vmatprep.subr.bf16.mxu0 %v5338
        %5392 = vmatpush2.bf16.msra.mxu0 %v5337
        %5393 = vmatprep.subr.bf16.mxu0 %v5336
        %5394 = vmatpush2.bf16.msra.mxu0 %v5335
        %5395 = vmatprep.subr.bf16.mxu0 %v5334
        %5396 = vmatpush2.bf16.msra.mxu0 %v5333
        %5397 = vmatprep.subr.bf16.mxu0 %v5332
        %5398 = vmatpush2.bf16.msra.mxu0 %v5331
        %5399 = vmatprep.subr.bf16.mxu0 %v5330
        %5400 = vmatpush2.bf16.msra.mxu0 %v5329
        %5401 = vmatprep.subr.bf16.mxu0 %v5328
        %5402 = vmatpush2.bf16.msra.mxu0 %v5327
        %5403 = vmatprep.subr.bf16.mxu0 %v5326
        %5404 = vmatpush2.bf16.msra.mxu0 %v5325
        %5405 = vmatprep.mubr.bf16.mxu0 %v5198
        %5406 = vmatmul.mubr.bf16.gmra.mxu0 %v5197
        %v5407 = vpop.f32.mrf.mxu0
        %v5408 = vadd.f32 0.0, %v5407
        %v5409 = vpop.f32.mrf.mxu0
        %v5410 = vadd.f32 0.0, %v5409
        %v5411 = vpop.f32.mrf.mxu0
        %v5412 = vadd.f32 0.0, %v5411
        %v5413 = vpop.f32.mrf.mxu0
        %v5414 = vadd.f32 0.0, %v5413
        %5415 = vmatprep.mubr.bf16.mxu0 %v5200
        %5416 = vmatmul.mubr.bf16.gmra.mxu0 %v5199
        %v5417 = vpop.f32.mrf.mxu0
        %v5418 = vadd.f32 0.0, %v5417
        %v5419 = vpop.f32.mrf.mxu0
        %v5420 = vadd.f32 0.0, %v5419
        %v5421 = vpop.f32.mrf.mxu0
        %v5422 = vadd.f32 0.0, %v5421
        %v5423 = vpop.f32.mrf.mxu0
        %v5424 = vadd.f32 0.0, %v5423
        %5425 = vmatprep.mubr.bf16.mxu0 %v5202
        %5426 = vmatmul.mubr.bf16.gmra.mxu0 %v5201
        %v5427 = vpop.f32.mrf.mxu0
        %v5428 = vadd.f32 0.0, %v5427
        %v5429 = vpop.f32.mrf.mxu0
        %v5430 = vadd.f32 0.0, %v5429
        %v5431 = vpop.f32.mrf.mxu0
        %v5432 = vadd.f32 0.0, %v5431
        %v5433 = vpop.f32.mrf.mxu0
        %v5434 = vadd.f32 0.0, %v5433
        %5435 = vmatprep.mubr.bf16.mxu0 %v5204
        %5436 = vmatmul.mubr.bf16.gmra.mxu0 %v5203
        %v5437 = vpop.f32.mrf.mxu0
        %v5438 = vadd.f32 0.0, %v5437
        %v5439 = vpop.f32.mrf.mxu0
        %v5440 = vadd.f32 0.0, %v5439
        %v5441 = vpop.f32.mrf.mxu0
        %v5442 = vadd.f32 0.0, %v5441
        %v5443 = vpop.f32.mrf.mxu0
        %v5444 = vadd.f32 0.0, %v5443
        %5445 = vdwg.mxu0
        %v5446 = vadd.f32 %v5116, %v5408
        %v5447 = vadd.f32 %v5117, %v5410
        %v5448 = vadd.f32 %v5118, %v5412
        %v5449 = vadd.f32 %v5119, %v5414
        %v5450 = vadd.f32 %v5120, %v5418
        %v5451 = vadd.f32 %v5121, %v5420
        %v5452 = vadd.f32 %v5122, %v5422
        %v5453 = vadd.f32 %v5123, %v5424
        %v5454 = vadd.f32 %v5124, %v5428
        %v5455 = vadd.f32 %v5125, %v5430
        %v5456 = vadd.f32 %v5126, %v5432
        %v5457 = vadd.f32 %v5127, %v5434
        %v5458 = vadd.f32 %v5128, %v5438
        %v5459 = vadd.f32 %v5129, %v5440
        %v5460 = vadd.f32 %v5130, %v5442
        %v5461 = vadd.f32 %v5131, %v5444
        %v5462 = vld [vmem:[%s3897] sm:$0xff]
        %v5463 = vld [vmem:[%s3897 + $0x8] sm:$0x11]
        %v5464 = vld [vmem:[%s3897 + $0x10] sm:$0xff]
        %v5465 = vld [vmem:[%s3897 + $0x18] sm:$0x11]
        %v5466 = vld [vmem:[%s3897 + $0x20] sm:$0xff]
        %v5467 = vld [vmem:[%s3897 + $0x28] sm:$0x11]
        %v5468 = vld [vmem:[%s3897 + $0x30] sm:$0xff]
        %v5469 = vld [vmem:[%s3897 + $0x38] sm:$0x11]
        %v5470 = vld [vmem:[%s3897 + $0x40] sm:$0xff]
        %v5471 = vld [vmem:[%s3897 + $0x48] sm:$0x11]
        %v5472 = vld [vmem:[%s3897 + $0x50] sm:$0xff]
        %v5473 = vld [vmem:[%s3897 + $0x58] sm:$0x11]
        %v5474 = vld [vmem:[%s3897 + $0x60] sm:$0xff]
        %v5475 = vld [vmem:[%s3897 + $0x68] sm:$0x11]
        %v5476 = vld [vmem:[%s3897 + $0x70] sm:$0xff]
        %v5477 = vld [vmem:[%s3897 + $0x78] sm:$0x11]
        %v5479 = vshrl.u32 %v5462, 16
        %v5481 = vrot.slane %v5479, 4
        %v5482 = vshll.u32 %v5462, 16
        %v5484 = vrot.slane %v5482, 5
        %v5485 = vor.u32 %v5481, %v5484
        %v5486 = vrot.slane %v5485, 4
        %v5488 = vshll.u32 %v5463, 16
        %v5490 = vrot.slane %v5488, 5
        %v5491 = vsel %vm4078, %v5486, %v5490
        %v5493 = vshrl.u32 %v5464, 16
        %v5495 = vrot.slane %v5493, 4
        %v5496 = vshll.u32 %v5464, 16
        %v5498 = vrot.slane %v5496, 5
        %v5499 = vor.u32 %v5495, %v5498
        %v5500 = vrot.slane %v5499, 4
        %v5502 = vshll.u32 %v5465, 16
        %v5504 = vrot.slane %v5502, 5
        %v5505 = vsel %vm4078, %v5500, %v5504
        %v5507 = vshrl.u32 %v5466, 16
        %v5509 = vrot.slane %v5507, 4
        %v5510 = vshll.u32 %v5466, 16
        %v5512 = vrot.slane %v5510, 5
        %v5513 = vor.u32 %v5509, %v5512
        %v5514 = vrot.slane %v5513, 4
        %v5516 = vshll.u32 %v5467, 16
        %v5518 = vrot.slane %v5516, 5
        %v5519 = vsel %vm4078, %v5514, %v5518
        %v5521 = vshrl.u32 %v5468, 16
        %v5523 = vrot.slane %v5521, 4
        %v5524 = vshll.u32 %v5468, 16
        %v5526 = vrot.slane %v5524, 5
        %v5527 = vor.u32 %v5523, %v5526
        %v5528 = vrot.slane %v5527, 4
        %v5530 = vshll.u32 %v5469, 16
        %v5532 = vrot.slane %v5530, 5
        %v5533 = vsel %vm4078, %v5528, %v5532
        %v5535 = vshrl.u32 %v5470, 16
        %v5537 = vrot.slane %v5535, 4
        %v5538 = vshll.u32 %v5470, 16
        %v5540 = vrot.slane %v5538, 5
        %v5541 = vor.u32 %v5537, %v5540
        %v5542 = vrot.slane %v5541, 4
        %v5544 = vshll.u32 %v5471, 16
        %v5546 = vrot.slane %v5544, 5
        %v5547 = vsel %vm4078, %v5542, %v5546
        %v5549 = vshrl.u32 %v5472, 16
        %v5551 = vrot.slane %v5549, 4
        %v5552 = vshll.u32 %v5472, 16
        %v5554 = vrot.slane %v5552, 5
        %v5555 = vor.u32 %v5551, %v5554
        %v5556 = vrot.slane %v5555, 4
        %v5558 = vshll.u32 %v5473, 16
        %v5560 = vrot.slane %v5558, 5
        %v5561 = vsel %vm4078, %v5556, %v5560
        %v5563 = vshrl.u32 %v5474, 16
        %v5565 = vrot.slane %v5563, 4
        %v5566 = vshll.u32 %v5474, 16
        %v5568 = vrot.slane %v5566, 5
        %v5569 = vor.u32 %v5565, %v5568
        %v5570 = vrot.slane %v5569, 4
        %v5572 = vshll.u32 %v5475, 16
        %v5574 = vrot.slane %v5572, 5
        %v5575 = vsel %vm4078, %v5570, %v5574
        %v5577 = vshrl.u32 %v5476, 16
        %v5579 = vrot.slane %v5577, 4
        %v5580 = vshll.u32 %v5476, 16
        %v5582 = vrot.slane %v5580, 5
        %v5583 = vor.u32 %v5579, %v5582
        %v5584 = vrot.slane %v5583, 4
        %v5586 = vshll.u32 %v5477, 16
        %v5588 = vrot.slane %v5586, 5
        %v5589 = vsel %vm4078, %v5584, %v5588
        %s5590 = scalar_lea.vmem [#allocation7], 1024
        %v5591 = vld [vmem:[%s5590] sm:$0xff]
        %v5592 = vld [vmem:[%s5590 + $0x8] sm:$0xff]
        %v5593 = vld [vmem:[%s5590 + $0x10] sm:$0xff]
        %v5594 = vld [vmem:[%s5590 + $0x18] sm:$0xff]
        %v5595 = vld [vmem:[%s5590 + $0x20] sm:$0xff]
        %v5596 = vld [vmem:[%s5590 + $0x28] sm:$0xff]
        %v5597 = vld [vmem:[%s5590 + $0x30] sm:$0xff]
        %v5598 = vld [vmem:[%s5590 + $0x38] sm:$0xff]
        %v5599 = vld [vmem:[%s5590 + $0x40] sm:$0xff]
        %v5600 = vld [vmem:[%s5590 + $0x48] sm:$0xff]
        %v5601 = vld [vmem:[%s5590 + $0x50] sm:$0xff]
        %v5602 = vld [vmem:[%s5590 + $0x58] sm:$0xff]
        %v5603 = vld [vmem:[%s5590 + $0x60] sm:$0xff]
        %v5604 = vld [vmem:[%s5590 + $0x68] sm:$0xff]
        %v5605 = vld [vmem:[%s5590 + $0x70] sm:$0xff]
        %v5606 = vld [vmem:[%s5590 + $0x78] sm:$0xff]
        %v5607 = vld [vmem:[%s5590 + $0x80] sm:$0xff]
        %v5608 = vld [vmem:[%s5590 + $0x88] sm:$0xff]
        %v5609 = vld [vmem:[%s5590 + $0x90] sm:$0xff]
        %v5610 = vld [vmem:[%s5590 + $0x98] sm:$0xff]
        %v5611 = vld [vmem:[%s5590 + $0xa0] sm:$0xff]
        %v5612 = vld [vmem:[%s5590 + $0xa8] sm:$0xff]
        %v5613 = vld [vmem:[%s5590 + $0xb0] sm:$0xff]
        %v5614 = vld [vmem:[%s5590 + $0xb8] sm:$0xff]
        %v5615 = vld [vmem:[%s5590 + $0xc0] sm:$0xff]
        %v5616 = vld [vmem:[%s5590 + $0xc8] sm:$0xff]
        %v5617 = vld [vmem:[%s5590 + $0xd0] sm:$0xff]
        %v5618 = vld [vmem:[%s5590 + $0xd8] sm:$0xff]
        %v5619 = vld [vmem:[%s5590 + $0xe0] sm:$0xff]
        %v5620 = vld [vmem:[%s5590 + $0xe8] sm:$0xff]
        %v5621 = vld [vmem:[%s5590 + $0xf0] sm:$0xff]
        %v5622 = vld [vmem:[%s5590 + $0xf8] sm:$0xff]
        %v5623 = vunpack.c.l.b16 %v5491
        %v5624 = vunpack.c.h.b16 %v5491
        %v5625 = vunpack.c.l.b16 %v5505
        %v5626 = vunpack.c.h.b16 %v5505
        %v5627 = vunpack.c.l.b16 %v5519
        %v5628 = vunpack.c.h.b16 %v5519
        %v5629 = vunpack.c.l.b16 %v5533
        %v5630 = vunpack.c.h.b16 %v5533
        %v5631 = vunpack.c.l.b16 %v5547
        %v5632 = vunpack.c.h.b16 %v5547
        %v5633 = vunpack.c.l.b16 %v5561
        %v5634 = vunpack.c.h.b16 %v5561
        %v5635 = vunpack.c.l.b16 %v5575
        %v5636 = vunpack.c.h.b16 %v5575
        %v5637 = vunpack.c.l.b16 %v5589
        %v5638 = vunpack.c.h.b16 %v5589
        %v5639 = vpack.c.b16 %v5625, %v5623
        %v5640 = vpack.c.b16 %v5626, %v5624
        %v5641 = vpack.c.b16 %v5629, %v5627
        %v5642 = vpack.c.b16 %v5630, %v5628
        %v5643 = vpack.c.b16 %v5633, %v5631
        %v5644 = vpack.c.b16 %v5634, %v5632
        %v5645 = vpack.c.b16 %v5637, %v5635
        %v5646 = vpack.c.b16 %v5638, %v5636
        %v5687 = vunpack.c.l.b16 %v5591
        %v5688 = vunpack.c.h.b16 %v5591
        %v5689 = vunpack.c.l.b16 %v5592
        %v5690 = vunpack.c.h.b16 %v5592
        %v5691 = vunpack.c.l.b16 %v5593
        %v5692 = vunpack.c.h.b16 %v5593
        %v5693 = vunpack.c.l.b16 %v5594
        %v5694 = vunpack.c.h.b16 %v5594
        %v5695 = vunpack.c.l.b16 %v5595
        %v5696 = vunpack.c.h.b16 %v5595
        %v5697 = vunpack.c.l.b16 %v5596
        %v5698 = vunpack.c.h.b16 %v5596
        %v5699 = vunpack.c.l.b16 %v5597
        %v5700 = vunpack.c.h.b16 %v5597
        %v5701 = vunpack.c.l.b16 %v5598
        %v5702 = vunpack.c.h.b16 %v5598
        %v5703 = vunpack.c.l.b16 %v5599
        %v5704 = vunpack.c.h.b16 %v5599
        %v5705 = vunpack.c.l.b16 %v5600
        %v5706 = vunpack.c.h.b16 %v5600
        %v5707 = vunpack.c.l.b16 %v5601
        %v5708 = vunpack.c.h.b16 %v5601
        %v5709 = vunpack.c.l.b16 %v5602
        %v5710 = vunpack.c.h.b16 %v5602
        %v5711 = vunpack.c.l.b16 %v5603
        %v5712 = vunpack.c.h.b16 %v5603
        %v5713 = vunpack.c.l.b16 %v5604
        %v5714 = vunpack.c.h.b16 %v5604
        %v5715 = vunpack.c.l.b16 %v5605
        %v5716 = vunpack.c.h.b16 %v5605
        %v5717 = vunpack.c.l.b16 %v5606
        %v5718 = vunpack.c.h.b16 %v5606
        %v5719 = vunpack.c.l.b16 %v5607
        %v5720 = vunpack.c.h.b16 %v5607
        %v5721 = vunpack.c.l.b16 %v5608
        %v5722 = vunpack.c.h.b16 %v5608
        %v5723 = vunpack.c.l.b16 %v5609
        %v5724 = vunpack.c.h.b16 %v5609
        %v5725 = vunpack.c.l.b16 %v5610
        %v5726 = vunpack.c.h.b16 %v5610
        %v5727 = vunpack.c.l.b16 %v5611
        %v5728 = vunpack.c.h.b16 %v5611
        %v5729 = vunpack.c.l.b16 %v5612
        %v5730 = vunpack.c.h.b16 %v5612
        %v5731 = vunpack.c.l.b16 %v5613
        %v5732 = vunpack.c.h.b16 %v5613
        %v5733 = vunpack.c.l.b16 %v5614
        %v5734 = vunpack.c.h.b16 %v5614
        %v5735 = vunpack.c.l.b16 %v5615
        %v5736 = vunpack.c.h.b16 %v5615
        %v5737 = vunpack.c.l.b16 %v5616
        %v5738 = vunpack.c.h.b16 %v5616
        %v5739 = vunpack.c.l.b16 %v5617
        %v5740 = vunpack.c.h.b16 %v5617
        %v5741 = vunpack.c.l.b16 %v5618
        %v5742 = vunpack.c.h.b16 %v5618
        %v5743 = vunpack.c.l.b16 %v5619
        %v5744 = vunpack.c.h.b16 %v5619
        %v5745 = vunpack.c.l.b16 %v5620
        %v5746 = vunpack.c.h.b16 %v5620
        %v5747 = vunpack.c.l.b16 %v5621
        %v5748 = vunpack.c.h.b16 %v5621
        %v5749 = vunpack.c.l.b16 %v5622
        %v5750 = vunpack.c.h.b16 %v5622
        %v5751 = vpack.c.b16 %v5689, %v5687
        %v5752 = vpack.c.b16 %v5690, %v5688
        %v5753 = vpack.c.b16 %v5693, %v5691
        %v5754 = vpack.c.b16 %v5694, %v5692
        %v5755 = vpack.c.b16 %v5697, %v5695
        %v5756 = vpack.c.b16 %v5698, %v5696
        %v5757 = vpack.c.b16 %v5701, %v5699
        %v5758 = vpack.c.b16 %v5702, %v5700
        %v5759 = vpack.c.b16 %v5705, %v5703
        %v5760 = vpack.c.b16 %v5706, %v5704
        %v5761 = vpack.c.b16 %v5709, %v5707
        %v5762 = vpack.c.b16 %v5710, %v5708
        %v5763 = vpack.c.b16 %v5713, %v5711
        %v5764 = vpack.c.b16 %v5714, %v5712
        %v5765 = vpack.c.b16 %v5717, %v5715
        %v5766 = vpack.c.b16 %v5718, %v5716
        %v5767 = vpack.c.b16 %v5721, %v5719
        %v5768 = vpack.c.b16 %v5722, %v5720
        %v5769 = vpack.c.b16 %v5725, %v5723
        %v5770 = vpack.c.b16 %v5726, %v5724
        %v5771 = vpack.c.b16 %v5729, %v5727
        %v5772 = vpack.c.b16 %v5730, %v5728
        %v5773 = vpack.c.b16 %v5733, %v5731
        %v5774 = vpack.c.b16 %v5734, %v5732
        %v5775 = vpack.c.b16 %v5737, %v5735
        %v5776 = vpack.c.b16 %v5738, %v5736
        %v5777 = vpack.c.b16 %v5741, %v5739
        %v5778 = vpack.c.b16 %v5742, %v5740
        %v5779 = vpack.c.b16 %v5745, %v5743
        %v5780 = vpack.c.b16 %v5746, %v5744
        %v5781 = vpack.c.b16 %v5749, %v5747
        %v5782 = vpack.c.b16 %v5750, %v5748
        %5815 = vmatprep.subr.bf16.mxu0 %v5766
        %5816 = vmatpush1.bf16.msra.mxu0 %v5765
        %5817 = vmatprep.subr.bf16.mxu0 %v5764
        %5818 = vmatpush1.bf16.msra.mxu0 %v5763
        %5819 = vmatprep.subr.bf16.mxu0 %v5762
        %5820 = vmatpush1.bf16.msra.mxu0 %v5761
        %5821 = vmatprep.subr.bf16.mxu0 %v5760
        %5822 = vmatpush1.bf16.msra.mxu0 %v5759
        %5823 = vmatprep.subr.bf16.mxu0 %v5758
        %5824 = vmatpush1.bf16.msra.mxu0 %v5757
        %5825 = vmatprep.subr.bf16.mxu0 %v5756
        %5826 = vmatpush1.bf16.msra.mxu0 %v5755
        %5827 = vmatprep.subr.bf16.mxu0 %v5754
        %5828 = vmatpush1.bf16.msra.mxu0 %v5753
        %5829 = vmatprep.subr.bf16.mxu0 %v5752
        %5830 = vmatpush1.bf16.msra.mxu0 %v5751
        %5831 = vmatprep.subr.bf16.mxu0 %v5782
        %5832 = vmatpush2.bf16.msra.mxu0 %v5781
        %5833 = vmatprep.subr.bf16.mxu0 %v5780
        %5834 = vmatpush2.bf16.msra.mxu0 %v5779
        %5835 = vmatprep.subr.bf16.mxu0 %v5778
        %5836 = vmatpush2.bf16.msra.mxu0 %v5777
        %5837 = vmatprep.subr.bf16.mxu0 %v5776
        %5838 = vmatpush2.bf16.msra.mxu0 %v5775
        %5839 = vmatprep.subr.bf16.mxu0 %v5774
        %5840 = vmatpush2.bf16.msra.mxu0 %v5773
        %5841 = vmatprep.subr.bf16.mxu0 %v5772
        %5842 = vmatpush2.bf16.msra.mxu0 %v5771
        %5843 = vmatprep.subr.bf16.mxu0 %v5770
        %5844 = vmatpush2.bf16.msra.mxu0 %v5769
        %5845 = vmatprep.subr.bf16.mxu0 %v5768
        %5846 = vmatpush2.bf16.msra.mxu0 %v5767
        %5847 = vmatprep.mubr.bf16.mxu0 %v5640
        %5848 = vmatmul.mubr.bf16.gmra.mxu0 %v5639
        %v5849 = vpop.f32.mrf.mxu0
        %v5850 = vadd.f32 0.0, %v5849
        %v5851 = vpop.f32.mrf.mxu0
        %v5852 = vadd.f32 0.0, %v5851
        %v5853 = vpop.f32.mrf.mxu0
        %v5854 = vadd.f32 0.0, %v5853
        %v5855 = vpop.f32.mrf.mxu0
        %v5856 = vadd.f32 0.0, %v5855
        %5857 = vmatprep.mubr.bf16.mxu0 %v5642
        %5858 = vmatmul.mubr.bf16.gmra.mxu0 %v5641
        %v5859 = vpop.f32.mrf.mxu0
        %v5860 = vadd.f32 0.0, %v5859
        %v5861 = vpop.f32.mrf.mxu0
        %v5862 = vadd.f32 0.0, %v5861
        %v5863 = vpop.f32.mrf.mxu0
        %v5864 = vadd.f32 0.0, %v5863
        %v5865 = vpop.f32.mrf.mxu0
        %v5866 = vadd.f32 0.0, %v5865
        %5867 = vmatprep.mubr.bf16.mxu0 %v5644
        %5868 = vmatmul.mubr.bf16.gmra.mxu0 %v5643
        %v5869 = vpop.f32.mrf.mxu0
        %v5870 = vadd.f32 0.0, %v5869
        %v5871 = vpop.f32.mrf.mxu0
        %v5872 = vadd.f32 0.0, %v5871
        %v5873 = vpop.f32.mrf.mxu0
        %v5874 = vadd.f32 0.0, %v5873
        %v5875 = vpop.f32.mrf.mxu0
        %v5876 = vadd.f32 0.0, %v5875
        %5877 = vmatprep.mubr.bf16.mxu0 %v5646
        %5878 = vmatmul.mubr.bf16.gmra.mxu0 %v5645
        %v5879 = vpop.f32.mrf.mxu0
        %v5880 = vadd.f32 0.0, %v5879
        %v5881 = vpop.f32.mrf.mxu0
        %v5882 = vadd.f32 0.0, %v5881
        %v5883 = vpop.f32.mrf.mxu0
        %v5884 = vadd.f32 0.0, %v5883
        %v5885 = vpop.f32.mrf.mxu0
        %v5886 = vadd.f32 0.0, %v5885
        %5887 = vdwg.mxu0
        %v5888 = vadd.f32 %v5446, %v5850
        %v5889 = vadd.f32 %v5447, %v5852
        %v5890 = vadd.f32 %v5448, %v5854
        %v5891 = vadd.f32 %v5449, %v5856
        %v5892 = vadd.f32 %v5450, %v5860
        %v5893 = vadd.f32 %v5451, %v5862
        %v5894 = vadd.f32 %v5452, %v5864
        %v5895 = vadd.f32 %v5453, %v5866
        %v5896 = vadd.f32 %v5454, %v5870
        %v5897 = vadd.f32 %v5455, %v5872
        %v5898 = vadd.f32 %v5456, %v5874
        %v5899 = vadd.f32 %v5457, %v5876
        %v5900 = vadd.f32 %v5458, %v5880
        %v5901 = vadd.f32 %v5459, %v5882
        %v5902 = vadd.f32 %v5460, %v5884
        %v5903 = vadd.f32 %v5461, %v5886
        %v5904 = vld [vmem:[%s3897] sm:$0xee]
        %v5905 = vld [vmem:[%s3897 + $0x10] sm:$0xee]
        %v5906 = vld [vmem:[%s3897 + $0x20] sm:$0xee]
        %v5907 = vld [vmem:[%s3897 + $0x30] sm:$0xee]
        %v5908 = vld [vmem:[%s3897 + $0x40] sm:$0xee]
        %v5909 = vld [vmem:[%s3897 + $0x50] sm:$0xee]
        %v5910 = vld [vmem:[%s3897 + $0x60] sm:$0xee]
        %v5911 = vld [vmem:[%s3897 + $0x70] sm:$0xee]
        %v5928 = vrot.slane %v5904, 5
        %v5929 = vrot.slane %v5928, 4
        %v5930 = vrot.slane %v5463, 5
        %v5931 = vsel %vm490, %v5929, %v5930
        %v5932 = vrot.slane %v5905, 5
        %v5933 = vrot.slane %v5932, 4
        %v5934 = vrot.slane %v5465, 5
        %v5935 = vsel %vm490, %v5933, %v5934
        %v5936 = vrot.slane %v5906, 5
        %v5937 = vrot.slane %v5936, 4
        %v5938 = vrot.slane %v5467, 5
        %v5939 = vsel %vm490, %v5937, %v5938
        %v5940 = vrot.slane %v5907, 5
        %v5941 = vrot.slane %v5940, 4
        %v5942 = vrot.slane %v5469, 5
        %v5943 = vsel %vm490, %v5941, %v5942
        %v5944 = vrot.slane %v5908, 5
        %v5945 = vrot.slane %v5944, 4
        %v5946 = vrot.slane %v5471, 5
        %v5947 = vsel %vm490, %v5945, %v5946
        %v5948 = vrot.slane %v5909, 5
        %v5949 = vrot.slane %v5948, 4
        %v5950 = vrot.slane %v5473, 5
        %v5951 = vsel %vm490, %v5949, %v5950
        %v5952 = vrot.slane %v5910, 5
        %v5953 = vrot.slane %v5952, 4
        %v5954 = vrot.slane %v5475, 5
        %v5955 = vsel %vm490, %v5953, %v5954
        %v5956 = vrot.slane %v5911, 5
        %v5957 = vrot.slane %v5956, 4
        %v5958 = vrot.slane %v5477, 5
        %v5959 = vsel %vm490, %v5957, %v5958
        %s5960 = scalar_lea.vmem [#allocation7], 1280
        %v5961 = vld [vmem:[%s5960] sm:$0xff]
        %v5962 = vld [vmem:[%s5960 + $0x8] sm:$0xff]
        %v5963 = vld [vmem:[%s5960 + $0x10] sm:$0xff]
        %v5964 = vld [vmem:[%s5960 + $0x18] sm:$0xff]
        %v5965 = vld [vmem:[%s5960 + $0x20] sm:$0xff]
        %v5966 = vld [vmem:[%s5960 + $0x28] sm:$0xff]
        %v5967 = vld [vmem:[%s5960 + $0x30] sm:$0xff]
        %v5968 = vld [vmem:[%s5960 + $0x38] sm:$0xff]
        %v5969 = vld [vmem:[%s5960 + $0x40] sm:$0xff]
        %v5970 = vld [vmem:[%s5960 + $0x48] sm:$0xff]
        %v5971 = vld [vmem:[%s5960 + $0x50] sm:$0xff]
        %v5972 = vld [vmem:[%s5960 + $0x58] sm:$0xff]
        %v5973 = vld [vmem:[%s5960 + $0x60] sm:$0xff]
        %v5974 = vld [vmem:[%s5960 + $0x68] sm:$0xff]
        %v5975 = vld [vmem:[%s5960 + $0x70] sm:$0xff]
        %v5976 = vld [vmem:[%s5960 + $0x78] sm:$0xff]
        %v5977 = vld [vmem:[%s5960 + $0x80] sm:$0xff]
        %v5978 = vld [vmem:[%s5960 + $0x88] sm:$0xff]
        %v5979 = vld [vmem:[%s5960 + $0x90] sm:$0xff]
        %v5980 = vld [vmem:[%s5960 + $0x98] sm:$0xff]
        %v5981 = vld [vmem:[%s5960 + $0xa0] sm:$0xff]
        %v5982 = vld [vmem:[%s5960 + $0xa8] sm:$0xff]
        %v5983 = vld [vmem:[%s5960 + $0xb0] sm:$0xff]
        %v5984 = vld [vmem:[%s5960 + $0xb8] sm:$0xff]
        %v5985 = vld [vmem:[%s5960 + $0xc0] sm:$0xff]
        %v5986 = vld [vmem:[%s5960 + $0xc8] sm:$0xff]
        %v5987 = vld [vmem:[%s5960 + $0xd0] sm:$0xff]
        %v5988 = vld [vmem:[%s5960 + $0xd8] sm:$0xff]
        %v5989 = vld [vmem:[%s5960 + $0xe0] sm:$0xff]
        %v5990 = vld [vmem:[%s5960 + $0xe8] sm:$0xff]
        %v5991 = vld [vmem:[%s5960 + $0xf0] sm:$0xff]
        %v5992 = vld [vmem:[%s5960 + $0xf8] sm:$0xff]
        %v5993 = vunpack.c.l.b16 %v5931
        %v5994 = vunpack.c.h.b16 %v5931
        %v5995 = vunpack.c.l.b16 %v5935
        %v5996 = vunpack.c.h.b16 %v5935
        %v5997 = vunpack.c.l.b16 %v5939
        %v5998 = vunpack.c.h.b16 %v5939
        %v5999 = vunpack.c.l.b16 %v5943
        %v6000 = vunpack.c.h.b16 %v5943
        %v6001 = vunpack.c.l.b16 %v5947
        %v6002 = vunpack.c.h.b16 %v5947
        %v6003 = vunpack.c.l.b16 %v5951
        %v6004 = vunpack.c.h.b16 %v5951
        %v6005 = vunpack.c.l.b16 %v5955
        %v6006 = vunpack.c.h.b16 %v5955
        %v6007 = vunpack.c.l.b16 %v5959
        %v6008 = vunpack.c.h.b16 %v5959
        %v6009 = vpack.c.b16 %v5995, %v5993
        %v6010 = vpack.c.b16 %v5996, %v5994
        %v6011 = vpack.c.b16 %v5999, %v5997
        %v6012 = vpack.c.b16 %v6000, %v5998
        %v6013 = vpack.c.b16 %v6003, %v6001
        %v6014 = vpack.c.b16 %v6004, %v6002
        %v6015 = vpack.c.b16 %v6007, %v6005
        %v6016 = vpack.c.b16 %v6008, %v6006
        %v6057 = vunpack.c.l.b16 %v5961
        %v6058 = vunpack.c.h.b16 %v5961
        %v6059 = vunpack.c.l.b16 %v5962
        %v6060 = vunpack.c.h.b16 %v5962
        %v6061 = vunpack.c.l.b16 %v5963
        %v6062 = vunpack.c.h.b16 %v5963
        %v6063 = vunpack.c.l.b16 %v5964
        %v6064 = vunpack.c.h.b16 %v5964
        %v6065 = vunpack.c.l.b16 %v5965
        %v6066 = vunpack.c.h.b16 %v5965
        %v6067 = vunpack.c.l.b16 %v5966
        %v6068 = vunpack.c.h.b16 %v5966
        %v6069 = vunpack.c.l.b16 %v5967
        %v6070 = vunpack.c.h.b16 %v5967
        %v6071 = vunpack.c.l.b16 %v5968
        %v6072 = vunpack.c.h.b16 %v5968
        %v6073 = vunpack.c.l.b16 %v5969
        %v6074 = vunpack.c.h.b16 %v5969
        %v6075 = vunpack.c.l.b16 %v5970
        %v6076 = vunpack.c.h.b16 %v5970
        %v6077 = vunpack.c.l.b16 %v5971
        %v6078 = vunpack.c.h.b16 %v5971
        %v6079 = vunpack.c.l.b16 %v5972
        %v6080 = vunpack.c.h.b16 %v5972
        %v6081 = vunpack.c.l.b16 %v5973
        %v6082 = vunpack.c.h.b16 %v5973
        %v6083 = vunpack.c.l.b16 %v5974
        %v6084 = vunpack.c.h.b16 %v5974
        %v6085 = vunpack.c.l.b16 %v5975
        %v6086 = vunpack.c.h.b16 %v5975
        %v6087 = vunpack.c.l.b16 %v5976
        %v6088 = vunpack.c.h.b16 %v5976
        %v6089 = vunpack.c.l.b16 %v5977
        %v6090 = vunpack.c.h.b16 %v5977
        %v6091 = vunpack.c.l.b16 %v5978
        %v6092 = vunpack.c.h.b16 %v5978
        %v6093 = vunpack.c.l.b16 %v5979
        %v6094 = vunpack.c.h.b16 %v5979
        %v6095 = vunpack.c.l.b16 %v5980
        %v6096 = vunpack.c.h.b16 %v5980
        %v6097 = vunpack.c.l.b16 %v5981
        %v6098 = vunpack.c.h.b16 %v5981
        %v6099 = vunpack.c.l.b16 %v5982
        %v6100 = vunpack.c.h.b16 %v5982
        %v6101 = vunpack.c.l.b16 %v5983
        %v6102 = vunpack.c.h.b16 %v5983
        %v6103 = vunpack.c.l.b16 %v5984
        %v6104 = vunpack.c.h.b16 %v5984
        %v6105 = vunpack.c.l.b16 %v5985
        %v6106 = vunpack.c.h.b16 %v5985
        %v6107 = vunpack.c.l.b16 %v5986
        %v6108 = vunpack.c.h.b16 %v5986
        %v6109 = vunpack.c.l.b16 %v5987
        %v6110 = vunpack.c.h.b16 %v5987
        %v6111 = vunpack.c.l.b16 %v5988
        %v6112 = vunpack.c.h.b16 %v5988
        %v6113 = vunpack.c.l.b16 %v5989
        %v6114 = vunpack.c.h.b16 %v5989
        %v6115 = vunpack.c.l.b16 %v5990
        %v6116 = vunpack.c.h.b16 %v5990
        %v6117 = vunpack.c.l.b16 %v5991
        %v6118 = vunpack.c.h.b16 %v5991
        %v6119 = vunpack.c.l.b16 %v5992
        %v6120 = vunpack.c.h.b16 %v5992
        %v6121 = vpack.c.b16 %v6059, %v6057
        %v6122 = vpack.c.b16 %v6060, %v6058
        %v6123 = vpack.c.b16 %v6063, %v6061
        %v6124 = vpack.c.b16 %v6064, %v6062
        %v6125 = vpack.c.b16 %v6067, %v6065
        %v6126 = vpack.c.b16 %v6068, %v6066
        %v6127 = vpack.c.b16 %v6071, %v6069
        %v6128 = vpack.c.b16 %v6072, %v6070
        %v6129 = vpack.c.b16 %v6075, %v6073
        %v6130 = vpack.c.b16 %v6076, %v6074
        %v6131 = vpack.c.b16 %v6079, %v6077
        %v6132 = vpack.c.b16 %v6080, %v6078
        %v6133 = vpack.c.b16 %v6083, %v6081
        %v6134 = vpack.c.b16 %v6084, %v6082
        %v6135 = vpack.c.b16 %v6087, %v6085
        %v6136 = vpack.c.b16 %v6088, %v6086
        %v6137 = vpack.c.b16 %v6091, %v6089
        %v6138 = vpack.c.b16 %v6092, %v6090
        %v6139 = vpack.c.b16 %v6095, %v6093
        %v6140 = vpack.c.b16 %v6096, %v6094
        %v6141 = vpack.c.b16 %v6099, %v6097
        %v6142 = vpack.c.b16 %v6100, %v6098
        %v6143 = vpack.c.b16 %v6103, %v6101
        %v6144 = vpack.c.b16 %v6104, %v6102
        %v6145 = vpack.c.b16 %v6107, %v6105
        %v6146 = vpack.c.b16 %v6108, %v6106
        %v6147 = vpack.c.b16 %v6111, %v6109
        %v6148 = vpack.c.b16 %v6112, %v6110
        %v6149 = vpack.c.b16 %v6115, %v6113
        %v6150 = vpack.c.b16 %v6116, %v6114
        %v6151 = vpack.c.b16 %v6119, %v6117
        %v6152 = vpack.c.b16 %v6120, %v6118
        %6185 = vmatprep.subr.bf16.mxu0 %v6136
        %6186 = vmatpush1.bf16.msra.mxu0 %v6135
        %6187 = vmatprep.subr.bf16.mxu0 %v6134
        %6188 = vmatpush1.bf16.msra.mxu0 %v6133
        %6189 = vmatprep.subr.bf16.mxu0 %v6132
        %6190 = vmatpush1.bf16.msra.mxu0 %v6131
        %6191 = vmatprep.subr.bf16.mxu0 %v6130
        %6192 = vmatpush1.bf16.msra.mxu0 %v6129
        %6193 = vmatprep.subr.bf16.mxu0 %v6128
        %6194 = vmatpush1.bf16.msra.mxu0 %v6127
        %6195 = vmatprep.subr.bf16.mxu0 %v6126
        %6196 = vmatpush1.bf16.msra.mxu0 %v6125
        %6197 = vmatprep.subr.bf16.mxu0 %v6124
        %6198 = vmatpush1.bf16.msra.mxu0 %v6123
        %6199 = vmatprep.subr.bf16.mxu0 %v6122
        %6200 = vmatpush1.bf16.msra.mxu0 %v6121
        %6201 = vmatprep.subr.bf16.mxu0 %v6152
        %6202 = vmatpush2.bf16.msra.mxu0 %v6151
        %6203 = vmatprep.subr.bf16.mxu0 %v6150
        %6204 = vmatpush2.bf16.msra.mxu0 %v6149
        %6205 = vmatprep.subr.bf16.mxu0 %v6148
        %6206 = vmatpush2.bf16.msra.mxu0 %v6147
        %6207 = vmatprep.subr.bf16.mxu0 %v6146
        %6208 = vmatpush2.bf16.msra.mxu0 %v6145
        %6209 = vmatprep.subr.bf16.mxu0 %v6144
        %6210 = vmatpush2.bf16.msra.mxu0 %v6143
        %6211 = vmatprep.subr.bf16.mxu0 %v6142
        %6212 = vmatpush2.bf16.msra.mxu0 %v6141
        %6213 = vmatprep.subr.bf16.mxu0 %v6140
        %6214 = vmatpush2.bf16.msra.mxu0 %v6139
        %6215 = vmatprep.subr.bf16.mxu0 %v6138
        %6216 = vmatpush2.bf16.msra.mxu0 %v6137
        %6217 = vmatprep.mubr.bf16.mxu0 %v6010
        %6218 = vmatmul.mubr.bf16.gmra.mxu0 %v6009
        %v6219 = vpop.f32.mrf.mxu0
        %v6220 = vadd.f32 0.0, %v6219
        %v6221 = vpop.f32.mrf.mxu0
        %v6222 = vadd.f32 0.0, %v6221
        %v6223 = vpop.f32.mrf.mxu0
        %v6224 = vadd.f32 0.0, %v6223
        %v6225 = vpop.f32.mrf.mxu0
        %v6226 = vadd.f32 0.0, %v6225
        %6227 = vmatprep.mubr.bf16.mxu0 %v6012
        %6228 = vmatmul.mubr.bf16.gmra.mxu0 %v6011
        %v6229 = vpop.f32.mrf.mxu0
        %v6230 = vadd.f32 0.0, %v6229
        %v6231 = vpop.f32.mrf.mxu0
        %v6232 = vadd.f32 0.0, %v6231
        %v6233 = vpop.f32.mrf.mxu0
        %v6234 = vadd.f32 0.0, %v6233
        %v6235 = vpop.f32.mrf.mxu0
        %v6236 = vadd.f32 0.0, %v6235
        %6237 = vmatprep.mubr.bf16.mxu0 %v6014
        %6238 = vmatmul.mubr.bf16.gmra.mxu0 %v6013
        %v6239 = vpop.f32.mrf.mxu0
        %v6240 = vadd.f32 0.0, %v6239
        %v6241 = vpop.f32.mrf.mxu0
        %v6242 = vadd.f32 0.0, %v6241
        %v6243 = vpop.f32.mrf.mxu0
        %v6244 = vadd.f32 0.0, %v6243
        %v6245 = vpop.f32.mrf.mxu0
        %v6246 = vadd.f32 0.0, %v6245
        %6247 = vmatprep.mubr.bf16.mxu0 %v6016
        %6248 = vmatmul.mubr.bf16.gmra.mxu0 %v6015
        %v6249 = vpop.f32.mrf.mxu0
        %v6250 = vadd.f32 0.0, %v6249
        %v6251 = vpop.f32.mrf.mxu0
        %v6252 = vadd.f32 0.0, %v6251
        %v6253 = vpop.f32.mrf.mxu0
        %v6254 = vadd.f32 0.0, %v6253
        %v6255 = vpop.f32.mrf.mxu0
        %v6256 = vadd.f32 0.0, %v6255
        %6257 = vdwg.mxu0
        %v6258 = vadd.f32 %v5888, %v6220
        %v6259 = vadd.f32 %v5889, %v6222
        %v6260 = vadd.f32 %v5890, %v6224
        %v6261 = vadd.f32 %v5891, %v6226
        %v6262 = vadd.f32 %v5892, %v6230
        %v6263 = vadd.f32 %v5893, %v6232
        %v6264 = vadd.f32 %v5894, %v6234
        %v6265 = vadd.f32 %v5895, %v6236
        %v6266 = vadd.f32 %v5896, %v6240
        %v6267 = vadd.f32 %v5897, %v6242
        %v6268 = vadd.f32 %v5898, %v6244
        %v6269 = vadd.f32 %v5899, %v6246
        %v6270 = vadd.f32 %v5900, %v6250
        %v6271 = vadd.f32 %v5901, %v6252
        %v6272 = vadd.f32 %v5902, %v6254
        %v6273 = vadd.f32 %v5903, %v6256
        %s6274 = scalar_lea.vmem [#allocation3], 32
        %v6275 = vld [vmem:[%s6274] sm:$0xff]
        %v6276 = vld [vmem:[%s6274 + $0x10] sm:$0xff]
        %v6277 = vld [vmem:[%s6274 + $0x20] sm:$0xff]
        %v6278 = vld [vmem:[%s6274 + $0x30] sm:$0xff]
        %v6279 = vld [vmem:[%s6274 + $0x40] sm:$0xff]
        %v6280 = vld [vmem:[%s6274 + $0x50] sm:$0xff]
        %v6281 = vld [vmem:[%s6274 + $0x60] sm:$0xff]
        %v6282 = vld [vmem:[%s6274 + $0x70] sm:$0xff]
        %s6283 = scalar_lea.vmem [#allocation7], 1536
        %v6284 = vld [vmem:[%s6283] sm:$0xff]
        %v6285 = vld [vmem:[%s6283 + $0x8] sm:$0xff]
        %v6286 = vld [vmem:[%s6283 + $0x10] sm:$0xff]
        %v6287 = vld [vmem:[%s6283 + $0x18] sm:$0xff]
        %v6288 = vld [vmem:[%s6283 + $0x20] sm:$0xff]
        %v6289 = vld [vmem:[%s6283 + $0x28] sm:$0xff]
        %v6290 = vld [vmem:[%s6283 + $0x30] sm:$0xff]
        %v6291 = vld [vmem:[%s6283 + $0x38] sm:$0xff]
        %v6292 = vld [vmem:[%s6283 + $0x40] sm:$0xff]
        %v6293 = vld [vmem:[%s6283 + $0x48] sm:$0xff]
        %v6294 = vld [vmem:[%s6283 + $0x50] sm:$0xff]
        %v6295 = vld [vmem:[%s6283 + $0x58] sm:$0xff]
        %v6296 = vld [vmem:[%s6283 + $0x60] sm:$0xff]
        %v6297 = vld [vmem:[%s6283 + $0x68] sm:$0xff]
        %v6298 = vld [vmem:[%s6283 + $0x70] sm:$0xff]
        %v6299 = vld [vmem:[%s6283 + $0x78] sm:$0xff]
        %v6300 = vld [vmem:[%s6283 + $0x80] sm:$0xff]
        %v6301 = vld [vmem:[%s6283 + $0x88] sm:$0xff]
        %v6302 = vld [vmem:[%s6283 + $0x90] sm:$0xff]
        %v6303 = vld [vmem:[%s6283 + $0x98] sm:$0xff]
        %v6304 = vld [vmem:[%s6283 + $0xa0] sm:$0xff]
        %v6305 = vld [vmem:[%s6283 + $0xa8] sm:$0xff]
        %v6306 = vld [vmem:[%s6283 + $0xb0] sm:$0xff]
        %v6307 = vld [vmem:[%s6283 + $0xb8] sm:$0xff]
        %v6308 = vld [vmem:[%s6283 + $0xc0] sm:$0xff]
        %v6309 = vld [vmem:[%s6283 + $0xc8] sm:$0xff]
        %v6310 = vld [vmem:[%s6283 + $0xd0] sm:$0xff]
        %v6311 = vld [vmem:[%s6283 + $0xd8] sm:$0xff]
        %v6312 = vld [vmem:[%s6283 + $0xe0] sm:$0xff]
        %v6313 = vld [vmem:[%s6283 + $0xe8] sm:$0xff]
        %v6314 = vld [vmem:[%s6283 + $0xf0] sm:$0xff]
        %v6315 = vld [vmem:[%s6283 + $0xf8] sm:$0xff]
        %v6324 = vunpack.c.l.b16 %v6275
        %v6325 = vunpack.c.h.b16 %v6275
        %v6326 = vunpack.c.l.b16 %v6276
        %v6327 = vunpack.c.h.b16 %v6276
        %v6328 = vunpack.c.l.b16 %v6277
        %v6329 = vunpack.c.h.b16 %v6277
        %v6330 = vunpack.c.l.b16 %v6278
        %v6331 = vunpack.c.h.b16 %v6278
        %v6332 = vunpack.c.l.b16 %v6279
        %v6333 = vunpack.c.h.b16 %v6279
        %v6334 = vunpack.c.l.b16 %v6280
        %v6335 = vunpack.c.h.b16 %v6280
        %v6336 = vunpack.c.l.b16 %v6281
        %v6337 = vunpack.c.h.b16 %v6281
        %v6338 = vunpack.c.l.b16 %v6282
        %v6339 = vunpack.c.h.b16 %v6282
        %v6340 = vpack.c.b16 %v6326, %v6324
        %v6341 = vpack.c.b16 %v6327, %v6325
        %v6342 = vpack.c.b16 %v6330, %v6328
        %v6343 = vpack.c.b16 %v6331, %v6329
        %v6344 = vpack.c.b16 %v6334, %v6332
        %v6345 = vpack.c.b16 %v6335, %v6333
        %v6346 = vpack.c.b16 %v6338, %v6336
        %v6347 = vpack.c.b16 %v6339, %v6337
        %v6388 = vunpack.c.l.b16 %v6284
        %v6389 = vunpack.c.h.b16 %v6284
        %v6390 = vunpack.c.l.b16 %v6285
        %v6391 = vunpack.c.h.b16 %v6285
        %v6392 = vunpack.c.l.b16 %v6286
        %v6393 = vunpack.c.h.b16 %v6286
        %v6394 = vunpack.c.l.b16 %v6287
        %v6395 = vunpack.c.h.b16 %v6287
        %v6396 = vunpack.c.l.b16 %v6288
        %v6397 = vunpack.c.h.b16 %v6288
        %v6398 = vunpack.c.l.b16 %v6289
        %v6399 = vunpack.c.h.b16 %v6289
        %v6400 = vunpack.c.l.b16 %v6290
        %v6401 = vunpack.c.h.b16 %v6290
        %v6402 = vunpack.c.l.b16 %v6291
        %v6403 = vunpack.c.h.b16 %v6291
        %v6404 = vunpack.c.l.b16 %v6292
        %v6405 = vunpack.c.h.b16 %v6292
        %v6406 = vunpack.c.l.b16 %v6293
        %v6407 = vunpack.c.h.b16 %v6293
        %v6408 = vunpack.c.l.b16 %v6294
        %v6409 = vunpack.c.h.b16 %v6294
        %v6410 = vunpack.c.l.b16 %v6295
        %v6411 = vunpack.c.h.b16 %v6295
        %v6412 = vunpack.c.l.b16 %v6296
        %v6413 = vunpack.c.h.b16 %v6296
        %v6414 = vunpack.c.l.b16 %v6297
        %v6415 = vunpack.c.h.b16 %v6297
        %v6416 = vunpack.c.l.b16 %v6298
        %v6417 = vunpack.c.h.b16 %v6298
        %v6418 = vunpack.c.l.b16 %v6299
        %v6419 = vunpack.c.h.b16 %v6299
        %v6420 = vunpack.c.l.b16 %v6300
        %v6421 = vunpack.c.h.b16 %v6300
        %v6422 = vunpack.c.l.b16 %v6301
        %v6423 = vunpack.c.h.b16 %v6301
        %v6424 = vunpack.c.l.b16 %v6302
        %v6425 = vunpack.c.h.b16 %v6302
        %v6426 = vunpack.c.l.b16 %v6303
        %v6427 = vunpack.c.h.b16 %v6303
        %v6428 = vunpack.c.l.b16 %v6304
        %v6429 = vunpack.c.h.b16 %v6304
        %v6430 = vunpack.c.l.b16 %v6305
        %v6431 = vunpack.c.h.b16 %v6305
        %v6432 = vunpack.c.l.b16 %v6306
        %v6433 = vunpack.c.h.b16 %v6306
        %v6434 = vunpack.c.l.b16 %v6307
        %v6435 = vunpack.c.h.b16 %v6307
        %v6436 = vunpack.c.l.b16 %v6308
        %v6437 = vunpack.c.h.b16 %v6308
        %v6438 = vunpack.c.l.b16 %v6309
        %v6439 = vunpack.c.h.b16 %v6309
        %v6440 = vunpack.c.l.b16 %v6310
        %v6441 = vunpack.c.h.b16 %v6310
        %v6442 = vunpack.c.l.b16 %v6311
        %v6443 = vunpack.c.h.b16 %v6311
        %v6444 = vunpack.c.l.b16 %v6312
        %v6445 = vunpack.c.h.b16 %v6312
        %v6446 = vunpack.c.l.b16 %v6313
        %v6447 = vunpack.c.h.b16 %v6313
        %v6448 = vunpack.c.l.b16 %v6314
        %v6449 = vunpack.c.h.b16 %v6314
        %v6450 = vunpack.c.l.b16 %v6315
        %v6451 = vunpack.c.h.b16 %v6315
        %v6452 = vpack.c.b16 %v6390, %v6388
        %v6453 = vpack.c.b16 %v6391, %v6389
        %v6454 = vpack.c.b16 %v6394, %v6392
        %v6455 = vpack.c.b16 %v6395, %v6393
        %v6456 = vpack.c.b16 %v6398, %v6396
        %v6457 = vpack.c.b16 %v6399, %v6397
        %v6458 = vpack.c.b16 %v6402, %v6400
        %v6459 = vpack.c.b16 %v6403, %v6401
        %v6460 = vpack.c.b16 %v6406, %v6404
        %v6461 = vpack.c.b16 %v6407, %v6405
        %v6462 = vpack.c.b16 %v6410, %v6408
        %v6463 = vpack.c.b16 %v6411, %v6409
        %v6464 = vpack.c.b16 %v6414, %v6412
        %v6465 = vpack.c.b16 %v6415, %v6413
        %v6466 = vpack.c.b16 %v6418, %v6416
        %v6467 = vpack.c.b16 %v6419, %v6417
        %v6468 = vpack.c.b16 %v6422, %v6420
        %v6469 = vpack.c.b16 %v6423, %v6421
        %v6470 = vpack.c.b16 %v6426, %v6424
        %v6471 = vpack.c.b16 %v6427, %v6425
        %v6472 = vpack.c.b16 %v6430, %v6428
        %v6473 = vpack.c.b16 %v6431, %v6429
        %v6474 = vpack.c.b16 %v6434, %v6432
        %v6475 = vpack.c.b16 %v6435, %v6433
        %v6476 = vpack.c.b16 %v6438, %v6436
        %v6477 = vpack.c.b16 %v6439, %v6437
        %v6478 = vpack.c.b16 %v6442, %v6440
        %v6479 = vpack.c.b16 %v6443, %v6441
        %v6480 = vpack.c.b16 %v6446, %v6444
        %v6481 = vpack.c.b16 %v6447, %v6445
        %v6482 = vpack.c.b16 %v6450, %v6448
        %v6483 = vpack.c.b16 %v6451, %v6449
        %6516 = vmatprep.subr.bf16.mxu0 %v6467
        %6517 = vmatpush1.bf16.msra.mxu0 %v6466
        %6518 = vmatprep.subr.bf16.mxu0 %v6465
        %6519 = vmatpush1.bf16.msra.mxu0 %v6464
        %6520 = vmatprep.subr.bf16.mxu0 %v6463
        %6521 = vmatpush1.bf16.msra.mxu0 %v6462
        %6522 = vmatprep.subr.bf16.mxu0 %v6461
        %6523 = vmatpush1.bf16.msra.mxu0 %v6460
        %6524 = vmatprep.subr.bf16.mxu0 %v6459
        %6525 = vmatpush1.bf16.msra.mxu0 %v6458
        %6526 = vmatprep.subr.bf16.mxu0 %v6457
        %6527 = vmatpush1.bf16.msra.mxu0 %v6456
        %6528 = vmatprep.subr.bf16.mxu0 %v6455
        %6529 = vmatpush1.bf16.msra.mxu0 %v6454
        %6530 = vmatprep.subr.bf16.mxu0 %v6453
        %6531 = vmatpush1.bf16.msra.mxu0 %v6452
        %6532 = vmatprep.subr.bf16.mxu0 %v6483
        %6533 = vmatpush2.bf16.msra.mxu0 %v6482
        %6534 = vmatprep.subr.bf16.mxu0 %v6481
        %6535 = vmatpush2.bf16.msra.mxu0 %v6480
        %6536 = vmatprep.subr.bf16.mxu0 %v6479
        %6537 = vmatpush2.bf16.msra.mxu0 %v6478
        %6538 = vmatprep.subr.bf16.mxu0 %v6477
        %6539 = vmatpush2.bf16.msra.mxu0 %v6476
        %6540 = vmatprep.subr.bf16.mxu0 %v6475
        %6541 = vmatpush2.bf16.msra.mxu0 %v6474
        %6542 = vmatprep.subr.bf16.mxu0 %v6473
        %6543 = vmatpush2.bf16.msra.mxu0 %v6472
        %6544 = vmatprep.subr.bf16.mxu0 %v6471
        %6545 = vmatpush2.bf16.msra.mxu0 %v6470
        %6546 = vmatprep.subr.bf16.mxu0 %v6469
        %6547 = vmatpush2.bf16.msra.mxu0 %v6468
        %6548 = vmatprep.mubr.bf16.mxu0 %v6341
        %6549 = vmatmul.mubr.bf16.gmra.mxu0 %v6340
        %v6550 = vpop.f32.mrf.mxu0
        %v6551 = vadd.f32 0.0, %v6550
        %v6552 = vpop.f32.mrf.mxu0
        %v6553 = vadd.f32 0.0, %v6552
        %v6554 = vpop.f32.mrf.mxu0
        %v6555 = vadd.f32 0.0, %v6554
        %v6556 = vpop.f32.mrf.mxu0
        %v6557 = vadd.f32 0.0, %v6556
        %6558 = vmatprep.mubr.bf16.mxu0 %v6343
        %6559 = vmatmul.mubr.bf16.gmra.mxu0 %v6342
        %v6560 = vpop.f32.mrf.mxu0
        %v6561 = vadd.f32 0.0, %v6560
        %v6562 = vpop.f32.mrf.mxu0
        %v6563 = vadd.f32 0.0, %v6562
        %v6564 = vpop.f32.mrf.mxu0
        %v6565 = vadd.f32 0.0, %v6564
        %v6566 = vpop.f32.mrf.mxu0
        %v6567 = vadd.f32 0.0, %v6566
        %6568 = vmatprep.mubr.bf16.mxu0 %v6345
        %6569 = vmatmul.mubr.bf16.gmra.mxu0 %v6344
        %v6570 = vpop.f32.mrf.mxu0
        %v6571 = vadd.f32 0.0, %v6570
        %v6572 = vpop.f32.mrf.mxu0
        %v6573 = vadd.f32 0.0, %v6572
        %v6574 = vpop.f32.mrf.mxu0
        %v6575 = vadd.f32 0.0, %v6574
        %v6576 = vpop.f32.mrf.mxu0
        %v6577 = vadd.f32 0.0, %v6576
        %6578 = vmatprep.mubr.bf16.mxu0 %v6347
        %6579 = vmatmul.mubr.bf16.gmra.mxu0 %v6346
        %v6580 = vpop.f32.mrf.mxu0
        %v6581 = vadd.f32 0.0, %v6580
        %v6582 = vpop.f32.mrf.mxu0
        %v6583 = vadd.f32 0.0, %v6582
        %v6584 = vpop.f32.mrf.mxu0
        %v6585 = vadd.f32 0.0, %v6584
        %v6586 = vpop.f32.mrf.mxu0
        %v6587 = vadd.f32 0.0, %v6586
        %6588 = vdwg.mxu0
        %v6589 = vadd.f32 %v6258, %v6551
        %v6590 = vadd.f32 %v6259, %v6553
        %v6591 = vadd.f32 %v6260, %v6555
        %v6592 = vadd.f32 %v6261, %v6557
        %v6593 = vadd.f32 %v6262, %v6561
        %v6594 = vadd.f32 %v6263, %v6563
        %v6595 = vadd.f32 %v6264, %v6565
        %v6596 = vadd.f32 %v6265, %v6567
        %v6597 = vadd.f32 %v6266, %v6571
        %v6598 = vadd.f32 %v6267, %v6573
        %v6599 = vadd.f32 %v6268, %v6575
        %v6600 = vadd.f32 %v6269, %v6577
        %v6601 = vadd.f32 %v6270, %v6581
        %v6602 = vadd.f32 %v6271, %v6583
        %v6603 = vadd.f32 %v6272, %v6585
        %v6604 = vadd.f32 %v6273, %v6587
        %v6605 = vld [vmem:[%s6274] sm:$0xff]
        %v6606 = vld [vmem:[%s6274 + $0x8] sm:$0x11]
        %v6607 = vld [vmem:[%s6274 + $0x10] sm:$0xff]
        %v6608 = vld [vmem:[%s6274 + $0x18] sm:$0x11]
        %v6609 = vld [vmem:[%s6274 + $0x20] sm:$0xff]
        %v6610 = vld [vmem:[%s6274 + $0x28] sm:$0x11]
        %v6611 = vld [vmem:[%s6274 + $0x30] sm:$0xff]
        %v6612 = vld [vmem:[%s6274 + $0x38] sm:$0x11]
        %v6613 = vld [vmem:[%s6274 + $0x40] sm:$0xff]
        %v6614 = vld [vmem:[%s6274 + $0x48] sm:$0x11]
        %v6615 = vld [vmem:[%s6274 + $0x50] sm:$0xff]
        %v6616 = vld [vmem:[%s6274 + $0x58] sm:$0x11]
        %v6617 = vld [vmem:[%s6274 + $0x60] sm:$0xff]
        %v6618 = vld [vmem:[%s6274 + $0x68] sm:$0x11]
        %v6619 = vld [vmem:[%s6274 + $0x70] sm:$0xff]
        %v6620 = vld [vmem:[%s6274 + $0x78] sm:$0x11]
        %v6622 = vshrl.u32 %v6605, 16
        %v6624 = vrot.slane %v6622, 4
        %v6625 = vshll.u32 %v6605, 16
        %v6627 = vrot.slane %v6625, 5
        %v6628 = vor.u32 %v6624, %v6627
        %v6629 = vrot.slane %v6628, 4
        %v6631 = vshll.u32 %v6606, 16
        %v6633 = vrot.slane %v6631, 5
        %v6634 = vsel %vm4078, %v6629, %v6633
        %v6636 = vshrl.u32 %v6607, 16
        %v6638 = vrot.slane %v6636, 4
        %v6639 = vshll.u32 %v6607, 16
        %v6641 = vrot.slane %v6639, 5
        %v6642 = vor.u32 %v6638, %v6641
        %v6643 = vrot.slane %v6642, 4
        %v6645 = vshll.u32 %v6608, 16
        %v6647 = vrot.slane %v6645, 5
        %v6648 = vsel %vm4078, %v6643, %v6647
        %v6650 = vshrl.u32 %v6609, 16
        %v6652 = vrot.slane %v6650, 4
        %v6653 = vshll.u32 %v6609, 16
        %v6655 = vrot.slane %v6653, 5
        %v6656 = vor.u32 %v6652, %v6655
        %v6657 = vrot.slane %v6656, 4
        %v6659 = vshll.u32 %v6610, 16
        %v6661 = vrot.slane %v6659, 5
        %v6662 = vsel %vm4078, %v6657, %v6661
        %v6664 = vshrl.u32 %v6611, 16
        %v6666 = vrot.slane %v6664, 4
        %v6667 = vshll.u32 %v6611, 16
        %v6669 = vrot.slane %v6667, 5
        %v6670 = vor.u32 %v6666, %v6669
        %v6671 = vrot.slane %v6670, 4
        %v6673 = vshll.u32 %v6612, 16
        %v6675 = vrot.slane %v6673, 5
        %v6676 = vsel %vm4078, %v6671, %v6675
        %v6678 = vshrl.u32 %v6613, 16
        %v6680 = vrot.slane %v6678, 4
        %v6681 = vshll.u32 %v6613, 16
        %v6683 = vrot.slane %v6681, 5
        %v6684 = vor.u32 %v6680, %v6683
        %v6685 = vrot.slane %v6684, 4
        %v6687 = vshll.u32 %v6614, 16
        %v6689 = vrot.slane %v6687, 5
        %v6690 = vsel %vm4078, %v6685, %v6689
        %v6692 = vshrl.u32 %v6615, 16
        %v6694 = vrot.slane %v6692, 4
        %v6695 = vshll.u32 %v6615, 16
        %v6697 = vrot.slane %v6695, 5
        %v6698 = vor.u32 %v6694, %v6697
        %v6699 = vrot.slane %v6698, 4
        %v6701 = vshll.u32 %v6616, 16
        %v6703 = vrot.slane %v6701, 5
        %v6704 = vsel %vm4078, %v6699, %v6703
        %v6706 = vshrl.u32 %v6617, 16
        %v6708 = vrot.slane %v6706, 4
        %v6709 = vshll.u32 %v6617, 16
        %v6711 = vrot.slane %v6709, 5
        %v6712 = vor.u32 %v6708, %v6711
        %v6713 = vrot.slane %v6712, 4
        %v6715 = vshll.u32 %v6618, 16
        %v6717 = vrot.slane %v6715, 5
        %v6718 = vsel %vm4078, %v6713, %v6717
        %v6720 = vshrl.u32 %v6619, 16
        %v6722 = vrot.slane %v6720, 4
        %v6723 = vshll.u32 %v6619, 16
        %v6725 = vrot.slane %v6723, 5
        %v6726 = vor.u32 %v6722, %v6725
        %v6727 = vrot.slane %v6726, 4
        %v6729 = vshll.u32 %v6620, 16
        %v6731 = vrot.slane %v6729, 5
        %v6732 = vsel %vm4078, %v6727, %v6731
        %s6733 = scalar_lea.vmem [#allocation7], 1792
        %v6734 = vld [vmem:[%s6733] sm:$0xff]
        %v6735 = vld [vmem:[%s6733 + $0x8] sm:$0xff]
        %v6736 = vld [vmem:[%s6733 + $0x10] sm:$0xff]
        %v6737 = vld [vmem:[%s6733 + $0x18] sm:$0xff]
        %v6738 = vld [vmem:[%s6733 + $0x20] sm:$0xff]
        %v6739 = vld [vmem:[%s6733 + $0x28] sm:$0xff]
        %v6740 = vld [vmem:[%s6733 + $0x30] sm:$0xff]
        %v6741 = vld [vmem:[%s6733 + $0x38] sm:$0xff]
        %v6742 = vld [vmem:[%s6733 + $0x40] sm:$0xff]
        %v6743 = vld [vmem:[%s6733 + $0x48] sm:$0xff]
        %v6744 = vld [vmem:[%s6733 + $0x50] sm:$0xff]
        %v6745 = vld [vmem:[%s6733 + $0x58] sm:$0xff]
        %v6746 = vld [vmem:[%s6733 + $0x60] sm:$0xff]
        %v6747 = vld [vmem:[%s6733 + $0x68] sm:$0xff]
        %v6748 = vld [vmem:[%s6733 + $0x70] sm:$0xff]
        %v6749 = vld [vmem:[%s6733 + $0x78] sm:$0xff]
        %v6750 = vld [vmem:[%s6733 + $0x80] sm:$0xff]
        %v6751 = vld [vmem:[%s6733 + $0x88] sm:$0xff]
        %v6752 = vld [vmem:[%s6733 + $0x90] sm:$0xff]
        %v6753 = vld [vmem:[%s6733 + $0x98] sm:$0xff]
        %v6754 = vld [vmem:[%s6733 + $0xa0] sm:$0xff]
        %v6755 = vld [vmem:[%s6733 + $0xa8] sm:$0xff]
        %v6756 = vld [vmem:[%s6733 + $0xb0] sm:$0xff]
        %v6757 = vld [vmem:[%s6733 + $0xb8] sm:$0xff]
        %v6758 = vld [vmem:[%s6733 + $0xc0] sm:$0xff]
        %v6759 = vld [vmem:[%s6733 + $0xc8] sm:$0xff]
        %v6760 = vld [vmem:[%s6733 + $0xd0] sm:$0xff]
        %v6761 = vld [vmem:[%s6733 + $0xd8] sm:$0xff]
        %v6762 = vld [vmem:[%s6733 + $0xe0] sm:$0xff]
        %v6763 = vld [vmem:[%s6733 + $0xe8] sm:$0xff]
        %v6764 = vld [vmem:[%s6733 + $0xf0] sm:$0xff]
        %v6765 = vld [vmem:[%s6733 + $0xf8] sm:$0xff]
        %v6766 = vunpack.c.l.b16 %v6634
        %v6767 = vunpack.c.h.b16 %v6634
        %v6768 = vunpack.c.l.b16 %v6648
        %v6769 = vunpack.c.h.b16 %v6648
        %v6770 = vunpack.c.l.b16 %v6662
        %v6771 = vunpack.c.h.b16 %v6662
        %v6772 = vunpack.c.l.b16 %v6676
        %v6773 = vunpack.c.h.b16 %v6676
        %v6774 = vunpack.c.l.b16 %v6690
        %v6775 = vunpack.c.h.b16 %v6690
        %v6776 = vunpack.c.l.b16 %v6704
        %v6777 = vunpack.c.h.b16 %v6704
        %v6778 = vunpack.c.l.b16 %v6718
        %v6779 = vunpack.c.h.b16 %v6718
        %v6780 = vunpack.c.l.b16 %v6732
        %v6781 = vunpack.c.h.b16 %v6732
        %v6782 = vpack.c.b16 %v6768, %v6766
        %v6783 = vpack.c.b16 %v6769, %v6767
        %v6784 = vpack.c.b16 %v6772, %v6770
        %v6785 = vpack.c.b16 %v6773, %v6771
        %v6786 = vpack.c.b16 %v6776, %v6774
        %v6787 = vpack.c.b16 %v6777, %v6775
        %v6788 = vpack.c.b16 %v6780, %v6778
        %v6789 = vpack.c.b16 %v6781, %v6779
        %v6830 = vunpack.c.l.b16 %v6734
        %v6831 = vunpack.c.h.b16 %v6734
        %v6832 = vunpack.c.l.b16 %v6735
        %v6833 = vunpack.c.h.b16 %v6735
        %v6834 = vunpack.c.l.b16 %v6736
        %v6835 = vunpack.c.h.b16 %v6736
        %v6836 = vunpack.c.l.b16 %v6737
        %v6837 = vunpack.c.h.b16 %v6737
        %v6838 = vunpack.c.l.b16 %v6738
        %v6839 = vunpack.c.h.b16 %v6738
        %v6840 = vunpack.c.l.b16 %v6739
        %v6841 = vunpack.c.h.b16 %v6739
        %v6842 = vunpack.c.l.b16 %v6740
        %v6843 = vunpack.c.h.b16 %v6740
        %v6844 = vunpack.c.l.b16 %v6741
        %v6845 = vunpack.c.h.b16 %v6741
        %v6846 = vunpack.c.l.b16 %v6742
        %v6847 = vunpack.c.h.b16 %v6742
        %v6848 = vunpack.c.l.b16 %v6743
        %v6849 = vunpack.c.h.b16 %v6743
        %v6850 = vunpack.c.l.b16 %v6744
        %v6851 = vunpack.c.h.b16 %v6744
        %v6852 = vunpack.c.l.b16 %v6745
        %v6853 = vunpack.c.h.b16 %v6745
        %v6854 = vunpack.c.l.b16 %v6746
        %v6855 = vunpack.c.h.b16 %v6746
        %v6856 = vunpack.c.l.b16 %v6747
        %v6857 = vunpack.c.h.b16 %v6747
        %v6858 = vunpack.c.l.b16 %v6748
        %v6859 = vunpack.c.h.b16 %v6748
        %v6860 = vunpack.c.l.b16 %v6749
        %v6861 = vunpack.c.h.b16 %v6749
        %v6862 = vunpack.c.l.b16 %v6750
        %v6863 = vunpack.c.h.b16 %v6750
        %v6864 = vunpack.c.l.b16 %v6751
        %v6865 = vunpack.c.h.b16 %v6751
        %v6866 = vunpack.c.l.b16 %v6752
        %v6867 = vunpack.c.h.b16 %v6752
        %v6868 = vunpack.c.l.b16 %v6753
        %v6869 = vunpack.c.h.b16 %v6753
        %v6870 = vunpack.c.l.b16 %v6754
        %v6871 = vunpack.c.h.b16 %v6754
        %v6872 = vunpack.c.l.b16 %v6755
        %v6873 = vunpack.c.h.b16 %v6755
        %v6874 = vunpack.c.l.b16 %v6756
        %v6875 = vunpack.c.h.b16 %v6756
        %v6876 = vunpack.c.l.b16 %v6757
        %v6877 = vunpack.c.h.b16 %v6757
        %v6878 = vunpack.c.l.b16 %v6758
        %v6879 = vunpack.c.h.b16 %v6758
        %v6880 = vunpack.c.l.b16 %v6759
        %v6881 = vunpack.c.h.b16 %v6759
        %v6882 = vunpack.c.l.b16 %v6760
        %v6883 = vunpack.c.h.b16 %v6760
        %v6884 = vunpack.c.l.b16 %v6761
        %v6885 = vunpack.c.h.b16 %v6761
        %v6886 = vunpack.c.l.b16 %v6762
        %v6887 = vunpack.c.h.b16 %v6762
        %v6888 = vunpack.c.l.b16 %v6763
        %v6889 = vunpack.c.h.b16 %v6763
        %v6890 = vunpack.c.l.b16 %v6764
        %v6891 = vunpack.c.h.b16 %v6764
        %v6892 = vunpack.c.l.b16 %v6765
        %v6893 = vunpack.c.h.b16 %v6765
        %v6894 = vpack.c.b16 %v6832, %v6830
        %v6895 = vpack.c.b16 %v6833, %v6831
        %v6896 = vpack.c.b16 %v6836, %v6834
        %v6897 = vpack.c.b16 %v6837, %v6835
        %v6898 = vpack.c.b16 %v6840, %v6838
        %v6899 = vpack.c.b16 %v6841, %v6839
        %v6900 = vpack.c.b16 %v6844, %v6842
        %v6901 = vpack.c.b16 %v6845, %v6843
        %v6902 = vpack.c.b16 %v6848, %v6846
        %v6903 = vpack.c.b16 %v6849, %v6847
        %v6904 = vpack.c.b16 %v6852, %v6850
        %v6905 = vpack.c.b16 %v6853, %v6851
        %v6906 = vpack.c.b16 %v6856, %v6854
        %v6907 = vpack.c.b16 %v6857, %v6855
        %v6908 = vpack.c.b16 %v6860, %v6858
        %v6909 = vpack.c.b16 %v6861, %v6859
        %v6910 = vpack.c.b16 %v6864, %v6862
        %v6911 = vpack.c.b16 %v6865, %v6863
        %v6912 = vpack.c.b16 %v6868, %v6866
        %v6913 = vpack.c.b16 %v6869, %v6867
        %v6914 = vpack.c.b16 %v6872, %v6870
        %v6915 = vpack.c.b16 %v6873, %v6871
        %v6916 = vpack.c.b16 %v6876, %v6874
        %v6917 = vpack.c.b16 %v6877, %v6875
        %v6918 = vpack.c.b16 %v6880, %v6878
        %v6919 = vpack.c.b16 %v6881, %v6879
        %v6920 = vpack.c.b16 %v6884, %v6882
        %v6921 = vpack.c.b16 %v6885, %v6883
        %v6922 = vpack.c.b16 %v6888, %v6886
        %v6923 = vpack.c.b16 %v6889, %v6887
        %v6924 = vpack.c.b16 %v6892, %v6890
        %v6925 = vpack.c.b16 %v6893, %v6891
        %6958 = vmatprep.subr.bf16.mxu0 %v6909
        %6959 = vmatpush1.bf16.msra.mxu0 %v6908
        %6960 = vmatprep.subr.bf16.mxu0 %v6907
        %6961 = vmatpush1.bf16.msra.mxu0 %v6906
        %6962 = vmatprep.subr.bf16.mxu0 %v6905
        %6963 = vmatpush1.bf16.msra.mxu0 %v6904
        %6964 = vmatprep.subr.bf16.mxu0 %v6903
        %6965 = vmatpush1.bf16.msra.mxu0 %v6902
        %6966 = vmatprep.subr.bf16.mxu0 %v6901
        %6967 = vmatpush1.bf16.msra.mxu0 %v6900
        %6968 = vmatprep.subr.bf16.mxu0 %v6899
        %6969 = vmatpush1.bf16.msra.mxu0 %v6898
        %6970 = vmatprep.subr.bf16.mxu0 %v6897
        %6971 = vmatpush1.bf16.msra.mxu0 %v6896
        %6972 = vmatprep.subr.bf16.mxu0 %v6895
        %6973 = vmatpush1.bf16.msra.mxu0 %v6894
        %6974 = vmatprep.subr.bf16.mxu0 %v6925
        %6975 = vmatpush2.bf16.msra.mxu0 %v6924
        %6976 = vmatprep.subr.bf16.mxu0 %v6923
        %6977 = vmatpush2.bf16.msra.mxu0 %v6922
        %6978 = vmatprep.subr.bf16.mxu0 %v6921
        %6979 = vmatpush2.bf16.msra.mxu0 %v6920
        %6980 = vmatprep.subr.bf16.mxu0 %v6919
        %6981 = vmatpush2.bf16.msra.mxu0 %v6918
        %6982 = vmatprep.subr.bf16.mxu0 %v6917
        %6983 = vmatpush2.bf16.msra.mxu0 %v6916
        %6984 = vmatprep.subr.bf16.mxu0 %v6915
        %6985 = vmatpush2.bf16.msra.mxu0 %v6914
        %6986 = vmatprep.subr.bf16.mxu0 %v6913
        %6987 = vmatpush2.bf16.msra.mxu0 %v6912
        %6988 = vmatprep.subr.bf16.mxu0 %v6911
        %6989 = vmatpush2.bf16.msra.mxu0 %v6910
        %6990 = vmatprep.mubr.bf16.mxu0 %v6783
        %6991 = vmatmul.mubr.bf16.gmra.mxu0 %v6782
        %v6992 = vpop.f32.mrf.mxu0
        %v6993 = vadd.f32 0.0, %v6992
        %v6994 = vpop.f32.mrf.mxu0
        %v6995 = vadd.f32 0.0, %v6994
        %v6996 = vpop.f32.mrf.mxu0
        %v6997 = vadd.f32 0.0, %v6996
        %v6998 = vpop.f32.mrf.mxu0
        %v6999 = vadd.f32 0.0, %v6998
        %7000 = vmatprep.mubr.bf16.mxu0 %v6785
        %7001 = vmatmul.mubr.bf16.gmra.mxu0 %v6784
        %v7002 = vpop.f32.mrf.mxu0
        %v7003 = vadd.f32 0.0, %v7002
        %v7004 = vpop.f32.mrf.mxu0
        %v7005 = vadd.f32 0.0, %v7004
        %v7006 = vpop.f32.mrf.mxu0
        %v7007 = vadd.f32 0.0, %v7006
        %v7008 = vpop.f32.mrf.mxu0
        %v7009 = vadd.f32 0.0, %v7008
        %7010 = vmatprep.mubr.bf16.mxu0 %v6787
        %7011 = vmatmul.mubr.bf16.gmra.mxu0 %v6786
        %v7012 = vpop.f32.mrf.mxu0
        %v7013 = vadd.f32 0.0, %v7012
        %v7014 = vpop.f32.mrf.mxu0
        %v7015 = vadd.f32 0.0, %v7014
        %v7016 = vpop.f32.mrf.mxu0
        %v7017 = vadd.f32 0.0, %v7016
        %v7018 = vpop.f32.mrf.mxu0
        %v7019 = vadd.f32 0.0, %v7018
        %7020 = vmatprep.mubr.bf16.mxu0 %v6789
        %7021 = vmatmul.mubr.bf16.gmra.mxu0 %v6788
        %v7022 = vpop.f32.mrf.mxu0
        %v7023 = vadd.f32 0.0, %v7022
        %v7024 = vpop.f32.mrf.mxu0
        %v7025 = vadd.f32 0.0, %v7024
        %v7026 = vpop.f32.mrf.mxu0
        %v7027 = vadd.f32 0.0, %v7026
        %v7028 = vpop.f32.mrf.mxu0
        %v7029 = vadd.f32 0.0, %v7028
        %7030 = vdwg.mxu0
        %v7031 = vadd.f32 %v6589, %v6993
        %v7032 = vadd.f32 %v6590, %v6995
        %v7033 = vadd.f32 %v6591, %v6997
        %v7034 = vadd.f32 %v6592, %v6999
        %v7035 = vadd.f32 %v6593, %v7003
        %v7036 = vadd.f32 %v6594, %v7005
        %v7037 = vadd.f32 %v6595, %v7007
        %v7038 = vadd.f32 %v6596, %v7009
        %v7039 = vadd.f32 %v6597, %v7013
        %v7040 = vadd.f32 %v6598, %v7015
        %v7041 = vadd.f32 %v6599, %v7017
        %v7042 = vadd.f32 %v6600, %v7019
        %v7043 = vadd.f32 %v6601, %v7023
        %v7044 = vadd.f32 %v6602, %v7025
        %v7045 = vadd.f32 %v6603, %v7027
        %v7046 = vadd.f32 %v6604, %v7029
        %v7047 = vld [vmem:[%s6274] sm:$0xee]
        %v7048 = vld [vmem:[%s6274 + $0x10] sm:$0xee]
        %v7049 = vld [vmem:[%s6274 + $0x20] sm:$0xee]
        %v7050 = vld [vmem:[%s6274 + $0x30] sm:$0xee]
        %v7051 = vld [vmem:[%s6274 + $0x40] sm:$0xee]
        %v7052 = vld [vmem:[%s6274 + $0x50] sm:$0xee]
        %v7053 = vld [vmem:[%s6274 + $0x60] sm:$0xee]
        %v7054 = vld [vmem:[%s6274 + $0x70] sm:$0xee]
        %v7071 = vrot.slane %v7047, 5
        %v7072 = vrot.slane %v7071, 4
        %v7073 = vrot.slane %v6606, 5
        %v7074 = vsel %vm490, %v7072, %v7073
        %v7075 = vrot.slane %v7048, 5
        %v7076 = vrot.slane %v7075, 4
        %v7077 = vrot.slane %v6608, 5
        %v7078 = vsel %vm490, %v7076, %v7077
        %v7079 = vrot.slane %v7049, 5
        %v7080 = vrot.slane %v7079, 4
        %v7081 = vrot.slane %v6610, 5
        %v7082 = vsel %vm490, %v7080, %v7081
        %v7083 = vrot.slane %v7050, 5
        %v7084 = vrot.slane %v7083, 4
        %v7085 = vrot.slane %v6612, 5
        %v7086 = vsel %vm490, %v7084, %v7085
        %v7087 = vrot.slane %v7051, 5
        %v7088 = vrot.slane %v7087, 4
        %v7089 = vrot.slane %v6614, 5
        %v7090 = vsel %vm490, %v7088, %v7089
        %v7091 = vrot.slane %v7052, 5
        %v7092 = vrot.slane %v7091, 4
        %v7093 = vrot.slane %v6616, 5
        %v7094 = vsel %vm490, %v7092, %v7093
        %v7095 = vrot.slane %v7053, 5
        %v7096 = vrot.slane %v7095, 4
        %v7097 = vrot.slane %v6618, 5
        %v7098 = vsel %vm490, %v7096, %v7097
        %v7099 = vrot.slane %v7054, 5
        %v7100 = vrot.slane %v7099, 4
        %v7101 = vrot.slane %v6620, 5
        %v7102 = vsel %vm490, %v7100, %v7101
        %s7103 = scalar_lea.vmem [#allocation7], 2048
        %v7104 = vld [vmem:[%s7103] sm:$0xff]
        %v7105 = vld [vmem:[%s7103 + $0x8] sm:$0xff]
        %v7106 = vld [vmem:[%s7103 + $0x10] sm:$0xff]
        %v7107 = vld [vmem:[%s7103 + $0x18] sm:$0xff]
        %v7108 = vld [vmem:[%s7103 + $0x20] sm:$0xff]
        %v7109 = vld [vmem:[%s7103 + $0x28] sm:$0xff]
        %v7110 = vld [vmem:[%s7103 + $0x30] sm:$0xff]
        %v7111 = vld [vmem:[%s7103 + $0x38] sm:$0xff]
        %v7112 = vld [vmem:[%s7103 + $0x40] sm:$0xff]
        %v7113 = vld [vmem:[%s7103 + $0x48] sm:$0xff]
        %v7114 = vld [vmem:[%s7103 + $0x50] sm:$0xff]
        %v7115 = vld [vmem:[%s7103 + $0x58] sm:$0xff]
        %v7116 = vld [vmem:[%s7103 + $0x60] sm:$0xff]
        %v7117 = vld [vmem:[%s7103 + $0x68] sm:$0xff]
        %v7118 = vld [vmem:[%s7103 + $0x70] sm:$0xff]
        %v7119 = vld [vmem:[%s7103 + $0x78] sm:$0xff]
        %v7120 = vld [vmem:[%s7103 + $0x80] sm:$0xff]
        %v7121 = vld [vmem:[%s7103 + $0x88] sm:$0xff]
        %v7122 = vld [vmem:[%s7103 + $0x90] sm:$0xff]
        %v7123 = vld [vmem:[%s7103 + $0x98] sm:$0xff]
        %v7124 = vld [vmem:[%s7103 + $0xa0] sm:$0xff]
        %v7125 = vld [vmem:[%s7103 + $0xa8] sm:$0xff]
        %v7126 = vld [vmem:[%s7103 + $0xb0] sm:$0xff]
        %v7127 = vld [vmem:[%s7103 + $0xb8] sm:$0xff]
        %v7128 = vld [vmem:[%s7103 + $0xc0] sm:$0xff]
        %v7129 = vld [vmem:[%s7103 + $0xc8] sm:$0xff]
        %v7130 = vld [vmem:[%s7103 + $0xd0] sm:$0xff]
        %v7131 = vld [vmem:[%s7103 + $0xd8] sm:$0xff]
        %v7132 = vld [vmem:[%s7103 + $0xe0] sm:$0xff]
        %v7133 = vld [vmem:[%s7103 + $0xe8] sm:$0xff]
        %v7134 = vld [vmem:[%s7103 + $0xf0] sm:$0xff]
        %v7135 = vld [vmem:[%s7103 + $0xf8] sm:$0xff]
        %v7136 = vunpack.c.l.b16 %v7074
        %v7137 = vunpack.c.h.b16 %v7074
        %v7138 = vunpack.c.l.b16 %v7078
        %v7139 = vunpack.c.h.b16 %v7078
        %v7140 = vunpack.c.l.b16 %v7082
        %v7141 = vunpack.c.h.b16 %v7082
        %v7142 = vunpack.c.l.b16 %v7086
        %v7143 = vunpack.c.h.b16 %v7086
        %v7144 = vunpack.c.l.b16 %v7090
        %v7145 = vunpack.c.h.b16 %v7090
        %v7146 = vunpack.c.l.b16 %v7094
        %v7147 = vunpack.c.h.b16 %v7094
        %v7148 = vunpack.c.l.b16 %v7098
        %v7149 = vunpack.c.h.b16 %v7098
        %v7150 = vunpack.c.l.b16 %v7102
        %v7151 = vunpack.c.h.b16 %v7102
        %v7152 = vpack.c.b16 %v7138, %v7136
        %v7153 = vpack.c.b16 %v7139, %v7137
        %v7154 = vpack.c.b16 %v7142, %v7140
        %v7155 = vpack.c.b16 %v7143, %v7141
        %v7156 = vpack.c.b16 %v7146, %v7144
        %v7157 = vpack.c.b16 %v7147, %v7145
        %v7158 = vpack.c.b16 %v7150, %v7148
        %v7159 = vpack.c.b16 %v7151, %v7149
        %v7200 = vunpack.c.l.b16 %v7104
        %v7201 = vunpack.c.h.b16 %v7104
        %v7202 = vunpack.c.l.b16 %v7105
        %v7203 = vunpack.c.h.b16 %v7105
        %v7204 = vunpack.c.l.b16 %v7106
        %v7205 = vunpack.c.h.b16 %v7106
        %v7206 = vunpack.c.l.b16 %v7107
        %v7207 = vunpack.c.h.b16 %v7107
        %v7208 = vunpack.c.l.b16 %v7108
        %v7209 = vunpack.c.h.b16 %v7108
        %v7210 = vunpack.c.l.b16 %v7109
        %v7211 = vunpack.c.h.b16 %v7109
        %v7212 = vunpack.c.l.b16 %v7110
        %v7213 = vunpack.c.h.b16 %v7110
        %v7214 = vunpack.c.l.b16 %v7111
        %v7215 = vunpack.c.h.b16 %v7111
        %v7216 = vunpack.c.l.b16 %v7112
        %v7217 = vunpack.c.h.b16 %v7112
        %v7218 = vunpack.c.l.b16 %v7113
        %v7219 = vunpack.c.h.b16 %v7113
        %v7220 = vunpack.c.l.b16 %v7114
        %v7221 = vunpack.c.h.b16 %v7114
        %v7222 = vunpack.c.l.b16 %v7115
        %v7223 = vunpack.c.h.b16 %v7115
        %v7224 = vunpack.c.l.b16 %v7116
        %v7225 = vunpack.c.h.b16 %v7116
        %v7226 = vunpack.c.l.b16 %v7117
        %v7227 = vunpack.c.h.b16 %v7117
        %v7228 = vunpack.c.l.b16 %v7118
        %v7229 = vunpack.c.h.b16 %v7118
        %v7230 = vunpack.c.l.b16 %v7119
        %v7231 = vunpack.c.h.b16 %v7119
        %v7232 = vunpack.c.l.b16 %v7120
        %v7233 = vunpack.c.h.b16 %v7120
        %v7234 = vunpack.c.l.b16 %v7121
        %v7235 = vunpack.c.h.b16 %v7121
        %v7236 = vunpack.c.l.b16 %v7122
        %v7237 = vunpack.c.h.b16 %v7122
        %v7238 = vunpack.c.l.b16 %v7123
        %v7239 = vunpack.c.h.b16 %v7123
        %v7240 = vunpack.c.l.b16 %v7124
        %v7241 = vunpack.c.h.b16 %v7124
        %v7242 = vunpack.c.l.b16 %v7125
        %v7243 = vunpack.c.h.b16 %v7125
        %v7244 = vunpack.c.l.b16 %v7126
        %v7245 = vunpack.c.h.b16 %v7126
        %v7246 = vunpack.c.l.b16 %v7127
        %v7247 = vunpack.c.h.b16 %v7127
        %v7248 = vunpack.c.l.b16 %v7128
        %v7249 = vunpack.c.h.b16 %v7128
        %v7250 = vunpack.c.l.b16 %v7129
        %v7251 = vunpack.c.h.b16 %v7129
        %v7252 = vunpack.c.l.b16 %v7130
        %v7253 = vunpack.c.h.b16 %v7130
        %v7254 = vunpack.c.l.b16 %v7131
        %v7255 = vunpack.c.h.b16 %v7131
        %v7256 = vunpack.c.l.b16 %v7132
        %v7257 = vunpack.c.h.b16 %v7132
        %v7258 = vunpack.c.l.b16 %v7133
        %v7259 = vunpack.c.h.b16 %v7133
        %v7260 = vunpack.c.l.b16 %v7134
        %v7261 = vunpack.c.h.b16 %v7134
        %v7262 = vunpack.c.l.b16 %v7135
        %v7263 = vunpack.c.h.b16 %v7135
        %v7264 = vpack.c.b16 %v7202, %v7200
        %v7265 = vpack.c.b16 %v7203, %v7201
        %v7266 = vpack.c.b16 %v7206, %v7204
        %v7267 = vpack.c.b16 %v7207, %v7205
        %v7268 = vpack.c.b16 %v7210, %v7208
        %v7269 = vpack.c.b16 %v7211, %v7209
        %v7270 = vpack.c.b16 %v7214, %v7212
        %v7271 = vpack.c.b16 %v7215, %v7213
        %v7272 = vpack.c.b16 %v7218, %v7216
        %v7273 = vpack.c.b16 %v7219, %v7217
        %v7274 = vpack.c.b16 %v7222, %v7220
        %v7275 = vpack.c.b16 %v7223, %v7221
        %v7276 = vpack.c.b16 %v7226, %v7224
        %v7277 = vpack.c.b16 %v7227, %v7225
        %v7278 = vpack.c.b16 %v7230, %v7228
        %v7279 = vpack.c.b16 %v7231, %v7229
        %v7280 = vpack.c.b16 %v7234, %v7232
        %v7281 = vpack.c.b16 %v7235, %v7233
        %v7282 = vpack.c.b16 %v7238, %v7236
        %v7283 = vpack.c.b16 %v7239, %v7237
        %v7284 = vpack.c.b16 %v7242, %v7240
        %v7285 = vpack.c.b16 %v7243, %v7241
        %v7286 = vpack.c.b16 %v7246, %v7244
        %v7287 = vpack.c.b16 %v7247, %v7245
        %v7288 = vpack.c.b16 %v7250, %v7248
        %v7289 = vpack.c.b16 %v7251, %v7249
        %v7290 = vpack.c.b16 %v7254, %v7252
        %v7291 = vpack.c.b16 %v7255, %v7253
        %v7292 = vpack.c.b16 %v7258, %v7256
        %v7293 = vpack.c.b16 %v7259, %v7257
        %v7294 = vpack.c.b16 %v7262, %v7260
        %v7295 = vpack.c.b16 %v7263, %v7261
        %7328 = vmatprep.subr.bf16.mxu0 %v7279
        %7329 = vmatpush1.bf16.msra.mxu0 %v7278
        %7330 = vmatprep.subr.bf16.mxu0 %v7277
        %7331 = vmatpush1.bf16.msra.mxu0 %v7276
        %7332 = vmatprep.subr.bf16.mxu0 %v7275
        %7333 = vmatpush1.bf16.msra.mxu0 %v7274
        %7334 = vmatprep.subr.bf16.mxu0 %v7273
        %7335 = vmatpush1.bf16.msra.mxu0 %v7272
        %7336 = vmatprep.subr.bf16.mxu0 %v7271
        %7337 = vmatpush1.bf16.msra.mxu0 %v7270
        %7338 = vmatprep.subr.bf16.mxu0 %v7269
        %7339 = vmatpush1.bf16.msra.mxu0 %v7268
        %7340 = vmatprep.subr.bf16.mxu0 %v7267
        %7341 = vmatpush1.bf16.msra.mxu0 %v7266
        %7342 = vmatprep.subr.bf16.mxu0 %v7265
        %7343 = vmatpush1.bf16.msra.mxu0 %v7264
        %7344 = vmatprep.subr.bf16.mxu0 %v7295
        %7345 = vmatpush2.bf16.msra.mxu0 %v7294
        %7346 = vmatprep.subr.bf16.mxu0 %v7293
        %7347 = vmatpush2.bf16.msra.mxu0 %v7292
        %7348 = vmatprep.subr.bf16.mxu0 %v7291
        %7349 = vmatpush2.bf16.msra.mxu0 %v7290
        %7350 = vmatprep.subr.bf16.mxu0 %v7289
        %7351 = vmatpush2.bf16.msra.mxu0 %v7288
        %7352 = vmatprep.subr.bf16.mxu0 %v7287
        %7353 = vmatpush2.bf16.msra.mxu0 %v7286
        %7354 = vmatprep.subr.bf16.mxu0 %v7285
        %7355 = vmatpush2.bf16.msra.mxu0 %v7284
        %7356 = vmatprep.subr.bf16.mxu0 %v7283
        %7357 = vmatpush2.bf16.msra.mxu0 %v7282
        %7358 = vmatprep.subr.bf16.mxu0 %v7281
        %7359 = vmatpush2.bf16.msra.mxu0 %v7280
        %7360 = vmatprep.mubr.bf16.mxu0 %v7153
        %7361 = vmatmul.mubr.bf16.gmra.mxu0 %v7152
        %v7362 = vpop.f32.mrf.mxu0
        %v7363 = vadd.f32 0.0, %v7362
        %v7364 = vpop.f32.mrf.mxu0
        %v7365 = vadd.f32 0.0, %v7364
        %v7366 = vpop.f32.mrf.mxu0
        %v7367 = vadd.f32 0.0, %v7366
        %v7368 = vpop.f32.mrf.mxu0
        %v7369 = vadd.f32 0.0, %v7368
        %7370 = vmatprep.mubr.bf16.mxu0 %v7155
        %7371 = vmatmul.mubr.bf16.gmra.mxu0 %v7154
        %v7372 = vpop.f32.mrf.mxu0
        %v7373 = vadd.f32 0.0, %v7372
        %v7374 = vpop.f32.mrf.mxu0
        %v7375 = vadd.f32 0.0, %v7374
        %v7376 = vpop.f32.mrf.mxu0
        %v7377 = vadd.f32 0.0, %v7376
        %v7378 = vpop.f32.mrf.mxu0
        %v7379 = vadd.f32 0.0, %v7378
        %7380 = vmatprep.mubr.bf16.mxu0 %v7157
        %7381 = vmatmul.mubr.bf16.gmra.mxu0 %v7156
        %v7382 = vpop.f32.mrf.mxu0
        %v7383 = vadd.f32 0.0, %v7382
        %v7384 = vpop.f32.mrf.mxu0
        %v7385 = vadd.f32 0.0, %v7384
        %v7386 = vpop.f32.mrf.mxu0
        %v7387 = vadd.f32 0.0, %v7386
        %v7388 = vpop.f32.mrf.mxu0
        %v7389 = vadd.f32 0.0, %v7388
        %7390 = vmatprep.mubr.bf16.mxu0 %v7159
        %7391 = vmatmul.mubr.bf16.gmra.mxu0 %v7158
        %v7392 = vpop.f32.mrf.mxu0
        %v7393 = vadd.f32 0.0, %v7392
        %v7394 = vpop.f32.mrf.mxu0
        %v7395 = vadd.f32 0.0, %v7394
        %v7396 = vpop.f32.mrf.mxu0
        %v7397 = vadd.f32 0.0, %v7396
        %v7398 = vpop.f32.mrf.mxu0
        %v7399 = vadd.f32 0.0, %v7398
        %7400 = vdwg.mxu0
        %v7401 = vadd.f32 %v7031, %v7363
        %v7402 = vadd.f32 %v7032, %v7365
        %v7403 = vadd.f32 %v7033, %v7367
        %v7404 = vadd.f32 %v7034, %v7369
        %v7405 = vadd.f32 %v7035, %v7373
        %v7406 = vadd.f32 %v7036, %v7375
        %v7407 = vadd.f32 %v7037, %v7377
        %v7408 = vadd.f32 %v7038, %v7379
        %v7409 = vadd.f32 %v7039, %v7383
        %v7410 = vadd.f32 %v7040, %v7385
        %v7411 = vadd.f32 %v7041, %v7387
        %v7412 = vadd.f32 %v7042, %v7389
        %v7413 = vadd.f32 %v7043, %v7393
        %v7414 = vadd.f32 %v7044, %v7395
        %v7415 = vadd.f32 %v7045, %v7397
        %v7416 = vadd.f32 %v7046, %v7399
        %v7417 = vadd.f32 %v7401, %v7403
        %v7418 = vadd.f32 %v7417, %v7405
        %v7419 = vadd.f32 %v7418, %v7407
        %v7420 = vadd.f32 %v7419, %v7409
        %v7421 = vadd.f32 %v7420, %v7411
        %v7422 = vadd.f32 %v7421, %v7413
        %v7423 = vadd.f32 %v7422, %v7415
        %v7424 = vrot.slane %v7423, 4
        %v7425 = vadd.f32 %v7423, %v7424
        %v7426 = vrot.slane %v7425, 2
        %v7427 = vadd.f32 %v7425, %v7426
        %v7428 = vrot.slane %v7427, 1
        %v7429 = vadd.f32 %v7427, %v7428
        %v7430 = vadd.f32 %v7402, %v7404
        %v7431 = vadd.f32 %v7430, %v7406
        %v7432 = vadd.f32 %v7431, %v7408
        %v7433 = vadd.f32 %v7432, %v7410
        %v7434 = vadd.f32 %v7433, %v7412
        %v7435 = vadd.f32 %v7434, %v7414
        %v7436 = vadd.f32 %v7435, %v7416
        %v7437 = vrot.slane %v7436, 4
        %v7438 = vadd.f32 %v7436, %v7437
        %v7439 = vrot.slane %v7438, 2
        %v7440 = vadd.f32 %v7438, %v7439
        %v7441 = vrot.slane %v7440, 1
        %v7442 = vadd.f32 %v7440, %v7441
        %v7443 = vmul.f32 %v7429, 0.015625
        %v7444 = vmul.f32 %v7442, 0.015625
        %v7445 = vmul.f32 %v7401, %v7401
        %v7446 = vmul.f32 %v7402, %v7402
        %v7447 = vmul.f32 %v7403, %v7403
        %v7448 = vmul.f32 %v7404, %v7404
        %v7449 = vmul.f32 %v7405, %v7405
        %v7450 = vmul.f32 %v7406, %v7406
        %v7451 = vmul.f32 %v7407, %v7407
        %v7452 = vmul.f32 %v7408, %v7408
        %v7453 = vmul.f32 %v7409, %v7409
        %v7454 = vmul.f32 %v7410, %v7410
        %v7455 = vmul.f32 %v7411, %v7411
        %v7456 = vmul.f32 %v7412, %v7412
        %v7457 = vmul.f32 %v7413, %v7413
        %v7458 = vmul.f32 %v7414, %v7414
        %v7459 = vmul.f32 %v7415, %v7415
        %v7460 = vmul.f32 %v7416, %v7416
        %v7461 = vadd.f32 %v7445, %v7447
        %v7462 = vadd.f32 %v7461, %v7449
        %v7463 = vadd.f32 %v7462, %v7451
        %v7464 = vadd.f32 %v7463, %v7453
        %v7465 = vadd.f32 %v7464, %v7455
        %v7466 = vadd.f32 %v7465, %v7457
        %v7467 = vadd.f32 %v7466, %v7459
        %v7468 = vrot.slane %v7467, 4
        %v7469 = vadd.f32 %v7467, %v7468
        %v7470 = vrot.slane %v7469, 2
        %v7471 = vadd.f32 %v7469, %v7470
        %v7472 = vrot.slane %v7471, 1
        %v7473 = vadd.f32 %v7471, %v7472
        %v7474 = vadd.f32 %v7446, %v7448
        %v7475 = vadd.f32 %v7474, %v7450
        %v7476 = vadd.f32 %v7475, %v7452
        %v7477 = vadd.f32 %v7476, %v7454
        %v7478 = vadd.f32 %v7477, %v7456
        %v7479 = vadd.f32 %v7478, %v7458
        %v7480 = vadd.f32 %v7479, %v7460
        %v7481 = vrot.slane %v7480, 4
        %v7482 = vadd.f32 %v7480, %v7481
        %v7483 = vrot.slane %v7482, 2
        %v7484 = vadd.f32 %v7482, %v7483
        %v7485 = vrot.slane %v7484, 1
        %v7486 = vadd.f32 %v7484, %v7485
        %v7487 = vmul.f32 %v7473, 0.015625
        %v7488 = vmul.f32 %v7486, 0.015625
        %v7489 = vmul.f32 %v7443, %v7443
        %v7490 = vmul.f32 %v7444, %v7444
        %v7491 = vsub.f32 %v7487, %v7489
        %v7492 = vsub.f32 %v7488, %v7490
        %v7493 = vsub.f32 %v7401, %v7443
        %v7494 = vsub.f32 %v7402, %v7444
        %v7495 = vsub.f32 %v7403, %v7443
        %v7496 = vsub.f32 %v7404, %v7444
        %v7497 = vsub.f32 %v7405, %v7443
        %v7498 = vsub.f32 %v7406, %v7444
        %v7499 = vsub.f32 %v7407, %v7443
        %v7500 = vsub.f32 %v7408, %v7444
        %v7501 = vsub.f32 %v7409, %v7443
        %v7502 = vsub.f32 %v7410, %v7444
        %v7503 = vsub.f32 %v7411, %v7443
        %v7504 = vsub.f32 %v7412, %v7444
        %v7505 = vsub.f32 %v7413, %v7443
        %v7506 = vsub.f32 %v7414, %v7444
        %v7507 = vsub.f32 %v7415, %v7443
        %v7508 = vsub.f32 %v7416, %v7444
        %v7509 = vadd.f32 %v7491, 1e-05
        %v7510 = vadd.f32 %v7492, 1e-05
        %v7511 = vrsqrt.pop %v7509
        %v7512 = vrsqrt.pop %v7510
        %v7513 = vmul.f32 %v7493, %v7511
        %v7514 = vmul.f32 %v7494, %v7512
        %v7515 = vmul.f32 %v7495, %v7511
        %v7516 = vmul.f32 %v7496, %v7512
        %v7517 = vmul.f32 %v7497, %v7511
        %v7518 = vmul.f32 %v7498, %v7512
        %v7519 = vmul.f32 %v7499, %v7511
        %v7520 = vmul.f32 %v7500, %v7512
        %v7521 = vmul.f32 %v7501, %v7511
        %v7522 = vmul.f32 %v7502, %v7512
        %v7523 = vmul.f32 %v7503, %v7511
        %v7524 = vmul.f32 %v7504, %v7512
        %v7525 = vmul.f32 %v7505, %v7511
        %v7526 = vmul.f32 %v7506, %v7512
        %v7527 = vmul.f32 %v7507, %v7511
        %v7528 = vmul.f32 %v7508, %v7512
        %s7529 = scalar_lea.vmem %s198, 64
        %v7530 = vld [vmem:[%s7529] sm:$0xfc]
        %v7531 = vld [vmem:[%s7529 + $0x8] sm:$0xfc]
        %v7532 = vld [vmem:[%s7529 + $0x10] sm:$0x3]
        %v7533 = vld [vmem:[%s7529 + $0x18] sm:$0x3]
        %v7534 = vld [vmem:[%s7529 + $0x20] sm:$0xfc]
        %v7535 = vld [vmem:[%s7529 + $0x28] sm:$0xfc]
        %v7536 = vld [vmem:[%s7529 + $0x30] sm:$0x3]
        %v7537 = vld [vmem:[%s7529 + $0x38] sm:$0x3]
        %v7538 = vld [vmem:[%s7529 + $0x40] sm:$0xfc]
        %v7539 = vld [vmem:[%s7529 + $0x48] sm:$0xfc]
        %v7540 = vld [vmem:[%s7529 + $0x50] sm:$0x3]
        %v7541 = vld [vmem:[%s7529 + $0x58] sm:$0x3]
        %v7542 = vld [vmem:[%s7529 + $0x60] sm:$0xfc]
        %v7543 = vld [vmem:[%s7529 + $0x68] sm:$0xfc]
        %v7544 = vld [vmem:[%s7529 + $0x70] sm:$0x3]
        %v7545 = vld [vmem:[%s7529 + $0x78] sm:$0x3]
        %v7546 = vld [vmem:[%s7529 + $0x80] sm:$0xfc]
        %v7547 = vld [vmem:[%s7529 + $0x88] sm:$0xfc]
        %v7548 = vld [vmem:[%s7529 + $0x90] sm:$0x3]
        %v7549 = vld [vmem:[%s7529 + $0x98] sm:$0x3]
        %v7550 = vld [vmem:[%s7529 + $0xa0] sm:$0xfc]
        %v7551 = vld [vmem:[%s7529 + $0xa8] sm:$0xfc]
        %v7552 = vld [vmem:[%s7529 + $0xb0] sm:$0x3]
        %v7553 = vld [vmem:[%s7529 + $0xb8] sm:$0x3]
        %v7554 = vld [vmem:[%s7529 + $0xc0] sm:$0xfc]
        %v7555 = vld [vmem:[%s7529 + $0xc8] sm:$0xfc]
        %v7556 = vld [vmem:[%s7529 + $0xd0] sm:$0x3]
        %v7557 = vld [vmem:[%s7529 + $0xd8] sm:$0x3]
        %v7558 = vld [vmem:[%s7529 + $0xe0] sm:$0xfc]
        %v7559 = vld [vmem:[%s7529 + $0xe8] sm:$0xfc]
        %v7560 = vld [vmem:[%s7529 + $0xf0] sm:$0x3]
        %v7561 = vld [vmem:[%s7529 + $0xf8] sm:$0x3]
        %vm7594 = vcmask 1045504
        %v7595 = vrot.slane %v7530, 2
        %v7596 = vrot.slane %v7532, 2
        %v7597 = vsel %vm7594, %v7595, %v7596
        %v7598 = vrot.slane %v7531, 2
        %v7599 = vrot.slane %v7533, 2
        %v7600 = vsel %vm7594, %v7598, %v7599
        %v7601 = vrot.slane %v7534, 2
        %v7602 = vrot.slane %v7536, 2
        %v7603 = vsel %vm7594, %v7601, %v7602
        %v7604 = vrot.slane %v7535, 2
        %v7605 = vrot.slane %v7537, 2
        %v7606 = vsel %vm7594, %v7604, %v7605
        %v7607 = vrot.slane %v7538, 2
        %v7608 = vrot.slane %v7540, 2
        %v7609 = vsel %vm7594, %v7607, %v7608
        %v7610 = vrot.slane %v7539, 2
        %v7611 = vrot.slane %v7541, 2
        %v7612 = vsel %vm7594, %v7610, %v7611
        %v7613 = vrot.slane %v7542, 2
        %v7614 = vrot.slane %v7544, 2
        %v7615 = vsel %vm7594, %v7613, %v7614
        %v7616 = vrot.slane %v7543, 2
        %v7617 = vrot.slane %v7545, 2
        %v7618 = vsel %vm7594, %v7616, %v7617
        %v7619 = vrot.slane %v7546, 2
        %v7620 = vrot.slane %v7548, 2
        %v7621 = vsel %vm7594, %v7619, %v7620
        %v7622 = vrot.slane %v7547, 2
        %v7623 = vrot.slane %v7549, 2
        %v7624 = vsel %vm7594, %v7622, %v7623
        %v7625 = vrot.slane %v7550, 2
        %v7626 = vrot.slane %v7552, 2
        %v7627 = vsel %vm7594, %v7625, %v7626
        %v7628 = vrot.slane %v7551, 2
        %v7629 = vrot.slane %v7553, 2
        %v7630 = vsel %vm7594, %v7628, %v7629
        %v7631 = vrot.slane %v7554, 2
        %v7632 = vrot.slane %v7556, 2
        %v7633 = vsel %vm7594, %v7631, %v7632
        %v7634 = vrot.slane %v7555, 2
        %v7635 = vrot.slane %v7557, 2
        %v7636 = vsel %vm7594, %v7634, %v7635
        %v7637 = vrot.slane %v7558, 2
        %v7638 = vrot.slane %v7560, 2
        %v7639 = vsel %vm7594, %v7637, %v7638
        %v7640 = vrot.slane %v7559, 2
        %v7641 = vrot.slane %v7561, 2
        %v7642 = vsel %vm7594, %v7640, %v7641
        %v7659 = vadd.f32 %v7513, %v7597
        %v7660 = vadd.f32 %v7514, %v7600
        %v7661 = vadd.f32 %v7515, %v7603
        %v7662 = vadd.f32 %v7516, %v7606
        %v7663 = vadd.f32 %v7517, %v7609
        %v7664 = vadd.f32 %v7518, %v7612
        %v7665 = vadd.f32 %v7519, %v7615
        %v7666 = vadd.f32 %v7520, %v7618
        %v7667 = vadd.f32 %v7521, %v7621
        %v7668 = vadd.f32 %v7522, %v7624
        %v7669 = vadd.f32 %v7523, %v7627
        %v7670 = vadd.f32 %v7524, %v7630
        %v7671 = vadd.f32 %v7525, %v7633
        %v7672 = vadd.f32 %v7526, %v7636
        %v7673 = vadd.f32 %v7527, %v7639
        %v7674 = vadd.f32 %v7528, %v7642
        %7675 = vst [vmem:[%s193] sm:$0xff] %v7659
        %7676 = vst [vmem:[%s193 + $0x8] sm:$0xff] %v7660
        %7677 = vst [vmem:[%s193 + $0x10] sm:$0xff] %v7661
        %7678 = vst [vmem:[%s193 + $0x18] sm:$0xff] %v7662
        %7679 = vst [vmem:[%s193 + $0x20] sm:$0xff] %v7663
        %7680 = vst [vmem:[%s193 + $0x28] sm:$0xff] %v7664
        %7681 = vst [vmem:[%s193 + $0x30] sm:$0xff] %v7665
        %7682 = vst [vmem:[%s193 + $0x38] sm:$0xff] %v7666
        %7683 = vst [vmem:[%s193 + $0x40] sm:$0xff] %v7667
        %7684 = vst [vmem:[%s193 + $0x48] sm:$0xff] %v7668
        %7685 = vst [vmem:[%s193 + $0x50] sm:$0xff] %v7669
        %7686 = vst [vmem:[%s193 + $0x58] sm:$0xff] %v7670
        %7687 = vst [vmem:[%s193 + $0x60] sm:$0xff] %v7671
        %7688 = vst [vmem:[%s193 + $0x68] sm:$0xff] %v7672
        %7689 = vst [vmem:[%s193 + $0x70] sm:$0xff] %v7673
        %7690 = vst [vmem:[%s193 + $0x78] sm:$0xff] %v7674
        %s7691 = sand.u32 %s95, 1
        %s7692 = scalar_lea.sflag [#allocation6], %s7691
        %s7693 = sand.u32 %s95, 1
        %s7694 = smul.addr %s7693, 128
        %s7695 = scalar_lea.vmem [#allocation9], %s7694
        // Predicated region
        $region41: #{tpu_custom_call.1} parent=31 // pred_check
          %p7696 = pneg %p105
        $region42: #{tpu_custom_call.1} parent=31 // pred_check_branch
          %7698 = sbr.rel (%p7696) target = $region44
        $region43: #{tpu_custom_call.1} parent=31 // pred_region
          %s7700 = ssub.s32 2048, 2048
          %7701 = vsyncadd %s7692, %s7700
          %s7702 = smul.addr %s19, 16
          %s7703 = smul.addr %s7702, 128
          %s7704 = scalar_lea.hbm %s3, %s7703
          %s7705 = sshll.u32 %s7695, 4
          %s7706 = int_to_ptr.vmem [resolvable:$true] %s7705
          %7711 = dma.vmem_to_hbm [thread:$0]  %s7706, 2048, %s7704, %s7692, 256, 256, 16
        $region44: #{tpu_custom_call.1} parent=31 // pred_fallthru
          _
      $region32: #{tpu_custom_call.1} parent=5 // pred_fallthru
        _
      %p7712 = scmp.le.s32.totalorder 2, %s14
      // Predicated region
      $region45: #{tpu_custom_call.1} parent=5 // pred_check
        %p7713 = pneg %p7712
      $region46: #{tpu_custom_call.1} parent=5 // pred_check_branch
        %7715 = sbr.rel (%p7713) target = $region48
      $region47: #{tpu_custom_call.1} parent=5 // pred_region
        %s7716 = ssub.s32 %s14, 2
        // Predicated region
        $region49: #{tpu_custom_call.1} parent=47 // pred_check
          %p7717 = pneg %p111
        $region50: #{tpu_custom_call.1} parent=47 // pred_check_branch
          %7719 = sbr.rel (%p7717) target = $region52
        $region51: #{tpu_custom_call.1} parent=47 // pred_region
          %s7720 = sand.u32 %s96, 1
          %s7721 = scalar_lea.sflag [#allocation6], %s7720
          %s7722 = sand.u32 %s96, 1
          %s7723 = smul.addr %s7722, 128
          %s7724 = scalar_lea.vmem [#allocation9], %s7723
          %7725 = dma.done %s7721, 2048
        $region52: #{tpu_custom_call.1} parent=47 // pred_fallthru
          _
      $region48: #{tpu_custom_call.1} parent=5 // pred_fallthru
        _
    $region6: #{tpu_custom_call.1} parent=1 // loop_footer
      %s18 = sadd.s32 1, %s14
    $region7: #{tpu_custom_call.1} parent=1 // loop_footer_branch
      %13 = sbr.rel target = $region3
    $region8: #{tpu_custom_call.1} parent=1 // loop_exit
      _
    %7726 = vsyncpa [#allocation5], 1
    %s7727 = scalar_lea.sflag [#allocation5], 1
    %7728 = vsyncpa %s7727, 1
    %7729 = vsyncpa [#allocation8], 1
    %7730 = vsyncpa [#allocation6], 1
    %s7731 = scalar_lea.sflag [#allocation6], 1
    %7732 = vsyncpa %s7731, 1

</llo_original>
